<compile_context>
chip_gen: v7x
topology: tpu7x:2x2x1
jax: 0.10.0
libtpu: 0.0.40
codegen_flags: <defaults>
</compile_context>

<pallas_src>
import functools

import jax
import jax.numpy as jnp
import numpy as np
from jax.experimental import pallas as pl
from jax.experimental.pallas import tpu as pltpu


def _round_up(x: int, m: int) -> int:
    return ((x + m - 1) // m) * m


# ----------------------------------------------------------------------------
# Deterministic "parameter" construction (DFT basis, Hann window, mel fbank).
# ----------------------------------------------------------------------------
def _hann_window(win_length: int) -> np.ndarray:
    # torch.hann_window(win_length, periodic=True)
    n = np.arange(win_length, dtype=np.float64)
    return 0.5 - 0.5 * np.cos(2.0 * np.pi * n / win_length)


def _fused_dft_basis(n_fft: int, win_length: int, n_freq_pad: int) -> np.ndarray:
    """Windowed real-DFT basis, [cos | -sin] fused along columns.

    Columns are zero-padded from n_freq = n_fft//2 + 1 up to n_freq_pad so both
    halves are lane-aligned.  Shape: (n_fft, 2 * n_freq_pad), float32.
    """
    n_freq = n_fft // 2 + 1
    win = _hann_window(win_length)
    w = np.zeros(n_fft, dtype=np.float64)
    lpad = (n_fft - win_length) // 2
    w[lpad:lpad + win_length] = win                              # torch.stft window pad

    n = np.arange(n_fft, dtype=np.float64)[:, None]              # (n_fft, 1)
    k = np.arange(n_freq, dtype=np.float64)[None, :]             # (1, n_freq)
    ang = 2.0 * np.pi * n * k / n_fft
    cos_m = np.zeros((n_fft, n_freq_pad), dtype=np.float64)
    sin_m = np.zeros((n_fft, n_freq_pad), dtype=np.float64)
    cos_m[:, :n_freq] = w[:, None] * np.cos(ang)
    sin_m[:, :n_freq] = -(w[:, None] * np.sin(ang))
    return np.concatenate([cos_m, sin_m], axis=1).astype(np.float32)


def _melscale_fbanks_padded(n_freqs: int, n_freq_pad: int, n_mels: int,
                            n_mels_pad: int, sample_rate: int) -> np.ndarray:
    # torchaudio.functional.melscale_fbanks(..., norm=None, mel_scale='htk'),
    # zero-padded to (n_freq_pad, n_mels_pad) for lane alignment.
    f_min = 0.0
    f_max = sample_rate / 2.0

    def hz_to_mel(f):
        return 2595.0 * np.log10(1.0 + f / 700.0)

    def mel_to_hz(m):
        return 700.0 * (10.0 ** (m / 2595.0) - 1.0)

    all_freqs = np.linspace(0.0, sample_rate // 2, n_freqs)      # (n_freqs,)
    m_pts = np.linspace(hz_to_mel(f_min), hz_to_mel(f_max), n_mels + 2)
    f_pts = mel_to_hz(m_pts)                                     # (n_mels + 2,)

    f_diff = f_pts[1:] - f_pts[:-1]                              # (n_mels + 1,)
    slopes = f_pts[None, :] - all_freqs[:, None]                 # (n_freqs, n_mels + 2)
    down = (-1.0 * slopes[:, :-2]) / f_diff[:-1]
    up = slopes[:, 2:] / f_diff[1:]
    fb = np.maximum(0.0, np.minimum(down, up))                   # (n_freqs, n_mels)

    fb_pad = np.zeros((n_freq_pad, n_mels_pad), dtype=np.float32)
    fb_pad[:n_freqs, :n_mels] = fb
    return fb_pad


# ----------------------------------------------------------------------------
# Pallas kernel: hop-blocks tile -> log-mel tile (transposed, lane-dense).
# Hot path = framing (VPU/XLU slack) + 2 bf16 MXU matmuls + elementwise.
# ----------------------------------------------------------------------------
def _mel_kernel(r, n_freq_pad, blk0_ref, blk1_ref, basis_ref, fb_ref, out_ref):
    # blk0: this tile's tile_t hop-blocks; blk1: the next 8 hop-blocks (needed
    # because frame t spans hop-blocks t .. t+r-1).
    b0 = blk0_ref[0].astype(jnp.float32)                          # (tile_t, hop)
    tile_t = b0.shape[0]
    if r > 1:
        b1 = blk1_ref[0].astype(jnp.float32)                      # (blk1_rows, hop)
        b_ext = jnp.concatenate([b0, b1], axis=0)                 # (tile_t + blk1_rows, hop)
    else:
        b_ext = b0
    # Column chunk j of the frame matrix = hop-block stream shifted by j rows.
    frames = jnp.concatenate(
        [b_ext[j:j + tile_t, :] for j in range(r)], axis=-1
    ).astype(jnp.bfloat16)                                        # (tile_t, n_fft)

    # Single fused DFT matmul (bf16 operands, f32 accumulation on the MXU).
    spec = jnp.dot(frames, basis_ref[...], preferred_element_type=jnp.float32)
    re = spec[:, :n_freq_pad]                                     # lane-aligned split
    im = spec[:, n_freq_pad:]
    mag = jnp.sqrt(re * re + im * im)                             # power=1 magnitude

    # Mel projection in bf16 (f32 accumulation) — full-rate MXU.
    mel = jnp.dot(mag.astype(jnp.bfloat16), fb_ref[...],
                  preferred_element_type=jnp.float32)             # (tile_t, n_mels_pad)
    logmel = jnp.log(jnp.maximum(mel, 1e-5))                      # clamp(1e-5).log()

    # Fused output transpose: store (n_mels_pad, tile_t), lane-dense (tile_t % 128 == 0).
    out_ref[0] = logmel.T


@functools.partial(jax.jit, static_argnames=("n_fft", "hop_length", "win_length",
                                              "n_mel_channels", "target_sample_rate"))
def mel_spec_forward(wav,
                     n_fft: int = 1024,
                     hop_length: int = 256,
                     win_length: int = 1024,
                     n_mel_channels: int = 100,
                     target_sample_rate: int = 24000):
    """MelSpec.forward.  wav: (B, L) or (B, 1, L) float32 -> (B, n_mels, T)."""
    if wav.ndim == 3:
        wav = jnp.squeeze(wav, axis=1)
    assert wav.ndim == 2
    # TODO(synk): kernel framing assumes hop_length divides n_fft (true for the
    # module defaults 1024/256); other configs would need a gather-style path.
    assert n_fft % hop_length == 0, "kernel assumes hop_length | n_fft"
    wav = wav.astype(jnp.float32)
    B, L = wav.shape

    n_freq = n_fft // 2 + 1
    n_freq_pad = _round_up(n_freq, 128)                           # 513 -> 640
    n_mels_pad = _round_up(n_mel_channels, 128)                   # 100 -> 128
    r = n_fft // hop_length                                       # 4 hop-blocks per frame
    blk1_rows = _round_up(max(r - 1, 1), 8)                       # 8

    basis = jnp.asarray(_fused_dft_basis(n_fft, win_length, n_freq_pad),
                        dtype=jnp.bfloat16)                       # (n_fft, 2*n_freq_pad)
    fb = jnp.asarray(_melscale_fbanks_padded(n_freq, n_freq_pad, n_mel_channels,
                                             n_mels_pad, target_sample_rate),
                     dtype=jnp.bfloat16)                          # (n_freq_pad, n_mels_pad)

    # --- glue: center (reflect) padding, then hop-block view of the waveform ---
    pad = n_fft // 2
    padded = jnp.pad(wav, ((0, 0), (pad, pad)), mode="reflect")   # (B, L + n_fft)
    n_frames = 1 + L // hop_length

    # Frame-tile size: multiple of 128 (lane-dense transposed output block),
    # chosen to minimize padded frames; prefer larger tiles on ties.
    tile_t = min((512, 384, 256, 128),
                 key=lambda t: (_round_up(n_frames, t), -t))
    T_pad = _round_up(n_frames, tile_t)
    num_tiles = T_pad // tile_t
    assert tile_t % blk1_rows == 0

    # Hop-block array: blocks t..t+r-1 form frame t.  Extra zero blocks at the
    # end so both BlockSpec windows (tile_t rows at i, blk1_rows rows at i+1)
    # stay exactly in bounds for every tile.
    n_blocks = T_pad + tile_t
    total_len = n_blocks * hop_length
    blocks = jnp.pad(padded, ((0, 0), (0, total_len - padded.shape[1])))
    blocks = blocks.reshape(B, n_blocks, hop_length).astype(jnp.bfloat16)

    rows = B * T_pad
    flops = (2 * rows * n_fft * (2 * n_freq_pad)
             + 2 * rows * n_freq_pad * n_mels_pad)
    transcendentals = rows * (n_freq_pad + n_mels_pad)
    bytes_accessed = (B * T_pad * hop_length * 2                  # blk0 stream (bf16)
                      + B * num_tiles * blk1_rows * hop_length * 2
                      + n_fft * 2 * n_freq_pad * 2                # fused DFT basis (bf16)
                      + n_freq_pad * n_mels_pad * 2               # mel fbank (bf16)
                      + B * n_mels_pad * T_pad * 4)               # output (f32)

    out = pl.pallas_call(
        functools.partial(_mel_kernel, r, n_freq_pad),
        out_shape=jax.ShapeDtypeStruct((B, n_mels_pad, T_pad), jnp.float32),
        grid_spec=pltpu.PrefetchScalarGridSpec(
            num_scalar_prefetch=0,
            grid=(B, num_tiles),
            in_specs=[
                # This tile's hop-blocks.
                pl.BlockSpec((1, tile_t, hop_length), lambda b, i: (b, i, 0)),
                # The next blk1_rows hop-blocks (frame overlap into next tile).
                pl.BlockSpec((1, blk1_rows, hop_length),
                             lambda b, i: (b, (i + 1) * (tile_t // blk1_rows), 0)),
                # Constant operands (index maps never change -> fetched once).
                pl.BlockSpec((n_fft, 2 * n_freq_pad), lambda b, i: (0, 0)),
                pl.BlockSpec((n_freq_pad, n_mels_pad), lambda b, i: (0, 0)),
            ],
            out_specs=pl.BlockSpec((1, n_mels_pad, tile_t), lambda b, i: (b, 0, i)),
        ),
        compiler_params=pltpu.CompilerParams(
            dimension_semantics=("parallel", "parallel"),
            # Per-tile footprint (tile_t=512): ~2.7 MiB constants + ~1 MiB
            # streamed blocks/out (double-buffered) + ~15 MiB f32 temporaries
            # -> well under the 48 MiB cap (v7x has 64 MiB physical per TC).
            vmem_limit_bytes=48 * 1024 * 1024,
        ),
        cost_estimate=pl.CostEstimate(flops=flops,
                                      transcendentals=transcendentals,
                                      bytes_accessed=bytes_accessed),
    )(blocks, blocks, basis, fb)

    # Slice off freq/mel/frame padding; output is already (B, n_mels, T) layout.
    return out[:, :n_mel_channels, :n_frames]


if __name__ == "__main__":
    key = jax.random.PRNGKey(0)
    B, L = 2, 4096                                   # small waveform, module defaults
    wav = jax.random.normal(key, (B, L), dtype=jnp.float32)

    mel = mel_spec_forward(wav)                      # (B, 100, 1 + L // 256) = (2, 100, 17)
    mel = jax.block_until_ready(mel)

    assert mel.shape == (B, 100, 1 + L // 256), mel.shape
    assert mel.dtype == jnp.float32
    assert bool(jnp.all(jnp.isfinite(mel)))
    print("KERNEL_OK")
</pallas_src>

<mosaic_0001>
module attributes {stable_mosaic.version = 11 : i64} {
  func.func @_mel_kernel(%arg0: i32, %arg1: i32, %arg2: memref<1x128x256xbf16, #tpu.memory_space<vmem>>, %arg3: memref<1x8x256xbf16, #tpu.memory_space<vmem>>, %arg4: memref<1024x1280xbf16, #tpu.memory_space<vmem>>, %arg5: memref<640x128xbf16, #tpu.memory_space<vmem>>, %arg6: memref<1x128x128xf32, #tpu.memory_space<vmem>>) attributes {dimension_semantics = [#tpu.dimension_semantics<parallel>, #tpu.dimension_semantics<parallel>], iteration_bounds = array<i64: 2, 1>, scalar_prefetch = 0 : i64, scratch_operands = 0 : i64, tpu.core_type = #tpu.core_type<tc>, window_params = [{transform_indices = @transform_0, window_bounds = array<i64: 1, 128, 256>}, {transform_indices = @transform_1, window_bounds = array<i64: 1, 8, 256>}, {pipeline_mode = #tpu.pipeline_mode<synchronous>, transform_indices = @transform_2, window_bounds = array<i64: 1024, 1280>}, {pipeline_mode = #tpu.pipeline_mode<synchronous>, transform_indices = @transform_3, window_bounds = array<i64: 640, 128>}, {transform_indices = @transform_4, window_bounds = array<i64: 1, 128, 128>}]} {
    %c0 = arith.constant 0 : index
    %c0_0 = arith.constant 0 : index
    %c0_1 = arith.constant 0 : index
    %0 = vector.load %arg2[%c0, %c0_0, %c0_1] : memref<1x128x256xbf16, #tpu.memory_space<vmem>>, vector<1x128x256xbf16>
    %1 = vector.shape_cast %0 : vector<1x128x256xbf16> to vector<128x256xbf16>
    %2 = arith.extf %1 : vector<128x256xbf16> to vector<128x256xf32>
    %c0_2 = arith.constant 0 : index
    %c0_3 = arith.constant 0 : index
    %c0_4 = arith.constant 0 : index
    %3 = vector.load %arg3[%c0_2, %c0_3, %c0_4] : memref<1x8x256xbf16, #tpu.memory_space<vmem>>, vector<1x8x256xbf16>
    %4 = vector.shape_cast %3 : vector<1x8x256xbf16> to vector<8x256xbf16>
    %5 = arith.extf %4 : vector<8x256xbf16> to vector<8x256xf32>
    %6 = tpu.concatenate %2, %5 in 0 : vector<128x256xf32>, vector<8x256xf32> -> vector<136x256xf32>
    %7 = vector.extract_strided_slice %6 {offsets = [0, 0], sizes = [128, 256], strides = [1, 1]} : vector<136x256xf32> to vector<128x256xf32>
    %8 = vector.extract_strided_slice %6 {offsets = [1, 0], sizes = [128, 256], strides = [1, 1]} : vector<136x256xf32> to vector<128x256xf32>
    %9 = vector.extract_strided_slice %6 {offsets = [2, 0], sizes = [128, 256], strides = [1, 1]} : vector<136x256xf32> to vector<128x256xf32>
    %10 = vector.extract_strided_slice %6 {offsets = [3, 0], sizes = [128, 256], strides = [1, 1]} : vector<136x256xf32> to vector<128x256xf32>
    %11 = tpu.concatenate %7, %8, %9, %10 in 1 : vector<128x256xf32>, vector<128x256xf32>, vector<128x256xf32>, vector<128x256xf32> -> vector<128x1024xf32>
    %12 = arith.truncf %11 : vector<128x1024xf32> to vector<128x1024xbf16>
    %c0_5 = arith.constant 0 : index
    %c0_6 = arith.constant 0 : index
    %13 = vector.load %arg4[%c0_5, %c0_6] : memref<1024x1280xbf16, #tpu.memory_space<vmem>>, vector<1024x1280xbf16>
    %cst = arith.constant dense<0.000000e+00> : vector<128x1280xf32>
    %14 = tpu.matmul %12, %13, %cst {dimension_numbers = #tpu.dot_dimension_numbers<[1], [0], [0], [1], [0, 0, 1, 1], [], []>} : vector<128x1024xbf16>, vector<1024x1280xbf16>, vector<128x1280xf32> -> vector<128x1280xf32>
    %15 = vector.extract_strided_slice %14 {offsets = [0, 0], sizes = [128, 640], strides = [1, 1]} : vector<128x1280xf32> to vector<128x640xf32>
    %16 = vector.extract_strided_slice %14 {offsets = [0, 640], sizes = [128, 640], strides = [1, 1]} : vector<128x1280xf32> to vector<128x640xf32>
    %17 = arith.mulf %15, %15 : vector<128x640xf32>
    %18 = arith.mulf %16, %16 : vector<128x640xf32>
    %19 = arith.addf %17, %18 : vector<128x640xf32>
    %20 = math.sqrt %19 : vector<128x640xf32>
    %21 = arith.truncf %20 : vector<128x640xf32> to vector<128x640xbf16>
    %c0_7 = arith.constant 0 : index
    %c0_8 = arith.constant 0 : index
    %22 = vector.load %arg5[%c0_7, %c0_8] : memref<640x128xbf16, #tpu.memory_space<vmem>>, vector<640x128xbf16>
    %cst_9 = arith.constant dense<0.000000e+00> : vector<128x128xf32>
    %23 = tpu.matmul %21, %22, %cst_9 {dimension_numbers = #tpu.dot_dimension_numbers<[1], [0], [0], [1], [0, 0, 1, 1], [], []>} : vector<128x640xbf16>, vector<640x128xbf16>, vector<128x128xf32> -> vector<128x128xf32>
    %cst_10 = arith.constant 9.99999974E-6 : f32
    %24 = vector.broadcast %cst_10 : f32 to vector<128x128xf32>
    %25 = arith.maximumf %23, %24 : vector<128x128xf32>
    %26 = math.log %25 : vector<128x128xf32>
    %27 = tpu.transpose %26, [1, 0] : vector<128x128xf32> -> vector<128x128xf32>
    %c0_11 = arith.constant 0 : index
    %c0_12 = arith.constant 0 : index
    %c0_13 = arith.constant 0 : index
    %28 = vector.load %arg6[%c0_11, %c0_12, %c0_13] : memref<1x128x128xf32, #tpu.memory_space<vmem>>, vector<1x128x128xf32>
    %29 = vector.shape_cast %28 : vector<1x128x128xf32> to vector<128x128xf32>
    %30 = vector.shape_cast %27 : vector<128x128xf32> to vector<1x128x128xf32>
    tpu.vector_store %arg6[%c0_11, %c0_12, %c0_13], %30 {strides = array<i32>} : memref<1x128x128xf32, #tpu.memory_space<vmem>>, vector<1x128x128xf32>,
    return
  }
  func.func @transform_0(%arg0: i32, %arg1: i32) -> (i32, i32, i32) {
    %c0_i32 = arith.constant 0 : i32
    %c0_i32_0 = arith.constant 0 : i32
    return %arg0, %arg1, %c0_i32 : i32, i32, i32
  }
  func.func @transform_1(%arg0: i32, %arg1: i32) -> (i32, i32, i32) {
    %c1_i32 = arith.constant 1 : i32
    %0 = arith.addi %arg1, %c1_i32 : i32
    %c16_i32 = arith.constant 16 : i32
    %1 = arith.muli %0, %c16_i32 : i32
    %c0_i32 = arith.constant 0 : i32
    %c0_i32_0 = arith.constant 0 : i32
    return %arg0, %1, %c0_i32 : i32, i32, i32
  }
  func.func @transform_2(%arg0: i32, %arg1: i32) -> (i32, i32) {
    %c0_i32 = arith.constant 0 : i32
    %c0_i32_0 = arith.constant 0 : i32
    %c0_i32_1 = arith.constant 0 : i32
    return %c0_i32, %c0_i32_0 : i32, i32
  }
  func.func @transform_3(%arg0: i32, %arg1: i32) -> (i32, i32) {
    %c0_i32 = arith.constant 0 : i32
    %c0_i32_0 = arith.constant 0 : i32
    %c0_i32_1 = arith.constant 0 : i32
    return %c0_i32, %c0_i32_0 : i32, i32
  }
  func.func @transform_4(%arg0: i32, %arg1: i32) -> (i32, i32, i32) {
    %c0_i32 = arith.constant 0 : i32
    %c0_i32_0 = arith.constant 0 : i32
    return %arg0, %c0_i32, %arg1 : i32, i32, i32
  }
}

</mosaic_0001>

<llo_original>
// kernel: mel_spec_forward.1
$region0: #{mel_spec_forward.1}
  #allocation0 [shape = 'u32[]', space=smem, size = 0x4, offset = 0x4, fixed_abs, tag = 'smem constant byte address 0x4 - core index']
  #allocation1 [shape = 'u32[144,128]{1,0:T(1,128)}', space=vmem, size = 0x12000, scoped, tag = 'internal scratch']
  %s0 = inlined_call_operand.vmem [shape: bf16[2,256,256], index: 0, kind: input, shape index: {}, may-alias: {0,1}]
  %s1 = inlined_call_operand.vmem [shape: bf16[2,256,256], index: 1, kind: input, shape index: {}, may-alias: {0,1}]
  %s2 = inlined_call_operand.vmem [shape: bf16[1024,1280], index: 2, kind: input, shape index: {}]
  %s3 = inlined_call_operand.vmem [shape: bf16[640,128], index: 3, kind: input, shape index: {}]
  %s4 = inlined_call_operand.vmem [shape: f32[2,128,128], index: 4, kind: output, shape index: {}]
  %s5 = sld [smem:[#allocation0]]
  $region49: #{mel_spec_forward.1} parent=0
    _
  %s7 = ssub.s32 1, %s5
  %s8 = scalar_select 0, %s7, %s5
  loop: start=0, step=1, limit=4
  $region2: #{mel_spec_forward.1} parent=0 // loop_pre_header
    _
  $region3: #{mel_spec_forward.1} parent=0 // loop_header
    %s10 = sphi 0, %s14
    %p11 = scmp.ge.s32.totalorder %s10, 4
    %s17 = sphi 0, %s29
    %s18 = sphi 0, %s25
    %s19 = sphi 0, %s17
    %s20 = sphi 0, %s18
    %s21 = sphi 0, %s19
    %s22 = sphi 0, %s20
    %s34 = sphi 0, %s36
    %s37 = sphi 0, %s34
    %s38 = sphi 0, %s37
    %s54 = sphi 0, %s38
    %s66 = sphi 0, %s68
    %s69 = sphi 0, %s66
    %s70 = sphi 0, %s69
    %s86 = sphi 0, %s70
    %s90 = sphi 0, %s90
    %s92 = sphi 0, %s90
    %s93 = sphi 0, %s92
    %s107 = sphi 0, %s93
    %s111 = sphi 0, %s111
    %s113 = sphi 0, %s111
    %s114 = sphi 0, %s113
    %s128 = sphi 0, %s114
    %s136 = sphi 0, %s138
    %s139 = sphi 0, %s136
    %s140 = sphi 0, %s139
    %s156 = sphi 0, %s140
  $region4: #{mel_spec_forward.1} parent=0 // loop_header_branch
    %13 = sbr.rel (%p11) target = $region8
  $region5: #{mel_spec_forward.1} parent=0 // loop_body
    %s15 = ssub.s32 %s10, 1
    %s16 = ssub.s32 %s10, 2
    %s23 = sadd.s32 1, %s18
    %p24 = scmp.ge.s32.totalorder %s23, 1
    %s25 = scalar_select %p24, 0, %s23
    %s26 = sadd.s32 1, %s17
    %s27 = scalar_select %p24, %s26, %s17
    %p28 = scmp.ge.s32.totalorder %s27, 2
    %s29 = scalar_select %p28, 0, %s27
    %s30 = ssub.s32 %s17, %s29
    %s31 = ssub.s32 %s18, %s25
    %s32 = sor.u32 %s30, %s31
    %p33 = scmp.eq.s32.totalorder %s32, 0
    %s35 = sadd.s32 %s34, 1
    %s36 = scalar_select %p33, %s34, %s35
    %p39 = pneg %p33
    %p40 = scmp.eq.s32.totalorder %s10, 1
    %p41 = por %p39, %p40
    %p42 = scmp.ne.s32.totalorder %s34, %s37
    %p43 = scmp.eq.s32.totalorder %s10, 0
    %p44 = por %p42, %p43
    %p45 = scmp.ne.s32.totalorder %s34, %s37
    %p46 = scmp.eq.s32.totalorder %s15, 1
    %p47 = por %p45, %p46
    %p48 = scmp.ne.s32.totalorder %s37, %s38
    %p49 = scmp.eq.s32.totalorder %s15, 0
    %p50 = por %p48, %p49
    %p51 = scmp.ne.s32.totalorder %s37, %s38
    %p52 = scmp.eq.s32.totalorder %s16, 1
    %p53 = por %p51, %p52
    %p55 = scmp.ne.s32.totalorder %s38, %s54
    %p56 = scmp.eq.s32.totalorder %s16, 0
    %p57 = por %p55, %p56
    %s58 = sadd.s32 %s18, 1
    %s59 = smul.u32 %s58, 16
    %s60 = sadd.s32 %s25, 1
    %s61 = smul.u32 %s60, 16
    %s62 = ssub.s32 %s17, %s29
    %s63 = ssub.s32 %s59, %s61
    %s64 = sor.u32 %s62, %s63
    %p65 = scmp.eq.s32.totalorder %s64, 0
    %s67 = sadd.s32 %s66, 1
    %s68 = scalar_select %p65, %s66, %s67
    %p71 = pneg %p65
    %p72 = scmp.eq.s32.totalorder %s10, 1
    %p73 = por %p71, %p72
    %p74 = scmp.ne.s32.totalorder %s66, %s69
    %p75 = scmp.eq.s32.totalorder %s10, 0
    %p76 = por %p74, %p75
    %p77 = scmp.ne.s32.totalorder %s66, %s69
    %p78 = scmp.eq.s32.totalorder %s15, 1
    %p79 = por %p77, %p78
    %p80 = scmp.ne.s32.totalorder %s69, %s70
    %p81 = scmp.eq.s32.totalorder %s15, 0
    %p82 = por %p80, %p81
    %p83 = scmp.ne.s32.totalorder %s69, %s70
    %p84 = scmp.eq.s32.totalorder %s16, 1
    %p85 = por %p83, %p84
    %p87 = scmp.ne.s32.totalorder %s70, %s86
    %p88 = scmp.eq.s32.totalorder %s16, 0
    %p89 = por %p87, %p88
    %s91 = sadd.s32 %s90, 1
    %p94 = scmp.eq.s32.totalorder %s10, 1
    %p95 = scmp.ne.s32.totalorder %s90, %s92
    %p96 = scmp.eq.s32.totalorder %s10, 0
    %p97 = por %p95, %p96
    %p98 = scmp.ne.s32.totalorder %s90, %s92
    %p99 = scmp.eq.s32.totalorder %s15, 1
    %p100 = por %p98, %p99
    %p101 = scmp.ne.s32.totalorder %s92, %s93
    %p102 = scmp.eq.s32.totalorder %s15, 0
    %p103 = por %p101, %p102
    %p104 = scmp.ne.s32.totalorder %s92, %s93
    %p105 = scmp.eq.s32.totalorder %s16, 1
    %p106 = por %p104, %p105
    %p108 = scmp.ne.s32.totalorder %s93, %s107
    %p109 = scmp.eq.s32.totalorder %s16, 0
    %p110 = por %p108, %p109
    %s112 = sadd.s32 %s111, 1
    %p115 = scmp.eq.s32.totalorder %s10, 1
    %p116 = scmp.ne.s32.totalorder %s111, %s113
    %p117 = scmp.eq.s32.totalorder %s10, 0
    %p118 = por %p116, %p117
    %p119 = scmp.ne.s32.totalorder %s111, %s113
    %p120 = scmp.eq.s32.totalorder %s15, 1
    %p121 = por %p119, %p120
    %p122 = scmp.ne.s32.totalorder %s113, %s114
    %p123 = scmp.eq.s32.totalorder %s15, 0
    %p124 = por %p122, %p123
    %p125 = scmp.ne.s32.totalorder %s113, %s114
    %p126 = scmp.eq.s32.totalorder %s16, 1
    %p127 = por %p125, %p126
    %p129 = scmp.ne.s32.totalorder %s114, %s128
    %p130 = scmp.eq.s32.totalorder %s16, 0
    %p131 = por %p129, %p130
    %s132 = ssub.s32 %s17, %s29
    %s133 = ssub.s32 %s18, %s25
    %s134 = sor.u32 %s132, %s133
    %p135 = scmp.eq.s32.totalorder %s134, 0
    %s137 = sadd.s32 %s136, 1
    %s138 = scalar_select %p135, %s136, %s137
    %p141 = pneg %p135
    %p142 = scmp.eq.s32.totalorder %s10, 1
    %p143 = por %p141, %p142
    %p144 = scmp.ne.s32.totalorder %s136, %s139
    %p145 = scmp.eq.s32.totalorder %s10, 0
    %p146 = por %p144, %p145
    %p147 = scmp.ne.s32.totalorder %s136, %s139
    %p148 = scmp.eq.s32.totalorder %s15, 1
    %p149 = por %p147, %p148
    %p150 = scmp.ne.s32.totalorder %s139, %s140
    %p151 = scmp.eq.s32.totalorder %s15, 0
    %p152 = por %p150, %p151
    %p153 = scmp.ne.s32.totalorder %s139, %s140
    %p154 = scmp.eq.s32.totalorder %s16, 1
    %p155 = por %p153, %p154
    %p157 = scmp.ne.s32.totalorder %s140, %s156
    %p158 = scmp.eq.s32.totalorder %s16, 0
    %p159 = por %p157, %p158
    %p160 = scmp.le.s32.totalorder 1, %s10
    %p161 = scmp.lt.s32.totalorder %s10, 3
    %p162 = pnand %p160, %p161
    %p163 = pneg %p162
    // Predicated region
    $region9: #{mel_spec_forward.1} parent=5 // pred_check
      _
    $region10: #{mel_spec_forward.1} parent=5 // pred_check_branch
      %165 = sbr.rel (%p162) target = $region12
    $region11: #{mel_spec_forward.1} parent=5 // pred_region
      %s166 = ssub.s32 %s10, 1
      // Predicated region
      $region13: #{mel_spec_forward.1} parent=11 // pred_check
        %p167 = pneg %p103
      $region14: #{mel_spec_forward.1} parent=11 // pred_check_branch
        %169 = sbr.rel (%p167) target = $region16
      $region15: #{mel_spec_forward.1} parent=11 // pred_region
        _
      $region16: #{mel_spec_forward.1} parent=11 // pred_fallthru
        _
      // Predicated region
      $region17: #{mel_spec_forward.1} parent=11 // pred_check
        %p170 = pneg %p124
      $region18: #{mel_spec_forward.1} parent=11 // pred_check_branch
        %172 = sbr.rel (%p170) target = $region20
      $region19: #{mel_spec_forward.1} parent=11 // pred_region
        _
      $region20: #{mel_spec_forward.1} parent=11 // pred_fallthru
        _
    $region12: #{mel_spec_forward.1} parent=5 // pred_fallthru
      _
    %p173 = scmp.lt.s32.totalorder %s10, 2
    // Predicated region
    $region21: #{mel_spec_forward.1} parent=5 // pred_check
      %p174 = pneg %p173
    $region22: #{mel_spec_forward.1} parent=5 // pred_check_branch
      %176 = sbr.rel (%p174) target = $region24
    $region23: #{mel_spec_forward.1} parent=5 // pred_region
      // Predicated region
      $region25: #{mel_spec_forward.1} parent=23 // pred_check
        %p177 = pneg %p44
      $region26: #{mel_spec_forward.1} parent=23 // pred_check_branch
        %179 = sbr.rel (%p177) target = $region28
      $region27: #{mel_spec_forward.1} parent=23 // pred_region
        %s180 = smul.u32 16, %s18
        %p181 = scmp.lt.s32.totalorder %s17, 1
        %s182 = scalar_select %p181, %s17, 1
        %p183 = scmp.lt.s32.totalorder %s180, 31
        %s184 = scalar_select %p183, %s180, 31
        %s185 = smul.addr %s184, 2
        %s186 = smul.addr %s182, 64
        %s187 = sadd.s32 %s185, %s186
        %s188 = smul.addr %s187, 4
        %s189 = scalar_lea.vmem %s0, %s188
        %s190 = smul.u32 16, %s18
      $region28: #{mel_spec_forward.1} parent=23 // pred_fallthru
        _
      // Predicated region
      $region29: #{mel_spec_forward.1} parent=23 // pred_check
        %p191 = pneg %p76
      $region30: #{mel_spec_forward.1} parent=23 // pred_check_branch
        %193 = sbr.rel (%p191) target = $region32
      $region31: #{mel_spec_forward.1} parent=23 // pred_region
        %s194 = sadd.s32 %s18, 1
        %s195 = smul.u32 %s194, 16
        %p196 = scmp.lt.s32.totalorder %s17, 1
        %s197 = scalar_select %p196, %s17, 1
        %p198 = scmp.lt.s32.totalorder %s195, 31
        %s199 = scalar_select %p198, %s195, 31
        %s200 = smul.addr %s199, 2
        %s201 = smul.addr %s197, 64
        %s202 = sadd.s32 %s200, %s201
        %s203 = smul.addr %s202, 4
        %s204 = scalar_lea.vmem %s1, %s203
        %s205 = sadd.s32 %s18, 1
        %s206 = smul.u32 %s205, 16
      $region32: #{mel_spec_forward.1} parent=23 // pred_fallthru
        _
    $region24: #{mel_spec_forward.1} parent=5 // pred_fallthru
      _
    %p207 = scmp.le.s32.totalorder 1, %s10
    %p208 = scmp.lt.s32.totalorder %s10, 3
    %p209 = pnand %p207, %p208
    %p210 = pneg %p209
    // Predicated region
    $region33: #{mel_spec_forward.1} parent=5 // pred_check
      _
    $region34: #{mel_spec_forward.1} parent=5 // pred_check_branch
      %212 = sbr.rel (%p209) target = $region36
    $region35: #{mel_spec_forward.1} parent=5 // pred_region
      %s213 = ssub.s32 %s10, 1
      %s214 = smul.u32 16, %s20
      %p215 = scmp.lt.s32.totalorder %s19, 1
      %s216 = scalar_select %p215, %s19, 1
      %p217 = scmp.lt.s32.totalorder %s214, 31
      %s218 = scalar_select %p217, %s214, 31
      %s219 = smul.addr %s218, 2
      %s220 = smul.addr %s216, 64
      %s221 = sadd.s32 %s219, %s220
      %s222 = smul.addr %s221, 4
      %s223 = scalar_lea.vmem %s0, %s222
      %p224 = pneg %p50
      %p225 = pneg %p47
      %s226 = sadd.s32 %s20, 1
      %s227 = smul.u32 %s226, 16
      %p228 = scmp.lt.s32.totalorder %s19, 1
      %s229 = scalar_select %p228, %s19, 1
      %p230 = scmp.lt.s32.totalorder %s227, 31
      %s231 = scalar_select %p230, %s227, 31
      %s232 = smul.addr %s231, 2
      %s233 = smul.addr %s229, 64
      %s234 = sadd.s32 %s232, %s233
      %s235 = smul.addr %s234, 4
      %s236 = scalar_lea.vmem %s1, %s235
      %p237 = pneg %p82
      %p238 = pneg %p79
      %p239 = pneg %p103
      %p240 = pneg %p100
      %p241 = pneg %p124
      %p242 = pneg %p121
      %p243 = pneg %p152
      %p244 = pneg %p149
      %p245 = scmp.lt.s32.totalorder %s19, 1
      %s246 = scalar_select %p245, %s19, 1
      %p247 = scmp.lt.s32.totalorder %s20, 0
      %s248 = scalar_select %p247, %s20, 0
      %s249 = smul.addr %s246, 16
      %s250 = sadd.s32 %s248, %s249
      %s251 = smul.addr %s250, 8
      %s252 = scalar_lea.vmem %s4, %s251
      %s253 = smul.u32 16, %s20
      %p254 = scmp.lt.s32.totalorder %s19, 1
      %s255 = scalar_select %p254, %s19, 1
      %p256 = scmp.lt.s32.totalorder %s253, 31
      %s257 = scalar_select %p256, %s253, 31
      %s258 = smul.addr %s257, 2
      %s259 = smul.addr %s255, 64
      %s260 = sadd.s32 %s258, %s259
      %s261 = smul.addr %s260, 4
      %s262 = scalar_lea.vmem %s0, %s261
      %s263 = smul.u32 16, %s20
      %s264 = sadd.s32 %s20, 1
      %s265 = smul.u32 %s264, 16
      %p266 = scmp.lt.s32.totalorder %s19, 1
      %s267 = scalar_select %p266, %s19, 1
      %p268 = scmp.lt.s32.totalorder %s265, 31
      %s269 = scalar_select %p268, %s265, 31
      %s270 = smul.addr %s269, 2
      %s271 = smul.addr %s267, 64
      %s272 = sadd.s32 %s270, %s271
      %s273 = smul.addr %s272, 4
      %s274 = scalar_lea.vmem %s1, %s273
      %s275 = sadd.s32 %s20, 1
      %s276 = smul.u32 %s275, 16
      %p277 = scmp.lt.s32.totalorder %s19, 1
      %s278 = scalar_select %p277, %s19, 1
      %p279 = scmp.lt.s32.totalorder %s20, 0
      %s280 = scalar_select %p279, %s20, 0
      %s281 = smul.addr %s278, 16
      %s282 = sadd.s32 %s280, %s281
      %s283 = smul.addr %s282, 8
      %s284 = scalar_lea.vmem %s4, %s283
      %v286 = vld [vmem:[%s262] sm:$0xff]
      %v287 = vld [vmem:[%s262 + $0x8] sm:$0xff]
      %v288 = vld [vmem:[%s262 + $0x10] sm:$0xff]
      %v289 = vld [vmem:[%s262 + $0x18] sm:$0xff]
      %v290 = vld [vmem:[%s262 + $0x20] sm:$0xff]
      %v291 = vld [vmem:[%s262 + $0x28] sm:$0xff]
      %v292 = vld [vmem:[%s262 + $0x30] sm:$0xff]
      %v293 = vld [vmem:[%s262 + $0x38] sm:$0xff]
      %v294 = vld [vmem:[%s262 + $0x40] sm:$0xff]
      %v295 = vld [vmem:[%s262 + $0x48] sm:$0xff]
      %v296 = vld [vmem:[%s262 + $0x50] sm:$0xff]
      %v297 = vld [vmem:[%s262 + $0x58] sm:$0xff]
      %v298 = vld [vmem:[%s262 + $0x60] sm:$0xff]
      %v299 = vld [vmem:[%s262 + $0x68] sm:$0xff]
      %v300 = vld [vmem:[%s262 + $0x70] sm:$0xff]
      %v301 = vld [vmem:[%s262 + $0x78] sm:$0xff]
      %v302 = vunpack.c.l.bf16 %v286
      %v303 = vunpack.c.h.bf16 %v286
      %v304 = vunpack.c.l.bf16 %v287
      %v305 = vunpack.c.h.bf16 %v287
      %v306 = vunpack.c.l.bf16 %v288
      %v307 = vunpack.c.h.bf16 %v288
      %v308 = vunpack.c.l.bf16 %v289
      %v309 = vunpack.c.h.bf16 %v289
      %v310 = vunpack.c.l.bf16 %v290
      %v311 = vunpack.c.h.bf16 %v290
      %v312 = vunpack.c.l.bf16 %v291
      %v313 = vunpack.c.h.bf16 %v291
      %v314 = vunpack.c.l.bf16 %v292
      %v315 = vunpack.c.h.bf16 %v292
      %v316 = vunpack.c.l.bf16 %v293
      %v317 = vunpack.c.h.bf16 %v293
      %v318 = vunpack.c.l.bf16 %v294
      %v319 = vunpack.c.h.bf16 %v294
      %v320 = vunpack.c.l.bf16 %v295
      %v321 = vunpack.c.h.bf16 %v295
      %v322 = vunpack.c.l.bf16 %v296
      %v323 = vunpack.c.h.bf16 %v296
      %v324 = vunpack.c.l.bf16 %v297
      %v325 = vunpack.c.h.bf16 %v297
      %v326 = vunpack.c.l.bf16 %v298
      %v327 = vunpack.c.h.bf16 %v298
      %v328 = vunpack.c.l.bf16 %v299
      %v329 = vunpack.c.h.bf16 %v299
      %v330 = vunpack.c.l.bf16 %v300
      %v331 = vunpack.c.h.bf16 %v300
      %v332 = vunpack.c.l.bf16 %v301
      %v333 = vunpack.c.h.bf16 %v301
      %v334 = vld [vmem:[%s274] sm:$0xff]
      %v335 = vunpack.c.l.bf16 %v334
      %v336 = vunpack.c.h.bf16 %v334
      %vm371 = vcmask 1046528
      %v372 = vrot.slane %v302, 1
      %v373 = vrot.slane %v304, 1
      %v374 = vsel %vm371, %v372, %v373
      %v375 = vrot.slane %v303, 1
      %v376 = vrot.slane %v305, 1
      %v377 = vsel %vm371, %v375, %v376
      %v378 = vrot.slane %v306, 1
      %v379 = vsel %vm371, %v373, %v378
      %v380 = vrot.slane %v307, 1
      %v381 = vsel %vm371, %v376, %v380
      %v382 = vrot.slane %v308, 1
      %v383 = vsel %vm371, %v378, %v382
      %v384 = vrot.slane %v309, 1
      %v385 = vsel %vm371, %v380, %v384
      %v386 = vrot.slane %v310, 1
      %v387 = vsel %vm371, %v382, %v386
      %v388 = vrot.slane %v311, 1
      %v389 = vsel %vm371, %v384, %v388
      %v390 = vrot.slane %v312, 1
      %v391 = vsel %vm371, %v386, %v390
      %v392 = vrot.slane %v313, 1
      %v393 = vsel %vm371, %v388, %v392
      %v394 = vrot.slane %v314, 1
      %v395 = vsel %vm371, %v390, %v394
      %v396 = vrot.slane %v315, 1
      %v397 = vsel %vm371, %v392, %v396
      %v398 = vrot.slane %v316, 1
      %v399 = vsel %vm371, %v394, %v398
      %v400 = vrot.slane %v317, 1
      %v401 = vsel %vm371, %v396, %v400
      %v402 = vrot.slane %v318, 1
      %v403 = vsel %vm371, %v398, %v402
      %v404 = vrot.slane %v319, 1
      %v405 = vsel %vm371, %v400, %v404
      %v406 = vrot.slane %v320, 1
      %v407 = vsel %vm371, %v402, %v406
      %v408 = vrot.slane %v321, 1
      %v409 = vsel %vm371, %v404, %v408
      %v410 = vrot.slane %v322, 1
      %v411 = vsel %vm371, %v406, %v410
      %v412 = vrot.slane %v323, 1
      %v413 = vsel %vm371, %v408, %v412
      %v414 = vrot.slane %v324, 1
      %v415 = vsel %vm371, %v410, %v414
      %v416 = vrot.slane %v325, 1
      %v417 = vsel %vm371, %v412, %v416
      %v418 = vrot.slane %v326, 1
      %v419 = vsel %vm371, %v414, %v418
      %v420 = vrot.slane %v327, 1
      %v421 = vsel %vm371, %v416, %v420
      %v422 = vrot.slane %v328, 1
      %v423 = vsel %vm371, %v418, %v422
      %v424 = vrot.slane %v329, 1
      %v425 = vsel %vm371, %v420, %v424
      %v426 = vrot.slane %v330, 1
      %v427 = vsel %vm371, %v422, %v426
      %v428 = vrot.slane %v331, 1
      %v429 = vsel %vm371, %v424, %v428
      %v430 = vrot.slane %v332, 1
      %v431 = vsel %vm371, %v426, %v430
      %v432 = vrot.slane %v333, 1
      %v433 = vsel %vm371, %v428, %v432
      %v434 = vrot.slane %v335, 1
      %v435 = vsel %vm371, %v430, %v434
      %v436 = vrot.slane %v336, 1
      %v437 = vsel %vm371, %v432, %v436
      %vm470 = vcmask 1045504
      %v471 = vrot.slane %v302, 2
      %v472 = vrot.slane %v304, 2
      %v473 = vsel %vm470, %v471, %v472
      %v474 = vrot.slane %v303, 2
      %v475 = vrot.slane %v305, 2
      %v476 = vsel %vm470, %v474, %v475
      %v477 = vrot.slane %v306, 2
      %v478 = vsel %vm470, %v472, %v477
      %v479 = vrot.slane %v307, 2
      %v480 = vsel %vm470, %v475, %v479
      %v481 = vrot.slane %v308, 2
      %v482 = vsel %vm470, %v477, %v481
      %v483 = vrot.slane %v309, 2
      %v484 = vsel %vm470, %v479, %v483
      %v485 = vrot.slane %v310, 2
      %v486 = vsel %vm470, %v481, %v485
      %v487 = vrot.slane %v311, 2
      %v488 = vsel %vm470, %v483, %v487
      %v489 = vrot.slane %v312, 2
      %v490 = vsel %vm470, %v485, %v489
      %v491 = vrot.slane %v313, 2
      %v492 = vsel %vm470, %v487, %v491
      %v493 = vrot.slane %v314, 2
      %v494 = vsel %vm470, %v489, %v493
      %v495 = vrot.slane %v315, 2
      %v496 = vsel %vm470, %v491, %v495
      %v497 = vrot.slane %v316, 2
      %v498 = vsel %vm470, %v493, %v497
      %v499 = vrot.slane %v317, 2
      %v500 = vsel %vm470, %v495, %v499
      %v501 = vrot.slane %v318, 2
      %v502 = vsel %vm470, %v497, %v501
      %v503 = vrot.slane %v319, 2
      %v504 = vsel %vm470, %v499, %v503
      %v505 = vrot.slane %v320, 2
      %v506 = vsel %vm470, %v501, %v505
      %v507 = vrot.slane %v321, 2
      %v508 = vsel %vm470, %v503, %v507
      %v509 = vrot.slane %v322, 2
      %v510 = vsel %vm470, %v505, %v509
      %v511 = vrot.slane %v323, 2
      %v512 = vsel %vm470, %v507, %v511
      %v513 = vrot.slane %v324, 2
      %v514 = vsel %vm470, %v509, %v513
      %v515 = vrot.slane %v325, 2
      %v516 = vsel %vm470, %v511, %v515
      %v517 = vrot.slane %v326, 2
      %v518 = vsel %vm470, %v513, %v517
      %v519 = vrot.slane %v327, 2
      %v520 = vsel %vm470, %v515, %v519
      %v521 = vrot.slane %v328, 2
      %v522 = vsel %vm470, %v517, %v521
      %v523 = vrot.slane %v329, 2
      %v524 = vsel %vm470, %v519, %v523
      %v525 = vrot.slane %v330, 2
      %v526 = vsel %vm470, %v521, %v525
      %v527 = vrot.slane %v331, 2
      %v528 = vsel %vm470, %v523, %v527
      %v529 = vrot.slane %v332, 2
      %v530 = vsel %vm470, %v525, %v529
      %v531 = vrot.slane %v333, 2
      %v532 = vsel %vm470, %v527, %v531
      %v533 = vrot.slane %v335, 2
      %v534 = vsel %vm470, %v529, %v533
      %v535 = vrot.slane %v336, 2
      %v536 = vsel %vm470, %v531, %v535
      %vm569 = vcmask 1044480
      %v570 = vrot.slane %v302, 3
      %v571 = vrot.slane %v304, 3
      %v572 = vsel %vm569, %v570, %v571
      %v573 = vrot.slane %v303, 3
      %v574 = vrot.slane %v305, 3
      %v575 = vsel %vm569, %v573, %v574
      %v576 = vrot.slane %v306, 3
      %v577 = vsel %vm569, %v571, %v576
      %v578 = vrot.slane %v307, 3
      %v579 = vsel %vm569, %v574, %v578
      %v580 = vrot.slane %v308, 3
      %v581 = vsel %vm569, %v576, %v580
      %v582 = vrot.slane %v309, 3
      %v583 = vsel %vm569, %v578, %v582
      %v584 = vrot.slane %v310, 3
      %v585 = vsel %vm569, %v580, %v584
      %v586 = vrot.slane %v311, 3
      %v587 = vsel %vm569, %v582, %v586
      %v588 = vrot.slane %v312, 3
      %v589 = vsel %vm569, %v584, %v588
      %v590 = vrot.slane %v313, 3
      %v591 = vsel %vm569, %v586, %v590
      %v592 = vrot.slane %v314, 3
      %v593 = vsel %vm569, %v588, %v592
      %v594 = vrot.slane %v315, 3
      %v595 = vsel %vm569, %v590, %v594
      %v596 = vrot.slane %v316, 3
      %v597 = vsel %vm569, %v592, %v596
      %v598 = vrot.slane %v317, 3
      %v599 = vsel %vm569, %v594, %v598
      %v600 = vrot.slane %v318, 3
      %v601 = vsel %vm569, %v596, %v600
      %v602 = vrot.slane %v319, 3
      %v603 = vsel %vm569, %v598, %v602
      %v604 = vrot.slane %v320, 3
      %v605 = vsel %vm569, %v600, %v604
      %v606 = vrot.slane %v321, 3
      %v607 = vsel %vm569, %v602, %v606
      %v608 = vrot.slane %v322, 3
      %v609 = vsel %vm569, %v604, %v608
      %v610 = vrot.slane %v323, 3
      %v611 = vsel %vm569, %v606, %v610
      %v612 = vrot.slane %v324, 3
      %v613 = vsel %vm569, %v608, %v612
      %v614 = vrot.slane %v325, 3
      %v615 = vsel %vm569, %v610, %v614
      %v616 = vrot.slane %v326, 3
      %v617 = vsel %vm569, %v612, %v616
      %v618 = vrot.slane %v327, 3
      %v619 = vsel %vm569, %v614, %v618
      %v620 = vrot.slane %v328, 3
      %v621 = vsel %vm569, %v616, %v620
      %v622 = vrot.slane %v329, 3
      %v623 = vsel %vm569, %v618, %v622
      %v624 = vrot.slane %v330, 3
      %v625 = vsel %vm569, %v620, %v624
      %v626 = vrot.slane %v331, 3
      %v627 = vsel %vm569, %v622, %v626
      %v628 = vrot.slane %v332, 3
      %v629 = vsel %vm569, %v624, %v628
      %v630 = vrot.slane %v333, 3
      %v631 = vsel %vm569, %v626, %v630
      %v632 = vrot.slane %v335, 3
      %v633 = vsel %vm569, %v628, %v632
      %v634 = vrot.slane %v336, 3
      %v635 = vsel %vm569, %v630, %v634
      %v668 = vpack.c.bf16 %v304, %v302
      %v669 = vpack.c.bf16 %v305, %v303
      %v670 = vpack.c.bf16 %v379, %v374
      %v671 = vpack.c.bf16 %v381, %v377
      %v672 = vpack.c.bf16 %v478, %v473
      %v673 = vpack.c.bf16 %v480, %v476
      %v674 = vpack.c.bf16 %v577, %v572
      %v675 = vpack.c.bf16 %v579, %v575
      %v676 = vpack.c.bf16 %v308, %v306
      %v677 = vpack.c.bf16 %v309, %v307
      %v678 = vpack.c.bf16 %v387, %v383
      %v679 = vpack.c.bf16 %v389, %v385
      %v680 = vpack.c.bf16 %v486, %v482
      %v681 = vpack.c.bf16 %v488, %v484
      %v682 = vpack.c.bf16 %v585, %v581
      %v683 = vpack.c.bf16 %v587, %v583
      %v684 = vpack.c.bf16 %v312, %v310
      %v685 = vpack.c.bf16 %v313, %v311
      %v686 = vpack.c.bf16 %v395, %v391
      %v687 = vpack.c.bf16 %v397, %v393
      %v688 = vpack.c.bf16 %v494, %v490
      %v689 = vpack.c.bf16 %v496, %v492
      %v690 = vpack.c.bf16 %v593, %v589
      %v691 = vpack.c.bf16 %v595, %v591
      %v692 = vpack.c.bf16 %v316, %v314
      %v693 = vpack.c.bf16 %v317, %v315
      %v694 = vpack.c.bf16 %v403, %v399
      %v695 = vpack.c.bf16 %v405, %v401
      %v696 = vpack.c.bf16 %v502, %v498
      %v697 = vpack.c.bf16 %v504, %v500
      %v698 = vpack.c.bf16 %v601, %v597
      %v699 = vpack.c.bf16 %v603, %v599
      %v700 = vpack.c.bf16 %v320, %v318
      %v701 = vpack.c.bf16 %v321, %v319
      %v702 = vpack.c.bf16 %v411, %v407
      %v703 = vpack.c.bf16 %v413, %v409
      %v704 = vpack.c.bf16 %v510, %v506
      %v705 = vpack.c.bf16 %v512, %v508
      %v706 = vpack.c.bf16 %v609, %v605
      %v707 = vpack.c.bf16 %v611, %v607
      %v708 = vpack.c.bf16 %v324, %v322
      %v709 = vpack.c.bf16 %v325, %v323
      %v710 = vpack.c.bf16 %v419, %v415
      %v711 = vpack.c.bf16 %v421, %v417
      %v712 = vpack.c.bf16 %v518, %v514
      %v713 = vpack.c.bf16 %v520, %v516
      %v714 = vpack.c.bf16 %v617, %v613
      %v715 = vpack.c.bf16 %v619, %v615
      %v716 = vpack.c.bf16 %v328, %v326
      %v717 = vpack.c.bf16 %v329, %v327
      %v718 = vpack.c.bf16 %v427, %v423
      %v719 = vpack.c.bf16 %v429, %v425
      %v720 = vpack.c.bf16 %v526, %v522
      %v721 = vpack.c.bf16 %v528, %v524
      %v722 = vpack.c.bf16 %v625, %v621
      %v723 = vpack.c.bf16 %v627, %v623
      %v724 = vpack.c.bf16 %v332, %v330
      %v725 = vpack.c.bf16 %v333, %v331
      %v726 = vpack.c.bf16 %v435, %v431
      %v727 = vpack.c.bf16 %v437, %v433
      %v728 = vpack.c.bf16 %v534, %v530
      %v729 = vpack.c.bf16 %v536, %v532
      %v730 = vpack.c.bf16 %v633, %v629
      %v731 = vpack.c.bf16 %v635, %v631
      %v732 = vld [vmem:[%s2] sm:$0xff]
      %v733 = vld [vmem:[%s2 + $0x8] sm:$0xff]
      %v734 = vld [vmem:[%s2 + $0x10] sm:$0xff]
      %v735 = vld [vmem:[%s2 + $0x18] sm:$0xff]
      %v736 = vld [vmem:[%s2 + $0x20] sm:$0xff]
      %v737 = vld [vmem:[%s2 + $0x28] sm:$0xff]
      %v738 = vld [vmem:[%s2 + $0x30] sm:$0xff]
      %v739 = vld [vmem:[%s2 + $0x38] sm:$0xff]
      %v740 = vld [vmem:[%s2 + $0x40] sm:$0xff]
      %v741 = vld [vmem:[%s2 + $0x48] sm:$0xff]
      %v742 = vld [vmem:[%s2 + $0x50] sm:$0xff]
      %v743 = vld [vmem:[%s2 + $0x58] sm:$0xff]
      %v744 = vld [vmem:[%s2 + $0x60] sm:$0xff]
      %v745 = vld [vmem:[%s2 + $0x68] sm:$0xff]
      %v746 = vld [vmem:[%s2 + $0x70] sm:$0xff]
      %v747 = vld [vmem:[%s2 + $0x78] sm:$0xff]
      %v748 = vld [vmem:[%s2 + $0x80] sm:$0xff]
      %v749 = vld [vmem:[%s2 + $0x88] sm:$0xff]
      %v750 = vld [vmem:[%s2 + $0x90] sm:$0xff]
      %v751 = vld [vmem:[%s2 + $0x98] sm:$0xff]
      %v752 = vld [vmem:[%s2 + $0xa0] sm:$0xff]
      %v753 = vld [vmem:[%s2 + $0xa8] sm:$0xff]
      %v754 = vld [vmem:[%s2 + $0xb0] sm:$0xff]
      %v755 = vld [vmem:[%s2 + $0xb8] sm:$0xff]
      %v756 = vld [vmem:[%s2 + $0xc0] sm:$0xff]
      %v757 = vld [vmem:[%s2 + $0xc8] sm:$0xff]
      %v758 = vld [vmem:[%s2 + $0xd0] sm:$0xff]
      %v759 = vld [vmem:[%s2 + $0xd8] sm:$0xff]
      %v760 = vld [vmem:[%s2 + $0xe0] sm:$0xff]
      %v761 = vld [vmem:[%s2 + $0xe8] sm:$0xff]
      %v762 = vld [vmem:[%s2 + $0xf0] sm:$0xff]
      %v763 = vld [vmem:[%s2 + $0xf8] sm:$0xff]
      %v764 = vld [vmem:[%s2 + $0x100] sm:$0xff]
      %v765 = vld [vmem:[%s2 + $0x108] sm:$0xff]
      %v766 = vld [vmem:[%s2 + $0x110] sm:$0xff]
      %v767 = vld [vmem:[%s2 + $0x118] sm:$0xff]
      %v768 = vld [vmem:[%s2 + $0x120] sm:$0xff]
      %v769 = vld [vmem:[%s2 + $0x128] sm:$0xff]
      %v770 = vld [vmem:[%s2 + $0x130] sm:$0xff]
      %v771 = vld [vmem:[%s2 + $0x138] sm:$0xff]
      %v772 = vld [vmem:[%s2 + $0x140] sm:$0xff]
      %v773 = vld [vmem:[%s2 + $0x148] sm:$0xff]
      %v774 = vld [vmem:[%s2 + $0x150] sm:$0xff]
      %v775 = vld [vmem:[%s2 + $0x158] sm:$0xff]
      %v776 = vld [vmem:[%s2 + $0x160] sm:$0xff]
      %v777 = vld [vmem:[%s2 + $0x168] sm:$0xff]
      %v778 = vld [vmem:[%s2 + $0x170] sm:$0xff]
      %v779 = vld [vmem:[%s2 + $0x178] sm:$0xff]
      %v780 = vld [vmem:[%s2 + $0x180] sm:$0xff]
      %v781 = vld [vmem:[%s2 + $0x188] sm:$0xff]
      %v782 = vld [vmem:[%s2 + $0x190] sm:$0xff]
      %v783 = vld [vmem:[%s2 + $0x198] sm:$0xff]
      %v784 = vld [vmem:[%s2 + $0x1a0] sm:$0xff]
      %v785 = vld [vmem:[%s2 + $0x1a8] sm:$0xff]
      %v786 = vld [vmem:[%s2 + $0x1b0] sm:$0xff]
      %v787 = vld [vmem:[%s2 + $0x1b8] sm:$0xff]
      %v788 = vld [vmem:[%s2 + $0x1c0] sm:$0xff]
      %v789 = vld [vmem:[%s2 + $0x1c8] sm:$0xff]
      %v790 = vld [vmem:[%s2 + $0x1d0] sm:$0xff]
      %v791 = vld [vmem:[%s2 + $0x1d8] sm:$0xff]
      %v792 = vld [vmem:[%s2 + $0x1e0] sm:$0xff]
      %v793 = vld [vmem:[%s2 + $0x1e8] sm:$0xff]
      %v794 = vld [vmem:[%s2 + $0x1f0] sm:$0xff]
      %v795 = vld [vmem:[%s2 + $0x1f8] sm:$0xff]
      %v796 = vld [vmem:[%s2 + $0x200] sm:$0xff]
      %v797 = vld [vmem:[%s2 + $0x208] sm:$0xff]
      %v798 = vld [vmem:[%s2 + $0x210] sm:$0xff]
      %v799 = vld [vmem:[%s2 + $0x218] sm:$0xff]
      %v800 = vld [vmem:[%s2 + $0x220] sm:$0xff]
      %v801 = vld [vmem:[%s2 + $0x228] sm:$0xff]
      %v802 = vld [vmem:[%s2 + $0x230] sm:$0xff]
      %v803 = vld [vmem:[%s2 + $0x238] sm:$0xff]
      %v804 = vld [vmem:[%s2 + $0x240] sm:$0xff]
      %v805 = vld [vmem:[%s2 + $0x248] sm:$0xff]
      %v806 = vld [vmem:[%s2 + $0x250] sm:$0xff]
      %v807 = vld [vmem:[%s2 + $0x258] sm:$0xff]
      %v808 = vld [vmem:[%s2 + $0x260] sm:$0xff]
      %v809 = vld [vmem:[%s2 + $0x268] sm:$0xff]
      %v810 = vld [vmem:[%s2 + $0x270] sm:$0xff]
      %v811 = vld [vmem:[%s2 + $0x278] sm:$0xff]
      %v812 = vld [vmem:[%s2 + $0x280] sm:$0xff]
      %v813 = vld [vmem:[%s2 + $0x288] sm:$0xff]
      %v814 = vld [vmem:[%s2 + $0x290] sm:$0xff]
      %v815 = vld [vmem:[%s2 + $0x298] sm:$0xff]
      %v816 = vld [vmem:[%s2 + $0x2a0] sm:$0xff]
      %v817 = vld [vmem:[%s2 + $0x2a8] sm:$0xff]
      %v818 = vld [vmem:[%s2 + $0x2b0] sm:$0xff]
      %v819 = vld [vmem:[%s2 + $0x2b8] sm:$0xff]
      %v820 = vld [vmem:[%s2 + $0x2c0] sm:$0xff]
      %v821 = vld [vmem:[%s2 + $0x2c8] sm:$0xff]
      %v822 = vld [vmem:[%s2 + $0x2d0] sm:$0xff]
      %v823 = vld [vmem:[%s2 + $0x2d8] sm:$0xff]
      %v824 = vld [vmem:[%s2 + $0x2e0] sm:$0xff]
      %v825 = vld [vmem:[%s2 + $0x2e8] sm:$0xff]
      %v826 = vld [vmem:[%s2 + $0x2f0] sm:$0xff]
      %v827 = vld [vmem:[%s2 + $0x2f8] sm:$0xff]
      %v828 = vld [vmem:[%s2 + $0x300] sm:$0xff]
      %v829 = vld [vmem:[%s2 + $0x308] sm:$0xff]
      %v830 = vld [vmem:[%s2 + $0x310] sm:$0xff]
      %v831 = vld [vmem:[%s2 + $0x318] sm:$0xff]
      %v832 = vld [vmem:[%s2 + $0x320] sm:$0xff]
      %v833 = vld [vmem:[%s2 + $0x328] sm:$0xff]
      %v834 = vld [vmem:[%s2 + $0x330] sm:$0xff]
      %v835 = vld [vmem:[%s2 + $0x338] sm:$0xff]
      %v836 = vld [vmem:[%s2 + $0x340] sm:$0xff]
      %v837 = vld [vmem:[%s2 + $0x348] sm:$0xff]
      %v838 = vld [vmem:[%s2 + $0x350] sm:$0xff]
      %v839 = vld [vmem:[%s2 + $0x358] sm:$0xff]
      %v840 = vld [vmem:[%s2 + $0x360] sm:$0xff]
      %v841 = vld [vmem:[%s2 + $0x368] sm:$0xff]
      %v842 = vld [vmem:[%s2 + $0x370] sm:$0xff]
      %v843 = vld [vmem:[%s2 + $0x378] sm:$0xff]
      %v844 = vld [vmem:[%s2 + $0x380] sm:$0xff]
      %v845 = vld [vmem:[%s2 + $0x388] sm:$0xff]
      %v846 = vld [vmem:[%s2 + $0x390] sm:$0xff]
      %v847 = vld [vmem:[%s2 + $0x398] sm:$0xff]
      %v848 = vld [vmem:[%s2 + $0x3a0] sm:$0xff]
      %v849 = vld [vmem:[%s2 + $0x3a8] sm:$0xff]
      %v850 = vld [vmem:[%s2 + $0x3b0] sm:$0xff]
      %v851 = vld [vmem:[%s2 + $0x3b8] sm:$0xff]
      %v852 = vld [vmem:[%s2 + $0x3c0] sm:$0xff]
      %v853 = vld [vmem:[%s2 + $0x3c8] sm:$0xff]
      %v854 = vld [vmem:[%s2 + $0x3d0] sm:$0xff]
      %v855 = vld [vmem:[%s2 + $0x3d8] sm:$0xff]
      %v856 = vld [vmem:[%s2 + $0x3e0] sm:$0xff]
      %v857 = vld [vmem:[%s2 + $0x3e8] sm:$0xff]
      %v858 = vld [vmem:[%s2 + $0x3f0] sm:$0xff]
      %v859 = vld [vmem:[%s2 + $0x3f8] sm:$0xff]
      %v860 = vld [vmem:[%s2 + $0x400] sm:$0xff]
      %v861 = vld [vmem:[%s2 + $0x408] sm:$0xff]
      %v862 = vld [vmem:[%s2 + $0x410] sm:$0xff]
      %v863 = vld [vmem:[%s2 + $0x418] sm:$0xff]
      %v864 = vld [vmem:[%s2 + $0x420] sm:$0xff]
      %v865 = vld [vmem:[%s2 + $0x428] sm:$0xff]
      %v866 = vld [vmem:[%s2 + $0x430] sm:$0xff]
      %v867 = vld [vmem:[%s2 + $0x438] sm:$0xff]
      %v868 = vld [vmem:[%s2 + $0x440] sm:$0xff]
      %v869 = vld [vmem:[%s2 + $0x448] sm:$0xff]
      %v870 = vld [vmem:[%s2 + $0x450] sm:$0xff]
      %v871 = vld [vmem:[%s2 + $0x458] sm:$0xff]
      %v872 = vld [vmem:[%s2 + $0x460] sm:$0xff]
      %v873 = vld [vmem:[%s2 + $0x468] sm:$0xff]
      %v874 = vld [vmem:[%s2 + $0x470] sm:$0xff]
      %v875 = vld [vmem:[%s2 + $0x478] sm:$0xff]
      %v876 = vld [vmem:[%s2 + $0x480] sm:$0xff]
      %v877 = vld [vmem:[%s2 + $0x488] sm:$0xff]
      %v878 = vld [vmem:[%s2 + $0x490] sm:$0xff]
      %v879 = vld [vmem:[%s2 + $0x498] sm:$0xff]
      %v880 = vld [vmem:[%s2 + $0x4a0] sm:$0xff]
      %v881 = vld [vmem:[%s2 + $0x4a8] sm:$0xff]
      %v882 = vld [vmem:[%s2 + $0x4b0] sm:$0xff]
      %v883 = vld [vmem:[%s2 + $0x4b8] sm:$0xff]
      %v884 = vld [vmem:[%s2 + $0x4c0] sm:$0xff]
      %v885 = vld [vmem:[%s2 + $0x4c8] sm:$0xff]
      %v886 = vld [vmem:[%s2 + $0x4d0] sm:$0xff]
      %v887 = vld [vmem:[%s2 + $0x4d8] sm:$0xff]
      %v888 = vld [vmem:[%s2 + $0x4e0] sm:$0xff]
      %v889 = vld [vmem:[%s2 + $0x4e8] sm:$0xff]
      %v890 = vld [vmem:[%s2 + $0x4f0] sm:$0xff]
      %v891 = vld [vmem:[%s2 + $0x4f8] sm:$0xff]
      %v892 = vld [vmem:[%s2 + $0x500] sm:$0xff]
      %v893 = vld [vmem:[%s2 + $0x508] sm:$0xff]
      %v894 = vld [vmem:[%s2 + $0x510] sm:$0xff]
      %v895 = vld [vmem:[%s2 + $0x518] sm:$0xff]
      %v896 = vld [vmem:[%s2 + $0x520] sm:$0xff]
      %v897 = vld [vmem:[%s2 + $0x528] sm:$0xff]
      %v898 = vld [vmem:[%s2 + $0x530] sm:$0xff]
      %v899 = vld [vmem:[%s2 + $0x538] sm:$0xff]
      %v900 = vld [vmem:[%s2 + $0x540] sm:$0xff]
      %v901 = vld [vmem:[%s2 + $0x548] sm:$0xff]
      %v902 = vld [vmem:[%s2 + $0x550] sm:$0xff]
      %v903 = vld [vmem:[%s2 + $0x558] sm:$0xff]
      %v904 = vld [vmem:[%s2 + $0x560] sm:$0xff]
      %v905 = vld [vmem:[%s2 + $0x568] sm:$0xff]
      %v906 = vld [vmem:[%s2 + $0x570] sm:$0xff]
      %v907 = vld [vmem:[%s2 + $0x578] sm:$0xff]
      %v908 = vld [vmem:[%s2 + $0x580] sm:$0xff]
      %v909 = vld [vmem:[%s2 + $0x588] sm:$0xff]
      %v910 = vld [vmem:[%s2 + $0x590] sm:$0xff]
      %v911 = vld [vmem:[%s2 + $0x598] sm:$0xff]
      %v912 = vld [vmem:[%s2 + $0x5a0] sm:$0xff]
      %v913 = vld [vmem:[%s2 + $0x5a8] sm:$0xff]
      %v914 = vld [vmem:[%s2 + $0x5b0] sm:$0xff]
      %v915 = vld [vmem:[%s2 + $0x5b8] sm:$0xff]
      %v916 = vld [vmem:[%s2 + $0x5c0] sm:$0xff]
      %v917 = vld [vmem:[%s2 + $0x5c8] sm:$0xff]
      %v918 = vld [vmem:[%s2 + $0x5d0] sm:$0xff]
      %v919 = vld [vmem:[%s2 + $0x5d8] sm:$0xff]
      %v920 = vld [vmem:[%s2 + $0x5e0] sm:$0xff]
      %v921 = vld [vmem:[%s2 + $0x5e8] sm:$0xff]
      %v922 = vld [vmem:[%s2 + $0x5f0] sm:$0xff]
      %v923 = vld [vmem:[%s2 + $0x5f8] sm:$0xff]
      %v924 = vld [vmem:[%s2 + $0x600] sm:$0xff]
      %v925 = vld [vmem:[%s2 + $0x608] sm:$0xff]
      %v926 = vld [vmem:[%s2 + $0x610] sm:$0xff]
      %v927 = vld [vmem:[%s2 + $0x618] sm:$0xff]
      %v928 = vld [vmem:[%s2 + $0x620] sm:$0xff]
      %v929 = vld [vmem:[%s2 + $0x628] sm:$0xff]
      %v930 = vld [vmem:[%s2 + $0x630] sm:$0xff]
      %v931 = vld [vmem:[%s2 + $0x638] sm:$0xff]
      %v932 = vld [vmem:[%s2 + $0x640] sm:$0xff]
      %v933 = vld [vmem:[%s2 + $0x648] sm:$0xff]
      %v934 = vld [vmem:[%s2 + $0x650] sm:$0xff]
      %v935 = vld [vmem:[%s2 + $0x658] sm:$0xff]
      %v936 = vld [vmem:[%s2 + $0x660] sm:$0xff]
      %v937 = vld [vmem:[%s2 + $0x668] sm:$0xff]
      %v938 = vld [vmem:[%s2 + $0x670] sm:$0xff]
      %v939 = vld [vmem:[%s2 + $0x678] sm:$0xff]
      %v940 = vld [vmem:[%s2 + $0x680] sm:$0xff]
      %v941 = vld [vmem:[%s2 + $0x688] sm:$0xff]
      %v942 = vld [vmem:[%s2 + $0x690] sm:$0xff]
      %v943 = vld [vmem:[%s2 + $0x698] sm:$0xff]
      %v944 = vld [vmem:[%s2 + $0x6a0] sm:$0xff]
      %v945 = vld [vmem:[%s2 + $0x6a8] sm:$0xff]
      %v946 = vld [vmem:[%s2 + $0x6b0] sm:$0xff]
      %v947 = vld [vmem:[%s2 + $0x6b8] sm:$0xff]
      %v948 = vld [vmem:[%s2 + $0x6c0] sm:$0xff]
      %v949 = vld [vmem:[%s2 + $0x6c8] sm:$0xff]
      %v950 = vld [vmem:[%s2 + $0x6d0] sm:$0xff]
      %v951 = vld [vmem:[%s2 + $0x6d8] sm:$0xff]
      %v952 = vld [vmem:[%s2 + $0x6e0] sm:$0xff]
      %v953 = vld [vmem:[%s2 + $0x6e8] sm:$0xff]
      %v954 = vld [vmem:[%s2 + $0x6f0] sm:$0xff]
      %v955 = vld [vmem:[%s2 + $0x6f8] sm:$0xff]
      %v956 = vld [vmem:[%s2 + $0x700] sm:$0xff]
      %v957 = vld [vmem:[%s2 + $0x708] sm:$0xff]
      %v958 = vld [vmem:[%s2 + $0x710] sm:$0xff]
      %v959 = vld [vmem:[%s2 + $0x718] sm:$0xff]
      %v960 = vld [vmem:[%s2 + $0x720] sm:$0xff]
      %v961 = vld [vmem:[%s2 + $0x728] sm:$0xff]
      %v962 = vld [vmem:[%s2 + $0x730] sm:$0xff]
      %v963 = vld [vmem:[%s2 + $0x738] sm:$0xff]
      %v964 = vld [vmem:[%s2 + $0x740] sm:$0xff]
      %v965 = vld [vmem:[%s2 + $0x748] sm:$0xff]
      %v966 = vld [vmem:[%s2 + $0x750] sm:$0xff]
      %v967 = vld [vmem:[%s2 + $0x758] sm:$0xff]
      %v968 = vld [vmem:[%s2 + $0x760] sm:$0xff]
      %v969 = vld [vmem:[%s2 + $0x768] sm:$0xff]
      %v970 = vld [vmem:[%s2 + $0x770] sm:$0xff]
      %v971 = vld [vmem:[%s2 + $0x778] sm:$0xff]
      %v972 = vld [vmem:[%s2 + $0x780] sm:$0xff]
      %v973 = vld [vmem:[%s2 + $0x788] sm:$0xff]
      %v974 = vld [vmem:[%s2 + $0x790] sm:$0xff]
      %v975 = vld [vmem:[%s2 + $0x798] sm:$0xff]
      %v976 = vld [vmem:[%s2 + $0x7a0] sm:$0xff]
      %v977 = vld [vmem:[%s2 + $0x7a8] sm:$0xff]
      %v978 = vld [vmem:[%s2 + $0x7b0] sm:$0xff]
      %v979 = vld [vmem:[%s2 + $0x7b8] sm:$0xff]
      %v980 = vld [vmem:[%s2 + $0x7c0] sm:$0xff]
      %v981 = vld [vmem:[%s2 + $0x7c8] sm:$0xff]
      %v982 = vld [vmem:[%s2 + $0x7d0] sm:$0xff]
      %v983 = vld [vmem:[%s2 + $0x7d8] sm:$0xff]
      %v984 = vld [vmem:[%s2 + $0x7e0] sm:$0xff]
      %v985 = vld [vmem:[%s2 + $0x7e8] sm:$0xff]
      %v986 = vld [vmem:[%s2 + $0x7f0] sm:$0xff]
      %v987 = vld [vmem:[%s2 + $0x7f8] sm:$0xff]
      %v988 = vld [vmem:[%s2 + $0x800] sm:$0xff]
      %v989 = vld [vmem:[%s2 + $0x808] sm:$0xff]
      %v990 = vld [vmem:[%s2 + $0x810] sm:$0xff]
      %v991 = vld [vmem:[%s2 + $0x818] sm:$0xff]
      %v992 = vld [vmem:[%s2 + $0x820] sm:$0xff]
      %v993 = vld [vmem:[%s2 + $0x828] sm:$0xff]
      %v994 = vld [vmem:[%s2 + $0x830] sm:$0xff]
      %v995 = vld [vmem:[%s2 + $0x838] sm:$0xff]
      %v996 = vld [vmem:[%s2 + $0x840] sm:$0xff]
      %v997 = vld [vmem:[%s2 + $0x848] sm:$0xff]
      %v998 = vld [vmem:[%s2 + $0x850] sm:$0xff]
      %v999 = vld [vmem:[%s2 + $0x858] sm:$0xff]
      %v1000 = vld [vmem:[%s2 + $0x860] sm:$0xff]
      %v1001 = vld [vmem:[%s2 + $0x868] sm:$0xff]
      %v1002 = vld [vmem:[%s2 + $0x870] sm:$0xff]
      %v1003 = vld [vmem:[%s2 + $0x878] sm:$0xff]
      %v1004 = vld [vmem:[%s2 + $0x880] sm:$0xff]
      %v1005 = vld [vmem:[%s2 + $0x888] sm:$0xff]
      %v1006 = vld [vmem:[%s2 + $0x890] sm:$0xff]
      %v1007 = vld [vmem:[%s2 + $0x898] sm:$0xff]
      %v1008 = vld [vmem:[%s2 + $0x8a0] sm:$0xff]
      %v1009 = vld [vmem:[%s2 + $0x8a8] sm:$0xff]
      %v1010 = vld [vmem:[%s2 + $0x8b0] sm:$0xff]
      %v1011 = vld [vmem:[%s2 + $0x8b8] sm:$0xff]
      %v1012 = vld [vmem:[%s2 + $0x8c0] sm:$0xff]
      %v1013 = vld [vmem:[%s2 + $0x8c8] sm:$0xff]
      %v1014 = vld [vmem:[%s2 + $0x8d0] sm:$0xff]
      %v1015 = vld [vmem:[%s2 + $0x8d8] sm:$0xff]
      %v1016 = vld [vmem:[%s2 + $0x8e0] sm:$0xff]
      %v1017 = vld [vmem:[%s2 + $0x8e8] sm:$0xff]
      %v1018 = vld [vmem:[%s2 + $0x8f0] sm:$0xff]
      %v1019 = vld [vmem:[%s2 + $0x8f8] sm:$0xff]
      %v1020 = vld [vmem:[%s2 + $0x900] sm:$0xff]
      %v1021 = vld [vmem:[%s2 + $0x908] sm:$0xff]
      %v1022 = vld [vmem:[%s2 + $0x910] sm:$0xff]
      %v1023 = vld [vmem:[%s2 + $0x918] sm:$0xff]
      %v1024 = vld [vmem:[%s2 + $0x920] sm:$0xff]
      %v1025 = vld [vmem:[%s2 + $0x928] sm:$0xff]
      %v1026 = vld [vmem:[%s2 + $0x930] sm:$0xff]
      %v1027 = vld [vmem:[%s2 + $0x938] sm:$0xff]
      %v1028 = vld [vmem:[%s2 + $0x940] sm:$0xff]
      %v1029 = vld [vmem:[%s2 + $0x948] sm:$0xff]
      %v1030 = vld [vmem:[%s2 + $0x950] sm:$0xff]
      %v1031 = vld [vmem:[%s2 + $0x958] sm:$0xff]
      %v1032 = vld [vmem:[%s2 + $0x960] sm:$0xff]
      %v1033 = vld [vmem:[%s2 + $0x968] sm:$0xff]
      %v1034 = vld [vmem:[%s2 + $0x970] sm:$0xff]
      %v1035 = vld [vmem:[%s2 + $0x978] sm:$0xff]
      %v1036 = vld [vmem:[%s2 + $0x980] sm:$0xff]
      %v1037 = vld [vmem:[%s2 + $0x988] sm:$0xff]
      %v1038 = vld [vmem:[%s2 + $0x990] sm:$0xff]
      %v1039 = vld [vmem:[%s2 + $0x998] sm:$0xff]
      %v1040 = vld [vmem:[%s2 + $0x9a0] sm:$0xff]
      %v1041 = vld [vmem:[%s2 + $0x9a8] sm:$0xff]
      %v1042 = vld [vmem:[%s2 + $0x9b0] sm:$0xff]
      %v1043 = vld [vmem:[%s2 + $0x9b8] sm:$0xff]
      %v1044 = vld [vmem:[%s2 + $0x9c0] sm:$0xff]
      %v1045 = vld [vmem:[%s2 + $0x9c8] sm:$0xff]
      %v1046 = vld [vmem:[%s2 + $0x9d0] sm:$0xff]
      %v1047 = vld [vmem:[%s2 + $0x9d8] sm:$0xff]
      %v1048 = vld [vmem:[%s2 + $0x9e0] sm:$0xff]
      %v1049 = vld [vmem:[%s2 + $0x9e8] sm:$0xff]
      %v1050 = vld [vmem:[%s2 + $0x9f0] sm:$0xff]
      %v1051 = vld [vmem:[%s2 + $0x9f8] sm:$0xff]
      %v1052 = vld [vmem:[%s2 + $0xa00] sm:$0xff]
      %v1053 = vld [vmem:[%s2 + $0xa08] sm:$0xff]
      %v1054 = vld [vmem:[%s2 + $0xa10] sm:$0xff]
      %v1055 = vld [vmem:[%s2 + $0xa18] sm:$0xff]
      %v1056 = vld [vmem:[%s2 + $0xa20] sm:$0xff]
      %v1057 = vld [vmem:[%s2 + $0xa28] sm:$0xff]
      %v1058 = vld [vmem:[%s2 + $0xa30] sm:$0xff]
      %v1059 = vld [vmem:[%s2 + $0xa38] sm:$0xff]
      %v1060 = vld [vmem:[%s2 + $0xa40] sm:$0xff]
      %v1061 = vld [vmem:[%s2 + $0xa48] sm:$0xff]
      %v1062 = vld [vmem:[%s2 + $0xa50] sm:$0xff]
      %v1063 = vld [vmem:[%s2 + $0xa58] sm:$0xff]
      %v1064 = vld [vmem:[%s2 + $0xa60] sm:$0xff]
      %v1065 = vld [vmem:[%s2 + $0xa68] sm:$0xff]
      %v1066 = vld [vmem:[%s2 + $0xa70] sm:$0xff]
      %v1067 = vld [vmem:[%s2 + $0xa78] sm:$0xff]
      %v1068 = vld [vmem:[%s2 + $0xa80] sm:$0xff]
      %v1069 = vld [vmem:[%s2 + $0xa88] sm:$0xff]
      %v1070 = vld [vmem:[%s2 + $0xa90] sm:$0xff]
      %v1071 = vld [vmem:[%s2 + $0xa98] sm:$0xff]
      %v1072 = vld [vmem:[%s2 + $0xaa0] sm:$0xff]
      %v1073 = vld [vmem:[%s2 + $0xaa8] sm:$0xff]
      %v1074 = vld [vmem:[%s2 + $0xab0] sm:$0xff]
      %v1075 = vld [vmem:[%s2 + $0xab8] sm:$0xff]
      %v1076 = vld [vmem:[%s2 + $0xac0] sm:$0xff]
      %v1077 = vld [vmem:[%s2 + $0xac8] sm:$0xff]
      %v1078 = vld [vmem:[%s2 + $0xad0] sm:$0xff]
      %v1079 = vld [vmem:[%s2 + $0xad8] sm:$0xff]
      %v1080 = vld [vmem:[%s2 + $0xae0] sm:$0xff]
      %v1081 = vld [vmem:[%s2 + $0xae8] sm:$0xff]
      %v1082 = vld [vmem:[%s2 + $0xaf0] sm:$0xff]
      %v1083 = vld [vmem:[%s2 + $0xaf8] sm:$0xff]
      %v1084 = vld [vmem:[%s2 + $0xb00] sm:$0xff]
      %v1085 = vld [vmem:[%s2 + $0xb08] sm:$0xff]
      %v1086 = vld [vmem:[%s2 + $0xb10] sm:$0xff]
      %v1087 = vld [vmem:[%s2 + $0xb18] sm:$0xff]
      %v1088 = vld [vmem:[%s2 + $0xb20] sm:$0xff]
      %v1089 = vld [vmem:[%s2 + $0xb28] sm:$0xff]
      %v1090 = vld [vmem:[%s2 + $0xb30] sm:$0xff]
      %v1091 = vld [vmem:[%s2 + $0xb38] sm:$0xff]
      %v1092 = vld [vmem:[%s2 + $0xb40] sm:$0xff]
      %v1093 = vld [vmem:[%s2 + $0xb48] sm:$0xff]
      %v1094 = vld [vmem:[%s2 + $0xb50] sm:$0xff]
      %v1095 = vld [vmem:[%s2 + $0xb58] sm:$0xff]
      %v1096 = vld [vmem:[%s2 + $0xb60] sm:$0xff]
      %v1097 = vld [vmem:[%s2 + $0xb68] sm:$0xff]
      %v1098 = vld [vmem:[%s2 + $0xb70] sm:$0xff]
      %v1099 = vld [vmem:[%s2 + $0xb78] sm:$0xff]
      %v1100 = vld [vmem:[%s2 + $0xb80] sm:$0xff]
      %v1101 = vld [vmem:[%s2 + $0xb88] sm:$0xff]
      %v1102 = vld [vmem:[%s2 + $0xb90] sm:$0xff]
      %v1103 = vld [vmem:[%s2 + $0xb98] sm:$0xff]
      %v1104 = vld [vmem:[%s2 + $0xba0] sm:$0xff]
      %v1105 = vld [vmem:[%s2 + $0xba8] sm:$0xff]
      %v1106 = vld [vmem:[%s2 + $0xbb0] sm:$0xff]
      %v1107 = vld [vmem:[%s2 + $0xbb8] sm:$0xff]
      %v1108 = vld [vmem:[%s2 + $0xbc0] sm:$0xff]
      %v1109 = vld [vmem:[%s2 + $0xbc8] sm:$0xff]
      %v1110 = vld [vmem:[%s2 + $0xbd0] sm:$0xff]
      %v1111 = vld [vmem:[%s2 + $0xbd8] sm:$0xff]
      %v1112 = vld [vmem:[%s2 + $0xbe0] sm:$0xff]
      %v1113 = vld [vmem:[%s2 + $0xbe8] sm:$0xff]
      %v1114 = vld [vmem:[%s2 + $0xbf0] sm:$0xff]
      %v1115 = vld [vmem:[%s2 + $0xbf8] sm:$0xff]
      %v1116 = vld [vmem:[%s2 + $0xc00] sm:$0xff]
      %v1117 = vld [vmem:[%s2 + $0xc08] sm:$0xff]
      %v1118 = vld [vmem:[%s2 + $0xc10] sm:$0xff]
      %v1119 = vld [vmem:[%s2 + $0xc18] sm:$0xff]
      %v1120 = vld [vmem:[%s2 + $0xc20] sm:$0xff]
      %v1121 = vld [vmem:[%s2 + $0xc28] sm:$0xff]
      %v1122 = vld [vmem:[%s2 + $0xc30] sm:$0xff]
      %v1123 = vld [vmem:[%s2 + $0xc38] sm:$0xff]
      %v1124 = vld [vmem:[%s2 + $0xc40] sm:$0xff]
      %v1125 = vld [vmem:[%s2 + $0xc48] sm:$0xff]
      %v1126 = vld [vmem:[%s2 + $0xc50] sm:$0xff]
      %v1127 = vld [vmem:[%s2 + $0xc58] sm:$0xff]
      %v1128 = vld [vmem:[%s2 + $0xc60] sm:$0xff]
      %v1129 = vld [vmem:[%s2 + $0xc68] sm:$0xff]
      %v1130 = vld [vmem:[%s2 + $0xc70] sm:$0xff]
      %v1131 = vld [vmem:[%s2 + $0xc78] sm:$0xff]
      %v1132 = vld [vmem:[%s2 + $0xc80] sm:$0xff]
      %v1133 = vld [vmem:[%s2 + $0xc88] sm:$0xff]
      %v1134 = vld [vmem:[%s2 + $0xc90] sm:$0xff]
      %v1135 = vld [vmem:[%s2 + $0xc98] sm:$0xff]
      %v1136 = vld [vmem:[%s2 + $0xca0] sm:$0xff]
      %v1137 = vld [vmem:[%s2 + $0xca8] sm:$0xff]
      %v1138 = vld [vmem:[%s2 + $0xcb0] sm:$0xff]
      %v1139 = vld [vmem:[%s2 + $0xcb8] sm:$0xff]
      %v1140 = vld [vmem:[%s2 + $0xcc0] sm:$0xff]
      %v1141 = vld [vmem:[%s2 + $0xcc8] sm:$0xff]
      %v1142 = vld [vmem:[%s2 + $0xcd0] sm:$0xff]
      %v1143 = vld [vmem:[%s2 + $0xcd8] sm:$0xff]
      %v1144 = vld [vmem:[%s2 + $0xce0] sm:$0xff]
      %v1145 = vld [vmem:[%s2 + $0xce8] sm:$0xff]
      %v1146 = vld [vmem:[%s2 + $0xcf0] sm:$0xff]
      %v1147 = vld [vmem:[%s2 + $0xcf8] sm:$0xff]
      %v1148 = vld [vmem:[%s2 + $0xd00] sm:$0xff]
      %v1149 = vld [vmem:[%s2 + $0xd08] sm:$0xff]
      %v1150 = vld [vmem:[%s2 + $0xd10] sm:$0xff]
      %v1151 = vld [vmem:[%s2 + $0xd18] sm:$0xff]
      %v1152 = vld [vmem:[%s2 + $0xd20] sm:$0xff]
      %v1153 = vld [vmem:[%s2 + $0xd28] sm:$0xff]
      %v1154 = vld [vmem:[%s2 + $0xd30] sm:$0xff]
      %v1155 = vld [vmem:[%s2 + $0xd38] sm:$0xff]
      %v1156 = vld [vmem:[%s2 + $0xd40] sm:$0xff]
      %v1157 = vld [vmem:[%s2 + $0xd48] sm:$0xff]
      %v1158 = vld [vmem:[%s2 + $0xd50] sm:$0xff]
      %v1159 = vld [vmem:[%s2 + $0xd58] sm:$0xff]
      %v1160 = vld [vmem:[%s2 + $0xd60] sm:$0xff]
      %v1161 = vld [vmem:[%s2 + $0xd68] sm:$0xff]
      %v1162 = vld [vmem:[%s2 + $0xd70] sm:$0xff]
      %v1163 = vld [vmem:[%s2 + $0xd78] sm:$0xff]
      %v1164 = vld [vmem:[%s2 + $0xd80] sm:$0xff]
      %v1165 = vld [vmem:[%s2 + $0xd88] sm:$0xff]
      %v1166 = vld [vmem:[%s2 + $0xd90] sm:$0xff]
      %v1167 = vld [vmem:[%s2 + $0xd98] sm:$0xff]
      %v1168 = vld [vmem:[%s2 + $0xda0] sm:$0xff]
      %v1169 = vld [vmem:[%s2 + $0xda8] sm:$0xff]
      %v1170 = vld [vmem:[%s2 + $0xdb0] sm:$0xff]
      %v1171 = vld [vmem:[%s2 + $0xdb8] sm:$0xff]
      %v1172 = vld [vmem:[%s2 + $0xdc0] sm:$0xff]
      %v1173 = vld [vmem:[%s2 + $0xdc8] sm:$0xff]
      %v1174 = vld [vmem:[%s2 + $0xdd0] sm:$0xff]
      %v1175 = vld [vmem:[%s2 + $0xdd8] sm:$0xff]
      %v1176 = vld [vmem:[%s2 + $0xde0] sm:$0xff]
      %v1177 = vld [vmem:[%s2 + $0xde8] sm:$0xff]
      %v1178 = vld [vmem:[%s2 + $0xdf0] sm:$0xff]
      %v1179 = vld [vmem:[%s2 + $0xdf8] sm:$0xff]
      %v1180 = vld [vmem:[%s2 + $0xe00] sm:$0xff]
      %v1181 = vld [vmem:[%s2 + $0xe08] sm:$0xff]
      %v1182 = vld [vmem:[%s2 + $0xe10] sm:$0xff]
      %v1183 = vld [vmem:[%s2 + $0xe18] sm:$0xff]
      %v1184 = vld [vmem:[%s2 + $0xe20] sm:$0xff]
      %v1185 = vld [vmem:[%s2 + $0xe28] sm:$0xff]
      %v1186 = vld [vmem:[%s2 + $0xe30] sm:$0xff]
      %v1187 = vld [vmem:[%s2 + $0xe38] sm:$0xff]
      %v1188 = vld [vmem:[%s2 + $0xe40] sm:$0xff]
      %v1189 = vld [vmem:[%s2 + $0xe48] sm:$0xff]
      %v1190 = vld [vmem:[%s2 + $0xe50] sm:$0xff]
      %v1191 = vld [vmem:[%s2 + $0xe58] sm:$0xff]
      %v1192 = vld [vmem:[%s2 + $0xe60] sm:$0xff]
      %v1193 = vld [vmem:[%s2 + $0xe68] sm:$0xff]
      %v1194 = vld [vmem:[%s2 + $0xe70] sm:$0xff]
      %v1195 = vld [vmem:[%s2 + $0xe78] sm:$0xff]
      %v1196 = vld [vmem:[%s2 + $0xe80] sm:$0xff]
      %v1197 = vld [vmem:[%s2 + $0xe88] sm:$0xff]
      %v1198 = vld [vmem:[%s2 + $0xe90] sm:$0xff]
      %v1199 = vld [vmem:[%s2 + $0xe98] sm:$0xff]
      %v1200 = vld [vmem:[%s2 + $0xea0] sm:$0xff]
      %v1201 = vld [vmem:[%s2 + $0xea8] sm:$0xff]
      %v1202 = vld [vmem:[%s2 + $0xeb0] sm:$0xff]
      %v1203 = vld [vmem:[%s2 + $0xeb8] sm:$0xff]
      %v1204 = vld [vmem:[%s2 + $0xec0] sm:$0xff]
      %v1205 = vld [vmem:[%s2 + $0xec8] sm:$0xff]
      %v1206 = vld [vmem:[%s2 + $0xed0] sm:$0xff]
      %v1207 = vld [vmem:[%s2 + $0xed8] sm:$0xff]
      %v1208 = vld [vmem:[%s2 + $0xee0] sm:$0xff]
      %v1209 = vld [vmem:[%s2 + $0xee8] sm:$0xff]
      %v1210 = vld [vmem:[%s2 + $0xef0] sm:$0xff]
      %v1211 = vld [vmem:[%s2 + $0xef8] sm:$0xff]
      %v1212 = vld [vmem:[%s2 + $0xf00] sm:$0xff]
      %v1213 = vld [vmem:[%s2 + $0xf08] sm:$0xff]
      %v1214 = vld [vmem:[%s2 + $0xf10] sm:$0xff]
      %v1215 = vld [vmem:[%s2 + $0xf18] sm:$0xff]
      %v1216 = vld [vmem:[%s2 + $0xf20] sm:$0xff]
      %v1217 = vld [vmem:[%s2 + $0xf28] sm:$0xff]
      %v1218 = vld [vmem:[%s2 + $0xf30] sm:$0xff]
      %v1219 = vld [vmem:[%s2 + $0xf38] sm:$0xff]
      %v1220 = vld [vmem:[%s2 + $0xf40] sm:$0xff]
      %v1221 = vld [vmem:[%s2 + $0xf48] sm:$0xff]
      %v1222 = vld [vmem:[%s2 + $0xf50] sm:$0xff]
      %v1223 = vld [vmem:[%s2 + $0xf58] sm:$0xff]
      %v1224 = vld [vmem:[%s2 + $0xf60] sm:$0xff]
      %v1225 = vld [vmem:[%s2 + $0xf68] sm:$0xff]
      %v1226 = vld [vmem:[%s2 + $0xf70] sm:$0xff]
      %v1227 = vld [vmem:[%s2 + $0xf78] sm:$0xff]
      %v1228 = vld [vmem:[%s2 + $0xf80] sm:$0xff]
      %v1229 = vld [vmem:[%s2 + $0xf88] sm:$0xff]
      %v1230 = vld [vmem:[%s2 + $0xf90] sm:$0xff]
      %v1231 = vld [vmem:[%s2 + $0xf98] sm:$0xff]
      %v1232 = vld [vmem:[%s2 + $0xfa0] sm:$0xff]
      %v1233 = vld [vmem:[%s2 + $0xfa8] sm:$0xff]
      %v1234 = vld [vmem:[%s2 + $0xfb0] sm:$0xff]
      %v1235 = vld [vmem:[%s2 + $0xfb8] sm:$0xff]
      %v1236 = vld [vmem:[%s2 + $0xfc0] sm:$0xff]
      %v1237 = vld [vmem:[%s2 + $0xfc8] sm:$0xff]
      %v1238 = vld [vmem:[%s2 + $0xfd0] sm:$0xff]
      %v1239 = vld [vmem:[%s2 + $0xfd8] sm:$0xff]
      %v1240 = vld [vmem:[%s2 + $0xfe0] sm:$0xff]
      %v1241 = vld [vmem:[%s2 + $0xfe8] sm:$0xff]
      %v1242 = vld [vmem:[%s2 + $0xff0] sm:$0xff]
      %v1243 = vld [vmem:[%s2 + $0xff8] sm:$0xff]
      %v1244 = vld [vmem:[%s2 + $0x1000] sm:$0xff]
      %v1245 = vld [vmem:[%s2 + $0x1008] sm:$0xff]
      %v1246 = vld [vmem:[%s2 + $0x1010] sm:$0xff]
      %v1247 = vld [vmem:[%s2 + $0x1018] sm:$0xff]
      %v1248 = vld [vmem:[%s2 + $0x1020] sm:$0xff]
      %v1249 = vld [vmem:[%s2 + $0x1028] sm:$0xff]
      %v1250 = vld [vmem:[%s2 + $0x1030] sm:$0xff]
      %v1251 = vld [vmem:[%s2 + $0x1038] sm:$0xff]
      %v1252 = vld [vmem:[%s2 + $0x1040] sm:$0xff]
      %v1253 = vld [vmem:[%s2 + $0x1048] sm:$0xff]
      %v1254 = vld [vmem:[%s2 + $0x1050] sm:$0xff]
      %v1255 = vld [vmem:[%s2 + $0x1058] sm:$0xff]
      %v1256 = vld [vmem:[%s2 + $0x1060] sm:$0xff]
      %v1257 = vld [vmem:[%s2 + $0x1068] sm:$0xff]
      %v1258 = vld [vmem:[%s2 + $0x1070] sm:$0xff]
      %v1259 = vld [vmem:[%s2 + $0x1078] sm:$0xff]
      %v1260 = vld [vmem:[%s2 + $0x1080] sm:$0xff]
      %v1261 = vld [vmem:[%s2 + $0x1088] sm:$0xff]
      %v1262 = vld [vmem:[%s2 + $0x1090] sm:$0xff]
      %v1263 = vld [vmem:[%s2 + $0x1098] sm:$0xff]
      %v1264 = vld [vmem:[%s2 + $0x10a0] sm:$0xff]
      %v1265 = vld [vmem:[%s2 + $0x10a8] sm:$0xff]
      %v1266 = vld [vmem:[%s2 + $0x10b0] sm:$0xff]
      %v1267 = vld [vmem:[%s2 + $0x10b8] sm:$0xff]
      %v1268 = vld [vmem:[%s2 + $0x10c0] sm:$0xff]
      %v1269 = vld [vmem:[%s2 + $0x10c8] sm:$0xff]
      %v1270 = vld [vmem:[%s2 + $0x10d0] sm:$0xff]
      %v1271 = vld [vmem:[%s2 + $0x10d8] sm:$0xff]
      %v1272 = vld [vmem:[%s2 + $0x10e0] sm:$0xff]
      %v1273 = vld [vmem:[%s2 + $0x10e8] sm:$0xff]
      %v1274 = vld [vmem:[%s2 + $0x10f0] sm:$0xff]
      %v1275 = vld [vmem:[%s2 + $0x10f8] sm:$0xff]
      %v1276 = vld [vmem:[%s2 + $0x1100] sm:$0xff]
      %v1277 = vld [vmem:[%s2 + $0x1108] sm:$0xff]
      %v1278 = vld [vmem:[%s2 + $0x1110] sm:$0xff]
      %v1279 = vld [vmem:[%s2 + $0x1118] sm:$0xff]
      %v1280 = vld [vmem:[%s2 + $0x1120] sm:$0xff]
      %v1281 = vld [vmem:[%s2 + $0x1128] sm:$0xff]
      %v1282 = vld [vmem:[%s2 + $0x1130] sm:$0xff]
      %v1283 = vld [vmem:[%s2 + $0x1138] sm:$0xff]
      %v1284 = vld [vmem:[%s2 + $0x1140] sm:$0xff]
      %v1285 = vld [vmem:[%s2 + $0x1148] sm:$0xff]
      %v1286 = vld [vmem:[%s2 + $0x1150] sm:$0xff]
      %v1287 = vld [vmem:[%s2 + $0x1158] sm:$0xff]
      %v1288 = vld [vmem:[%s2 + $0x1160] sm:$0xff]
      %v1289 = vld [vmem:[%s2 + $0x1168] sm:$0xff]
      %v1290 = vld [vmem:[%s2 + $0x1170] sm:$0xff]
      %v1291 = vld [vmem:[%s2 + $0x1178] sm:$0xff]
      %v1292 = vld [vmem:[%s2 + $0x1180] sm:$0xff]
      %v1293 = vld [vmem:[%s2 + $0x1188] sm:$0xff]
      %v1294 = vld [vmem:[%s2 + $0x1190] sm:$0xff]
      %v1295 = vld [vmem:[%s2 + $0x1198] sm:$0xff]
      %v1296 = vld [vmem:[%s2 + $0x11a0] sm:$0xff]
      %v1297 = vld [vmem:[%s2 + $0x11a8] sm:$0xff]
      %v1298 = vld [vmem:[%s2 + $0x11b0] sm:$0xff]
      %v1299 = vld [vmem:[%s2 + $0x11b8] sm:$0xff]
      %v1300 = vld [vmem:[%s2 + $0x11c0] sm:$0xff]
      %v1301 = vld [vmem:[%s2 + $0x11c8] sm:$0xff]
      %v1302 = vld [vmem:[%s2 + $0x11d0] sm:$0xff]
      %v1303 = vld [vmem:[%s2 + $0x11d8] sm:$0xff]
      %v1304 = vld [vmem:[%s2 + $0x11e0] sm:$0xff]
      %v1305 = vld [vmem:[%s2 + $0x11e8] sm:$0xff]
      %v1306 = vld [vmem:[%s2 + $0x11f0] sm:$0xff]
      %v1307 = vld [vmem:[%s2 + $0x11f8] sm:$0xff]
      %v1308 = vld [vmem:[%s2 + $0x1200] sm:$0xff]
      %v1309 = vld [vmem:[%s2 + $0x1208] sm:$0xff]
      %v1310 = vld [vmem:[%s2 + $0x1210] sm:$0xff]
      %v1311 = vld [vmem:[%s2 + $0x1218] sm:$0xff]
      %v1312 = vld [vmem:[%s2 + $0x1220] sm:$0xff]
      %v1313 = vld [vmem:[%s2 + $0x1228] sm:$0xff]
      %v1314 = vld [vmem:[%s2 + $0x1230] sm:$0xff]
      %v1315 = vld [vmem:[%s2 + $0x1238] sm:$0xff]
      %v1316 = vld [vmem:[%s2 + $0x1240] sm:$0xff]
      %v1317 = vld [vmem:[%s2 + $0x1248] sm:$0xff]
      %v1318 = vld [vmem:[%s2 + $0x1250] sm:$0xff]
      %v1319 = vld [vmem:[%s2 + $0x1258] sm:$0xff]
      %v1320 = vld [vmem:[%s2 + $0x1260] sm:$0xff]
      %v1321 = vld [vmem:[%s2 + $0x1268] sm:$0xff]
      %v1322 = vld [vmem:[%s2 + $0x1270] sm:$0xff]
      %v1323 = vld [vmem:[%s2 + $0x1278] sm:$0xff]
      %v1324 = vld [vmem:[%s2 + $0x1280] sm:$0xff]
      %v1325 = vld [vmem:[%s2 + $0x1288] sm:$0xff]
      %v1326 = vld [vmem:[%s2 + $0x1290] sm:$0xff]
      %v1327 = vld [vmem:[%s2 + $0x1298] sm:$0xff]
      %v1328 = vld [vmem:[%s2 + $0x12a0] sm:$0xff]
      %v1329 = vld [vmem:[%s2 + $0x12a8] sm:$0xff]
      %v1330 = vld [vmem:[%s2 + $0x12b0] sm:$0xff]
      %v1331 = vld [vmem:[%s2 + $0x12b8] sm:$0xff]
      %v1332 = vld [vmem:[%s2 + $0x12c0] sm:$0xff]
      %v1333 = vld [vmem:[%s2 + $0x12c8] sm:$0xff]
      %v1334 = vld [vmem:[%s2 + $0x12d0] sm:$0xff]
      %v1335 = vld [vmem:[%s2 + $0x12d8] sm:$0xff]
      %v1336 = vld [vmem:[%s2 + $0x12e0] sm:$0xff]
      %v1337 = vld [vmem:[%s2 + $0x12e8] sm:$0xff]
      %v1338 = vld [vmem:[%s2 + $0x12f0] sm:$0xff]
      %v1339 = vld [vmem:[%s2 + $0x12f8] sm:$0xff]
      %v1340 = vld [vmem:[%s2 + $0x1300] sm:$0xff]
      %v1341 = vld [vmem:[%s2 + $0x1308] sm:$0xff]
      %v1342 = vld [vmem:[%s2 + $0x1310] sm:$0xff]
      %v1343 = vld [vmem:[%s2 + $0x1318] sm:$0xff]
      %v1344 = vld [vmem:[%s2 + $0x1320] sm:$0xff]
      %v1345 = vld [vmem:[%s2 + $0x1328] sm:$0xff]
      %v1346 = vld [vmem:[%s2 + $0x1330] sm:$0xff]
      %v1347 = vld [vmem:[%s2 + $0x1338] sm:$0xff]
      %v1348 = vld [vmem:[%s2 + $0x1340] sm:$0xff]
      %v1349 = vld [vmem:[%s2 + $0x1348] sm:$0xff]
      %v1350 = vld [vmem:[%s2 + $0x1350] sm:$0xff]
      %v1351 = vld [vmem:[%s2 + $0x1358] sm:$0xff]
      %v1352 = vld [vmem:[%s2 + $0x1360] sm:$0xff]
      %v1353 = vld [vmem:[%s2 + $0x1368] sm:$0xff]
      %v1354 = vld [vmem:[%s2 + $0x1370] sm:$0xff]
      %v1355 = vld [vmem:[%s2 + $0x1378] sm:$0xff]
      %v1356 = vld [vmem:[%s2 + $0x1380] sm:$0xff]
      %v1357 = vld [vmem:[%s2 + $0x1388] sm:$0xff]
      %v1358 = vld [vmem:[%s2 + $0x1390] sm:$0xff]
      %v1359 = vld [vmem:[%s2 + $0x1398] sm:$0xff]
      %v1360 = vld [vmem:[%s2 + $0x13a0] sm:$0xff]
      %v1361 = vld [vmem:[%s2 + $0x13a8] sm:$0xff]
      %v1362 = vld [vmem:[%s2 + $0x13b0] sm:$0xff]
      %v1363 = vld [vmem:[%s2 + $0x13b8] sm:$0xff]
      %v1364 = vld [vmem:[%s2 + $0x13c0] sm:$0xff]
      %v1365 = vld [vmem:[%s2 + $0x13c8] sm:$0xff]
      %v1366 = vld [vmem:[%s2 + $0x13d0] sm:$0xff]
      %v1367 = vld [vmem:[%s2 + $0x13d8] sm:$0xff]
      %v1368 = vld [vmem:[%s2 + $0x13e0] sm:$0xff]
      %v1369 = vld [vmem:[%s2 + $0x13e8] sm:$0xff]
      %v1370 = vld [vmem:[%s2 + $0x13f0] sm:$0xff]
      %v1371 = vld [vmem:[%s2 + $0x13f8] sm:$0xff]
      %v2012 = vunpack.c.l.b16 %v732
      %v2013 = vunpack.c.h.b16 %v732
      %v2014 = vunpack.c.l.b16 %v733
      %v2015 = vunpack.c.h.b16 %v733
      %v2016 = vunpack.c.l.b16 %v734
      %v2017 = vunpack.c.h.b16 %v734
      %v2018 = vunpack.c.l.b16 %v735
      %v2019 = vunpack.c.h.b16 %v735
      %v2020 = vunpack.c.l.b16 %v736
      %v2021 = vunpack.c.h.b16 %v736
      %v2022 = vunpack.c.l.b16 %v737
      %v2023 = vunpack.c.h.b16 %v737
      %v2024 = vunpack.c.l.b16 %v738
      %v2025 = vunpack.c.h.b16 %v738
      %v2026 = vunpack.c.l.b16 %v739
      %v2027 = vunpack.c.h.b16 %v739
      %v2028 = vunpack.c.l.b16 %v740
      %v2029 = vunpack.c.h.b16 %v740
      %v2030 = vunpack.c.l.b16 %v741
      %v2031 = vunpack.c.h.b16 %v741
      %v2032 = vunpack.c.l.b16 %v742
      %v2033 = vunpack.c.h.b16 %v742
      %v2034 = vunpack.c.l.b16 %v743
      %v2035 = vunpack.c.h.b16 %v743
      %v2036 = vunpack.c.l.b16 %v744
      %v2037 = vunpack.c.h.b16 %v744
      %v2038 = vunpack.c.l.b16 %v745
      %v2039 = vunpack.c.h.b16 %v745
      %v2040 = vunpack.c.l.b16 %v746
      %v2041 = vunpack.c.h.b16 %v746
      %v2042 = vunpack.c.l.b16 %v747
      %v2043 = vunpack.c.h.b16 %v747
      %v2044 = vunpack.c.l.b16 %v748
      %v2045 = vunpack.c.h.b16 %v748
      %v2046 = vunpack.c.l.b16 %v749
      %v2047 = vunpack.c.h.b16 %v749
      %v2048 = vunpack.c.l.b16 %v750
      %v2049 = vunpack.c.h.b16 %v750
      %v2050 = vunpack.c.l.b16 %v751
      %v2051 = vunpack.c.h.b16 %v751
      %v2052 = vunpack.c.l.b16 %v752
      %v2053 = vunpack.c.h.b16 %v752
      %v2054 = vunpack.c.l.b16 %v753
      %v2055 = vunpack.c.h.b16 %v753
      %v2056 = vunpack.c.l.b16 %v754
      %v2057 = vunpack.c.h.b16 %v754
      %v2058 = vunpack.c.l.b16 %v755
      %v2059 = vunpack.c.h.b16 %v755
      %v2060 = vunpack.c.l.b16 %v756
      %v2061 = vunpack.c.h.b16 %v756
      %v2062 = vunpack.c.l.b16 %v757
      %v2063 = vunpack.c.h.b16 %v757
      %v2064 = vunpack.c.l.b16 %v758
      %v2065 = vunpack.c.h.b16 %v758
      %v2066 = vunpack.c.l.b16 %v759
      %v2067 = vunpack.c.h.b16 %v759
      %v2068 = vunpack.c.l.b16 %v760
      %v2069 = vunpack.c.h.b16 %v760
      %v2070 = vunpack.c.l.b16 %v761
      %v2071 = vunpack.c.h.b16 %v761
      %v2072 = vunpack.c.l.b16 %v762
      %v2073 = vunpack.c.h.b16 %v762
      %v2074 = vunpack.c.l.b16 %v763
      %v2075 = vunpack.c.h.b16 %v763
      %v2076 = vunpack.c.l.b16 %v764
      %v2077 = vunpack.c.h.b16 %v764
      %v2078 = vunpack.c.l.b16 %v765
      %v2079 = vunpack.c.h.b16 %v765
      %v2080 = vunpack.c.l.b16 %v766
      %v2081 = vunpack.c.h.b16 %v766
      %v2082 = vunpack.c.l.b16 %v767
      %v2083 = vunpack.c.h.b16 %v767
      %v2084 = vunpack.c.l.b16 %v768
      %v2085 = vunpack.c.h.b16 %v768
      %v2086 = vunpack.c.l.b16 %v769
      %v2087 = vunpack.c.h.b16 %v769
      %v2088 = vunpack.c.l.b16 %v770
      %v2089 = vunpack.c.h.b16 %v770
      %v2090 = vunpack.c.l.b16 %v771
      %v2091 = vunpack.c.h.b16 %v771
      %v2092 = vunpack.c.l.b16 %v772
      %v2093 = vunpack.c.h.b16 %v772
      %v2094 = vunpack.c.l.b16 %v773
      %v2095 = vunpack.c.h.b16 %v773
      %v2096 = vunpack.c.l.b16 %v774
      %v2097 = vunpack.c.h.b16 %v774
      %v2098 = vunpack.c.l.b16 %v775
      %v2099 = vunpack.c.h.b16 %v775
      %v2100 = vunpack.c.l.b16 %v776
      %v2101 = vunpack.c.h.b16 %v776
      %v2102 = vunpack.c.l.b16 %v777
      %v2103 = vunpack.c.h.b16 %v777
      %v2104 = vunpack.c.l.b16 %v778
      %v2105 = vunpack.c.h.b16 %v778
      %v2106 = vunpack.c.l.b16 %v779
      %v2107 = vunpack.c.h.b16 %v779
      %v2108 = vunpack.c.l.b16 %v780
      %v2109 = vunpack.c.h.b16 %v780
      %v2110 = vunpack.c.l.b16 %v781
      %v2111 = vunpack.c.h.b16 %v781
      %v2112 = vunpack.c.l.b16 %v782
      %v2113 = vunpack.c.h.b16 %v782
      %v2114 = vunpack.c.l.b16 %v783
      %v2115 = vunpack.c.h.b16 %v783
      %v2116 = vunpack.c.l.b16 %v784
      %v2117 = vunpack.c.h.b16 %v784
      %v2118 = vunpack.c.l.b16 %v785
      %v2119 = vunpack.c.h.b16 %v785
      %v2120 = vunpack.c.l.b16 %v786
      %v2121 = vunpack.c.h.b16 %v786
      %v2122 = vunpack.c.l.b16 %v787
      %v2123 = vunpack.c.h.b16 %v787
      %v2124 = vunpack.c.l.b16 %v788
      %v2125 = vunpack.c.h.b16 %v788
      %v2126 = vunpack.c.l.b16 %v789
      %v2127 = vunpack.c.h.b16 %v789
      %v2128 = vunpack.c.l.b16 %v790
      %v2129 = vunpack.c.h.b16 %v790
      %v2130 = vunpack.c.l.b16 %v791
      %v2131 = vunpack.c.h.b16 %v791
      %v2132 = vunpack.c.l.b16 %v792
      %v2133 = vunpack.c.h.b16 %v792
      %v2134 = vunpack.c.l.b16 %v793
      %v2135 = vunpack.c.h.b16 %v793
      %v2136 = vunpack.c.l.b16 %v794
      %v2137 = vunpack.c.h.b16 %v794
      %v2138 = vunpack.c.l.b16 %v795
      %v2139 = vunpack.c.h.b16 %v795
      %v2140 = vunpack.c.l.b16 %v796
      %v2141 = vunpack.c.h.b16 %v796
      %v2142 = vunpack.c.l.b16 %v797
      %v2143 = vunpack.c.h.b16 %v797
      %v2144 = vunpack.c.l.b16 %v798
      %v2145 = vunpack.c.h.b16 %v798
      %v2146 = vunpack.c.l.b16 %v799
      %v2147 = vunpack.c.h.b16 %v799
      %v2148 = vunpack.c.l.b16 %v800
      %v2149 = vunpack.c.h.b16 %v800
      %v2150 = vunpack.c.l.b16 %v801
      %v2151 = vunpack.c.h.b16 %v801
      %v2152 = vunpack.c.l.b16 %v802
      %v2153 = vunpack.c.h.b16 %v802
      %v2154 = vunpack.c.l.b16 %v803
      %v2155 = vunpack.c.h.b16 %v803
      %v2156 = vunpack.c.l.b16 %v804
      %v2157 = vunpack.c.h.b16 %v804
      %v2158 = vunpack.c.l.b16 %v805
      %v2159 = vunpack.c.h.b16 %v805
      %v2160 = vunpack.c.l.b16 %v806
      %v2161 = vunpack.c.h.b16 %v806
      %v2162 = vunpack.c.l.b16 %v807
      %v2163 = vunpack.c.h.b16 %v807
      %v2164 = vunpack.c.l.b16 %v808
      %v2165 = vunpack.c.h.b16 %v808
      %v2166 = vunpack.c.l.b16 %v809
      %v2167 = vunpack.c.h.b16 %v809
      %v2168 = vunpack.c.l.b16 %v810
      %v2169 = vunpack.c.h.b16 %v810
      %v2170 = vunpack.c.l.b16 %v811
      %v2171 = vunpack.c.h.b16 %v811
      %v2172 = vunpack.c.l.b16 %v812
      %v2173 = vunpack.c.h.b16 %v812
      %v2174 = vunpack.c.l.b16 %v813
      %v2175 = vunpack.c.h.b16 %v813
      %v2176 = vunpack.c.l.b16 %v814
      %v2177 = vunpack.c.h.b16 %v814
      %v2178 = vunpack.c.l.b16 %v815
      %v2179 = vunpack.c.h.b16 %v815
      %v2180 = vunpack.c.l.b16 %v816
      %v2181 = vunpack.c.h.b16 %v816
      %v2182 = vunpack.c.l.b16 %v817
      %v2183 = vunpack.c.h.b16 %v817
      %v2184 = vunpack.c.l.b16 %v818
      %v2185 = vunpack.c.h.b16 %v818
      %v2186 = vunpack.c.l.b16 %v819
      %v2187 = vunpack.c.h.b16 %v819
      %v2188 = vunpack.c.l.b16 %v820
      %v2189 = vunpack.c.h.b16 %v820
      %v2190 = vunpack.c.l.b16 %v821
      %v2191 = vunpack.c.h.b16 %v821
      %v2192 = vunpack.c.l.b16 %v822
      %v2193 = vunpack.c.h.b16 %v822
      %v2194 = vunpack.c.l.b16 %v823
      %v2195 = vunpack.c.h.b16 %v823
      %v2196 = vunpack.c.l.b16 %v824
      %v2197 = vunpack.c.h.b16 %v824
      %v2198 = vunpack.c.l.b16 %v825
      %v2199 = vunpack.c.h.b16 %v825
      %v2200 = vunpack.c.l.b16 %v826
      %v2201 = vunpack.c.h.b16 %v826
      %v2202 = vunpack.c.l.b16 %v827
      %v2203 = vunpack.c.h.b16 %v827
      %v2204 = vunpack.c.l.b16 %v828
      %v2205 = vunpack.c.h.b16 %v828
      %v2206 = vunpack.c.l.b16 %v829
      %v2207 = vunpack.c.h.b16 %v829
      %v2208 = vunpack.c.l.b16 %v830
      %v2209 = vunpack.c.h.b16 %v830
      %v2210 = vunpack.c.l.b16 %v831
      %v2211 = vunpack.c.h.b16 %v831
      %v2212 = vunpack.c.l.b16 %v832
      %v2213 = vunpack.c.h.b16 %v832
      %v2214 = vunpack.c.l.b16 %v833
      %v2215 = vunpack.c.h.b16 %v833
      %v2216 = vunpack.c.l.b16 %v834
      %v2217 = vunpack.c.h.b16 %v834
      %v2218 = vunpack.c.l.b16 %v835
      %v2219 = vunpack.c.h.b16 %v835
      %v2220 = vunpack.c.l.b16 %v836
      %v2221 = vunpack.c.h.b16 %v836
      %v2222 = vunpack.c.l.b16 %v837
      %v2223 = vunpack.c.h.b16 %v837
      %v2224 = vunpack.c.l.b16 %v838
      %v2225 = vunpack.c.h.b16 %v838
      %v2226 = vunpack.c.l.b16 %v839
      %v2227 = vunpack.c.h.b16 %v839
      %v2228 = vunpack.c.l.b16 %v840
      %v2229 = vunpack.c.h.b16 %v840
      %v2230 = vunpack.c.l.b16 %v841
      %v2231 = vunpack.c.h.b16 %v841
      %v2232 = vunpack.c.l.b16 %v842
      %v2233 = vunpack.c.h.b16 %v842
      %v2234 = vunpack.c.l.b16 %v843
      %v2235 = vunpack.c.h.b16 %v843
      %v2236 = vunpack.c.l.b16 %v844
      %v2237 = vunpack.c.h.b16 %v844
      %v2238 = vunpack.c.l.b16 %v845
      %v2239 = vunpack.c.h.b16 %v845
      %v2240 = vunpack.c.l.b16 %v846
      %v2241 = vunpack.c.h.b16 %v846
      %v2242 = vunpack.c.l.b16 %v847
      %v2243 = vunpack.c.h.b16 %v847
      %v2244 = vunpack.c.l.b16 %v848
      %v2245 = vunpack.c.h.b16 %v848
      %v2246 = vunpack.c.l.b16 %v849
      %v2247 = vunpack.c.h.b16 %v849
      %v2248 = vunpack.c.l.b16 %v850
      %v2249 = vunpack.c.h.b16 %v850
      %v2250 = vunpack.c.l.b16 %v851
      %v2251 = vunpack.c.h.b16 %v851
      %v2252 = vunpack.c.l.b16 %v852
      %v2253 = vunpack.c.h.b16 %v852
      %v2254 = vunpack.c.l.b16 %v853
      %v2255 = vunpack.c.h.b16 %v853
      %v2256 = vunpack.c.l.b16 %v854
      %v2257 = vunpack.c.h.b16 %v854
      %v2258 = vunpack.c.l.b16 %v855
      %v2259 = vunpack.c.h.b16 %v855
      %v2260 = vunpack.c.l.b16 %v856
      %v2261 = vunpack.c.h.b16 %v856
      %v2262 = vunpack.c.l.b16 %v857
      %v2263 = vunpack.c.h.b16 %v857
      %v2264 = vunpack.c.l.b16 %v858
      %v2265 = vunpack.c.h.b16 %v858
      %v2266 = vunpack.c.l.b16 %v859
      %v2267 = vunpack.c.h.b16 %v859
      %v2268 = vunpack.c.l.b16 %v860
      %v2269 = vunpack.c.h.b16 %v860
      %v2270 = vunpack.c.l.b16 %v861
      %v2271 = vunpack.c.h.b16 %v861
      %v2272 = vunpack.c.l.b16 %v862
      %v2273 = vunpack.c.h.b16 %v862
      %v2274 = vunpack.c.l.b16 %v863
      %v2275 = vunpack.c.h.b16 %v863
      %v2276 = vunpack.c.l.b16 %v864
      %v2277 = vunpack.c.h.b16 %v864
      %v2278 = vunpack.c.l.b16 %v865
      %v2279 = vunpack.c.h.b16 %v865
      %v2280 = vunpack.c.l.b16 %v866
      %v2281 = vunpack.c.h.b16 %v866
      %v2282 = vunpack.c.l.b16 %v867
      %v2283 = vunpack.c.h.b16 %v867
      %v2284 = vunpack.c.l.b16 %v868
      %v2285 = vunpack.c.h.b16 %v868
      %v2286 = vunpack.c.l.b16 %v869
      %v2287 = vunpack.c.h.b16 %v869
      %v2288 = vunpack.c.l.b16 %v870
      %v2289 = vunpack.c.h.b16 %v870
      %v2290 = vunpack.c.l.b16 %v871
      %v2291 = vunpack.c.h.b16 %v871
      %v2292 = vunpack.c.l.b16 %v872
      %v2293 = vunpack.c.h.b16 %v872
      %v2294 = vunpack.c.l.b16 %v873
      %v2295 = vunpack.c.h.b16 %v873
      %v2296 = vunpack.c.l.b16 %v874
      %v2297 = vunpack.c.h.b16 %v874
      %v2298 = vunpack.c.l.b16 %v875
      %v2299 = vunpack.c.h.b16 %v875
      %v2300 = vunpack.c.l.b16 %v876
      %v2301 = vunpack.c.h.b16 %v876
      %v2302 = vunpack.c.l.b16 %v877
      %v2303 = vunpack.c.h.b16 %v877
      %v2304 = vunpack.c.l.b16 %v878
      %v2305 = vunpack.c.h.b16 %v878
      %v2306 = vunpack.c.l.b16 %v879
      %v2307 = vunpack.c.h.b16 %v879
      %v2308 = vunpack.c.l.b16 %v880
      %v2309 = vunpack.c.h.b16 %v880
      %v2310 = vunpack.c.l.b16 %v881
      %v2311 = vunpack.c.h.b16 %v881
      %v2312 = vunpack.c.l.b16 %v882
      %v2313 = vunpack.c.h.b16 %v882
      %v2314 = vunpack.c.l.b16 %v883
      %v2315 = vunpack.c.h.b16 %v883
      %v2316 = vunpack.c.l.b16 %v884
      %v2317 = vunpack.c.h.b16 %v884
      %v2318 = vunpack.c.l.b16 %v885
      %v2319 = vunpack.c.h.b16 %v885
      %v2320 = vunpack.c.l.b16 %v886
      %v2321 = vunpack.c.h.b16 %v886
      %v2322 = vunpack.c.l.b16 %v887
      %v2323 = vunpack.c.h.b16 %v887
      %v2324 = vunpack.c.l.b16 %v888
      %v2325 = vunpack.c.h.b16 %v888
      %v2326 = vunpack.c.l.b16 %v889
      %v2327 = vunpack.c.h.b16 %v889
      %v2328 = vunpack.c.l.b16 %v890
      %v2329 = vunpack.c.h.b16 %v890
      %v2330 = vunpack.c.l.b16 %v891
      %v2331 = vunpack.c.h.b16 %v891
      %v2332 = vunpack.c.l.b16 %v892
      %v2333 = vunpack.c.h.b16 %v892
      %v2334 = vunpack.c.l.b16 %v893
      %v2335 = vunpack.c.h.b16 %v893
      %v2336 = vunpack.c.l.b16 %v894
      %v2337 = vunpack.c.h.b16 %v894
      %v2338 = vunpack.c.l.b16 %v895
      %v2339 = vunpack.c.h.b16 %v895
      %v2340 = vunpack.c.l.b16 %v896
      %v2341 = vunpack.c.h.b16 %v896
      %v2342 = vunpack.c.l.b16 %v897
      %v2343 = vunpack.c.h.b16 %v897
      %v2344 = vunpack.c.l.b16 %v898
      %v2345 = vunpack.c.h.b16 %v898
      %v2346 = vunpack.c.l.b16 %v899
      %v2347 = vunpack.c.h.b16 %v899
      %v2348 = vunpack.c.l.b16 %v900
      %v2349 = vunpack.c.h.b16 %v900
      %v2350 = vunpack.c.l.b16 %v901
      %v2351 = vunpack.c.h.b16 %v901
      %v2352 = vunpack.c.l.b16 %v902
      %v2353 = vunpack.c.h.b16 %v902
      %v2354 = vunpack.c.l.b16 %v903
      %v2355 = vunpack.c.h.b16 %v903
      %v2356 = vunpack.c.l.b16 %v904
      %v2357 = vunpack.c.h.b16 %v904
      %v2358 = vunpack.c.l.b16 %v905
      %v2359 = vunpack.c.h.b16 %v905
      %v2360 = vunpack.c.l.b16 %v906
      %v2361 = vunpack.c.h.b16 %v906
      %v2362 = vunpack.c.l.b16 %v907
      %v2363 = vunpack.c.h.b16 %v907
      %v2364 = vunpack.c.l.b16 %v908
      %v2365 = vunpack.c.h.b16 %v908
      %v2366 = vunpack.c.l.b16 %v909
      %v2367 = vunpack.c.h.b16 %v909
      %v2368 = vunpack.c.l.b16 %v910
      %v2369 = vunpack.c.h.b16 %v910
      %v2370 = vunpack.c.l.b16 %v911
      %v2371 = vunpack.c.h.b16 %v911
      %v2372 = vunpack.c.l.b16 %v912
      %v2373 = vunpack.c.h.b16 %v912
      %v2374 = vunpack.c.l.b16 %v913
      %v2375 = vunpack.c.h.b16 %v913
      %v2376 = vunpack.c.l.b16 %v914
      %v2377 = vunpack.c.h.b16 %v914
      %v2378 = vunpack.c.l.b16 %v915
      %v2379 = vunpack.c.h.b16 %v915
      %v2380 = vunpack.c.l.b16 %v916
      %v2381 = vunpack.c.h.b16 %v916
      %v2382 = vunpack.c.l.b16 %v917
      %v2383 = vunpack.c.h.b16 %v917
      %v2384 = vunpack.c.l.b16 %v918
      %v2385 = vunpack.c.h.b16 %v918
      %v2386 = vunpack.c.l.b16 %v919
      %v2387 = vunpack.c.h.b16 %v919
      %v2388 = vunpack.c.l.b16 %v920
      %v2389 = vunpack.c.h.b16 %v920
      %v2390 = vunpack.c.l.b16 %v921
      %v2391 = vunpack.c.h.b16 %v921
      %v2392 = vunpack.c.l.b16 %v922
      %v2393 = vunpack.c.h.b16 %v922
      %v2394 = vunpack.c.l.b16 %v923
      %v2395 = vunpack.c.h.b16 %v923
      %v2396 = vunpack.c.l.b16 %v924
      %v2397 = vunpack.c.h.b16 %v924
      %v2398 = vunpack.c.l.b16 %v925
      %v2399 = vunpack.c.h.b16 %v925
      %v2400 = vunpack.c.l.b16 %v926
      %v2401 = vunpack.c.h.b16 %v926
      %v2402 = vunpack.c.l.b16 %v927
      %v2403 = vunpack.c.h.b16 %v927
      %v2404 = vunpack.c.l.b16 %v928
      %v2405 = vunpack.c.h.b16 %v928
      %v2406 = vunpack.c.l.b16 %v929
      %v2407 = vunpack.c.h.b16 %v929
      %v2408 = vunpack.c.l.b16 %v930
      %v2409 = vunpack.c.h.b16 %v930
      %v2410 = vunpack.c.l.b16 %v931
      %v2411 = vunpack.c.h.b16 %v931
      %v2412 = vunpack.c.l.b16 %v932
      %v2413 = vunpack.c.h.b16 %v932
      %v2414 = vunpack.c.l.b16 %v933
      %v2415 = vunpack.c.h.b16 %v933
      %v2416 = vunpack.c.l.b16 %v934
      %v2417 = vunpack.c.h.b16 %v934
      %v2418 = vunpack.c.l.b16 %v935
      %v2419 = vunpack.c.h.b16 %v935
      %v2420 = vunpack.c.l.b16 %v936
      %v2421 = vunpack.c.h.b16 %v936
      %v2422 = vunpack.c.l.b16 %v937
      %v2423 = vunpack.c.h.b16 %v937
      %v2424 = vunpack.c.l.b16 %v938
      %v2425 = vunpack.c.h.b16 %v938
      %v2426 = vunpack.c.l.b16 %v939
      %v2427 = vunpack.c.h.b16 %v939
      %v2428 = vunpack.c.l.b16 %v940
      %v2429 = vunpack.c.h.b16 %v940
      %v2430 = vunpack.c.l.b16 %v941
      %v2431 = vunpack.c.h.b16 %v941
      %v2432 = vunpack.c.l.b16 %v942
      %v2433 = vunpack.c.h.b16 %v942
      %v2434 = vunpack.c.l.b16 %v943
      %v2435 = vunpack.c.h.b16 %v943
      %v2436 = vunpack.c.l.b16 %v944
      %v2437 = vunpack.c.h.b16 %v944
      %v2438 = vunpack.c.l.b16 %v945
      %v2439 = vunpack.c.h.b16 %v945
      %v2440 = vunpack.c.l.b16 %v946
      %v2441 = vunpack.c.h.b16 %v946
      %v2442 = vunpack.c.l.b16 %v947
      %v2443 = vunpack.c.h.b16 %v947
      %v2444 = vunpack.c.l.b16 %v948
      %v2445 = vunpack.c.h.b16 %v948
      %v2446 = vunpack.c.l.b16 %v949
      %v2447 = vunpack.c.h.b16 %v949
      %v2448 = vunpack.c.l.b16 %v950
      %v2449 = vunpack.c.h.b16 %v950
      %v2450 = vunpack.c.l.b16 %v951
      %v2451 = vunpack.c.h.b16 %v951
      %v2452 = vunpack.c.l.b16 %v952
      %v2453 = vunpack.c.h.b16 %v952
      %v2454 = vunpack.c.l.b16 %v953
      %v2455 = vunpack.c.h.b16 %v953
      %v2456 = vunpack.c.l.b16 %v954
      %v2457 = vunpack.c.h.b16 %v954
      %v2458 = vunpack.c.l.b16 %v955
      %v2459 = vunpack.c.h.b16 %v955
      %v2460 = vunpack.c.l.b16 %v956
      %v2461 = vunpack.c.h.b16 %v956
      %v2462 = vunpack.c.l.b16 %v957
      %v2463 = vunpack.c.h.b16 %v957
      %v2464 = vunpack.c.l.b16 %v958
      %v2465 = vunpack.c.h.b16 %v958
      %v2466 = vunpack.c.l.b16 %v959
      %v2467 = vunpack.c.h.b16 %v959
      %v2468 = vunpack.c.l.b16 %v960
      %v2469 = vunpack.c.h.b16 %v960
      %v2470 = vunpack.c.l.b16 %v961
      %v2471 = vunpack.c.h.b16 %v961
      %v2472 = vunpack.c.l.b16 %v962
      %v2473 = vunpack.c.h.b16 %v962
      %v2474 = vunpack.c.l.b16 %v963
      %v2475 = vunpack.c.h.b16 %v963
      %v2476 = vunpack.c.l.b16 %v964
      %v2477 = vunpack.c.h.b16 %v964
      %v2478 = vunpack.c.l.b16 %v965
      %v2479 = vunpack.c.h.b16 %v965
      %v2480 = vunpack.c.l.b16 %v966
      %v2481 = vunpack.c.h.b16 %v966
      %v2482 = vunpack.c.l.b16 %v967
      %v2483 = vunpack.c.h.b16 %v967
      %v2484 = vunpack.c.l.b16 %v968
      %v2485 = vunpack.c.h.b16 %v968
      %v2486 = vunpack.c.l.b16 %v969
      %v2487 = vunpack.c.h.b16 %v969
      %v2488 = vunpack.c.l.b16 %v970
      %v2489 = vunpack.c.h.b16 %v970
      %v2490 = vunpack.c.l.b16 %v971
      %v2491 = vunpack.c.h.b16 %v971
      %v2492 = vunpack.c.l.b16 %v972
      %v2493 = vunpack.c.h.b16 %v972
      %v2494 = vunpack.c.l.b16 %v973
      %v2495 = vunpack.c.h.b16 %v973
      %v2496 = vunpack.c.l.b16 %v974
      %v2497 = vunpack.c.h.b16 %v974
      %v2498 = vunpack.c.l.b16 %v975
      %v2499 = vunpack.c.h.b16 %v975
      %v2500 = vunpack.c.l.b16 %v976
      %v2501 = vunpack.c.h.b16 %v976
      %v2502 = vunpack.c.l.b16 %v977
      %v2503 = vunpack.c.h.b16 %v977
      %v2504 = vunpack.c.l.b16 %v978
      %v2505 = vunpack.c.h.b16 %v978
      %v2506 = vunpack.c.l.b16 %v979
      %v2507 = vunpack.c.h.b16 %v979
      %v2508 = vunpack.c.l.b16 %v980
      %v2509 = vunpack.c.h.b16 %v980
      %v2510 = vunpack.c.l.b16 %v981
      %v2511 = vunpack.c.h.b16 %v981
      %v2512 = vunpack.c.l.b16 %v982
      %v2513 = vunpack.c.h.b16 %v982
      %v2514 = vunpack.c.l.b16 %v983
      %v2515 = vunpack.c.h.b16 %v983
      %v2516 = vunpack.c.l.b16 %v984
      %v2517 = vunpack.c.h.b16 %v984
      %v2518 = vunpack.c.l.b16 %v985
      %v2519 = vunpack.c.h.b16 %v985
      %v2520 = vunpack.c.l.b16 %v986
      %v2521 = vunpack.c.h.b16 %v986
      %v2522 = vunpack.c.l.b16 %v987
      %v2523 = vunpack.c.h.b16 %v987
      %v2524 = vunpack.c.l.b16 %v988
      %v2525 = vunpack.c.h.b16 %v988
      %v2526 = vunpack.c.l.b16 %v989
      %v2527 = vunpack.c.h.b16 %v989
      %v2528 = vunpack.c.l.b16 %v990
      %v2529 = vunpack.c.h.b16 %v990
      %v2530 = vunpack.c.l.b16 %v991
      %v2531 = vunpack.c.h.b16 %v991
      %v2532 = vunpack.c.l.b16 %v992
      %v2533 = vunpack.c.h.b16 %v992
      %v2534 = vunpack.c.l.b16 %v993
      %v2535 = vunpack.c.h.b16 %v993
      %v2536 = vunpack.c.l.b16 %v994
      %v2537 = vunpack.c.h.b16 %v994
      %v2538 = vunpack.c.l.b16 %v995
      %v2539 = vunpack.c.h.b16 %v995
      %v2540 = vunpack.c.l.b16 %v996
      %v2541 = vunpack.c.h.b16 %v996
      %v2542 = vunpack.c.l.b16 %v997
      %v2543 = vunpack.c.h.b16 %v997
      %v2544 = vunpack.c.l.b16 %v998
      %v2545 = vunpack.c.h.b16 %v998
      %v2546 = vunpack.c.l.b16 %v999
      %v2547 = vunpack.c.h.b16 %v999
      %v2548 = vunpack.c.l.b16 %v1000
      %v2549 = vunpack.c.h.b16 %v1000
      %v2550 = vunpack.c.l.b16 %v1001
      %v2551 = vunpack.c.h.b16 %v1001
      %v2552 = vunpack.c.l.b16 %v1002
      %v2553 = vunpack.c.h.b16 %v1002
      %v2554 = vunpack.c.l.b16 %v1003
      %v2555 = vunpack.c.h.b16 %v1003
      %v2556 = vunpack.c.l.b16 %v1004
      %v2557 = vunpack.c.h.b16 %v1004
      %v2558 = vunpack.c.l.b16 %v1005
      %v2559 = vunpack.c.h.b16 %v1005
      %v2560 = vunpack.c.l.b16 %v1006
      %v2561 = vunpack.c.h.b16 %v1006
      %v2562 = vunpack.c.l.b16 %v1007
      %v2563 = vunpack.c.h.b16 %v1007
      %v2564 = vunpack.c.l.b16 %v1008
      %v2565 = vunpack.c.h.b16 %v1008
      %v2566 = vunpack.c.l.b16 %v1009
      %v2567 = vunpack.c.h.b16 %v1009
      %v2568 = vunpack.c.l.b16 %v1010
      %v2569 = vunpack.c.h.b16 %v1010
      %v2570 = vunpack.c.l.b16 %v1011
      %v2571 = vunpack.c.h.b16 %v1011
      %v2572 = vunpack.c.l.b16 %v1012
      %v2573 = vunpack.c.h.b16 %v1012
      %v2574 = vunpack.c.l.b16 %v1013
      %v2575 = vunpack.c.h.b16 %v1013
      %v2576 = vunpack.c.l.b16 %v1014
      %v2577 = vunpack.c.h.b16 %v1014
      %v2578 = vunpack.c.l.b16 %v1015
      %v2579 = vunpack.c.h.b16 %v1015
      %v2580 = vunpack.c.l.b16 %v1016
      %v2581 = vunpack.c.h.b16 %v1016
      %v2582 = vunpack.c.l.b16 %v1017
      %v2583 = vunpack.c.h.b16 %v1017
      %v2584 = vunpack.c.l.b16 %v1018
      %v2585 = vunpack.c.h.b16 %v1018
      %v2586 = vunpack.c.l.b16 %v1019
      %v2587 = vunpack.c.h.b16 %v1019
      %v2588 = vunpack.c.l.b16 %v1020
      %v2589 = vunpack.c.h.b16 %v1020
      %v2590 = vunpack.c.l.b16 %v1021
      %v2591 = vunpack.c.h.b16 %v1021
      %v2592 = vunpack.c.l.b16 %v1022
      %v2593 = vunpack.c.h.b16 %v1022
      %v2594 = vunpack.c.l.b16 %v1023
      %v2595 = vunpack.c.h.b16 %v1023
      %v2596 = vunpack.c.l.b16 %v1024
      %v2597 = vunpack.c.h.b16 %v1024
      %v2598 = vunpack.c.l.b16 %v1025
      %v2599 = vunpack.c.h.b16 %v1025
      %v2600 = vunpack.c.l.b16 %v1026
      %v2601 = vunpack.c.h.b16 %v1026
      %v2602 = vunpack.c.l.b16 %v1027
      %v2603 = vunpack.c.h.b16 %v1027
      %v2604 = vunpack.c.l.b16 %v1028
      %v2605 = vunpack.c.h.b16 %v1028
      %v2606 = vunpack.c.l.b16 %v1029
      %v2607 = vunpack.c.h.b16 %v1029
      %v2608 = vunpack.c.l.b16 %v1030
      %v2609 = vunpack.c.h.b16 %v1030
      %v2610 = vunpack.c.l.b16 %v1031
      %v2611 = vunpack.c.h.b16 %v1031
      %v2612 = vunpack.c.l.b16 %v1032
      %v2613 = vunpack.c.h.b16 %v1032
      %v2614 = vunpack.c.l.b16 %v1033
      %v2615 = vunpack.c.h.b16 %v1033
      %v2616 = vunpack.c.l.b16 %v1034
      %v2617 = vunpack.c.h.b16 %v1034
      %v2618 = vunpack.c.l.b16 %v1035
      %v2619 = vunpack.c.h.b16 %v1035
      %v2620 = vunpack.c.l.b16 %v1036
      %v2621 = vunpack.c.h.b16 %v1036
      %v2622 = vunpack.c.l.b16 %v1037
      %v2623 = vunpack.c.h.b16 %v1037
      %v2624 = vunpack.c.l.b16 %v1038
      %v2625 = vunpack.c.h.b16 %v1038
      %v2626 = vunpack.c.l.b16 %v1039
      %v2627 = vunpack.c.h.b16 %v1039
      %v2628 = vunpack.c.l.b16 %v1040
      %v2629 = vunpack.c.h.b16 %v1040
      %v2630 = vunpack.c.l.b16 %v1041
      %v2631 = vunpack.c.h.b16 %v1041
      %v2632 = vunpack.c.l.b16 %v1042
      %v2633 = vunpack.c.h.b16 %v1042
      %v2634 = vunpack.c.l.b16 %v1043
      %v2635 = vunpack.c.h.b16 %v1043
      %v2636 = vunpack.c.l.b16 %v1044
      %v2637 = vunpack.c.h.b16 %v1044
      %v2638 = vunpack.c.l.b16 %v1045
      %v2639 = vunpack.c.h.b16 %v1045
      %v2640 = vunpack.c.l.b16 %v1046
      %v2641 = vunpack.c.h.b16 %v1046
      %v2642 = vunpack.c.l.b16 %v1047
      %v2643 = vunpack.c.h.b16 %v1047
      %v2644 = vunpack.c.l.b16 %v1048
      %v2645 = vunpack.c.h.b16 %v1048
      %v2646 = vunpack.c.l.b16 %v1049
      %v2647 = vunpack.c.h.b16 %v1049
      %v2648 = vunpack.c.l.b16 %v1050
      %v2649 = vunpack.c.h.b16 %v1050
      %v2650 = vunpack.c.l.b16 %v1051
      %v2651 = vunpack.c.h.b16 %v1051
      %v2652 = vunpack.c.l.b16 %v1052
      %v2653 = vunpack.c.h.b16 %v1052
      %v2654 = vunpack.c.l.b16 %v1053
      %v2655 = vunpack.c.h.b16 %v1053
      %v2656 = vunpack.c.l.b16 %v1054
      %v2657 = vunpack.c.h.b16 %v1054
      %v2658 = vunpack.c.l.b16 %v1055
      %v2659 = vunpack.c.h.b16 %v1055
      %v2660 = vunpack.c.l.b16 %v1056
      %v2661 = vunpack.c.h.b16 %v1056
      %v2662 = vunpack.c.l.b16 %v1057
      %v2663 = vunpack.c.h.b16 %v1057
      %v2664 = vunpack.c.l.b16 %v1058
      %v2665 = vunpack.c.h.b16 %v1058
      %v2666 = vunpack.c.l.b16 %v1059
      %v2667 = vunpack.c.h.b16 %v1059
      %v2668 = vunpack.c.l.b16 %v1060
      %v2669 = vunpack.c.h.b16 %v1060
      %v2670 = vunpack.c.l.b16 %v1061
      %v2671 = vunpack.c.h.b16 %v1061
      %v2672 = vunpack.c.l.b16 %v1062
      %v2673 = vunpack.c.h.b16 %v1062
      %v2674 = vunpack.c.l.b16 %v1063
      %v2675 = vunpack.c.h.b16 %v1063
      %v2676 = vunpack.c.l.b16 %v1064
      %v2677 = vunpack.c.h.b16 %v1064
      %v2678 = vunpack.c.l.b16 %v1065
      %v2679 = vunpack.c.h.b16 %v1065
      %v2680 = vunpack.c.l.b16 %v1066
      %v2681 = vunpack.c.h.b16 %v1066
      %v2682 = vunpack.c.l.b16 %v1067
      %v2683 = vunpack.c.h.b16 %v1067
      %v2684 = vunpack.c.l.b16 %v1068
      %v2685 = vunpack.c.h.b16 %v1068
      %v2686 = vunpack.c.l.b16 %v1069
      %v2687 = vunpack.c.h.b16 %v1069
      %v2688 = vunpack.c.l.b16 %v1070
      %v2689 = vunpack.c.h.b16 %v1070
      %v2690 = vunpack.c.l.b16 %v1071
      %v2691 = vunpack.c.h.b16 %v1071
      %v2692 = vunpack.c.l.b16 %v1072
      %v2693 = vunpack.c.h.b16 %v1072
      %v2694 = vunpack.c.l.b16 %v1073
      %v2695 = vunpack.c.h.b16 %v1073
      %v2696 = vunpack.c.l.b16 %v1074
      %v2697 = vunpack.c.h.b16 %v1074
      %v2698 = vunpack.c.l.b16 %v1075
      %v2699 = vunpack.c.h.b16 %v1075
      %v2700 = vunpack.c.l.b16 %v1076
      %v2701 = vunpack.c.h.b16 %v1076
      %v2702 = vunpack.c.l.b16 %v1077
      %v2703 = vunpack.c.h.b16 %v1077
      %v2704 = vunpack.c.l.b16 %v1078
      %v2705 = vunpack.c.h.b16 %v1078
      %v2706 = vunpack.c.l.b16 %v1079
      %v2707 = vunpack.c.h.b16 %v1079
      %v2708 = vunpack.c.l.b16 %v1080
      %v2709 = vunpack.c.h.b16 %v1080
      %v2710 = vunpack.c.l.b16 %v1081
      %v2711 = vunpack.c.h.b16 %v1081
      %v2712 = vunpack.c.l.b16 %v1082
      %v2713 = vunpack.c.h.b16 %v1082
      %v2714 = vunpack.c.l.b16 %v1083
      %v2715 = vunpack.c.h.b16 %v1083
      %v2716 = vunpack.c.l.b16 %v1084
      %v2717 = vunpack.c.h.b16 %v1084
      %v2718 = vunpack.c.l.b16 %v1085
      %v2719 = vunpack.c.h.b16 %v1085
      %v2720 = vunpack.c.l.b16 %v1086
      %v2721 = vunpack.c.h.b16 %v1086
      %v2722 = vunpack.c.l.b16 %v1087
      %v2723 = vunpack.c.h.b16 %v1087
      %v2724 = vunpack.c.l.b16 %v1088
      %v2725 = vunpack.c.h.b16 %v1088
      %v2726 = vunpack.c.l.b16 %v1089
      %v2727 = vunpack.c.h.b16 %v1089
      %v2728 = vunpack.c.l.b16 %v1090
      %v2729 = vunpack.c.h.b16 %v1090
      %v2730 = vunpack.c.l.b16 %v1091
      %v2731 = vunpack.c.h.b16 %v1091
      %v2732 = vunpack.c.l.b16 %v1092
      %v2733 = vunpack.c.h.b16 %v1092
      %v2734 = vunpack.c.l.b16 %v1093
      %v2735 = vunpack.c.h.b16 %v1093
      %v2736 = vunpack.c.l.b16 %v1094
      %v2737 = vunpack.c.h.b16 %v1094
      %v2738 = vunpack.c.l.b16 %v1095
      %v2739 = vunpack.c.h.b16 %v1095
      %v2740 = vunpack.c.l.b16 %v1096
      %v2741 = vunpack.c.h.b16 %v1096
      %v2742 = vunpack.c.l.b16 %v1097
      %v2743 = vunpack.c.h.b16 %v1097
      %v2744 = vunpack.c.l.b16 %v1098
      %v2745 = vunpack.c.h.b16 %v1098
      %v2746 = vunpack.c.l.b16 %v1099
      %v2747 = vunpack.c.h.b16 %v1099
      %v2748 = vunpack.c.l.b16 %v1100
      %v2749 = vunpack.c.h.b16 %v1100
      %v2750 = vunpack.c.l.b16 %v1101
      %v2751 = vunpack.c.h.b16 %v1101
      %v2752 = vunpack.c.l.b16 %v1102
      %v2753 = vunpack.c.h.b16 %v1102
      %v2754 = vunpack.c.l.b16 %v1103
      %v2755 = vunpack.c.h.b16 %v1103
      %v2756 = vunpack.c.l.b16 %v1104
      %v2757 = vunpack.c.h.b16 %v1104
      %v2758 = vunpack.c.l.b16 %v1105
      %v2759 = vunpack.c.h.b16 %v1105
      %v2760 = vunpack.c.l.b16 %v1106
      %v2761 = vunpack.c.h.b16 %v1106
      %v2762 = vunpack.c.l.b16 %v1107
      %v2763 = vunpack.c.h.b16 %v1107
      %v2764 = vunpack.c.l.b16 %v1108
      %v2765 = vunpack.c.h.b16 %v1108
      %v2766 = vunpack.c.l.b16 %v1109
      %v2767 = vunpack.c.h.b16 %v1109
      %v2768 = vunpack.c.l.b16 %v1110
      %v2769 = vunpack.c.h.b16 %v1110
      %v2770 = vunpack.c.l.b16 %v1111
      %v2771 = vunpack.c.h.b16 %v1111
      %v2772 = vunpack.c.l.b16 %v1112
      %v2773 = vunpack.c.h.b16 %v1112
      %v2774 = vunpack.c.l.b16 %v1113
      %v2775 = vunpack.c.h.b16 %v1113
      %v2776 = vunpack.c.l.b16 %v1114
      %v2777 = vunpack.c.h.b16 %v1114
      %v2778 = vunpack.c.l.b16 %v1115
      %v2779 = vunpack.c.h.b16 %v1115
      %v2780 = vunpack.c.l.b16 %v1116
      %v2781 = vunpack.c.h.b16 %v1116
      %v2782 = vunpack.c.l.b16 %v1117
      %v2783 = vunpack.c.h.b16 %v1117
      %v2784 = vunpack.c.l.b16 %v1118
      %v2785 = vunpack.c.h.b16 %v1118
      %v2786 = vunpack.c.l.b16 %v1119
      %v2787 = vunpack.c.h.b16 %v1119
      %v2788 = vunpack.c.l.b16 %v1120
      %v2789 = vunpack.c.h.b16 %v1120
      %v2790 = vunpack.c.l.b16 %v1121
      %v2791 = vunpack.c.h.b16 %v1121
      %v2792 = vunpack.c.l.b16 %v1122
      %v2793 = vunpack.c.h.b16 %v1122
      %v2794 = vunpack.c.l.b16 %v1123
      %v2795 = vunpack.c.h.b16 %v1123
      %v2796 = vunpack.c.l.b16 %v1124
      %v2797 = vunpack.c.h.b16 %v1124
      %v2798 = vunpack.c.l.b16 %v1125
      %v2799 = vunpack.c.h.b16 %v1125
      %v2800 = vunpack.c.l.b16 %v1126
      %v2801 = vunpack.c.h.b16 %v1126
      %v2802 = vunpack.c.l.b16 %v1127
      %v2803 = vunpack.c.h.b16 %v1127
      %v2804 = vunpack.c.l.b16 %v1128
      %v2805 = vunpack.c.h.b16 %v1128
      %v2806 = vunpack.c.l.b16 %v1129
      %v2807 = vunpack.c.h.b16 %v1129
      %v2808 = vunpack.c.l.b16 %v1130
      %v2809 = vunpack.c.h.b16 %v1130
      %v2810 = vunpack.c.l.b16 %v1131
      %v2811 = vunpack.c.h.b16 %v1131
      %v2812 = vunpack.c.l.b16 %v1132
      %v2813 = vunpack.c.h.b16 %v1132
      %v2814 = vunpack.c.l.b16 %v1133
      %v2815 = vunpack.c.h.b16 %v1133
      %v2816 = vunpack.c.l.b16 %v1134
      %v2817 = vunpack.c.h.b16 %v1134
      %v2818 = vunpack.c.l.b16 %v1135
      %v2819 = vunpack.c.h.b16 %v1135
      %v2820 = vunpack.c.l.b16 %v1136
      %v2821 = vunpack.c.h.b16 %v1136
      %v2822 = vunpack.c.l.b16 %v1137
      %v2823 = vunpack.c.h.b16 %v1137
      %v2824 = vunpack.c.l.b16 %v1138
      %v2825 = vunpack.c.h.b16 %v1138
      %v2826 = vunpack.c.l.b16 %v1139
      %v2827 = vunpack.c.h.b16 %v1139
      %v2828 = vunpack.c.l.b16 %v1140
      %v2829 = vunpack.c.h.b16 %v1140
      %v2830 = vunpack.c.l.b16 %v1141
      %v2831 = vunpack.c.h.b16 %v1141
      %v2832 = vunpack.c.l.b16 %v1142
      %v2833 = vunpack.c.h.b16 %v1142
      %v2834 = vunpack.c.l.b16 %v1143
      %v2835 = vunpack.c.h.b16 %v1143
      %v2836 = vunpack.c.l.b16 %v1144
      %v2837 = vunpack.c.h.b16 %v1144
      %v2838 = vunpack.c.l.b16 %v1145
      %v2839 = vunpack.c.h.b16 %v1145
      %v2840 = vunpack.c.l.b16 %v1146
      %v2841 = vunpack.c.h.b16 %v1146
      %v2842 = vunpack.c.l.b16 %v1147
      %v2843 = vunpack.c.h.b16 %v1147
      %v2844 = vunpack.c.l.b16 %v1148
      %v2845 = vunpack.c.h.b16 %v1148
      %v2846 = vunpack.c.l.b16 %v1149
      %v2847 = vunpack.c.h.b16 %v1149
      %v2848 = vunpack.c.l.b16 %v1150
      %v2849 = vunpack.c.h.b16 %v1150
      %v2850 = vunpack.c.l.b16 %v1151
      %v2851 = vunpack.c.h.b16 %v1151
      %v2852 = vunpack.c.l.b16 %v1152
      %v2853 = vunpack.c.h.b16 %v1152
      %v2854 = vunpack.c.l.b16 %v1153
      %v2855 = vunpack.c.h.b16 %v1153
      %v2856 = vunpack.c.l.b16 %v1154
      %v2857 = vunpack.c.h.b16 %v1154
      %v2858 = vunpack.c.l.b16 %v1155
      %v2859 = vunpack.c.h.b16 %v1155
      %v2860 = vunpack.c.l.b16 %v1156
      %v2861 = vunpack.c.h.b16 %v1156
      %v2862 = vunpack.c.l.b16 %v1157
      %v2863 = vunpack.c.h.b16 %v1157
      %v2864 = vunpack.c.l.b16 %v1158
      %v2865 = vunpack.c.h.b16 %v1158
      %v2866 = vunpack.c.l.b16 %v1159
      %v2867 = vunpack.c.h.b16 %v1159
      %v2868 = vunpack.c.l.b16 %v1160
      %v2869 = vunpack.c.h.b16 %v1160
      %v2870 = vunpack.c.l.b16 %v1161
      %v2871 = vunpack.c.h.b16 %v1161
      %v2872 = vunpack.c.l.b16 %v1162
      %v2873 = vunpack.c.h.b16 %v1162
      %v2874 = vunpack.c.l.b16 %v1163
      %v2875 = vunpack.c.h.b16 %v1163
      %v2876 = vunpack.c.l.b16 %v1164
      %v2877 = vunpack.c.h.b16 %v1164
      %v2878 = vunpack.c.l.b16 %v1165
      %v2879 = vunpack.c.h.b16 %v1165
      %v2880 = vunpack.c.l.b16 %v1166
      %v2881 = vunpack.c.h.b16 %v1166
      %v2882 = vunpack.c.l.b16 %v1167
      %v2883 = vunpack.c.h.b16 %v1167
      %v2884 = vunpack.c.l.b16 %v1168
      %v2885 = vunpack.c.h.b16 %v1168
      %v2886 = vunpack.c.l.b16 %v1169
      %v2887 = vunpack.c.h.b16 %v1169
      %v2888 = vunpack.c.l.b16 %v1170
      %v2889 = vunpack.c.h.b16 %v1170
      %v2890 = vunpack.c.l.b16 %v1171
      %v2891 = vunpack.c.h.b16 %v1171
      %v2892 = vunpack.c.l.b16 %v1172
      %v2893 = vunpack.c.h.b16 %v1172
      %v2894 = vunpack.c.l.b16 %v1173
      %v2895 = vunpack.c.h.b16 %v1173
      %v2896 = vunpack.c.l.b16 %v1174
      %v2897 = vunpack.c.h.b16 %v1174
      %v2898 = vunpack.c.l.b16 %v1175
      %v2899 = vunpack.c.h.b16 %v1175
      %v2900 = vunpack.c.l.b16 %v1176
      %v2901 = vunpack.c.h.b16 %v1176
      %v2902 = vunpack.c.l.b16 %v1177
      %v2903 = vunpack.c.h.b16 %v1177
      %v2904 = vunpack.c.l.b16 %v1178
      %v2905 = vunpack.c.h.b16 %v1178
      %v2906 = vunpack.c.l.b16 %v1179
      %v2907 = vunpack.c.h.b16 %v1179
      %v2908 = vunpack.c.l.b16 %v1180
      %v2909 = vunpack.c.h.b16 %v1180
      %v2910 = vunpack.c.l.b16 %v1181
      %v2911 = vunpack.c.h.b16 %v1181
      %v2912 = vunpack.c.l.b16 %v1182
      %v2913 = vunpack.c.h.b16 %v1182
      %v2914 = vunpack.c.l.b16 %v1183
      %v2915 = vunpack.c.h.b16 %v1183
      %v2916 = vunpack.c.l.b16 %v1184
      %v2917 = vunpack.c.h.b16 %v1184
      %v2918 = vunpack.c.l.b16 %v1185
      %v2919 = vunpack.c.h.b16 %v1185
      %v2920 = vunpack.c.l.b16 %v1186
      %v2921 = vunpack.c.h.b16 %v1186
      %v2922 = vunpack.c.l.b16 %v1187
      %v2923 = vunpack.c.h.b16 %v1187
      %v2924 = vunpack.c.l.b16 %v1188
      %v2925 = vunpack.c.h.b16 %v1188
      %v2926 = vunpack.c.l.b16 %v1189
      %v2927 = vunpack.c.h.b16 %v1189
      %v2928 = vunpack.c.l.b16 %v1190
      %v2929 = vunpack.c.h.b16 %v1190
      %v2930 = vunpack.c.l.b16 %v1191
      %v2931 = vunpack.c.h.b16 %v1191
      %v2932 = vunpack.c.l.b16 %v1192
      %v2933 = vunpack.c.h.b16 %v1192
      %v2934 = vunpack.c.l.b16 %v1193
      %v2935 = vunpack.c.h.b16 %v1193
      %v2936 = vunpack.c.l.b16 %v1194
      %v2937 = vunpack.c.h.b16 %v1194
      %v2938 = vunpack.c.l.b16 %v1195
      %v2939 = vunpack.c.h.b16 %v1195
      %v2940 = vunpack.c.l.b16 %v1196
      %v2941 = vunpack.c.h.b16 %v1196
      %v2942 = vunpack.c.l.b16 %v1197
      %v2943 = vunpack.c.h.b16 %v1197
      %v2944 = vunpack.c.l.b16 %v1198
      %v2945 = vunpack.c.h.b16 %v1198
      %v2946 = vunpack.c.l.b16 %v1199
      %v2947 = vunpack.c.h.b16 %v1199
      %v2948 = vunpack.c.l.b16 %v1200
      %v2949 = vunpack.c.h.b16 %v1200
      %v2950 = vunpack.c.l.b16 %v1201
      %v2951 = vunpack.c.h.b16 %v1201
      %v2952 = vunpack.c.l.b16 %v1202
      %v2953 = vunpack.c.h.b16 %v1202
      %v2954 = vunpack.c.l.b16 %v1203
      %v2955 = vunpack.c.h.b16 %v1203
      %v2956 = vunpack.c.l.b16 %v1204
      %v2957 = vunpack.c.h.b16 %v1204
      %v2958 = vunpack.c.l.b16 %v1205
      %v2959 = vunpack.c.h.b16 %v1205
      %v2960 = vunpack.c.l.b16 %v1206
      %v2961 = vunpack.c.h.b16 %v1206
      %v2962 = vunpack.c.l.b16 %v1207
      %v2963 = vunpack.c.h.b16 %v1207
      %v2964 = vunpack.c.l.b16 %v1208
      %v2965 = vunpack.c.h.b16 %v1208
      %v2966 = vunpack.c.l.b16 %v1209
      %v2967 = vunpack.c.h.b16 %v1209
      %v2968 = vunpack.c.l.b16 %v1210
      %v2969 = vunpack.c.h.b16 %v1210
      %v2970 = vunpack.c.l.b16 %v1211
      %v2971 = vunpack.c.h.b16 %v1211
      %v2972 = vunpack.c.l.b16 %v1212
      %v2973 = vunpack.c.h.b16 %v1212
      %v2974 = vunpack.c.l.b16 %v1213
      %v2975 = vunpack.c.h.b16 %v1213
      %v2976 = vunpack.c.l.b16 %v1214
      %v2977 = vunpack.c.h.b16 %v1214
      %v2978 = vunpack.c.l.b16 %v1215
      %v2979 = vunpack.c.h.b16 %v1215
      %v2980 = vunpack.c.l.b16 %v1216
      %v2981 = vunpack.c.h.b16 %v1216
      %v2982 = vunpack.c.l.b16 %v1217
      %v2983 = vunpack.c.h.b16 %v1217
      %v2984 = vunpack.c.l.b16 %v1218
      %v2985 = vunpack.c.h.b16 %v1218
      %v2986 = vunpack.c.l.b16 %v1219
      %v2987 = vunpack.c.h.b16 %v1219
      %v2988 = vunpack.c.l.b16 %v1220
      %v2989 = vunpack.c.h.b16 %v1220
      %v2990 = vunpack.c.l.b16 %v1221
      %v2991 = vunpack.c.h.b16 %v1221
      %v2992 = vunpack.c.l.b16 %v1222
      %v2993 = vunpack.c.h.b16 %v1222
      %v2994 = vunpack.c.l.b16 %v1223
      %v2995 = vunpack.c.h.b16 %v1223
      %v2996 = vunpack.c.l.b16 %v1224
      %v2997 = vunpack.c.h.b16 %v1224
      %v2998 = vunpack.c.l.b16 %v1225
      %v2999 = vunpack.c.h.b16 %v1225
      %v3000 = vunpack.c.l.b16 %v1226
      %v3001 = vunpack.c.h.b16 %v1226
      %v3002 = vunpack.c.l.b16 %v1227
      %v3003 = vunpack.c.h.b16 %v1227
      %v3004 = vunpack.c.l.b16 %v1228
      %v3005 = vunpack.c.h.b16 %v1228
      %v3006 = vunpack.c.l.b16 %v1229
      %v3007 = vunpack.c.h.b16 %v1229
      %v3008 = vunpack.c.l.b16 %v1230
      %v3009 = vunpack.c.h.b16 %v1230
      %v3010 = vunpack.c.l.b16 %v1231
      %v3011 = vunpack.c.h.b16 %v1231
      %v3012 = vunpack.c.l.b16 %v1232
      %v3013 = vunpack.c.h.b16 %v1232
      %v3014 = vunpack.c.l.b16 %v1233
      %v3015 = vunpack.c.h.b16 %v1233
      %v3016 = vunpack.c.l.b16 %v1234
      %v3017 = vunpack.c.h.b16 %v1234
      %v3018 = vunpack.c.l.b16 %v1235
      %v3019 = vunpack.c.h.b16 %v1235
      %v3020 = vunpack.c.l.b16 %v1236
      %v3021 = vunpack.c.h.b16 %v1236
      %v3022 = vunpack.c.l.b16 %v1237
      %v3023 = vunpack.c.h.b16 %v1237
      %v3024 = vunpack.c.l.b16 %v1238
      %v3025 = vunpack.c.h.b16 %v1238
      %v3026 = vunpack.c.l.b16 %v1239
      %v3027 = vunpack.c.h.b16 %v1239
      %v3028 = vunpack.c.l.b16 %v1240
      %v3029 = vunpack.c.h.b16 %v1240
      %v3030 = vunpack.c.l.b16 %v1241
      %v3031 = vunpack.c.h.b16 %v1241
      %v3032 = vunpack.c.l.b16 %v1242
      %v3033 = vunpack.c.h.b16 %v1242
      %v3034 = vunpack.c.l.b16 %v1243
      %v3035 = vunpack.c.h.b16 %v1243
      %v3036 = vunpack.c.l.b16 %v1244
      %v3037 = vunpack.c.h.b16 %v1244
      %v3038 = vunpack.c.l.b16 %v1245
      %v3039 = vunpack.c.h.b16 %v1245
      %v3040 = vunpack.c.l.b16 %v1246
      %v3041 = vunpack.c.h.b16 %v1246
      %v3042 = vunpack.c.l.b16 %v1247
      %v3043 = vunpack.c.h.b16 %v1247
      %v3044 = vunpack.c.l.b16 %v1248
      %v3045 = vunpack.c.h.b16 %v1248
      %v3046 = vunpack.c.l.b16 %v1249
      %v3047 = vunpack.c.h.b16 %v1249
      %v3048 = vunpack.c.l.b16 %v1250
      %v3049 = vunpack.c.h.b16 %v1250
      %v3050 = vunpack.c.l.b16 %v1251
      %v3051 = vunpack.c.h.b16 %v1251
      %v3052 = vunpack.c.l.b16 %v1252
      %v3053 = vunpack.c.h.b16 %v1252
      %v3054 = vunpack.c.l.b16 %v1253
      %v3055 = vunpack.c.h.b16 %v1253
      %v3056 = vunpack.c.l.b16 %v1254
      %v3057 = vunpack.c.h.b16 %v1254
      %v3058 = vunpack.c.l.b16 %v1255
      %v3059 = vunpack.c.h.b16 %v1255
      %v3060 = vunpack.c.l.b16 %v1256
      %v3061 = vunpack.c.h.b16 %v1256
      %v3062 = vunpack.c.l.b16 %v1257
      %v3063 = vunpack.c.h.b16 %v1257
      %v3064 = vunpack.c.l.b16 %v1258
      %v3065 = vunpack.c.h.b16 %v1258
      %v3066 = vunpack.c.l.b16 %v1259
      %v3067 = vunpack.c.h.b16 %v1259
      %v3068 = vunpack.c.l.b16 %v1260
      %v3069 = vunpack.c.h.b16 %v1260
      %v3070 = vunpack.c.l.b16 %v1261
      %v3071 = vunpack.c.h.b16 %v1261
      %v3072 = vunpack.c.l.b16 %v1262
      %v3073 = vunpack.c.h.b16 %v1262
      %v3074 = vunpack.c.l.b16 %v1263
      %v3075 = vunpack.c.h.b16 %v1263
      %v3076 = vunpack.c.l.b16 %v1264
      %v3077 = vunpack.c.h.b16 %v1264
      %v3078 = vunpack.c.l.b16 %v1265
      %v3079 = vunpack.c.h.b16 %v1265
      %v3080 = vunpack.c.l.b16 %v1266
      %v3081 = vunpack.c.h.b16 %v1266
      %v3082 = vunpack.c.l.b16 %v1267
      %v3083 = vunpack.c.h.b16 %v1267
      %v3084 = vunpack.c.l.b16 %v1268
      %v3085 = vunpack.c.h.b16 %v1268
      %v3086 = vunpack.c.l.b16 %v1269
      %v3087 = vunpack.c.h.b16 %v1269
      %v3088 = vunpack.c.l.b16 %v1270
      %v3089 = vunpack.c.h.b16 %v1270
      %v3090 = vunpack.c.l.b16 %v1271
      %v3091 = vunpack.c.h.b16 %v1271
      %v3092 = vunpack.c.l.b16 %v1272
      %v3093 = vunpack.c.h.b16 %v1272
      %v3094 = vunpack.c.l.b16 %v1273
      %v3095 = vunpack.c.h.b16 %v1273
      %v3096 = vunpack.c.l.b16 %v1274
      %v3097 = vunpack.c.h.b16 %v1274
      %v3098 = vunpack.c.l.b16 %v1275
      %v3099 = vunpack.c.h.b16 %v1275
      %v3100 = vunpack.c.l.b16 %v1276
      %v3101 = vunpack.c.h.b16 %v1276
      %v3102 = vunpack.c.l.b16 %v1277
      %v3103 = vunpack.c.h.b16 %v1277
      %v3104 = vunpack.c.l.b16 %v1278
      %v3105 = vunpack.c.h.b16 %v1278
      %v3106 = vunpack.c.l.b16 %v1279
      %v3107 = vunpack.c.h.b16 %v1279
      %v3108 = vunpack.c.l.b16 %v1280
      %v3109 = vunpack.c.h.b16 %v1280
      %v3110 = vunpack.c.l.b16 %v1281
      %v3111 = vunpack.c.h.b16 %v1281
      %v3112 = vunpack.c.l.b16 %v1282
      %v3113 = vunpack.c.h.b16 %v1282
      %v3114 = vunpack.c.l.b16 %v1283
      %v3115 = vunpack.c.h.b16 %v1283
      %v3116 = vunpack.c.l.b16 %v1284
      %v3117 = vunpack.c.h.b16 %v1284
      %v3118 = vunpack.c.l.b16 %v1285
      %v3119 = vunpack.c.h.b16 %v1285
      %v3120 = vunpack.c.l.b16 %v1286
      %v3121 = vunpack.c.h.b16 %v1286
      %v3122 = vunpack.c.l.b16 %v1287
      %v3123 = vunpack.c.h.b16 %v1287
      %v3124 = vunpack.c.l.b16 %v1288
      %v3125 = vunpack.c.h.b16 %v1288
      %v3126 = vunpack.c.l.b16 %v1289
      %v3127 = vunpack.c.h.b16 %v1289
      %v3128 = vunpack.c.l.b16 %v1290
      %v3129 = vunpack.c.h.b16 %v1290
      %v3130 = vunpack.c.l.b16 %v1291
      %v3131 = vunpack.c.h.b16 %v1291
      %v3132 = vunpack.c.l.b16 %v1292
      %v3133 = vunpack.c.h.b16 %v1292
      %v3134 = vunpack.c.l.b16 %v1293
      %v3135 = vunpack.c.h.b16 %v1293
      %v3136 = vunpack.c.l.b16 %v1294
      %v3137 = vunpack.c.h.b16 %v1294
      %v3138 = vunpack.c.l.b16 %v1295
      %v3139 = vunpack.c.h.b16 %v1295
      %v3140 = vunpack.c.l.b16 %v1296
      %v3141 = vunpack.c.h.b16 %v1296
      %v3142 = vunpack.c.l.b16 %v1297
      %v3143 = vunpack.c.h.b16 %v1297
      %v3144 = vunpack.c.l.b16 %v1298
      %v3145 = vunpack.c.h.b16 %v1298
      %v3146 = vunpack.c.l.b16 %v1299
      %v3147 = vunpack.c.h.b16 %v1299
      %v3148 = vunpack.c.l.b16 %v1300
      %v3149 = vunpack.c.h.b16 %v1300
      %v3150 = vunpack.c.l.b16 %v1301
      %v3151 = vunpack.c.h.b16 %v1301
      %v3152 = vunpack.c.l.b16 %v1302
      %v3153 = vunpack.c.h.b16 %v1302
      %v3154 = vunpack.c.l.b16 %v1303
      %v3155 = vunpack.c.h.b16 %v1303
      %v3156 = vunpack.c.l.b16 %v1304
      %v3157 = vunpack.c.h.b16 %v1304
      %v3158 = vunpack.c.l.b16 %v1305
      %v3159 = vunpack.c.h.b16 %v1305
      %v3160 = vunpack.c.l.b16 %v1306
      %v3161 = vunpack.c.h.b16 %v1306
      %v3162 = vunpack.c.l.b16 %v1307
      %v3163 = vunpack.c.h.b16 %v1307
      %v3164 = vunpack.c.l.b16 %v1308
      %v3165 = vunpack.c.h.b16 %v1308
      %v3166 = vunpack.c.l.b16 %v1309
      %v3167 = vunpack.c.h.b16 %v1309
      %v3168 = vunpack.c.l.b16 %v1310
      %v3169 = vunpack.c.h.b16 %v1310
      %v3170 = vunpack.c.l.b16 %v1311
      %v3171 = vunpack.c.h.b16 %v1311
      %v3172 = vunpack.c.l.b16 %v1312
      %v3173 = vunpack.c.h.b16 %v1312
      %v3174 = vunpack.c.l.b16 %v1313
      %v3175 = vunpack.c.h.b16 %v1313
      %v3176 = vunpack.c.l.b16 %v1314
      %v3177 = vunpack.c.h.b16 %v1314
      %v3178 = vunpack.c.l.b16 %v1315
      %v3179 = vunpack.c.h.b16 %v1315
      %v3180 = vunpack.c.l.b16 %v1316
      %v3181 = vunpack.c.h.b16 %v1316
      %v3182 = vunpack.c.l.b16 %v1317
      %v3183 = vunpack.c.h.b16 %v1317
      %v3184 = vunpack.c.l.b16 %v1318
      %v3185 = vunpack.c.h.b16 %v1318
      %v3186 = vunpack.c.l.b16 %v1319
      %v3187 = vunpack.c.h.b16 %v1319
      %v3188 = vunpack.c.l.b16 %v1320
      %v3189 = vunpack.c.h.b16 %v1320
      %v3190 = vunpack.c.l.b16 %v1321
      %v3191 = vunpack.c.h.b16 %v1321
      %v3192 = vunpack.c.l.b16 %v1322
      %v3193 = vunpack.c.h.b16 %v1322
      %v3194 = vunpack.c.l.b16 %v1323
      %v3195 = vunpack.c.h.b16 %v1323
      %v3196 = vunpack.c.l.b16 %v1324
      %v3197 = vunpack.c.h.b16 %v1324
      %v3198 = vunpack.c.l.b16 %v1325
      %v3199 = vunpack.c.h.b16 %v1325
      %v3200 = vunpack.c.l.b16 %v1326
      %v3201 = vunpack.c.h.b16 %v1326
      %v3202 = vunpack.c.l.b16 %v1327
      %v3203 = vunpack.c.h.b16 %v1327
      %v3204 = vunpack.c.l.b16 %v1328
      %v3205 = vunpack.c.h.b16 %v1328
      %v3206 = vunpack.c.l.b16 %v1329
      %v3207 = vunpack.c.h.b16 %v1329
      %v3208 = vunpack.c.l.b16 %v1330
      %v3209 = vunpack.c.h.b16 %v1330
      %v3210 = vunpack.c.l.b16 %v1331
      %v3211 = vunpack.c.h.b16 %v1331
      %v3212 = vunpack.c.l.b16 %v1332
      %v3213 = vunpack.c.h.b16 %v1332
      %v3214 = vunpack.c.l.b16 %v1333
      %v3215 = vunpack.c.h.b16 %v1333
      %v3216 = vunpack.c.l.b16 %v1334
      %v3217 = vunpack.c.h.b16 %v1334
      %v3218 = vunpack.c.l.b16 %v1335
      %v3219 = vunpack.c.h.b16 %v1335
      %v3220 = vunpack.c.l.b16 %v1336
      %v3221 = vunpack.c.h.b16 %v1336
      %v3222 = vunpack.c.l.b16 %v1337
      %v3223 = vunpack.c.h.b16 %v1337
      %v3224 = vunpack.c.l.b16 %v1338
      %v3225 = vunpack.c.h.b16 %v1338
      %v3226 = vunpack.c.l.b16 %v1339
      %v3227 = vunpack.c.h.b16 %v1339
      %v3228 = vunpack.c.l.b16 %v1340
      %v3229 = vunpack.c.h.b16 %v1340
      %v3230 = vunpack.c.l.b16 %v1341
      %v3231 = vunpack.c.h.b16 %v1341
      %v3232 = vunpack.c.l.b16 %v1342
      %v3233 = vunpack.c.h.b16 %v1342
      %v3234 = vunpack.c.l.b16 %v1343
      %v3235 = vunpack.c.h.b16 %v1343
      %v3236 = vunpack.c.l.b16 %v1344
      %v3237 = vunpack.c.h.b16 %v1344
      %v3238 = vunpack.c.l.b16 %v1345
      %v3239 = vunpack.c.h.b16 %v1345
      %v3240 = vunpack.c.l.b16 %v1346
      %v3241 = vunpack.c.h.b16 %v1346
      %v3242 = vunpack.c.l.b16 %v1347
      %v3243 = vunpack.c.h.b16 %v1347
      %v3244 = vunpack.c.l.b16 %v1348
      %v3245 = vunpack.c.h.b16 %v1348
      %v3246 = vunpack.c.l.b16 %v1349
      %v3247 = vunpack.c.h.b16 %v1349
      %v3248 = vunpack.c.l.b16 %v1350
      %v3249 = vunpack.c.h.b16 %v1350
      %v3250 = vunpack.c.l.b16 %v1351
      %v3251 = vunpack.c.h.b16 %v1351
      %v3252 = vunpack.c.l.b16 %v1352
      %v3253 = vunpack.c.h.b16 %v1352
      %v3254 = vunpack.c.l.b16 %v1353
      %v3255 = vunpack.c.h.b16 %v1353
      %v3256 = vunpack.c.l.b16 %v1354
      %v3257 = vunpack.c.h.b16 %v1354
      %v3258 = vunpack.c.l.b16 %v1355
      %v3259 = vunpack.c.h.b16 %v1355
      %v3260 = vunpack.c.l.b16 %v1356
      %v3261 = vunpack.c.h.b16 %v1356
      %v3262 = vunpack.c.l.b16 %v1357
      %v3263 = vunpack.c.h.b16 %v1357
      %v3264 = vunpack.c.l.b16 %v1358
      %v3265 = vunpack.c.h.b16 %v1358
      %v3266 = vunpack.c.l.b16 %v1359
      %v3267 = vunpack.c.h.b16 %v1359
      %v3268 = vunpack.c.l.b16 %v1360
      %v3269 = vunpack.c.h.b16 %v1360
      %v3270 = vunpack.c.l.b16 %v1361
      %v3271 = vunpack.c.h.b16 %v1361
      %v3272 = vunpack.c.l.b16 %v1362
      %v3273 = vunpack.c.h.b16 %v1362
      %v3274 = vunpack.c.l.b16 %v1363
      %v3275 = vunpack.c.h.b16 %v1363
      %v3276 = vunpack.c.l.b16 %v1364
      %v3277 = vunpack.c.h.b16 %v1364
      %v3278 = vunpack.c.l.b16 %v1365
      %v3279 = vunpack.c.h.b16 %v1365
      %v3280 = vunpack.c.l.b16 %v1366
      %v3281 = vunpack.c.h.b16 %v1366
      %v3282 = vunpack.c.l.b16 %v1367
      %v3283 = vunpack.c.h.b16 %v1367
      %v3284 = vunpack.c.l.b16 %v1368
      %v3285 = vunpack.c.h.b16 %v1368
      %v3286 = vunpack.c.l.b16 %v1369
      %v3287 = vunpack.c.h.b16 %v1369
      %v3288 = vunpack.c.l.b16 %v1370
      %v3289 = vunpack.c.h.b16 %v1370
      %v3290 = vunpack.c.l.b16 %v1371
      %v3291 = vunpack.c.h.b16 %v1371
      %v3292 = vpack.c.b16 %v2022, %v2012
      %v3293 = vpack.c.b16 %v2023, %v2013
      %v3294 = vpack.c.b16 %v2024, %v2014
      %v3295 = vpack.c.b16 %v2025, %v2015
      %v3296 = vpack.c.b16 %v2026, %v2016
      %v3297 = vpack.c.b16 %v2027, %v2017
      %v3298 = vpack.c.b16 %v2028, %v2018
      %v3299 = vpack.c.b16 %v2029, %v2019
      %v3300 = vpack.c.b16 %v2030, %v2020
      %v3301 = vpack.c.b16 %v2031, %v2021
      %v3302 = vpack.c.b16 %v2042, %v2032
      %v3303 = vpack.c.b16 %v2043, %v2033
      %v3304 = vpack.c.b16 %v2044, %v2034
      %v3305 = vpack.c.b16 %v2045, %v2035
      %v3306 = vpack.c.b16 %v2046, %v2036
      %v3307 = vpack.c.b16 %v2047, %v2037
      %v3308 = vpack.c.b16 %v2048, %v2038
      %v3309 = vpack.c.b16 %v2049, %v2039
      %v3310 = vpack.c.b16 %v2050, %v2040
      %v3311 = vpack.c.b16 %v2051, %v2041
      %v3312 = vpack.c.b16 %v2062, %v2052
      %v3313 = vpack.c.b16 %v2063, %v2053
      %v3314 = vpack.c.b16 %v2064, %v2054
      %v3315 = vpack.c.b16 %v2065, %v2055
      %v3316 = vpack.c.b16 %v2066, %v2056
      %v3317 = vpack.c.b16 %v2067, %v2057
      %v3318 = vpack.c.b16 %v2068, %v2058
      %v3319 = vpack.c.b16 %v2069, %v2059
      %v3320 = vpack.c.b16 %v2070, %v2060
      %v3321 = vpack.c.b16 %v2071, %v2061
      %v3322 = vpack.c.b16 %v2082, %v2072
      %v3323 = vpack.c.b16 %v2083, %v2073
      %v3324 = vpack.c.b16 %v2084, %v2074
      %v3325 = vpack.c.b16 %v2085, %v2075
      %v3326 = vpack.c.b16 %v2086, %v2076
      %v3327 = vpack.c.b16 %v2087, %v2077
      %v3328 = vpack.c.b16 %v2088, %v2078
      %v3329 = vpack.c.b16 %v2089, %v2079
      %v3330 = vpack.c.b16 %v2090, %v2080
      %v3331 = vpack.c.b16 %v2091, %v2081
      %v3332 = vpack.c.b16 %v2102, %v2092
      %v3333 = vpack.c.b16 %v2103, %v2093
      %v3334 = vpack.c.b16 %v2104, %v2094
      %v3335 = vpack.c.b16 %v2105, %v2095
      %v3336 = vpack.c.b16 %v2106, %v2096
      %v3337 = vpack.c.b16 %v2107, %v2097
      %v3338 = vpack.c.b16 %v2108, %v2098
      %v3339 = vpack.c.b16 %v2109, %v2099
      %v3340 = vpack.c.b16 %v2110, %v2100
      %v3341 = vpack.c.b16 %v2111, %v2101
      %v3342 = vpack.c.b16 %v2122, %v2112
      %v3343 = vpack.c.b16 %v2123, %v2113
      %v3344 = vpack.c.b16 %v2124, %v2114
      %v3345 = vpack.c.b16 %v2125, %v2115
      %v3346 = vpack.c.b16 %v2126, %v2116
      %v3347 = vpack.c.b16 %v2127, %v2117
      %v3348 = vpack.c.b16 %v2128, %v2118
      %v3349 = vpack.c.b16 %v2129, %v2119
      %v3350 = vpack.c.b16 %v2130, %v2120
      %v3351 = vpack.c.b16 %v2131, %v2121
      %v3352 = vpack.c.b16 %v2142, %v2132
      %v3353 = vpack.c.b16 %v2143, %v2133
      %v3354 = vpack.c.b16 %v2144, %v2134
      %v3355 = vpack.c.b16 %v2145, %v2135
      %v3356 = vpack.c.b16 %v2146, %v2136
      %v3357 = vpack.c.b16 %v2147, %v2137
      %v3358 = vpack.c.b16 %v2148, %v2138
      %v3359 = vpack.c.b16 %v2149, %v2139
      %v3360 = vpack.c.b16 %v2150, %v2140
      %v3361 = vpack.c.b16 %v2151, %v2141
      %v3362 = vpack.c.b16 %v2162, %v2152
      %v3363 = vpack.c.b16 %v2163, %v2153
      %v3364 = vpack.c.b16 %v2164, %v2154
      %v3365 = vpack.c.b16 %v2165, %v2155
      %v3366 = vpack.c.b16 %v2166, %v2156
      %v3367 = vpack.c.b16 %v2167, %v2157
      %v3368 = vpack.c.b16 %v2168, %v2158
      %v3369 = vpack.c.b16 %v2169, %v2159
      %v3370 = vpack.c.b16 %v2170, %v2160
      %v3371 = vpack.c.b16 %v2171, %v2161
      %v3372 = vpack.c.b16 %v2182, %v2172
      %v3373 = vpack.c.b16 %v2183, %v2173
      %v3374 = vpack.c.b16 %v2184, %v2174
      %v3375 = vpack.c.b16 %v2185, %v2175
      %v3376 = vpack.c.b16 %v2186, %v2176
      %v3377 = vpack.c.b16 %v2187, %v2177
      %v3378 = vpack.c.b16 %v2188, %v2178
      %v3379 = vpack.c.b16 %v2189, %v2179
      %v3380 = vpack.c.b16 %v2190, %v2180
      %v3381 = vpack.c.b16 %v2191, %v2181
      %v3382 = vpack.c.b16 %v2202, %v2192
      %v3383 = vpack.c.b16 %v2203, %v2193
      %v3384 = vpack.c.b16 %v2204, %v2194
      %v3385 = vpack.c.b16 %v2205, %v2195
      %v3386 = vpack.c.b16 %v2206, %v2196
      %v3387 = vpack.c.b16 %v2207, %v2197
      %v3388 = vpack.c.b16 %v2208, %v2198
      %v3389 = vpack.c.b16 %v2209, %v2199
      %v3390 = vpack.c.b16 %v2210, %v2200
      %v3391 = vpack.c.b16 %v2211, %v2201
      %v3392 = vpack.c.b16 %v2222, %v2212
      %v3393 = vpack.c.b16 %v2223, %v2213
      %v3394 = vpack.c.b16 %v2224, %v2214
      %v3395 = vpack.c.b16 %v2225, %v2215
      %v3396 = vpack.c.b16 %v2226, %v2216
      %v3397 = vpack.c.b16 %v2227, %v2217
      %v3398 = vpack.c.b16 %v2228, %v2218
      %v3399 = vpack.c.b16 %v2229, %v2219
      %v3400 = vpack.c.b16 %v2230, %v2220
      %v3401 = vpack.c.b16 %v2231, %v2221
      %v3402 = vpack.c.b16 %v2242, %v2232
      %v3403 = vpack.c.b16 %v2243, %v2233
      %v3404 = vpack.c.b16 %v2244, %v2234
      %v3405 = vpack.c.b16 %v2245, %v2235
      %v3406 = vpack.c.b16 %v2246, %v2236
      %v3407 = vpack.c.b16 %v2247, %v2237
      %v3408 = vpack.c.b16 %v2248, %v2238
      %v3409 = vpack.c.b16 %v2249, %v2239
      %v3410 = vpack.c.b16 %v2250, %v2240
      %v3411 = vpack.c.b16 %v2251, %v2241
      %v3412 = vpack.c.b16 %v2262, %v2252
      %v3413 = vpack.c.b16 %v2263, %v2253
      %v3414 = vpack.c.b16 %v2264, %v2254
      %v3415 = vpack.c.b16 %v2265, %v2255
      %v3416 = vpack.c.b16 %v2266, %v2256
      %v3417 = vpack.c.b16 %v2267, %v2257
      %v3418 = vpack.c.b16 %v2268, %v2258
      %v3419 = vpack.c.b16 %v2269, %v2259
      %v3420 = vpack.c.b16 %v2270, %v2260
      %v3421 = vpack.c.b16 %v2271, %v2261
      %v3422 = vpack.c.b16 %v2282, %v2272
      %v3423 = vpack.c.b16 %v2283, %v2273
      %v3424 = vpack.c.b16 %v2284, %v2274
      %v3425 = vpack.c.b16 %v2285, %v2275
      %v3426 = vpack.c.b16 %v2286, %v2276
      %v3427 = vpack.c.b16 %v2287, %v2277
      %v3428 = vpack.c.b16 %v2288, %v2278
      %v3429 = vpack.c.b16 %v2289, %v2279
      %v3430 = vpack.c.b16 %v2290, %v2280
      %v3431 = vpack.c.b16 %v2291, %v2281
      %v3432 = vpack.c.b16 %v2302, %v2292
      %v3433 = vpack.c.b16 %v2303, %v2293
      %v3434 = vpack.c.b16 %v2304, %v2294
      %v3435 = vpack.c.b16 %v2305, %v2295
      %v3436 = vpack.c.b16 %v2306, %v2296
      %v3437 = vpack.c.b16 %v2307, %v2297
      %v3438 = vpack.c.b16 %v2308, %v2298
      %v3439 = vpack.c.b16 %v2309, %v2299
      %v3440 = vpack.c.b16 %v2310, %v2300
      %v3441 = vpack.c.b16 %v2311, %v2301
      %v3442 = vpack.c.b16 %v2322, %v2312
      %v3443 = vpack.c.b16 %v2323, %v2313
      %v3444 = vpack.c.b16 %v2324, %v2314
      %v3445 = vpack.c.b16 %v2325, %v2315
      %v3446 = vpack.c.b16 %v2326, %v2316
      %v3447 = vpack.c.b16 %v2327, %v2317
      %v3448 = vpack.c.b16 %v2328, %v2318
      %v3449 = vpack.c.b16 %v2329, %v2319
      %v3450 = vpack.c.b16 %v2330, %v2320
      %v3451 = vpack.c.b16 %v2331, %v2321
      %v3452 = vpack.c.b16 %v2342, %v2332
      %v3453 = vpack.c.b16 %v2343, %v2333
      %v3454 = vpack.c.b16 %v2344, %v2334
      %v3455 = vpack.c.b16 %v2345, %v2335
      %v3456 = vpack.c.b16 %v2346, %v2336
      %v3457 = vpack.c.b16 %v2347, %v2337
      %v3458 = vpack.c.b16 %v2348, %v2338
      %v3459 = vpack.c.b16 %v2349, %v2339
      %v3460 = vpack.c.b16 %v2350, %v2340
      %v3461 = vpack.c.b16 %v2351, %v2341
      %v3462 = vpack.c.b16 %v2362, %v2352
      %v3463 = vpack.c.b16 %v2363, %v2353
      %v3464 = vpack.c.b16 %v2364, %v2354
      %v3465 = vpack.c.b16 %v2365, %v2355
      %v3466 = vpack.c.b16 %v2366, %v2356
      %v3467 = vpack.c.b16 %v2367, %v2357
      %v3468 = vpack.c.b16 %v2368, %v2358
      %v3469 = vpack.c.b16 %v2369, %v2359
      %v3470 = vpack.c.b16 %v2370, %v2360
      %v3471 = vpack.c.b16 %v2371, %v2361
      %v3472 = vpack.c.b16 %v2382, %v2372
      %v3473 = vpack.c.b16 %v2383, %v2373
      %v3474 = vpack.c.b16 %v2384, %v2374
      %v3475 = vpack.c.b16 %v2385, %v2375
      %v3476 = vpack.c.b16 %v2386, %v2376
      %v3477 = vpack.c.b16 %v2387, %v2377
      %v3478 = vpack.c.b16 %v2388, %v2378
      %v3479 = vpack.c.b16 %v2389, %v2379
      %v3480 = vpack.c.b16 %v2390, %v2380
      %v3481 = vpack.c.b16 %v2391, %v2381
      %v3482 = vpack.c.b16 %v2402, %v2392
      %v3483 = vpack.c.b16 %v2403, %v2393
      %v3484 = vpack.c.b16 %v2404, %v2394
      %v3485 = vpack.c.b16 %v2405, %v2395
      %v3486 = vpack.c.b16 %v2406, %v2396
      %v3487 = vpack.c.b16 %v2407, %v2397
      %v3488 = vpack.c.b16 %v2408, %v2398
      %v3489 = vpack.c.b16 %v2409, %v2399
      %v3490 = vpack.c.b16 %v2410, %v2400
      %v3491 = vpack.c.b16 %v2411, %v2401
      %v3492 = vpack.c.b16 %v2422, %v2412
      %v3493 = vpack.c.b16 %v2423, %v2413
      %v3494 = vpack.c.b16 %v2424, %v2414
      %v3495 = vpack.c.b16 %v2425, %v2415
      %v3496 = vpack.c.b16 %v2426, %v2416
      %v3497 = vpack.c.b16 %v2427, %v2417
      %v3498 = vpack.c.b16 %v2428, %v2418
      %v3499 = vpack.c.b16 %v2429, %v2419
      %v3500 = vpack.c.b16 %v2430, %v2420
      %v3501 = vpack.c.b16 %v2431, %v2421
      %v3502 = vpack.c.b16 %v2442, %v2432
      %v3503 = vpack.c.b16 %v2443, %v2433
      %v3504 = vpack.c.b16 %v2444, %v2434
      %v3505 = vpack.c.b16 %v2445, %v2435
      %v3506 = vpack.c.b16 %v2446, %v2436
      %v3507 = vpack.c.b16 %v2447, %v2437
      %v3508 = vpack.c.b16 %v2448, %v2438
      %v3509 = vpack.c.b16 %v2449, %v2439
      %v3510 = vpack.c.b16 %v2450, %v2440
      %v3511 = vpack.c.b16 %v2451, %v2441
      %v3512 = vpack.c.b16 %v2462, %v2452
      %v3513 = vpack.c.b16 %v2463, %v2453
      %v3514 = vpack.c.b16 %v2464, %v2454
      %v3515 = vpack.c.b16 %v2465, %v2455
      %v3516 = vpack.c.b16 %v2466, %v2456
      %v3517 = vpack.c.b16 %v2467, %v2457
      %v3518 = vpack.c.b16 %v2468, %v2458
      %v3519 = vpack.c.b16 %v2469, %v2459
      %v3520 = vpack.c.b16 %v2470, %v2460
      %v3521 = vpack.c.b16 %v2471, %v2461
      %v3522 = vpack.c.b16 %v2482, %v2472
      %v3523 = vpack.c.b16 %v2483, %v2473
      %v3524 = vpack.c.b16 %v2484, %v2474
      %v3525 = vpack.c.b16 %v2485, %v2475
      %v3526 = vpack.c.b16 %v2486, %v2476
      %v3527 = vpack.c.b16 %v2487, %v2477
      %v3528 = vpack.c.b16 %v2488, %v2478
      %v3529 = vpack.c.b16 %v2489, %v2479
      %v3530 = vpack.c.b16 %v2490, %v2480
      %v3531 = vpack.c.b16 %v2491, %v2481
      %v3532 = vpack.c.b16 %v2502, %v2492
      %v3533 = vpack.c.b16 %v2503, %v2493
      %v3534 = vpack.c.b16 %v2504, %v2494
      %v3535 = vpack.c.b16 %v2505, %v2495
      %v3536 = vpack.c.b16 %v2506, %v2496
      %v3537 = vpack.c.b16 %v2507, %v2497
      %v3538 = vpack.c.b16 %v2508, %v2498
      %v3539 = vpack.c.b16 %v2509, %v2499
      %v3540 = vpack.c.b16 %v2510, %v2500
      %v3541 = vpack.c.b16 %v2511, %v2501
      %v3542 = vpack.c.b16 %v2522, %v2512
      %v3543 = vpack.c.b16 %v2523, %v2513
      %v3544 = vpack.c.b16 %v2524, %v2514
      %v3545 = vpack.c.b16 %v2525, %v2515
      %v3546 = vpack.c.b16 %v2526, %v2516
      %v3547 = vpack.c.b16 %v2527, %v2517
      %v3548 = vpack.c.b16 %v2528, %v2518
      %v3549 = vpack.c.b16 %v2529, %v2519
      %v3550 = vpack.c.b16 %v2530, %v2520
      %v3551 = vpack.c.b16 %v2531, %v2521
      %v3552 = vpack.c.b16 %v2542, %v2532
      %v3553 = vpack.c.b16 %v2543, %v2533
      %v3554 = vpack.c.b16 %v2544, %v2534
      %v3555 = vpack.c.b16 %v2545, %v2535
      %v3556 = vpack.c.b16 %v2546, %v2536
      %v3557 = vpack.c.b16 %v2547, %v2537
      %v3558 = vpack.c.b16 %v2548, %v2538
      %v3559 = vpack.c.b16 %v2549, %v2539
      %v3560 = vpack.c.b16 %v2550, %v2540
      %v3561 = vpack.c.b16 %v2551, %v2541
      %v3562 = vpack.c.b16 %v2562, %v2552
      %v3563 = vpack.c.b16 %v2563, %v2553
      %v3564 = vpack.c.b16 %v2564, %v2554
      %v3565 = vpack.c.b16 %v2565, %v2555
      %v3566 = vpack.c.b16 %v2566, %v2556
      %v3567 = vpack.c.b16 %v2567, %v2557
      %v3568 = vpack.c.b16 %v2568, %v2558
      %v3569 = vpack.c.b16 %v2569, %v2559
      %v3570 = vpack.c.b16 %v2570, %v2560
      %v3571 = vpack.c.b16 %v2571, %v2561
      %v3572 = vpack.c.b16 %v2582, %v2572
      %v3573 = vpack.c.b16 %v2583, %v2573
      %v3574 = vpack.c.b16 %v2584, %v2574
      %v3575 = vpack.c.b16 %v2585, %v2575
      %v3576 = vpack.c.b16 %v2586, %v2576
      %v3577 = vpack.c.b16 %v2587, %v2577
      %v3578 = vpack.c.b16 %v2588, %v2578
      %v3579 = vpack.c.b16 %v2589, %v2579
      %v3580 = vpack.c.b16 %v2590, %v2580
      %v3581 = vpack.c.b16 %v2591, %v2581
      %v3582 = vpack.c.b16 %v2602, %v2592
      %v3583 = vpack.c.b16 %v2603, %v2593
      %v3584 = vpack.c.b16 %v2604, %v2594
      %v3585 = vpack.c.b16 %v2605, %v2595
      %v3586 = vpack.c.b16 %v2606, %v2596
      %v3587 = vpack.c.b16 %v2607, %v2597
      %v3588 = vpack.c.b16 %v2608, %v2598
      %v3589 = vpack.c.b16 %v2609, %v2599
      %v3590 = vpack.c.b16 %v2610, %v2600
      %v3591 = vpack.c.b16 %v2611, %v2601
      %v3592 = vpack.c.b16 %v2622, %v2612
      %v3593 = vpack.c.b16 %v2623, %v2613
      %v3594 = vpack.c.b16 %v2624, %v2614
      %v3595 = vpack.c.b16 %v2625, %v2615
      %v3596 = vpack.c.b16 %v2626, %v2616
      %v3597 = vpack.c.b16 %v2627, %v2617
      %v3598 = vpack.c.b16 %v2628, %v2618
      %v3599 = vpack.c.b16 %v2629, %v2619
      %v3600 = vpack.c.b16 %v2630, %v2620
      %v3601 = vpack.c.b16 %v2631, %v2621
      %v3602 = vpack.c.b16 %v2642, %v2632
      %v3603 = vpack.c.b16 %v2643, %v2633
      %v3604 = vpack.c.b16 %v2644, %v2634
      %v3605 = vpack.c.b16 %v2645, %v2635
      %v3606 = vpack.c.b16 %v2646, %v2636
      %v3607 = vpack.c.b16 %v2647, %v2637
      %v3608 = vpack.c.b16 %v2648, %v2638
      %v3609 = vpack.c.b16 %v2649, %v2639
      %v3610 = vpack.c.b16 %v2650, %v2640
      %v3611 = vpack.c.b16 %v2651, %v2641
      %v3612 = vpack.c.b16 %v2662, %v2652
      %v3613 = vpack.c.b16 %v2663, %v2653
      %v3614 = vpack.c.b16 %v2664, %v2654
      %v3615 = vpack.c.b16 %v2665, %v2655
      %v3616 = vpack.c.b16 %v2666, %v2656
      %v3617 = vpack.c.b16 %v2667, %v2657
      %v3618 = vpack.c.b16 %v2668, %v2658
      %v3619 = vpack.c.b16 %v2669, %v2659
      %v3620 = vpack.c.b16 %v2670, %v2660
      %v3621 = vpack.c.b16 %v2671, %v2661
      %v3622 = vpack.c.b16 %v2682, %v2672
      %v3623 = vpack.c.b16 %v2683, %v2673
      %v3624 = vpack.c.b16 %v2684, %v2674
      %v3625 = vpack.c.b16 %v2685, %v2675
      %v3626 = vpack.c.b16 %v2686, %v2676
      %v3627 = vpack.c.b16 %v2687, %v2677
      %v3628 = vpack.c.b16 %v2688, %v2678
      %v3629 = vpack.c.b16 %v2689, %v2679
      %v3630 = vpack.c.b16 %v2690, %v2680
      %v3631 = vpack.c.b16 %v2691, %v2681
      %v3632 = vpack.c.b16 %v2702, %v2692
      %v3633 = vpack.c.b16 %v2703, %v2693
      %v3634 = vpack.c.b16 %v2704, %v2694
      %v3635 = vpack.c.b16 %v2705, %v2695
      %v3636 = vpack.c.b16 %v2706, %v2696
      %v3637 = vpack.c.b16 %v2707, %v2697
      %v3638 = vpack.c.b16 %v2708, %v2698
      %v3639 = vpack.c.b16 %v2709, %v2699
      %v3640 = vpack.c.b16 %v2710, %v2700
      %v3641 = vpack.c.b16 %v2711, %v2701
      %v3642 = vpack.c.b16 %v2722, %v2712
      %v3643 = vpack.c.b16 %v2723, %v2713
      %v3644 = vpack.c.b16 %v2724, %v2714
      %v3645 = vpack.c.b16 %v2725, %v2715
      %v3646 = vpack.c.b16 %v2726, %v2716
      %v3647 = vpack.c.b16 %v2727, %v2717
      %v3648 = vpack.c.b16 %v2728, %v2718
      %v3649 = vpack.c.b16 %v2729, %v2719
      %v3650 = vpack.c.b16 %v2730, %v2720
      %v3651 = vpack.c.b16 %v2731, %v2721
      %v3652 = vpack.c.b16 %v2742, %v2732
      %v3653 = vpack.c.b16 %v2743, %v2733
      %v3654 = vpack.c.b16 %v2744, %v2734
      %v3655 = vpack.c.b16 %v2745, %v2735
      %v3656 = vpack.c.b16 %v2746, %v2736
      %v3657 = vpack.c.b16 %v2747, %v2737
      %v3658 = vpack.c.b16 %v2748, %v2738
      %v3659 = vpack.c.b16 %v2749, %v2739
      %v3660 = vpack.c.b16 %v2750, %v2740
      %v3661 = vpack.c.b16 %v2751, %v2741
      %v3662 = vpack.c.b16 %v2762, %v2752
      %v3663 = vpack.c.b16 %v2763, %v2753
      %v3664 = vpack.c.b16 %v2764, %v2754
      %v3665 = vpack.c.b16 %v2765, %v2755
      %v3666 = vpack.c.b16 %v2766, %v2756
      %v3667 = vpack.c.b16 %v2767, %v2757
      %v3668 = vpack.c.b16 %v2768, %v2758
      %v3669 = vpack.c.b16 %v2769, %v2759
      %v3670 = vpack.c.b16 %v2770, %v2760
      %v3671 = vpack.c.b16 %v2771, %v2761
      %v3672 = vpack.c.b16 %v2782, %v2772
      %v3673 = vpack.c.b16 %v2783, %v2773
      %v3674 = vpack.c.b16 %v2784, %v2774
      %v3675 = vpack.c.b16 %v2785, %v2775
      %v3676 = vpack.c.b16 %v2786, %v2776
      %v3677 = vpack.c.b16 %v2787, %v2777
      %v3678 = vpack.c.b16 %v2788, %v2778
      %v3679 = vpack.c.b16 %v2789, %v2779
      %v3680 = vpack.c.b16 %v2790, %v2780
      %v3681 = vpack.c.b16 %v2791, %v2781
      %v3682 = vpack.c.b16 %v2802, %v2792
      %v3683 = vpack.c.b16 %v2803, %v2793
      %v3684 = vpack.c.b16 %v2804, %v2794
      %v3685 = vpack.c.b16 %v2805, %v2795
      %v3686 = vpack.c.b16 %v2806, %v2796
      %v3687 = vpack.c.b16 %v2807, %v2797
      %v3688 = vpack.c.b16 %v2808, %v2798
      %v3689 = vpack.c.b16 %v2809, %v2799
      %v3690 = vpack.c.b16 %v2810, %v2800
      %v3691 = vpack.c.b16 %v2811, %v2801
      %v3692 = vpack.c.b16 %v2822, %v2812
      %v3693 = vpack.c.b16 %v2823, %v2813
      %v3694 = vpack.c.b16 %v2824, %v2814
      %v3695 = vpack.c.b16 %v2825, %v2815
      %v3696 = vpack.c.b16 %v2826, %v2816
      %v3697 = vpack.c.b16 %v2827, %v2817
      %v3698 = vpack.c.b16 %v2828, %v2818
      %v3699 = vpack.c.b16 %v2829, %v2819
      %v3700 = vpack.c.b16 %v2830, %v2820
      %v3701 = vpack.c.b16 %v2831, %v2821
      %v3702 = vpack.c.b16 %v2842, %v2832
      %v3703 = vpack.c.b16 %v2843, %v2833
      %v3704 = vpack.c.b16 %v2844, %v2834
      %v3705 = vpack.c.b16 %v2845, %v2835
      %v3706 = vpack.c.b16 %v2846, %v2836
      %v3707 = vpack.c.b16 %v2847, %v2837
      %v3708 = vpack.c.b16 %v2848, %v2838
      %v3709 = vpack.c.b16 %v2849, %v2839
      %v3710 = vpack.c.b16 %v2850, %v2840
      %v3711 = vpack.c.b16 %v2851, %v2841
      %v3712 = vpack.c.b16 %v2862, %v2852
      %v3713 = vpack.c.b16 %v2863, %v2853
      %v3714 = vpack.c.b16 %v2864, %v2854
      %v3715 = vpack.c.b16 %v2865, %v2855
      %v3716 = vpack.c.b16 %v2866, %v2856
      %v3717 = vpack.c.b16 %v2867, %v2857
      %v3718 = vpack.c.b16 %v2868, %v2858
      %v3719 = vpack.c.b16 %v2869, %v2859
      %v3720 = vpack.c.b16 %v2870, %v2860
      %v3721 = vpack.c.b16 %v2871, %v2861
      %v3722 = vpack.c.b16 %v2882, %v2872
      %v3723 = vpack.c.b16 %v2883, %v2873
      %v3724 = vpack.c.b16 %v2884, %v2874
      %v3725 = vpack.c.b16 %v2885, %v2875
      %v3726 = vpack.c.b16 %v2886, %v2876
      %v3727 = vpack.c.b16 %v2887, %v2877
      %v3728 = vpack.c.b16 %v2888, %v2878
      %v3729 = vpack.c.b16 %v2889, %v2879
      %v3730 = vpack.c.b16 %v2890, %v2880
      %v3731 = vpack.c.b16 %v2891, %v2881
      %v3732 = vpack.c.b16 %v2902, %v2892
      %v3733 = vpack.c.b16 %v2903, %v2893
      %v3734 = vpack.c.b16 %v2904, %v2894
      %v3735 = vpack.c.b16 %v2905, %v2895
      %v3736 = vpack.c.b16 %v2906, %v2896
      %v3737 = vpack.c.b16 %v2907, %v2897
      %v3738 = vpack.c.b16 %v2908, %v2898
      %v3739 = vpack.c.b16 %v2909, %v2899
      %v3740 = vpack.c.b16 %v2910, %v2900
      %v3741 = vpack.c.b16 %v2911, %v2901
      %v3742 = vpack.c.b16 %v2922, %v2912
      %v3743 = vpack.c.b16 %v2923, %v2913
      %v3744 = vpack.c.b16 %v2924, %v2914
      %v3745 = vpack.c.b16 %v2925, %v2915
      %v3746 = vpack.c.b16 %v2926, %v2916
      %v3747 = vpack.c.b16 %v2927, %v2917
      %v3748 = vpack.c.b16 %v2928, %v2918
      %v3749 = vpack.c.b16 %v2929, %v2919
      %v3750 = vpack.c.b16 %v2930, %v2920
      %v3751 = vpack.c.b16 %v2931, %v2921
      %v3752 = vpack.c.b16 %v2942, %v2932
      %v3753 = vpack.c.b16 %v2943, %v2933
      %v3754 = vpack.c.b16 %v2944, %v2934
      %v3755 = vpack.c.b16 %v2945, %v2935
      %v3756 = vpack.c.b16 %v2946, %v2936
      %v3757 = vpack.c.b16 %v2947, %v2937
      %v3758 = vpack.c.b16 %v2948, %v2938
      %v3759 = vpack.c.b16 %v2949, %v2939
      %v3760 = vpack.c.b16 %v2950, %v2940
      %v3761 = vpack.c.b16 %v2951, %v2941
      %v3762 = vpack.c.b16 %v2962, %v2952
      %v3763 = vpack.c.b16 %v2963, %v2953
      %v3764 = vpack.c.b16 %v2964, %v2954
      %v3765 = vpack.c.b16 %v2965, %v2955
      %v3766 = vpack.c.b16 %v2966, %v2956
      %v3767 = vpack.c.b16 %v2967, %v2957
      %v3768 = vpack.c.b16 %v2968, %v2958
      %v3769 = vpack.c.b16 %v2969, %v2959
      %v3770 = vpack.c.b16 %v2970, %v2960
      %v3771 = vpack.c.b16 %v2971, %v2961
      %v3772 = vpack.c.b16 %v2982, %v2972
      %v3773 = vpack.c.b16 %v2983, %v2973
      %v3774 = vpack.c.b16 %v2984, %v2974
      %v3775 = vpack.c.b16 %v2985, %v2975
      %v3776 = vpack.c.b16 %v2986, %v2976
      %v3777 = vpack.c.b16 %v2987, %v2977
      %v3778 = vpack.c.b16 %v2988, %v2978
      %v3779 = vpack.c.b16 %v2989, %v2979
      %v3780 = vpack.c.b16 %v2990, %v2980
      %v3781 = vpack.c.b16 %v2991, %v2981
      %v3782 = vpack.c.b16 %v3002, %v2992
      %v3783 = vpack.c.b16 %v3003, %v2993
      %v3784 = vpack.c.b16 %v3004, %v2994
      %v3785 = vpack.c.b16 %v3005, %v2995
      %v3786 = vpack.c.b16 %v3006, %v2996
      %v3787 = vpack.c.b16 %v3007, %v2997
      %v3788 = vpack.c.b16 %v3008, %v2998
      %v3789 = vpack.c.b16 %v3009, %v2999
      %v3790 = vpack.c.b16 %v3010, %v3000
      %v3791 = vpack.c.b16 %v3011, %v3001
      %v3792 = vpack.c.b16 %v3022, %v3012
      %v3793 = vpack.c.b16 %v3023, %v3013
      %v3794 = vpack.c.b16 %v3024, %v3014
      %v3795 = vpack.c.b16 %v3025, %v3015
      %v3796 = vpack.c.b16 %v3026, %v3016
      %v3797 = vpack.c.b16 %v3027, %v3017
      %v3798 = vpack.c.b16 %v3028, %v3018
      %v3799 = vpack.c.b16 %v3029, %v3019
      %v3800 = vpack.c.b16 %v3030, %v3020
      %v3801 = vpack.c.b16 %v3031, %v3021
      %v3802 = vpack.c.b16 %v3042, %v3032
      %v3803 = vpack.c.b16 %v3043, %v3033
      %v3804 = vpack.c.b16 %v3044, %v3034
      %v3805 = vpack.c.b16 %v3045, %v3035
      %v3806 = vpack.c.b16 %v3046, %v3036
      %v3807 = vpack.c.b16 %v3047, %v3037
      %v3808 = vpack.c.b16 %v3048, %v3038
      %v3809 = vpack.c.b16 %v3049, %v3039
      %v3810 = vpack.c.b16 %v3050, %v3040
      %v3811 = vpack.c.b16 %v3051, %v3041
      %v3812 = vpack.c.b16 %v3062, %v3052
      %v3813 = vpack.c.b16 %v3063, %v3053
      %v3814 = vpack.c.b16 %v3064, %v3054
      %v3815 = vpack.c.b16 %v3065, %v3055
      %v3816 = vpack.c.b16 %v3066, %v3056
      %v3817 = vpack.c.b16 %v3067, %v3057
      %v3818 = vpack.c.b16 %v3068, %v3058
      %v3819 = vpack.c.b16 %v3069, %v3059
      %v3820 = vpack.c.b16 %v3070, %v3060
      %v3821 = vpack.c.b16 %v3071, %v3061
      %v3822 = vpack.c.b16 %v3082, %v3072
      %v3823 = vpack.c.b16 %v3083, %v3073
      %v3824 = vpack.c.b16 %v3084, %v3074
      %v3825 = vpack.c.b16 %v3085, %v3075
      %v3826 = vpack.c.b16 %v3086, %v3076
      %v3827 = vpack.c.b16 %v3087, %v3077
      %v3828 = vpack.c.b16 %v3088, %v3078
      %v3829 = vpack.c.b16 %v3089, %v3079
      %v3830 = vpack.c.b16 %v3090, %v3080
      %v3831 = vpack.c.b16 %v3091, %v3081
      %v3832 = vpack.c.b16 %v3102, %v3092
      %v3833 = vpack.c.b16 %v3103, %v3093
      %v3834 = vpack.c.b16 %v3104, %v3094
      %v3835 = vpack.c.b16 %v3105, %v3095
      %v3836 = vpack.c.b16 %v3106, %v3096
      %v3837 = vpack.c.b16 %v3107, %v3097
      %v3838 = vpack.c.b16 %v3108, %v3098
      %v3839 = vpack.c.b16 %v3109, %v3099
      %v3840 = vpack.c.b16 %v3110, %v3100
      %v3841 = vpack.c.b16 %v3111, %v3101
      %v3842 = vpack.c.b16 %v3122, %v3112
      %v3843 = vpack.c.b16 %v3123, %v3113
      %v3844 = vpack.c.b16 %v3124, %v3114
      %v3845 = vpack.c.b16 %v3125, %v3115
      %v3846 = vpack.c.b16 %v3126, %v3116
      %v3847 = vpack.c.b16 %v3127, %v3117
      %v3848 = vpack.c.b16 %v3128, %v3118
      %v3849 = vpack.c.b16 %v3129, %v3119
      %v3850 = vpack.c.b16 %v3130, %v3120
      %v3851 = vpack.c.b16 %v3131, %v3121
      %v3852 = vpack.c.b16 %v3142, %v3132
      %v3853 = vpack.c.b16 %v3143, %v3133
      %v3854 = vpack.c.b16 %v3144, %v3134
      %v3855 = vpack.c.b16 %v3145, %v3135
      %v3856 = vpack.c.b16 %v3146, %v3136
      %v3857 = vpack.c.b16 %v3147, %v3137
      %v3858 = vpack.c.b16 %v3148, %v3138
      %v3859 = vpack.c.b16 %v3149, %v3139
      %v3860 = vpack.c.b16 %v3150, %v3140
      %v3861 = vpack.c.b16 %v3151, %v3141
      %v3862 = vpack.c.b16 %v3162, %v3152
      %v3863 = vpack.c.b16 %v3163, %v3153
      %v3864 = vpack.c.b16 %v3164, %v3154
      %v3865 = vpack.c.b16 %v3165, %v3155
      %v3866 = vpack.c.b16 %v3166, %v3156
      %v3867 = vpack.c.b16 %v3167, %v3157
      %v3868 = vpack.c.b16 %v3168, %v3158
      %v3869 = vpack.c.b16 %v3169, %v3159
      %v3870 = vpack.c.b16 %v3170, %v3160
      %v3871 = vpack.c.b16 %v3171, %v3161
      %v3872 = vpack.c.b16 %v3182, %v3172
      %v3873 = vpack.c.b16 %v3183, %v3173
      %v3874 = vpack.c.b16 %v3184, %v3174
      %v3875 = vpack.c.b16 %v3185, %v3175
      %v3876 = vpack.c.b16 %v3186, %v3176
      %v3877 = vpack.c.b16 %v3187, %v3177
      %v3878 = vpack.c.b16 %v3188, %v3178
      %v3879 = vpack.c.b16 %v3189, %v3179
      %v3880 = vpack.c.b16 %v3190, %v3180
      %v3881 = vpack.c.b16 %v3191, %v3181
      %v3882 = vpack.c.b16 %v3202, %v3192
      %v3883 = vpack.c.b16 %v3203, %v3193
      %v3884 = vpack.c.b16 %v3204, %v3194
      %v3885 = vpack.c.b16 %v3205, %v3195
      %v3886 = vpack.c.b16 %v3206, %v3196
      %v3887 = vpack.c.b16 %v3207, %v3197
      %v3888 = vpack.c.b16 %v3208, %v3198
      %v3889 = vpack.c.b16 %v3209, %v3199
      %v3890 = vpack.c.b16 %v3210, %v3200
      %v3891 = vpack.c.b16 %v3211, %v3201
      %v3892 = vpack.c.b16 %v3222, %v3212
      %v3893 = vpack.c.b16 %v3223, %v3213
      %v3894 = vpack.c.b16 %v3224, %v3214
      %v3895 = vpack.c.b16 %v3225, %v3215
      %v3896 = vpack.c.b16 %v3226, %v3216
      %v3897 = vpack.c.b16 %v3227, %v3217
      %v3898 = vpack.c.b16 %v3228, %v3218
      %v3899 = vpack.c.b16 %v3229, %v3219
      %v3900 = vpack.c.b16 %v3230, %v3220
      %v3901 = vpack.c.b16 %v3231, %v3221
      %v3902 = vpack.c.b16 %v3242, %v3232
      %v3903 = vpack.c.b16 %v3243, %v3233
      %v3904 = vpack.c.b16 %v3244, %v3234
      %v3905 = vpack.c.b16 %v3245, %v3235
      %v3906 = vpack.c.b16 %v3246, %v3236
      %v3907 = vpack.c.b16 %v3247, %v3237
      %v3908 = vpack.c.b16 %v3248, %v3238
      %v3909 = vpack.c.b16 %v3249, %v3239
      %v3910 = vpack.c.b16 %v3250, %v3240
      %v3911 = vpack.c.b16 %v3251, %v3241
      %v3912 = vpack.c.b16 %v3262, %v3252
      %v3913 = vpack.c.b16 %v3263, %v3253
      %v3914 = vpack.c.b16 %v3264, %v3254
      %v3915 = vpack.c.b16 %v3265, %v3255
      %v3916 = vpack.c.b16 %v3266, %v3256
      %v3917 = vpack.c.b16 %v3267, %v3257
      %v3918 = vpack.c.b16 %v3268, %v3258
      %v3919 = vpack.c.b16 %v3269, %v3259
      %v3920 = vpack.c.b16 %v3270, %v3260
      %v3921 = vpack.c.b16 %v3271, %v3261
      %v3922 = vpack.c.b16 %v3282, %v3272
      %v3923 = vpack.c.b16 %v3283, %v3273
      %v3924 = vpack.c.b16 %v3284, %v3274
      %v3925 = vpack.c.b16 %v3285, %v3275
      %v3926 = vpack.c.b16 %v3286, %v3276
      %v3927 = vpack.c.b16 %v3287, %v3277
      %v3928 = vpack.c.b16 %v3288, %v3278
      %v3929 = vpack.c.b16 %v3289, %v3279
      %v3930 = vpack.c.b16 %v3290, %v3280
      %v3931 = vpack.c.b16 %v3291, %v3281
      %4572 = vmatprep.subr.bf16.mxu0 %v3293
      %4573 = vmatpush1.bf16.msra.mxu0 %v3292
      %4574 = vmatprep.subr.bf16.mxu0 %v3303
      %4575 = vmatpush1.bf16.msra.mxu0 %v3302
      %4576 = vmatprep.subr.bf16.mxu0 %v3313
      %4577 = vmatpush1.bf16.msra.mxu0 %v3312
      %4578 = vmatprep.subr.bf16.mxu0 %v3323
      %4579 = vmatpush1.bf16.msra.mxu0 %v3322
      %4580 = vmatprep.subr.bf16.mxu0 %v3333
      %4581 = vmatpush1.bf16.msra.mxu0 %v3332
      %4582 = vmatprep.subr.bf16.mxu0 %v3343
      %4583 = vmatpush1.bf16.msra.mxu0 %v3342
      %4584 = vmatprep.subr.bf16.mxu0 %v3353
      %4585 = vmatpush1.bf16.msra.mxu0 %v3352
      %4586 = vmatprep.subr.bf16.mxu0 %v3363
      %4587 = vmatpush1.bf16.msra.mxu0 %v3362
      %4588 = vmatprep.subr.bf16.mxu0 %v3373
      %4589 = vmatpush1.bf16.msra.mxu0 %v3372
      %4590 = vmatprep.subr.bf16.mxu0 %v3383
      %4591 = vmatpush1.bf16.msra.mxu0 %v3382
      %4592 = vmatprep.subr.bf16.mxu0 %v3393
      %4593 = vmatpush1.bf16.msra.mxu0 %v3392
      %4594 = vmatprep.subr.bf16.mxu0 %v3403
      %4595 = vmatpush1.bf16.msra.mxu0 %v3402
      %4596 = vmatprep.subr.bf16.mxu0 %v3413
      %4597 = vmatpush1.bf16.msra.mxu0 %v3412
      %4598 = vmatprep.subr.bf16.mxu0 %v3423
      %4599 = vmatpush1.bf16.msra.mxu0 %v3422
      %4600 = vmatprep.subr.bf16.mxu0 %v3433
      %4601 = vmatpush1.bf16.msra.mxu0 %v3432
      %4602 = vmatprep.subr.bf16.mxu0 %v3443
      %4603 = vmatpush1.bf16.msra.mxu0 %v3442
      %4604 = vmatprep.mubr.bf16.mxu0 %v669
      %4605 = vmatmul.mubr.bf16.gmra.mrb[0].mxu0 %v668
      %v4606 = vpop.f32.mrb[0].mxu0
      %v4607 = vadd.f32 0.0, %v4606
      %v4608 = vpop.f32.mrb[0].mxu0
      %v4609 = vadd.f32 0.0, %v4608
      %v4610 = vpop.f32.mrb[0].mxu0
      %v4611 = vadd.f32 0.0, %v4610
      %v4612 = vpop.f32.mrb[0].mxu0
      %v4613 = vadd.f32 0.0, %v4612
      %4614 = vmatprep.mubr.bf16.mxu0 %v677
      %4615 = vmatmul.mubr.bf16.gmra.mrb[0].mxu0 %v676
      %v4616 = vpop.f32.mrb[0].mxu0
      %v4617 = vadd.f32 0.0, %v4616
      %v4618 = vpop.f32.mrb[0].mxu0
      %v4619 = vadd.f32 0.0, %v4618
      %v4620 = vpop.f32.mrb[0].mxu0
      %v4621 = vadd.f32 0.0, %v4620
      %v4622 = vpop.f32.mrb[0].mxu0
      %v4623 = vadd.f32 0.0, %v4622
      %4624 = vmatprep.mubr.bf16.mxu0 %v685
      %4625 = vmatmul.mubr.bf16.gmra.mrb[0].mxu0 %v684
      %v4626 = vpop.f32.mrb[0].mxu0
      %v4627 = vadd.f32 0.0, %v4626
      %v4628 = vpop.f32.mrb[0].mxu0
      %v4629 = vadd.f32 0.0, %v4628
      %v4630 = vpop.f32.mrb[0].mxu0
      %v4631 = vadd.f32 0.0, %v4630
      %v4632 = vpop.f32.mrb[0].mxu0
      %v4633 = vadd.f32 0.0, %v4632
      %4634 = vmatprep.mubr.bf16.mxu0 %v693
      %4635 = vmatmul.mubr.bf16.gmra.mrb[0].mxu0 %v692
      %v4636 = vpop.f32.mrb[0].mxu0
      %v4637 = vadd.f32 0.0, %v4636
      %v4638 = vpop.f32.mrb[0].mxu0
      %v4639 = vadd.f32 0.0, %v4638
      %v4640 = vpop.f32.mrb[0].mxu0
      %v4641 = vadd.f32 0.0, %v4640
      %v4642 = vpop.f32.mrb[0].mxu0
      %v4643 = vadd.f32 0.0, %v4642
      %4644 = vmatprep.mubr.bf16.mxu0 %v701
      %4645 = vmatmul.mubr.bf16.gmra.mrb[0].mxu0 %v700
      %v4646 = vpop.f32.mrb[0].mxu0
      %v4647 = vadd.f32 0.0, %v4646
      %v4648 = vpop.f32.mrb[0].mxu0
      %v4649 = vadd.f32 0.0, %v4648
      %v4650 = vpop.f32.mrb[0].mxu0
      %v4651 = vadd.f32 0.0, %v4650
      %v4652 = vpop.f32.mrb[0].mxu0
      %v4653 = vadd.f32 0.0, %v4652
      %4654 = vmatprep.mubr.bf16.mxu0 %v709
      %4655 = vmatmul.mubr.bf16.gmra.mrb[0].mxu0 %v708
      %v4656 = vpop.f32.mrb[0].mxu0
      %v4657 = vadd.f32 0.0, %v4656
      %v4658 = vpop.f32.mrb[0].mxu0
      %v4659 = vadd.f32 0.0, %v4658
      %v4660 = vpop.f32.mrb[0].mxu0
      %v4661 = vadd.f32 0.0, %v4660
      %v4662 = vpop.f32.mrb[0].mxu0
      %v4663 = vadd.f32 0.0, %v4662
      %4664 = vmatprep.mubr.bf16.mxu0 %v717
      %4665 = vmatmul.mubr.bf16.gmra.mrb[0].mxu0 %v716
      %v4666 = vpop.f32.mrb[0].mxu0
      %v4667 = vadd.f32 0.0, %v4666
      %v4668 = vpop.f32.mrb[0].mxu0
      %v4669 = vadd.f32 0.0, %v4668
      %v4670 = vpop.f32.mrb[0].mxu0
      %v4671 = vadd.f32 0.0, %v4670
      %v4672 = vpop.f32.mrb[0].mxu0
      %v4673 = vadd.f32 0.0, %v4672
      %4674 = vmatprep.mubr.bf16.mxu0 %v725
      %4675 = vmatmul.mubr.bf16.gmra.mrb[0].mxu0 %v724
      %v4676 = vpop.f32.mrb[0].mxu0
      %v4677 = vadd.f32 0.0, %v4676
      %v4678 = vpop.f32.mrb[0].mxu0
      %v4679 = vadd.f32 0.0, %v4678
      %v4680 = vpop.f32.mrb[0].mxu0
      %v4681 = vadd.f32 0.0, %v4680
      %v4682 = vpop.f32.mrb[0].mxu0
      %v4683 = vadd.f32 0.0, %v4682
      %4684 = vdwg.mxu0
      %4685 = vmatprep.subr.bf16.mxu0 %v3453
      %4686 = vmatpush1.bf16.msra.mxu0 %v3452
      %4687 = vmatprep.subr.bf16.mxu0 %v3463
      %4688 = vmatpush1.bf16.msra.mxu0 %v3462
      %4689 = vmatprep.subr.bf16.mxu0 %v3473
      %4690 = vmatpush1.bf16.msra.mxu0 %v3472
      %4691 = vmatprep.subr.bf16.mxu0 %v3483
      %4692 = vmatpush1.bf16.msra.mxu0 %v3482
      %4693 = vmatprep.subr.bf16.mxu0 %v3493
      %4694 = vmatpush1.bf16.msra.mxu0 %v3492
      %4695 = vmatprep.subr.bf16.mxu0 %v3503
      %4696 = vmatpush1.bf16.msra.mxu0 %v3502
      %4697 = vmatprep.subr.bf16.mxu0 %v3513
      %4698 = vmatpush1.bf16.msra.mxu0 %v3512
      %4699 = vmatprep.subr.bf16.mxu0 %v3523
      %4700 = vmatpush1.bf16.msra.mxu0 %v3522
      %4701 = vmatprep.subr.bf16.mxu0 %v3533
      %4702 = vmatpush1.bf16.msra.mxu0 %v3532
      %4703 = vmatprep.subr.bf16.mxu0 %v3543
      %4704 = vmatpush1.bf16.msra.mxu0 %v3542
      %4705 = vmatprep.subr.bf16.mxu0 %v3553
      %4706 = vmatpush1.bf16.msra.mxu0 %v3552
      %4707 = vmatprep.subr.bf16.mxu0 %v3563
      %4708 = vmatpush1.bf16.msra.mxu0 %v3562
      %4709 = vmatprep.subr.bf16.mxu0 %v3573
      %4710 = vmatpush1.bf16.msra.mxu0 %v3572
      %4711 = vmatprep.subr.bf16.mxu0 %v3583
      %4712 = vmatpush1.bf16.msra.mxu0 %v3582
      %4713 = vmatprep.subr.bf16.mxu0 %v3593
      %4714 = vmatpush1.bf16.msra.mxu0 %v3592
      %4715 = vmatprep.subr.bf16.mxu0 %v3603
      %4716 = vmatpush1.bf16.msra.mxu0 %v3602
      %4717 = vmatprep.mubr.bf16.mxu0 %v671
      %4718 = vmatmul.mubr.bf16.gmra.mrb[0].mxu0 %v670
      %v4719 = vpop.f32.mrb[0].mxu0
      %v4720 = vadd.f32 %v4607, %v4719
      %v4721 = vpop.f32.mrb[0].mxu0
      %v4722 = vadd.f32 %v4609, %v4721
      %v4723 = vpop.f32.mrb[0].mxu0
      %v4724 = vadd.f32 %v4611, %v4723
      %v4725 = vpop.f32.mrb[0].mxu0
      %v4726 = vadd.f32 %v4613, %v4725
      %4727 = vmatprep.mubr.bf16.mxu0 %v679
      %4728 = vmatmul.mubr.bf16.gmra.mrb[0].mxu0 %v678
      %v4729 = vpop.f32.mrb[0].mxu0
      %v4730 = vadd.f32 %v4617, %v4729
      %v4731 = vpop.f32.mrb[0].mxu0
      %v4732 = vadd.f32 %v4619, %v4731
      %v4733 = vpop.f32.mrb[0].mxu0
      %v4734 = vadd.f32 %v4621, %v4733
      %v4735 = vpop.f32.mrb[0].mxu0
      %v4736 = vadd.f32 %v4623, %v4735
      %4737 = vmatprep.mubr.bf16.mxu0 %v687
      %4738 = vmatmul.mubr.bf16.gmra.mrb[0].mxu0 %v686
      %v4739 = vpop.f32.mrb[0].mxu0
      %v4740 = vadd.f32 %v4627, %v4739
      %v4741 = vpop.f32.mrb[0].mxu0
      %v4742 = vadd.f32 %v4629, %v4741
      %v4743 = vpop.f32.mrb[0].mxu0
      %v4744 = vadd.f32 %v4631, %v4743
      %v4745 = vpop.f32.mrb[0].mxu0
      %v4746 = vadd.f32 %v4633, %v4745
      %4747 = vmatprep.mubr.bf16.mxu0 %v695
      %4748 = vmatmul.mubr.bf16.gmra.mrb[0].mxu0 %v694
      %v4749 = vpop.f32.mrb[0].mxu0
      %v4750 = vadd.f32 %v4637, %v4749
      %v4751 = vpop.f32.mrb[0].mxu0
      %v4752 = vadd.f32 %v4639, %v4751
      %v4753 = vpop.f32.mrb[0].mxu0
      %v4754 = vadd.f32 %v4641, %v4753
      %v4755 = vpop.f32.mrb[0].mxu0
      %v4756 = vadd.f32 %v4643, %v4755
      %4757 = vmatprep.mubr.bf16.mxu0 %v703
      %4758 = vmatmul.mubr.bf16.gmra.mrb[0].mxu0 %v702
      %v4759 = vpop.f32.mrb[0].mxu0
      %v4760 = vadd.f32 %v4647, %v4759
      %v4761 = vpop.f32.mrb[0].mxu0
      %v4762 = vadd.f32 %v4649, %v4761
      %v4763 = vpop.f32.mrb[0].mxu0
      %v4764 = vadd.f32 %v4651, %v4763
      %v4765 = vpop.f32.mrb[0].mxu0
      %v4766 = vadd.f32 %v4653, %v4765
      %4767 = vmatprep.mubr.bf16.mxu0 %v711
      %4768 = vmatmul.mubr.bf16.gmra.mrb[0].mxu0 %v710
      %v4769 = vpop.f32.mrb[0].mxu0
      %v4770 = vadd.f32 %v4657, %v4769
      %v4771 = vpop.f32.mrb[0].mxu0
      %v4772 = vadd.f32 %v4659, %v4771
      %v4773 = vpop.f32.mrb[0].mxu0
      %v4774 = vadd.f32 %v4661, %v4773
      %v4775 = vpop.f32.mrb[0].mxu0
      %v4776 = vadd.f32 %v4663, %v4775
      %4777 = vmatprep.mubr.bf16.mxu0 %v719
      %4778 = vmatmul.mubr.bf16.gmra.mrb[0].mxu0 %v718
      %v4779 = vpop.f32.mrb[0].mxu0
      %v4780 = vadd.f32 %v4667, %v4779
      %v4781 = vpop.f32.mrb[0].mxu0
      %v4782 = vadd.f32 %v4669, %v4781
      %v4783 = vpop.f32.mrb[0].mxu0
      %v4784 = vadd.f32 %v4671, %v4783
      %v4785 = vpop.f32.mrb[0].mxu0
      %v4786 = vadd.f32 %v4673, %v4785
      %4787 = vmatprep.mubr.bf16.mxu0 %v727
      %4788 = vmatmul.mubr.bf16.gmra.mrb[0].mxu0 %v726
      %v4789 = vpop.f32.mrb[0].mxu0
      %v4790 = vadd.f32 %v4677, %v4789
      %v4791 = vpop.f32.mrb[0].mxu0
      %v4792 = vadd.f32 %v4679, %v4791
      %v4793 = vpop.f32.mrb[0].mxu0
      %v4794 = vadd.f32 %v4681, %v4793
      %v4795 = vpop.f32.mrb[0].mxu0
      %v4796 = vadd.f32 %v4683, %v4795
      %4797 = vdwg.mxu0
      %4798 = vmatprep.subr.bf16.mxu0 %v3613
      %4799 = vmatpush1.bf16.msra.mxu0 %v3612
      %4800 = vmatprep.subr.bf16.mxu0 %v3623
      %4801 = vmatpush1.bf16.msra.mxu0 %v3622
      %4802 = vmatprep.subr.bf16.mxu0 %v3633
      %4803 = vmatpush1.bf16.msra.mxu0 %v3632
      %4804 = vmatprep.subr.bf16.mxu0 %v3643
      %4805 = vmatpush1.bf16.msra.mxu0 %v3642
      %4806 = vmatprep.subr.bf16.mxu0 %v3653
      %4807 = vmatpush1.bf16.msra.mxu0 %v3652
      %4808 = vmatprep.subr.bf16.mxu0 %v3663
      %4809 = vmatpush1.bf16.msra.mxu0 %v3662
      %4810 = vmatprep.subr.bf16.mxu0 %v3673
      %4811 = vmatpush1.bf16.msra.mxu0 %v3672
      %4812 = vmatprep.subr.bf16.mxu0 %v3683
      %4813 = vmatpush1.bf16.msra.mxu0 %v3682
      %4814 = vmatprep.subr.bf16.mxu0 %v3693
      %4815 = vmatpush1.bf16.msra.mxu0 %v3692
      %4816 = vmatprep.subr.bf16.mxu0 %v3703
      %4817 = vmatpush1.bf16.msra.mxu0 %v3702
      %4818 = vmatprep.subr.bf16.mxu0 %v3713
      %4819 = vmatpush1.bf16.msra.mxu0 %v3712
      %4820 = vmatprep.subr.bf16.mxu0 %v3723
      %4821 = vmatpush1.bf16.msra.mxu0 %v3722
      %4822 = vmatprep.subr.bf16.mxu0 %v3733
      %4823 = vmatpush1.bf16.msra.mxu0 %v3732
      %4824 = vmatprep.subr.bf16.mxu0 %v3743
      %4825 = vmatpush1.bf16.msra.mxu0 %v3742
      %4826 = vmatprep.subr.bf16.mxu0 %v3753
      %4827 = vmatpush1.bf16.msra.mxu0 %v3752
      %4828 = vmatprep.subr.bf16.mxu0 %v3763
      %4829 = vmatpush1.bf16.msra.mxu0 %v3762
      %4830 = vmatprep.mubr.bf16.mxu0 %v673
      %4831 = vmatmul.mubr.bf16.gmra.mrb[0].mxu0 %v672
      %v4832 = vpop.f32.mrb[0].mxu0
      %v4833 = vadd.f32 %v4720, %v4832
      %v4834 = vpop.f32.mrb[0].mxu0
      %v4835 = vadd.f32 %v4722, %v4834
      %v4836 = vpop.f32.mrb[0].mxu0
      %v4837 = vadd.f32 %v4724, %v4836
      %v4838 = vpop.f32.mrb[0].mxu0
      %v4839 = vadd.f32 %v4726, %v4838
      %4840 = vmatprep.mubr.bf16.mxu0 %v681
      %4841 = vmatmul.mubr.bf16.gmra.mrb[0].mxu0 %v680
      %v4842 = vpop.f32.mrb[0].mxu0
      %v4843 = vadd.f32 %v4730, %v4842
      %v4844 = vpop.f32.mrb[0].mxu0
      %v4845 = vadd.f32 %v4732, %v4844
      %v4846 = vpop.f32.mrb[0].mxu0
      %v4847 = vadd.f32 %v4734, %v4846
      %v4848 = vpop.f32.mrb[0].mxu0
      %v4849 = vadd.f32 %v4736, %v4848
      %4850 = vmatprep.mubr.bf16.mxu0 %v689
      %4851 = vmatmul.mubr.bf16.gmra.mrb[0].mxu0 %v688
      %v4852 = vpop.f32.mrb[0].mxu0
      %v4853 = vadd.f32 %v4740, %v4852
      %v4854 = vpop.f32.mrb[0].mxu0
      %v4855 = vadd.f32 %v4742, %v4854
      %v4856 = vpop.f32.mrb[0].mxu0
      %v4857 = vadd.f32 %v4744, %v4856
      %v4858 = vpop.f32.mrb[0].mxu0
      %v4859 = vadd.f32 %v4746, %v4858
      %4860 = vmatprep.mubr.bf16.mxu0 %v697
      %4861 = vmatmul.mubr.bf16.gmra.mrb[0].mxu0 %v696
      %v4862 = vpop.f32.mrb[0].mxu0
      %v4863 = vadd.f32 %v4750, %v4862
      %v4864 = vpop.f32.mrb[0].mxu0
      %v4865 = vadd.f32 %v4752, %v4864
      %v4866 = vpop.f32.mrb[0].mxu0
      %v4867 = vadd.f32 %v4754, %v4866
      %v4868 = vpop.f32.mrb[0].mxu0
      %v4869 = vadd.f32 %v4756, %v4868
      %4870 = vmatprep.mubr.bf16.mxu0 %v705
      %4871 = vmatmul.mubr.bf16.gmra.mrb[0].mxu0 %v704
      %v4872 = vpop.f32.mrb[0].mxu0
      %v4873 = vadd.f32 %v4760, %v4872
      %v4874 = vpop.f32.mrb[0].mxu0
      %v4875 = vadd.f32 %v4762, %v4874
      %v4876 = vpop.f32.mrb[0].mxu0
      %v4877 = vadd.f32 %v4764, %v4876
      %v4878 = vpop.f32.mrb[0].mxu0
      %v4879 = vadd.f32 %v4766, %v4878
      %4880 = vmatprep.mubr.bf16.mxu0 %v713
      %4881 = vmatmul.mubr.bf16.gmra.mrb[0].mxu0 %v712
      %v4882 = vpop.f32.mrb[0].mxu0
      %v4883 = vadd.f32 %v4770, %v4882
      %v4884 = vpop.f32.mrb[0].mxu0
      %v4885 = vadd.f32 %v4772, %v4884
      %v4886 = vpop.f32.mrb[0].mxu0
      %v4887 = vadd.f32 %v4774, %v4886
      %v4888 = vpop.f32.mrb[0].mxu0
      %v4889 = vadd.f32 %v4776, %v4888
      %4890 = vmatprep.mubr.bf16.mxu0 %v721
      %4891 = vmatmul.mubr.bf16.gmra.mrb[0].mxu0 %v720
      %v4892 = vpop.f32.mrb[0].mxu0
      %v4893 = vadd.f32 %v4780, %v4892
      %v4894 = vpop.f32.mrb[0].mxu0
      %v4895 = vadd.f32 %v4782, %v4894
      %v4896 = vpop.f32.mrb[0].mxu0
      %v4897 = vadd.f32 %v4784, %v4896
      %v4898 = vpop.f32.mrb[0].mxu0
      %v4899 = vadd.f32 %v4786, %v4898
      %4900 = vmatprep.mubr.bf16.mxu0 %v729
      %4901 = vmatmul.mubr.bf16.gmra.mrb[0].mxu0 %v728
      %v4902 = vpop.f32.mrb[0].mxu0
      %v4903 = vadd.f32 %v4790, %v4902
      %v4904 = vpop.f32.mrb[0].mxu0
      %v4905 = vadd.f32 %v4792, %v4904
      %v4906 = vpop.f32.mrb[0].mxu0
      %v4907 = vadd.f32 %v4794, %v4906
      %v4908 = vpop.f32.mrb[0].mxu0
      %v4909 = vadd.f32 %v4796, %v4908
      %4910 = vdwg.mxu0
      %4911 = vmatprep.subr.bf16.mxu0 %v3773
      %4912 = vmatpush1.bf16.msra.mxu0 %v3772
      %4913 = vmatprep.subr.bf16.mxu0 %v3783
      %4914 = vmatpush1.bf16.msra.mxu0 %v3782
      %4915 = vmatprep.subr.bf16.mxu0 %v3793
      %4916 = vmatpush1.bf16.msra.mxu0 %v3792
      %4917 = vmatprep.subr.bf16.mxu0 %v3803
      %4918 = vmatpush1.bf16.msra.mxu0 %v3802
      %4919 = vmatprep.subr.bf16.mxu0 %v3813
      %4920 = vmatpush1.bf16.msra.mxu0 %v3812
      %4921 = vmatprep.subr.bf16.mxu0 %v3823
      %4922 = vmatpush1.bf16.msra.mxu0 %v3822
      %4923 = vmatprep.subr.bf16.mxu0 %v3833
      %4924 = vmatpush1.bf16.msra.mxu0 %v3832
      %4925 = vmatprep.subr.bf16.mxu0 %v3843
      %4926 = vmatpush1.bf16.msra.mxu0 %v3842
      %4927 = vmatprep.subr.bf16.mxu0 %v3853
      %4928 = vmatpush1.bf16.msra.mxu0 %v3852
      %4929 = vmatprep.subr.bf16.mxu0 %v3863
      %4930 = vmatpush1.bf16.msra.mxu0 %v3862
      %4931 = vmatprep.subr.bf16.mxu0 %v3873
      %4932 = vmatpush1.bf16.msra.mxu0 %v3872
      %4933 = vmatprep.subr.bf16.mxu0 %v3883
      %4934 = vmatpush1.bf16.msra.mxu0 %v3882
      %4935 = vmatprep.subr.bf16.mxu0 %v3893
      %4936 = vmatpush1.bf16.msra.mxu0 %v3892
      %4937 = vmatprep.subr.bf16.mxu0 %v3903
      %4938 = vmatpush1.bf16.msra.mxu0 %v3902
      %4939 = vmatprep.subr.bf16.mxu0 %v3913
      %4940 = vmatpush1.bf16.msra.mxu0 %v3912
      %4941 = vmatprep.subr.bf16.mxu0 %v3923
      %4942 = vmatpush1.bf16.msra.mxu0 %v3922
      %4943 = vmatprep.mubr.bf16.mxu0 %v675
      %4944 = vmatmul.mubr.bf16.gmra.mrb[0].mxu0 %v674
      %v4945 = vpop.f32.mrb[0].mxu0
      %v4946 = vadd.f32 %v4833, %v4945
      %v4947 = vpop.f32.mrb[0].mxu0
      %v4948 = vadd.f32 %v4835, %v4947
      %v4949 = vpop.f32.mrb[0].mxu0
      %v4950 = vadd.f32 %v4837, %v4949
      %v4951 = vpop.f32.mrb[0].mxu0
      %v4952 = vadd.f32 %v4839, %v4951
      %4953 = vmatprep.mubr.bf16.mxu0 %v683
      %4954 = vmatmul.mubr.bf16.gmra.mrb[0].mxu0 %v682
      %v4955 = vpop.f32.mrb[0].mxu0
      %v4956 = vadd.f32 %v4843, %v4955
      %v4957 = vpop.f32.mrb[0].mxu0
      %v4958 = vadd.f32 %v4845, %v4957
      %v4959 = vpop.f32.mrb[0].mxu0
      %v4960 = vadd.f32 %v4847, %v4959
      %v4961 = vpop.f32.mrb[0].mxu0
      %v4962 = vadd.f32 %v4849, %v4961
      %4963 = vmatprep.mubr.bf16.mxu0 %v691
      %4964 = vmatmul.mubr.bf16.gmra.mrb[0].mxu0 %v690
      %v4965 = vpop.f32.mrb[0].mxu0
      %v4966 = vadd.f32 %v4853, %v4965
      %v4967 = vpop.f32.mrb[0].mxu0
      %v4968 = vadd.f32 %v4855, %v4967
      %v4969 = vpop.f32.mrb[0].mxu0
      %v4970 = vadd.f32 %v4857, %v4969
      %v4971 = vpop.f32.mrb[0].mxu0
      %v4972 = vadd.f32 %v4859, %v4971
      %4973 = vmatprep.mubr.bf16.mxu0 %v699
      %4974 = vmatmul.mubr.bf16.gmra.mrb[0].mxu0 %v698
      %v4975 = vpop.f32.mrb[0].mxu0
      %v4976 = vadd.f32 %v4863, %v4975
      %v4977 = vpop.f32.mrb[0].mxu0
      %v4978 = vadd.f32 %v4865, %v4977
      %v4979 = vpop.f32.mrb[0].mxu0
      %v4980 = vadd.f32 %v4867, %v4979
      %v4981 = vpop.f32.mrb[0].mxu0
      %v4982 = vadd.f32 %v4869, %v4981
      %4983 = vmatprep.mubr.bf16.mxu0 %v707
      %4984 = vmatmul.mubr.bf16.gmra.mrb[0].mxu0 %v706
      %v4985 = vpop.f32.mrb[0].mxu0
      %v4986 = vadd.f32 %v4873, %v4985
      %v4987 = vpop.f32.mrb[0].mxu0
      %v4988 = vadd.f32 %v4875, %v4987
      %v4989 = vpop.f32.mrb[0].mxu0
      %v4990 = vadd.f32 %v4877, %v4989
      %v4991 = vpop.f32.mrb[0].mxu0
      %v4992 = vadd.f32 %v4879, %v4991
      %4993 = vmatprep.mubr.bf16.mxu0 %v715
      %4994 = vmatmul.mubr.bf16.gmra.mrb[0].mxu0 %v714
      %v4995 = vpop.f32.mrb[0].mxu0
      %v4996 = vadd.f32 %v4883, %v4995
      %v4997 = vpop.f32.mrb[0].mxu0
      %v4998 = vadd.f32 %v4885, %v4997
      %v4999 = vpop.f32.mrb[0].mxu0
      %v5000 = vadd.f32 %v4887, %v4999
      %v5001 = vpop.f32.mrb[0].mxu0
      %v5002 = vadd.f32 %v4889, %v5001
      %5003 = vmatprep.mubr.bf16.mxu0 %v723
      %5004 = vmatmul.mubr.bf16.gmra.mrb[0].mxu0 %v722
      %v5005 = vpop.f32.mrb[0].mxu0
      %v5006 = vadd.f32 %v4893, %v5005
      %v5007 = vpop.f32.mrb[0].mxu0
      %v5008 = vadd.f32 %v4895, %v5007
      %v5009 = vpop.f32.mrb[0].mxu0
      %v5010 = vadd.f32 %v4897, %v5009
      %v5011 = vpop.f32.mrb[0].mxu0
      %v5012 = vadd.f32 %v4899, %v5011
      %5013 = vmatprep.mubr.bf16.mxu0 %v731
      %5014 = vmatmul.mubr.bf16.gmra.mrb[0].mxu0 %v730
      %v5015 = vpop.f32.mrb[0].mxu0
      %v5016 = vadd.f32 %v4903, %v5015
      %v5017 = vpop.f32.mrb[0].mxu0
      %v5018 = vadd.f32 %v4905, %v5017
      %v5019 = vpop.f32.mrb[0].mxu0
      %v5020 = vadd.f32 %v4907, %v5019
      %v5021 = vpop.f32.mrb[0].mxu0
      %v5022 = vadd.f32 %v4909, %v5021
      %5023 = vdwg.mxu0
      %5024 = vmatprep.subr.bf16.mxu0 %v3295
      %5025 = vmatpush1.bf16.msra.mxu0 %v3294
      %5026 = vmatprep.subr.bf16.mxu0 %v3305
      %5027 = vmatpush1.bf16.msra.mxu0 %v3304
      %5028 = vmatprep.subr.bf16.mxu0 %v3315
      %5029 = vmatpush1.bf16.msra.mxu0 %v3314
      %5030 = vmatprep.subr.bf16.mxu0 %v3325
      %5031 = vmatpush1.bf16.msra.mxu0 %v3324
      %5032 = vmatprep.subr.bf16.mxu0 %v3335
      %5033 = vmatpush1.bf16.msra.mxu0 %v3334
      %5034 = vmatprep.subr.bf16.mxu0 %v3345
      %5035 = vmatpush1.bf16.msra.mxu0 %v3344
      %5036 = vmatprep.subr.bf16.mxu0 %v3355
      %5037 = vmatpush1.bf16.msra.mxu0 %v3354
      %5038 = vmatprep.subr.bf16.mxu0 %v3365
      %5039 = vmatpush1.bf16.msra.mxu0 %v3364
      %5040 = vmatprep.subr.bf16.mxu0 %v3375
      %5041 = vmatpush1.bf16.msra.mxu0 %v3374
      %5042 = vmatprep.subr.bf16.mxu0 %v3385
      %5043 = vmatpush1.bf16.msra.mxu0 %v3384
      %5044 = vmatprep.subr.bf16.mxu0 %v3395
      %5045 = vmatpush1.bf16.msra.mxu0 %v3394
      %5046 = vmatprep.subr.bf16.mxu0 %v3405
      %5047 = vmatpush1.bf16.msra.mxu0 %v3404
      %5048 = vmatprep.subr.bf16.mxu0 %v3415
      %5049 = vmatpush1.bf16.msra.mxu0 %v3414
      %5050 = vmatprep.subr.bf16.mxu0 %v3425
      %5051 = vmatpush1.bf16.msra.mxu0 %v3424
      %5052 = vmatprep.subr.bf16.mxu0 %v3435
      %5053 = vmatpush1.bf16.msra.mxu0 %v3434
      %5054 = vmatprep.subr.bf16.mxu0 %v3445
      %5055 = vmatpush1.bf16.msra.mxu0 %v3444
      %5056 = vmatprep.mubr.bf16.mxu0 %v669
      %5057 = vmatmul.mubr.bf16.gmra.mrb[0].mxu0 %v668
      %v5058 = vpop.f32.mrb[0].mxu0
      %v5059 = vadd.f32 0.0, %v5058
      %v5060 = vpop.f32.mrb[0].mxu0
      %v5061 = vadd.f32 0.0, %v5060
      %v5062 = vpop.f32.mrb[0].mxu0
      %v5063 = vadd.f32 0.0, %v5062
      %v5064 = vpop.f32.mrb[0].mxu0
      %v5065 = vadd.f32 0.0, %v5064
      %5066 = vmatprep.mubr.bf16.mxu0 %v677
      %5067 = vmatmul.mubr.bf16.gmra.mrb[0].mxu0 %v676
      %v5068 = vpop.f32.mrb[0].mxu0
      %v5069 = vadd.f32 0.0, %v5068
      %v5070 = vpop.f32.mrb[0].mxu0
      %v5071 = vadd.f32 0.0, %v5070
      %v5072 = vpop.f32.mrb[0].mxu0
      %v5073 = vadd.f32 0.0, %v5072
      %v5074 = vpop.f32.mrb[0].mxu0
      %v5075 = vadd.f32 0.0, %v5074
      %5076 = vmatprep.mubr.bf16.mxu0 %v685
      %5077 = vmatmul.mubr.bf16.gmra.mrb[0].mxu0 %v684
      %v5078 = vpop.f32.mrb[0].mxu0
      %v5079 = vadd.f32 0.0, %v5078
      %v5080 = vpop.f32.mrb[0].mxu0
      %v5081 = vadd.f32 0.0, %v5080
      %v5082 = vpop.f32.mrb[0].mxu0
      %v5083 = vadd.f32 0.0, %v5082
      %v5084 = vpop.f32.mrb[0].mxu0
      %v5085 = vadd.f32 0.0, %v5084
      %5086 = vmatprep.mubr.bf16.mxu0 %v693
      %5087 = vmatmul.mubr.bf16.gmra.mrb[0].mxu0 %v692
      %v5088 = vpop.f32.mrb[0].mxu0
      %v5089 = vadd.f32 0.0, %v5088
      %v5090 = vpop.f32.mrb[0].mxu0
      %v5091 = vadd.f32 0.0, %v5090
      %v5092 = vpop.f32.mrb[0].mxu0
      %v5093 = vadd.f32 0.0, %v5092
      %v5094 = vpop.f32.mrb[0].mxu0
      %v5095 = vadd.f32 0.0, %v5094
      %5096 = vmatprep.mubr.bf16.mxu0 %v701
      %5097 = vmatmul.mubr.bf16.gmra.mrb[0].mxu0 %v700
      %v5098 = vpop.f32.mrb[0].mxu0
      %v5099 = vadd.f32 0.0, %v5098
      %v5100 = vpop.f32.mrb[0].mxu0
      %v5101 = vadd.f32 0.0, %v5100
      %v5102 = vpop.f32.mrb[0].mxu0
      %v5103 = vadd.f32 0.0, %v5102
      %v5104 = vpop.f32.mrb[0].mxu0
      %v5105 = vadd.f32 0.0, %v5104
      %5106 = vmatprep.mubr.bf16.mxu0 %v709
      %5107 = vmatmul.mubr.bf16.gmra.mrb[0].mxu0 %v708
      %v5108 = vpop.f32.mrb[0].mxu0
      %v5109 = vadd.f32 0.0, %v5108
      %v5110 = vpop.f32.mrb[0].mxu0
      %v5111 = vadd.f32 0.0, %v5110
      %v5112 = vpop.f32.mrb[0].mxu0
      %v5113 = vadd.f32 0.0, %v5112
      %v5114 = vpop.f32.mrb[0].mxu0
      %v5115 = vadd.f32 0.0, %v5114
      %5116 = vmatprep.mubr.bf16.mxu0 %v717
      %5117 = vmatmul.mubr.bf16.gmra.mrb[0].mxu0 %v716
      %v5118 = vpop.f32.mrb[0].mxu0
      %v5119 = vadd.f32 0.0, %v5118
      %v5120 = vpop.f32.mrb[0].mxu0
      %v5121 = vadd.f32 0.0, %v5120
      %v5122 = vpop.f32.mrb[0].mxu0
      %v5123 = vadd.f32 0.0, %v5122
      %v5124 = vpop.f32.mrb[0].mxu0
      %v5125 = vadd.f32 0.0, %v5124
      %5126 = vmatprep.mubr.bf16.mxu0 %v725
      %5127 = vmatmul.mubr.bf16.gmra.mrb[0].mxu0 %v724
      %v5128 = vpop.f32.mrb[0].mxu0
      %v5129 = vadd.f32 0.0, %v5128
      %v5130 = vpop.f32.mrb[0].mxu0
      %v5131 = vadd.f32 0.0, %v5130
      %v5132 = vpop.f32.mrb[0].mxu0
      %v5133 = vadd.f32 0.0, %v5132
      %v5134 = vpop.f32.mrb[0].mxu0
      %v5135 = vadd.f32 0.0, %v5134
      %5136 = vdwg.mxu0
      %5137 = vmatprep.subr.bf16.mxu0 %v3455
      %5138 = vmatpush1.bf16.msra.mxu0 %v3454
      %5139 = vmatprep.subr.bf16.mxu0 %v3465
      %5140 = vmatpush1.bf16.msra.mxu0 %v3464
      %5141 = vmatprep.subr.bf16.mxu0 %v3475
      %5142 = vmatpush1.bf16.msra.mxu0 %v3474
      %5143 = vmatprep.subr.bf16.mxu0 %v3485
      %5144 = vmatpush1.bf16.msra.mxu0 %v3484
      %5145 = vmatprep.subr.bf16.mxu0 %v3495
      %5146 = vmatpush1.bf16.msra.mxu0 %v3494
      %5147 = vmatprep.subr.bf16.mxu0 %v3505
      %5148 = vmatpush1.bf16.msra.mxu0 %v3504
      %5149 = vmatprep.subr.bf16.mxu0 %v3515
      %5150 = vmatpush1.bf16.msra.mxu0 %v3514
      %5151 = vmatprep.subr.bf16.mxu0 %v3525
      %5152 = vmatpush1.bf16.msra.mxu0 %v3524
      %5153 = vmatprep.subr.bf16.mxu0 %v3535
      %5154 = vmatpush1.bf16.msra.mxu0 %v3534
      %5155 = vmatprep.subr.bf16.mxu0 %v3545
      %5156 = vmatpush1.bf16.msra.mxu0 %v3544
      %5157 = vmatprep.subr.bf16.mxu0 %v3555
      %5158 = vmatpush1.bf16.msra.mxu0 %v3554
      %5159 = vmatprep.subr.bf16.mxu0 %v3565
      %5160 = vmatpush1.bf16.msra.mxu0 %v3564
      %5161 = vmatprep.subr.bf16.mxu0 %v3575
      %5162 = vmatpush1.bf16.msra.mxu0 %v3574
      %5163 = vmatprep.subr.bf16.mxu0 %v3585
      %5164 = vmatpush1.bf16.msra.mxu0 %v3584
      %5165 = vmatprep.subr.bf16.mxu0 %v3595
      %5166 = vmatpush1.bf16.msra.mxu0 %v3594
      %5167 = vmatprep.subr.bf16.mxu0 %v3605
      %5168 = vmatpush1.bf16.msra.mxu0 %v3604
      %5169 = vmatprep.mubr.bf16.mxu0 %v671
      %5170 = vmatmul.mubr.bf16.gmra.mrb[0].mxu0 %v670
      %v5171 = vpop.f32.mrb[0].mxu0
      %v5172 = vadd.f32 %v5059, %v5171
      %v5173 = vpop.f32.mrb[0].mxu0
      %v5174 = vadd.f32 %v5061, %v5173
      %v5175 = vpop.f32.mrb[0].mxu0
      %v5176 = vadd.f32 %v5063, %v5175
      %v5177 = vpop.f32.mrb[0].mxu0
      %v5178 = vadd.f32 %v5065, %v5177
      %5179 = vmatprep.mubr.bf16.mxu0 %v679
      %5180 = vmatmul.mubr.bf16.gmra.mrb[0].mxu0 %v678
      %v5181 = vpop.f32.mrb[0].mxu0
      %v5182 = vadd.f32 %v5069, %v5181
      %v5183 = vpop.f32.mrb[0].mxu0
      %v5184 = vadd.f32 %v5071, %v5183
      %v5185 = vpop.f32.mrb[0].mxu0
      %v5186 = vadd.f32 %v5073, %v5185
      %v5187 = vpop.f32.mrb[0].mxu0
      %v5188 = vadd.f32 %v5075, %v5187
      %5189 = vmatprep.mubr.bf16.mxu0 %v687
      %5190 = vmatmul.mubr.bf16.gmra.mrb[0].mxu0 %v686
      %v5191 = vpop.f32.mrb[0].mxu0
      %v5192 = vadd.f32 %v5079, %v5191
      %v5193 = vpop.f32.mrb[0].mxu0
      %v5194 = vadd.f32 %v5081, %v5193
      %v5195 = vpop.f32.mrb[0].mxu0
      %v5196 = vadd.f32 %v5083, %v5195
      %v5197 = vpop.f32.mrb[0].mxu0
      %v5198 = vadd.f32 %v5085, %v5197
      %5199 = vmatprep.mubr.bf16.mxu0 %v695
      %5200 = vmatmul.mubr.bf16.gmra.mrb[0].mxu0 %v694
      %v5201 = vpop.f32.mrb[0].mxu0
      %v5202 = vadd.f32 %v5089, %v5201
      %v5203 = vpop.f32.mrb[0].mxu0
      %v5204 = vadd.f32 %v5091, %v5203
      %v5205 = vpop.f32.mrb[0].mxu0
      %v5206 = vadd.f32 %v5093, %v5205
      %v5207 = vpop.f32.mrb[0].mxu0
      %v5208 = vadd.f32 %v5095, %v5207
      %5209 = vmatprep.mubr.bf16.mxu0 %v703
      %5210 = vmatmul.mubr.bf16.gmra.mrb[0].mxu0 %v702
      %v5211 = vpop.f32.mrb[0].mxu0
      %v5212 = vadd.f32 %v5099, %v5211
      %v5213 = vpop.f32.mrb[0].mxu0
      %v5214 = vadd.f32 %v5101, %v5213
      %v5215 = vpop.f32.mrb[0].mxu0
      %v5216 = vadd.f32 %v5103, %v5215
      %v5217 = vpop.f32.mrb[0].mxu0
      %v5218 = vadd.f32 %v5105, %v5217
      %5219 = vmatprep.mubr.bf16.mxu0 %v711
      %5220 = vmatmul.mubr.bf16.gmra.mrb[0].mxu0 %v710
      %v5221 = vpop.f32.mrb[0].mxu0
      %v5222 = vadd.f32 %v5109, %v5221
      %v5223 = vpop.f32.mrb[0].mxu0
      %v5224 = vadd.f32 %v5111, %v5223
      %v5225 = vpop.f32.mrb[0].mxu0
      %v5226 = vadd.f32 %v5113, %v5225
      %v5227 = vpop.f32.mrb[0].mxu0
      %v5228 = vadd.f32 %v5115, %v5227
      %5229 = vmatprep.mubr.bf16.mxu0 %v719
      %5230 = vmatmul.mubr.bf16.gmra.mrb[0].mxu0 %v718
      %v5231 = vpop.f32.mrb[0].mxu0
      %v5232 = vadd.f32 %v5119, %v5231
      %v5233 = vpop.f32.mrb[0].mxu0
      %v5234 = vadd.f32 %v5121, %v5233
      %v5235 = vpop.f32.mrb[0].mxu0
      %v5236 = vadd.f32 %v5123, %v5235
      %v5237 = vpop.f32.mrb[0].mxu0
      %v5238 = vadd.f32 %v5125, %v5237
      %5239 = vmatprep.mubr.bf16.mxu0 %v727
      %5240 = vmatmul.mubr.bf16.gmra.mrb[0].mxu0 %v726
      %v5241 = vpop.f32.mrb[0].mxu0
      %v5242 = vadd.f32 %v5129, %v5241
      %v5243 = vpop.f32.mrb[0].mxu0
      %v5244 = vadd.f32 %v5131, %v5243
      %v5245 = vpop.f32.mrb[0].mxu0
      %v5246 = vadd.f32 %v5133, %v5245
      %v5247 = vpop.f32.mrb[0].mxu0
      %v5248 = vadd.f32 %v5135, %v5247
      %5249 = vdwg.mxu0
      %5250 = vmatprep.subr.bf16.mxu0 %v3615
      %5251 = vmatpush1.bf16.msra.mxu0 %v3614
      %5252 = vmatprep.subr.bf16.mxu0 %v3625
      %5253 = vmatpush1.bf16.msra.mxu0 %v3624
      %5254 = vmatprep.subr.bf16.mxu0 %v3635
      %5255 = vmatpush1.bf16.msra.mxu0 %v3634
      %5256 = vmatprep.subr.bf16.mxu0 %v3645
      %5257 = vmatpush1.bf16.msra.mxu0 %v3644
      %5258 = vmatprep.subr.bf16.mxu0 %v3655
      %5259 = vmatpush1.bf16.msra.mxu0 %v3654
      %5260 = vmatprep.subr.bf16.mxu0 %v3665
      %5261 = vmatpush1.bf16.msra.mxu0 %v3664
      %5262 = vmatprep.subr.bf16.mxu0 %v3675
      %5263 = vmatpush1.bf16.msra.mxu0 %v3674
      %5264 = vmatprep.subr.bf16.mxu0 %v3685
      %5265 = vmatpush1.bf16.msra.mxu0 %v3684
      %5266 = vmatprep.subr.bf16.mxu0 %v3695
      %5267 = vmatpush1.bf16.msra.mxu0 %v3694
      %5268 = vmatprep.subr.bf16.mxu0 %v3705
      %5269 = vmatpush1.bf16.msra.mxu0 %v3704
      %5270 = vmatprep.subr.bf16.mxu0 %v3715
      %5271 = vmatpush1.bf16.msra.mxu0 %v3714
      %5272 = vmatprep.subr.bf16.mxu0 %v3725
      %5273 = vmatpush1.bf16.msra.mxu0 %v3724
      %5274 = vmatprep.subr.bf16.mxu0 %v3735
      %5275 = vmatpush1.bf16.msra.mxu0 %v3734
      %5276 = vmatprep.subr.bf16.mxu0 %v3745
      %5277 = vmatpush1.bf16.msra.mxu0 %v3744
      %5278 = vmatprep.subr.bf16.mxu0 %v3755
      %5279 = vmatpush1.bf16.msra.mxu0 %v3754
      %5280 = vmatprep.subr.bf16.mxu0 %v3765
      %5281 = vmatpush1.bf16.msra.mxu0 %v3764
      %5282 = vmatprep.mubr.bf16.mxu0 %v673
      %5283 = vmatmul.mubr.bf16.gmra.mrb[0].mxu0 %v672
      %v5284 = vpop.f32.mrb[0].mxu0
      %v5285 = vadd.f32 %v5172, %v5284
      %v5286 = vpop.f32.mrb[0].mxu0
      %v5287 = vadd.f32 %v5174, %v5286
      %v5288 = vpop.f32.mrb[0].mxu0
      %v5289 = vadd.f32 %v5176, %v5288
      %v5290 = vpop.f32.mrb[0].mxu0
      %v5291 = vadd.f32 %v5178, %v5290
      %5292 = vmatprep.mubr.bf16.mxu0 %v681
      %5293 = vmatmul.mubr.bf16.gmra.mrb[0].mxu0 %v680
      %v5294 = vpop.f32.mrb[0].mxu0
      %v5295 = vadd.f32 %v5182, %v5294
      %v5296 = vpop.f32.mrb[0].mxu0
      %v5297 = vadd.f32 %v5184, %v5296
      %v5298 = vpop.f32.mrb[0].mxu0
      %v5299 = vadd.f32 %v5186, %v5298
      %v5300 = vpop.f32.mrb[0].mxu0
      %v5301 = vadd.f32 %v5188, %v5300
      %5302 = vmatprep.mubr.bf16.mxu0 %v689
      %5303 = vmatmul.mubr.bf16.gmra.mrb[0].mxu0 %v688
      %v5304 = vpop.f32.mrb[0].mxu0
      %v5305 = vadd.f32 %v5192, %v5304
      %v5306 = vpop.f32.mrb[0].mxu0
      %v5307 = vadd.f32 %v5194, %v5306
      %v5308 = vpop.f32.mrb[0].mxu0
      %v5309 = vadd.f32 %v5196, %v5308
      %v5310 = vpop.f32.mrb[0].mxu0
      %v5311 = vadd.f32 %v5198, %v5310
      %5312 = vmatprep.mubr.bf16.mxu0 %v697
      %5313 = vmatmul.mubr.bf16.gmra.mrb[0].mxu0 %v696
      %v5314 = vpop.f32.mrb[0].mxu0
      %v5315 = vadd.f32 %v5202, %v5314
      %v5316 = vpop.f32.mrb[0].mxu0
      %v5317 = vadd.f32 %v5204, %v5316
      %v5318 = vpop.f32.mrb[0].mxu0
      %v5319 = vadd.f32 %v5206, %v5318
      %v5320 = vpop.f32.mrb[0].mxu0
      %v5321 = vadd.f32 %v5208, %v5320
      %5322 = vmatprep.mubr.bf16.mxu0 %v705
      %5323 = vmatmul.mubr.bf16.gmra.mrb[0].mxu0 %v704
      %v5324 = vpop.f32.mrb[0].mxu0
      %v5325 = vadd.f32 %v5212, %v5324
      %v5326 = vpop.f32.mrb[0].mxu0
      %v5327 = vadd.f32 %v5214, %v5326
      %v5328 = vpop.f32.mrb[0].mxu0
      %v5329 = vadd.f32 %v5216, %v5328
      %v5330 = vpop.f32.mrb[0].mxu0
      %v5331 = vadd.f32 %v5218, %v5330
      %5332 = vmatprep.mubr.bf16.mxu0 %v713
      %5333 = vmatmul.mubr.bf16.gmra.mrb[0].mxu0 %v712
      %v5334 = vpop.f32.mrb[0].mxu0
      %v5335 = vadd.f32 %v5222, %v5334
      %v5336 = vpop.f32.mrb[0].mxu0
      %v5337 = vadd.f32 %v5224, %v5336
      %v5338 = vpop.f32.mrb[0].mxu0
      %v5339 = vadd.f32 %v5226, %v5338
      %v5340 = vpop.f32.mrb[0].mxu0
      %v5341 = vadd.f32 %v5228, %v5340
      %5342 = vmatprep.mubr.bf16.mxu0 %v721
      %5343 = vmatmul.mubr.bf16.gmra.mrb[0].mxu0 %v720
      %v5344 = vpop.f32.mrb[0].mxu0
      %v5345 = vadd.f32 %v5232, %v5344
      %v5346 = vpop.f32.mrb[0].mxu0
      %v5347 = vadd.f32 %v5234, %v5346
      %v5348 = vpop.f32.mrb[0].mxu0
      %v5349 = vadd.f32 %v5236, %v5348
      %v5350 = vpop.f32.mrb[0].mxu0
      %v5351 = vadd.f32 %v5238, %v5350
      %5352 = vmatprep.mubr.bf16.mxu0 %v729
      %5353 = vmatmul.mubr.bf16.gmra.mrb[0].mxu0 %v728
      %v5354 = vpop.f32.mrb[0].mxu0
      %v5355 = vadd.f32 %v5242, %v5354
      %v5356 = vpop.f32.mrb[0].mxu0
      %v5357 = vadd.f32 %v5244, %v5356
      %v5358 = vpop.f32.mrb[0].mxu0
      %v5359 = vadd.f32 %v5246, %v5358
      %v5360 = vpop.f32.mrb[0].mxu0
      %v5361 = vadd.f32 %v5248, %v5360
      %5362 = vdwg.mxu0
      %5363 = vmatprep.subr.bf16.mxu0 %v3775
      %5364 = vmatpush1.bf16.msra.mxu0 %v3774
      %5365 = vmatprep.subr.bf16.mxu0 %v3785
      %5366 = vmatpush1.bf16.msra.mxu0 %v3784
      %5367 = vmatprep.subr.bf16.mxu0 %v3795
      %5368 = vmatpush1.bf16.msra.mxu0 %v3794
      %5369 = vmatprep.subr.bf16.mxu0 %v3805
      %5370 = vmatpush1.bf16.msra.mxu0 %v3804
      %5371 = vmatprep.subr.bf16.mxu0 %v3815
      %5372 = vmatpush1.bf16.msra.mxu0 %v3814
      %5373 = vmatprep.subr.bf16.mxu0 %v3825
      %5374 = vmatpush1.bf16.msra.mxu0 %v3824
      %5375 = vmatprep.subr.bf16.mxu0 %v3835
      %5376 = vmatpush1.bf16.msra.mxu0 %v3834
      %5377 = vmatprep.subr.bf16.mxu0 %v3845
      %5378 = vmatpush1.bf16.msra.mxu0 %v3844
      %5379 = vmatprep.subr.bf16.mxu0 %v3855
      %5380 = vmatpush1.bf16.msra.mxu0 %v3854
      %5381 = vmatprep.subr.bf16.mxu0 %v3865
      %5382 = vmatpush1.bf16.msra.mxu0 %v3864
      %5383 = vmatprep.subr.bf16.mxu0 %v3875
      %5384 = vmatpush1.bf16.msra.mxu0 %v3874
      %5385 = vmatprep.subr.bf16.mxu0 %v3885
      %5386 = vmatpush1.bf16.msra.mxu0 %v3884
      %5387 = vmatprep.subr.bf16.mxu0 %v3895
      %5388 = vmatpush1.bf16.msra.mxu0 %v3894
      %5389 = vmatprep.subr.bf16.mxu0 %v3905
      %5390 = vmatpush1.bf16.msra.mxu0 %v3904
      %5391 = vmatprep.subr.bf16.mxu0 %v3915
      %5392 = vmatpush1.bf16.msra.mxu0 %v3914
      %5393 = vmatprep.subr.bf16.mxu0 %v3925
      %5394 = vmatpush1.bf16.msra.mxu0 %v3924
      %5395 = vmatprep.mubr.bf16.mxu0 %v675
      %5396 = vmatmul.mubr.bf16.gmra.mrb[0].mxu0 %v674
      %v5397 = vpop.f32.mrb[0].mxu0
      %v5398 = vadd.f32 %v5285, %v5397
      %v5399 = vpop.f32.mrb[0].mxu0
      %v5400 = vadd.f32 %v5287, %v5399
      %v5401 = vpop.f32.mrb[0].mxu0
      %v5402 = vadd.f32 %v5289, %v5401
      %v5403 = vpop.f32.mrb[0].mxu0
      %v5404 = vadd.f32 %v5291, %v5403
      %5405 = vmatprep.mubr.bf16.mxu0 %v683
      %5406 = vmatmul.mubr.bf16.gmra.mrb[0].mxu0 %v682
      %v5407 = vpop.f32.mrb[0].mxu0
      %v5408 = vadd.f32 %v5295, %v5407
      %v5409 = vpop.f32.mrb[0].mxu0
      %v5410 = vadd.f32 %v5297, %v5409
      %v5411 = vpop.f32.mrb[0].mxu0
      %v5412 = vadd.f32 %v5299, %v5411
      %v5413 = vpop.f32.mrb[0].mxu0
      %v5414 = vadd.f32 %v5301, %v5413
      %5415 = vmatprep.mubr.bf16.mxu0 %v691
      %5416 = vmatmul.mubr.bf16.gmra.mrb[0].mxu0 %v690
      %v5417 = vpop.f32.mrb[0].mxu0
      %v5418 = vadd.f32 %v5305, %v5417
      %v5419 = vpop.f32.mrb[0].mxu0
      %v5420 = vadd.f32 %v5307, %v5419
      %v5421 = vpop.f32.mrb[0].mxu0
      %v5422 = vadd.f32 %v5309, %v5421
      %v5423 = vpop.f32.mrb[0].mxu0
      %v5424 = vadd.f32 %v5311, %v5423
      %5425 = vmatprep.mubr.bf16.mxu0 %v699
      %5426 = vmatmul.mubr.bf16.gmra.mrb[0].mxu0 %v698
      %v5427 = vpop.f32.mrb[0].mxu0
      %v5428 = vadd.f32 %v5315, %v5427
      %v5429 = vpop.f32.mrb[0].mxu0
      %v5430 = vadd.f32 %v5317, %v5429
      %v5431 = vpop.f32.mrb[0].mxu0
      %v5432 = vadd.f32 %v5319, %v5431
      %v5433 = vpop.f32.mrb[0].mxu0
      %v5434 = vadd.f32 %v5321, %v5433
      %5435 = vmatprep.mubr.bf16.mxu0 %v707
      %5436 = vmatmul.mubr.bf16.gmra.mrb[0].mxu0 %v706
      %v5437 = vpop.f32.mrb[0].mxu0
      %v5438 = vadd.f32 %v5325, %v5437
      %v5439 = vpop.f32.mrb[0].mxu0
      %v5440 = vadd.f32 %v5327, %v5439
      %v5441 = vpop.f32.mrb[0].mxu0
      %v5442 = vadd.f32 %v5329, %v5441
      %v5443 = vpop.f32.mrb[0].mxu0
      %v5444 = vadd.f32 %v5331, %v5443
      %5445 = vmatprep.mubr.bf16.mxu0 %v715
      %5446 = vmatmul.mubr.bf16.gmra.mrb[0].mxu0 %v714
      %v5447 = vpop.f32.mrb[0].mxu0
      %v5448 = vadd.f32 %v5335, %v5447
      %v5449 = vpop.f32.mrb[0].mxu0
      %v5450 = vadd.f32 %v5337, %v5449
      %v5451 = vpop.f32.mrb[0].mxu0
      %v5452 = vadd.f32 %v5339, %v5451
      %v5453 = vpop.f32.mrb[0].mxu0
      %v5454 = vadd.f32 %v5341, %v5453
      %5455 = vmatprep.mubr.bf16.mxu0 %v723
      %5456 = vmatmul.mubr.bf16.gmra.mrb[0].mxu0 %v722
      %v5457 = vpop.f32.mrb[0].mxu0
      %v5458 = vadd.f32 %v5345, %v5457
      %v5459 = vpop.f32.mrb[0].mxu0
      %v5460 = vadd.f32 %v5347, %v5459
      %v5461 = vpop.f32.mrb[0].mxu0
      %v5462 = vadd.f32 %v5349, %v5461
      %v5463 = vpop.f32.mrb[0].mxu0
      %v5464 = vadd.f32 %v5351, %v5463
      %5465 = vmatprep.mubr.bf16.mxu0 %v731
      %5466 = vmatmul.mubr.bf16.gmra.mrb[0].mxu0 %v730
      %v5467 = vpop.f32.mrb[0].mxu0
      %v5468 = vadd.f32 %v5355, %v5467
      %v5469 = vpop.f32.mrb[0].mxu0
      %v5470 = vadd.f32 %v5357, %v5469
      %v5471 = vpop.f32.mrb[0].mxu0
      %v5472 = vadd.f32 %v5359, %v5471
      %v5473 = vpop.f32.mrb[0].mxu0
      %v5474 = vadd.f32 %v5361, %v5473
      %5475 = vdwg.mxu0
      %5476 = vmatprep.subr.bf16.mxu0 %v3297
      %5477 = vmatpush1.bf16.msra.mxu0 %v3296
      %5478 = vmatprep.subr.bf16.mxu0 %v3307
      %5479 = vmatpush1.bf16.msra.mxu0 %v3306
      %5480 = vmatprep.subr.bf16.mxu0 %v3317
      %5481 = vmatpush1.bf16.msra.mxu0 %v3316
      %5482 = vmatprep.subr.bf16.mxu0 %v3327
      %5483 = vmatpush1.bf16.msra.mxu0 %v3326
      %5484 = vmatprep.subr.bf16.mxu0 %v3337
      %5485 = vmatpush1.bf16.msra.mxu0 %v3336
      %5486 = vmatprep.subr.bf16.mxu0 %v3347
      %5487 = vmatpush1.bf16.msra.mxu0 %v3346
      %5488 = vmatprep.subr.bf16.mxu0 %v3357
      %5489 = vmatpush1.bf16.msra.mxu0 %v3356
      %5490 = vmatprep.subr.bf16.mxu0 %v3367
      %5491 = vmatpush1.bf16.msra.mxu0 %v3366
      %5492 = vmatprep.subr.bf16.mxu0 %v3377
      %5493 = vmatpush1.bf16.msra.mxu0 %v3376
      %5494 = vmatprep.subr.bf16.mxu0 %v3387
      %5495 = vmatpush1.bf16.msra.mxu0 %v3386
      %5496 = vmatprep.subr.bf16.mxu0 %v3397
      %5497 = vmatpush1.bf16.msra.mxu0 %v3396
      %5498 = vmatprep.subr.bf16.mxu0 %v3407
      %5499 = vmatpush1.bf16.msra.mxu0 %v3406
      %5500 = vmatprep.subr.bf16.mxu0 %v3417
      %5501 = vmatpush1.bf16.msra.mxu0 %v3416
      %5502 = vmatprep.subr.bf16.mxu0 %v3427
      %5503 = vmatpush1.bf16.msra.mxu0 %v3426
      %5504 = vmatprep.subr.bf16.mxu0 %v3437
      %5505 = vmatpush1.bf16.msra.mxu0 %v3436
      %5506 = vmatprep.subr.bf16.mxu0 %v3447
      %5507 = vmatpush1.bf16.msra.mxu0 %v3446
      %5508 = vmatprep.mubr.bf16.mxu0 %v669
      %5509 = vmatmul.mubr.bf16.gmra.mrb[0].mxu0 %v668
      %v5510 = vpop.f32.mrb[0].mxu0
      %v5511 = vadd.f32 0.0, %v5510
      %v5512 = vpop.f32.mrb[0].mxu0
      %v5513 = vadd.f32 0.0, %v5512
      %v5514 = vpop.f32.mrb[0].mxu0
      %v5515 = vadd.f32 0.0, %v5514
      %v5516 = vpop.f32.mrb[0].mxu0
      %v5517 = vadd.f32 0.0, %v5516
      %5518 = vmatprep.mubr.bf16.mxu0 %v677
      %5519 = vmatmul.mubr.bf16.gmra.mrb[0].mxu0 %v676
      %v5520 = vpop.f32.mrb[0].mxu0
      %v5521 = vadd.f32 0.0, %v5520
      %v5522 = vpop.f32.mrb[0].mxu0
      %v5523 = vadd.f32 0.0, %v5522
      %v5524 = vpop.f32.mrb[0].mxu0
      %v5525 = vadd.f32 0.0, %v5524
      %v5526 = vpop.f32.mrb[0].mxu0
      %v5527 = vadd.f32 0.0, %v5526
      %5528 = vmatprep.mubr.bf16.mxu0 %v685
      %5529 = vmatmul.mubr.bf16.gmra.mrb[0].mxu0 %v684
      %v5530 = vpop.f32.mrb[0].mxu0
      %v5531 = vadd.f32 0.0, %v5530
      %v5532 = vpop.f32.mrb[0].mxu0
      %v5533 = vadd.f32 0.0, %v5532
      %v5534 = vpop.f32.mrb[0].mxu0
      %v5535 = vadd.f32 0.0, %v5534
      %v5536 = vpop.f32.mrb[0].mxu0
      %v5537 = vadd.f32 0.0, %v5536
      %5538 = vmatprep.mubr.bf16.mxu0 %v693
      %5539 = vmatmul.mubr.bf16.gmra.mrb[0].mxu0 %v692
      %v5540 = vpop.f32.mrb[0].mxu0
      %v5541 = vadd.f32 0.0, %v5540
      %v5542 = vpop.f32.mrb[0].mxu0
      %v5543 = vadd.f32 0.0, %v5542
      %v5544 = vpop.f32.mrb[0].mxu0
      %v5545 = vadd.f32 0.0, %v5544
      %v5546 = vpop.f32.mrb[0].mxu0
      %v5547 = vadd.f32 0.0, %v5546
      %5548 = vmatprep.mubr.bf16.mxu0 %v701
      %5549 = vmatmul.mubr.bf16.gmra.mrb[0].mxu0 %v700
      %v5550 = vpop.f32.mrb[0].mxu0
      %v5551 = vadd.f32 0.0, %v5550
      %v5552 = vpop.f32.mrb[0].mxu0
      %v5553 = vadd.f32 0.0, %v5552
      %v5554 = vpop.f32.mrb[0].mxu0
      %v5555 = vadd.f32 0.0, %v5554
      %v5556 = vpop.f32.mrb[0].mxu0
      %v5557 = vadd.f32 0.0, %v5556
      %5558 = vmatprep.mubr.bf16.mxu0 %v709
      %5559 = vmatmul.mubr.bf16.gmra.mrb[0].mxu0 %v708
      %v5560 = vpop.f32.mrb[0].mxu0
      %v5561 = vadd.f32 0.0, %v5560
      %v5562 = vpop.f32.mrb[0].mxu0
      %v5563 = vadd.f32 0.0, %v5562
      %v5564 = vpop.f32.mrb[0].mxu0
      %v5565 = vadd.f32 0.0, %v5564
      %v5566 = vpop.f32.mrb[0].mxu0
      %v5567 = vadd.f32 0.0, %v5566
      %5568 = vmatprep.mubr.bf16.mxu0 %v717
      %5569 = vmatmul.mubr.bf16.gmra.mrb[0].mxu0 %v716
      %v5570 = vpop.f32.mrb[0].mxu0
      %v5571 = vadd.f32 0.0, %v5570
      %v5572 = vpop.f32.mrb[0].mxu0
      %v5573 = vadd.f32 0.0, %v5572
      %v5574 = vpop.f32.mrb[0].mxu0
      %v5575 = vadd.f32 0.0, %v5574
      %v5576 = vpop.f32.mrb[0].mxu0
      %v5577 = vadd.f32 0.0, %v5576
      %5578 = vmatprep.mubr.bf16.mxu0 %v725
      %5579 = vmatmul.mubr.bf16.gmra.mrb[0].mxu0 %v724
      %v5580 = vpop.f32.mrb[0].mxu0
      %v5581 = vadd.f32 0.0, %v5580
      %v5582 = vpop.f32.mrb[0].mxu0
      %v5583 = vadd.f32 0.0, %v5582
      %v5584 = vpop.f32.mrb[0].mxu0
      %v5585 = vadd.f32 0.0, %v5584
      %v5586 = vpop.f32.mrb[0].mxu0
      %v5587 = vadd.f32 0.0, %v5586
      %5588 = vdwg.mxu0
      %5589 = vmatprep.subr.bf16.mxu0 %v3457
      %5590 = vmatpush1.bf16.msra.mxu0 %v3456
      %5591 = vmatprep.subr.bf16.mxu0 %v3467
      %5592 = vmatpush1.bf16.msra.mxu0 %v3466
      %5593 = vmatprep.subr.bf16.mxu0 %v3477
      %5594 = vmatpush1.bf16.msra.mxu0 %v3476
      %5595 = vmatprep.subr.bf16.mxu0 %v3487
      %5596 = vmatpush1.bf16.msra.mxu0 %v3486
      %5597 = vmatprep.subr.bf16.mxu0 %v3497
      %5598 = vmatpush1.bf16.msra.mxu0 %v3496
      %5599 = vmatprep.subr.bf16.mxu0 %v3507
      %5600 = vmatpush1.bf16.msra.mxu0 %v3506
      %5601 = vmatprep.subr.bf16.mxu0 %v3517
      %5602 = vmatpush1.bf16.msra.mxu0 %v3516
      %5603 = vmatprep.subr.bf16.mxu0 %v3527
      %5604 = vmatpush1.bf16.msra.mxu0 %v3526
      %5605 = vmatprep.subr.bf16.mxu0 %v3537
      %5606 = vmatpush1.bf16.msra.mxu0 %v3536
      %5607 = vmatprep.subr.bf16.mxu0 %v3547
      %5608 = vmatpush1.bf16.msra.mxu0 %v3546
      %5609 = vmatprep.subr.bf16.mxu0 %v3557
      %5610 = vmatpush1.bf16.msra.mxu0 %v3556
      %5611 = vmatprep.subr.bf16.mxu0 %v3567
      %5612 = vmatpush1.bf16.msra.mxu0 %v3566
      %5613 = vmatprep.subr.bf16.mxu0 %v3577
      %5614 = vmatpush1.bf16.msra.mxu0 %v3576
      %5615 = vmatprep.subr.bf16.mxu0 %v3587
      %5616 = vmatpush1.bf16.msra.mxu0 %v3586
      %5617 = vmatprep.subr.bf16.mxu0 %v3597
      %5618 = vmatpush1.bf16.msra.mxu0 %v3596
      %5619 = vmatprep.subr.bf16.mxu0 %v3607
      %5620 = vmatpush1.bf16.msra.mxu0 %v3606
      %5621 = vmatprep.mubr.bf16.mxu0 %v671
      %5622 = vmatmul.mubr.bf16.gmra.mrb[0].mxu0 %v670
      %v5623 = vpop.f32.mrb[0].mxu0
      %v5624 = vadd.f32 %v5511, %v5623
      %v5625 = vpop.f32.mrb[0].mxu0
      %v5626 = vadd.f32 %v5513, %v5625
      %v5627 = vpop.f32.mrb[0].mxu0
      %v5628 = vadd.f32 %v5515, %v5627
      %v5629 = vpop.f32.mrb[0].mxu0
      %v5630 = vadd.f32 %v5517, %v5629
      %5631 = vmatprep.mubr.bf16.mxu0 %v679
      %5632 = vmatmul.mubr.bf16.gmra.mrb[0].mxu0 %v678
      %v5633 = vpop.f32.mrb[0].mxu0
      %v5634 = vadd.f32 %v5521, %v5633
      %v5635 = vpop.f32.mrb[0].mxu0
      %v5636 = vadd.f32 %v5523, %v5635
      %v5637 = vpop.f32.mrb[0].mxu0
      %v5638 = vadd.f32 %v5525, %v5637
      %v5639 = vpop.f32.mrb[0].mxu0
      %v5640 = vadd.f32 %v5527, %v5639
      %5641 = vmatprep.mubr.bf16.mxu0 %v687
      %5642 = vmatmul.mubr.bf16.gmra.mrb[0].mxu0 %v686
      %v5643 = vpop.f32.mrb[0].mxu0
      %v5644 = vadd.f32 %v5531, %v5643
      %v5645 = vpop.f32.mrb[0].mxu0
      %v5646 = vadd.f32 %v5533, %v5645
      %v5647 = vpop.f32.mrb[0].mxu0
      %v5648 = vadd.f32 %v5535, %v5647
      %v5649 = vpop.f32.mrb[0].mxu0
      %v5650 = vadd.f32 %v5537, %v5649
      %5651 = vmatprep.mubr.bf16.mxu0 %v695
      %5652 = vmatmul.mubr.bf16.gmra.mrb[0].mxu0 %v694
      %v5653 = vpop.f32.mrb[0].mxu0
      %v5654 = vadd.f32 %v5541, %v5653
      %v5655 = vpop.f32.mrb[0].mxu0
      %v5656 = vadd.f32 %v5543, %v5655
      %v5657 = vpop.f32.mrb[0].mxu0
      %v5658 = vadd.f32 %v5545, %v5657
      %v5659 = vpop.f32.mrb[0].mxu0
      %v5660 = vadd.f32 %v5547, %v5659
      %5661 = vmatprep.mubr.bf16.mxu0 %v703
      %5662 = vmatmul.mubr.bf16.gmra.mrb[0].mxu0 %v702
      %v5663 = vpop.f32.mrb[0].mxu0
      %v5664 = vadd.f32 %v5551, %v5663
      %v5665 = vpop.f32.mrb[0].mxu0
      %v5666 = vadd.f32 %v5553, %v5665
      %v5667 = vpop.f32.mrb[0].mxu0
      %v5668 = vadd.f32 %v5555, %v5667
      %v5669 = vpop.f32.mrb[0].mxu0
      %v5670 = vadd.f32 %v5557, %v5669
      %5671 = vmatprep.mubr.bf16.mxu0 %v711
      %5672 = vmatmul.mubr.bf16.gmra.mrb[0].mxu0 %v710
      %v5673 = vpop.f32.mrb[0].mxu0
      %v5674 = vadd.f32 %v5561, %v5673
      %v5675 = vpop.f32.mrb[0].mxu0
      %v5676 = vadd.f32 %v5563, %v5675
      %v5677 = vpop.f32.mrb[0].mxu0
      %v5678 = vadd.f32 %v5565, %v5677
      %v5679 = vpop.f32.mrb[0].mxu0
      %v5680 = vadd.f32 %v5567, %v5679
      %5681 = vmatprep.mubr.bf16.mxu0 %v719
      %5682 = vmatmul.mubr.bf16.gmra.mrb[0].mxu0 %v718
      %v5683 = vpop.f32.mrb[0].mxu0
      %v5684 = vadd.f32 %v5571, %v5683
      %v5685 = vpop.f32.mrb[0].mxu0
      %v5686 = vadd.f32 %v5573, %v5685
      %v5687 = vpop.f32.mrb[0].mxu0
      %v5688 = vadd.f32 %v5575, %v5687
      %v5689 = vpop.f32.mrb[0].mxu0
      %v5690 = vadd.f32 %v5577, %v5689
      %5691 = vmatprep.mubr.bf16.mxu0 %v727
      %5692 = vmatmul.mubr.bf16.gmra.mrb[0].mxu0 %v726
      %v5693 = vpop.f32.mrb[0].mxu0
      %v5694 = vadd.f32 %v5581, %v5693
      %v5695 = vpop.f32.mrb[0].mxu0
      %v5696 = vadd.f32 %v5583, %v5695
      %v5697 = vpop.f32.mrb[0].mxu0
      %v5698 = vadd.f32 %v5585, %v5697
      %v5699 = vpop.f32.mrb[0].mxu0
      %v5700 = vadd.f32 %v5587, %v5699
      %5701 = vdwg.mxu0
      %5702 = vmatprep.subr.bf16.mxu0 %v3617
      %5703 = vmatpush1.bf16.msra.mxu0 %v3616
      %5704 = vmatprep.subr.bf16.mxu0 %v3627
      %5705 = vmatpush1.bf16.msra.mxu0 %v3626
      %5706 = vmatprep.subr.bf16.mxu0 %v3637
      %5707 = vmatpush1.bf16.msra.mxu0 %v3636
      %5708 = vmatprep.subr.bf16.mxu0 %v3647
      %5709 = vmatpush1.bf16.msra.mxu0 %v3646
      %5710 = vmatprep.subr.bf16.mxu0 %v3657
      %5711 = vmatpush1.bf16.msra.mxu0 %v3656
      %5712 = vmatprep.subr.bf16.mxu0 %v3667
      %5713 = vmatpush1.bf16.msra.mxu0 %v3666
      %5714 = vmatprep.subr.bf16.mxu0 %v3677
      %5715 = vmatpush1.bf16.msra.mxu0 %v3676
      %5716 = vmatprep.subr.bf16.mxu0 %v3687
      %5717 = vmatpush1.bf16.msra.mxu0 %v3686
      %5718 = vmatprep.subr.bf16.mxu0 %v3697
      %5719 = vmatpush1.bf16.msra.mxu0 %v3696
      %5720 = vmatprep.subr.bf16.mxu0 %v3707
      %5721 = vmatpush1.bf16.msra.mxu0 %v3706
      %5722 = vmatprep.subr.bf16.mxu0 %v3717
      %5723 = vmatpush1.bf16.msra.mxu0 %v3716
      %5724 = vmatprep.subr.bf16.mxu0 %v3727
      %5725 = vmatpush1.bf16.msra.mxu0 %v3726
      %5726 = vmatprep.subr.bf16.mxu0 %v3737
      %5727 = vmatpush1.bf16.msra.mxu0 %v3736
      %5728 = vmatprep.subr.bf16.mxu0 %v3747
      %5729 = vmatpush1.bf16.msra.mxu0 %v3746
      %5730 = vmatprep.subr.bf16.mxu0 %v3757
      %5731 = vmatpush1.bf16.msra.mxu0 %v3756
      %5732 = vmatprep.subr.bf16.mxu0 %v3767
      %5733 = vmatpush1.bf16.msra.mxu0 %v3766
      %5734 = vmatprep.mubr.bf16.mxu0 %v673
      %5735 = vmatmul.mubr.bf16.gmra.mrb[0].mxu0 %v672
      %v5736 = vpop.f32.mrb[0].mxu0
      %v5737 = vadd.f32 %v5624, %v5736
      %v5738 = vpop.f32.mrb[0].mxu0
      %v5739 = vadd.f32 %v5626, %v5738
      %v5740 = vpop.f32.mrb[0].mxu0
      %v5741 = vadd.f32 %v5628, %v5740
      %v5742 = vpop.f32.mrb[0].mxu0
      %v5743 = vadd.f32 %v5630, %v5742
      %5744 = vmatprep.mubr.bf16.mxu0 %v681
      %5745 = vmatmul.mubr.bf16.gmra.mrb[0].mxu0 %v680
      %v5746 = vpop.f32.mrb[0].mxu0
      %v5747 = vadd.f32 %v5634, %v5746
      %v5748 = vpop.f32.mrb[0].mxu0
      %v5749 = vadd.f32 %v5636, %v5748
      %v5750 = vpop.f32.mrb[0].mxu0
      %v5751 = vadd.f32 %v5638, %v5750
      %v5752 = vpop.f32.mrb[0].mxu0
      %v5753 = vadd.f32 %v5640, %v5752
      %5754 = vmatprep.mubr.bf16.mxu0 %v689
      %5755 = vmatmul.mubr.bf16.gmra.mrb[0].mxu0 %v688
      %v5756 = vpop.f32.mrb[0].mxu0
      %v5757 = vadd.f32 %v5644, %v5756
      %v5758 = vpop.f32.mrb[0].mxu0
      %v5759 = vadd.f32 %v5646, %v5758
      %v5760 = vpop.f32.mrb[0].mxu0
      %v5761 = vadd.f32 %v5648, %v5760
      %v5762 = vpop.f32.mrb[0].mxu0
      %v5763 = vadd.f32 %v5650, %v5762
      %5764 = vmatprep.mubr.bf16.mxu0 %v697
      %5765 = vmatmul.mubr.bf16.gmra.mrb[0].mxu0 %v696
      %v5766 = vpop.f32.mrb[0].mxu0
      %v5767 = vadd.f32 %v5654, %v5766
      %v5768 = vpop.f32.mrb[0].mxu0
      %v5769 = vadd.f32 %v5656, %v5768
      %v5770 = vpop.f32.mrb[0].mxu0
      %v5771 = vadd.f32 %v5658, %v5770
      %v5772 = vpop.f32.mrb[0].mxu0
      %v5773 = vadd.f32 %v5660, %v5772
      %5774 = vmatprep.mubr.bf16.mxu0 %v705
      %5775 = vmatmul.mubr.bf16.gmra.mrb[0].mxu0 %v704
      %v5776 = vpop.f32.mrb[0].mxu0
      %v5777 = vadd.f32 %v5664, %v5776
      %v5778 = vpop.f32.mrb[0].mxu0
      %v5779 = vadd.f32 %v5666, %v5778
      %v5780 = vpop.f32.mrb[0].mxu0
      %v5781 = vadd.f32 %v5668, %v5780
      %v5782 = vpop.f32.mrb[0].mxu0
      %v5783 = vadd.f32 %v5670, %v5782
      %5784 = vmatprep.mubr.bf16.mxu0 %v713
      %5785 = vmatmul.mubr.bf16.gmra.mrb[0].mxu0 %v712
      %v5786 = vpop.f32.mrb[0].mxu0
      %v5787 = vadd.f32 %v5674, %v5786
      %v5788 = vpop.f32.mrb[0].mxu0
      %v5789 = vadd.f32 %v5676, %v5788
      %v5790 = vpop.f32.mrb[0].mxu0
      %v5791 = vadd.f32 %v5678, %v5790
      %v5792 = vpop.f32.mrb[0].mxu0
      %v5793 = vadd.f32 %v5680, %v5792
      %5794 = vmatprep.mubr.bf16.mxu0 %v721
      %5795 = vmatmul.mubr.bf16.gmra.mrb[0].mxu0 %v720
      %v5796 = vpop.f32.mrb[0].mxu0
      %v5797 = vadd.f32 %v5684, %v5796
      %v5798 = vpop.f32.mrb[0].mxu0
      %v5799 = vadd.f32 %v5686, %v5798
      %v5800 = vpop.f32.mrb[0].mxu0
      %v5801 = vadd.f32 %v5688, %v5800
      %v5802 = vpop.f32.mrb[0].mxu0
      %v5803 = vadd.f32 %v5690, %v5802
      %5804 = vmatprep.mubr.bf16.mxu0 %v729
      %5805 = vmatmul.mubr.bf16.gmra.mrb[0].mxu0 %v728
      %v5806 = vpop.f32.mrb[0].mxu0
      %v5807 = vadd.f32 %v5694, %v5806
      %v5808 = vpop.f32.mrb[0].mxu0
      %v5809 = vadd.f32 %v5696, %v5808
      %v5810 = vpop.f32.mrb[0].mxu0
      %v5811 = vadd.f32 %v5698, %v5810
      %v5812 = vpop.f32.mrb[0].mxu0
      %v5813 = vadd.f32 %v5700, %v5812
      %5814 = vdwg.mxu0
      %5815 = vmatprep.subr.bf16.mxu0 %v3777
      %5816 = vmatpush1.bf16.msra.mxu0 %v3776
      %5817 = vmatprep.subr.bf16.mxu0 %v3787
      %5818 = vmatpush1.bf16.msra.mxu0 %v3786
      %5819 = vmatprep.subr.bf16.mxu0 %v3797
      %5820 = vmatpush1.bf16.msra.mxu0 %v3796
      %5821 = vmatprep.subr.bf16.mxu0 %v3807
      %5822 = vmatpush1.bf16.msra.mxu0 %v3806
      %5823 = vmatprep.subr.bf16.mxu0 %v3817
      %5824 = vmatpush1.bf16.msra.mxu0 %v3816
      %5825 = vmatprep.subr.bf16.mxu0 %v3827
      %5826 = vmatpush1.bf16.msra.mxu0 %v3826
      %5827 = vmatprep.subr.bf16.mxu0 %v3837
      %5828 = vmatpush1.bf16.msra.mxu0 %v3836
      %5829 = vmatprep.subr.bf16.mxu0 %v3847
      %5830 = vmatpush1.bf16.msra.mxu0 %v3846
      %5831 = vmatprep.subr.bf16.mxu0 %v3857
      %5832 = vmatpush1.bf16.msra.mxu0 %v3856
      %5833 = vmatprep.subr.bf16.mxu0 %v3867
      %5834 = vmatpush1.bf16.msra.mxu0 %v3866
      %5835 = vmatprep.subr.bf16.mxu0 %v3877
      %5836 = vmatpush1.bf16.msra.mxu0 %v3876
      %5837 = vmatprep.subr.bf16.mxu0 %v3887
      %5838 = vmatpush1.bf16.msra.mxu0 %v3886
      %5839 = vmatprep.subr.bf16.mxu0 %v3897
      %5840 = vmatpush1.bf16.msra.mxu0 %v3896
      %5841 = vmatprep.subr.bf16.mxu0 %v3907
      %5842 = vmatpush1.bf16.msra.mxu0 %v3906
      %5843 = vmatprep.subr.bf16.mxu0 %v3917
      %5844 = vmatpush1.bf16.msra.mxu0 %v3916
      %5845 = vmatprep.subr.bf16.mxu0 %v3927
      %5846 = vmatpush1.bf16.msra.mxu0 %v3926
      %5847 = vmatprep.mubr.bf16.mxu0 %v675
      %5848 = vmatmul.mubr.bf16.gmra.mrb[0].mxu0 %v674
      %v5849 = vpop.f32.mrb[0].mxu0
      %v5850 = vadd.f32 %v5737, %v5849
      %v5851 = vpop.f32.mrb[0].mxu0
      %v5852 = vadd.f32 %v5739, %v5851
      %v5853 = vpop.f32.mrb[0].mxu0
      %v5854 = vadd.f32 %v5741, %v5853
      %v5855 = vpop.f32.mrb[0].mxu0
      %v5856 = vadd.f32 %v5743, %v5855
      %5857 = vmatprep.mubr.bf16.mxu0 %v683
      %5858 = vmatmul.mubr.bf16.gmra.mrb[0].mxu0 %v682
      %v5859 = vpop.f32.mrb[0].mxu0
      %v5860 = vadd.f32 %v5747, %v5859
      %v5861 = vpop.f32.mrb[0].mxu0
      %v5862 = vadd.f32 %v5749, %v5861
      %v5863 = vpop.f32.mrb[0].mxu0
      %v5864 = vadd.f32 %v5751, %v5863
      %v5865 = vpop.f32.mrb[0].mxu0
      %v5866 = vadd.f32 %v5753, %v5865
      %5867 = vmatprep.mubr.bf16.mxu0 %v691
      %5868 = vmatmul.mubr.bf16.gmra.mrb[0].mxu0 %v690
      %v5869 = vpop.f32.mrb[0].mxu0
      %v5870 = vadd.f32 %v5757, %v5869
      %v5871 = vpop.f32.mrb[0].mxu0
      %v5872 = vadd.f32 %v5759, %v5871
      %v5873 = vpop.f32.mrb[0].mxu0
      %v5874 = vadd.f32 %v5761, %v5873
      %v5875 = vpop.f32.mrb[0].mxu0
      %v5876 = vadd.f32 %v5763, %v5875
      %5877 = vmatprep.mubr.bf16.mxu0 %v699
      %5878 = vmatmul.mubr.bf16.gmra.mrb[0].mxu0 %v698
      %v5879 = vpop.f32.mrb[0].mxu0
      %v5880 = vadd.f32 %v5767, %v5879
      %v5881 = vpop.f32.mrb[0].mxu0
      %v5882 = vadd.f32 %v5769, %v5881
      %v5883 = vpop.f32.mrb[0].mxu0
      %v5884 = vadd.f32 %v5771, %v5883
      %v5885 = vpop.f32.mrb[0].mxu0
      %v5886 = vadd.f32 %v5773, %v5885
      %5887 = vmatprep.mubr.bf16.mxu0 %v707
      %5888 = vmatmul.mubr.bf16.gmra.mrb[0].mxu0 %v706
      %v5889 = vpop.f32.mrb[0].mxu0
      %v5890 = vadd.f32 %v5777, %v5889
      %v5891 = vpop.f32.mrb[0].mxu0
      %v5892 = vadd.f32 %v5779, %v5891
      %v5893 = vpop.f32.mrb[0].mxu0
      %v5894 = vadd.f32 %v5781, %v5893
      %v5895 = vpop.f32.mrb[0].mxu0
      %v5896 = vadd.f32 %v5783, %v5895
      %5897 = vmatprep.mubr.bf16.mxu0 %v715
      %5898 = vmatmul.mubr.bf16.gmra.mrb[0].mxu0 %v714
      %v5899 = vpop.f32.mrb[0].mxu0
      %v5900 = vadd.f32 %v5787, %v5899
      %v5901 = vpop.f32.mrb[0].mxu0
      %v5902 = vadd.f32 %v5789, %v5901
      %v5903 = vpop.f32.mrb[0].mxu0
      %v5904 = vadd.f32 %v5791, %v5903
      %v5905 = vpop.f32.mrb[0].mxu0
      %v5906 = vadd.f32 %v5793, %v5905
      %5907 = vmatprep.mubr.bf16.mxu0 %v723
      %5908 = vmatmul.mubr.bf16.gmra.mrb[0].mxu0 %v722
      %v5909 = vpop.f32.mrb[0].mxu0
      %v5910 = vadd.f32 %v5797, %v5909
      %v5911 = vpop.f32.mrb[0].mxu0
      %v5912 = vadd.f32 %v5799, %v5911
      %v5913 = vpop.f32.mrb[0].mxu0
      %v5914 = vadd.f32 %v5801, %v5913
      %v5915 = vpop.f32.mrb[0].mxu0
      %v5916 = vadd.f32 %v5803, %v5915
      %5917 = vmatprep.mubr.bf16.mxu0 %v731
      %5918 = vmatmul.mubr.bf16.gmra.mrb[0].mxu0 %v730
      %v5919 = vpop.f32.mrb[0].mxu0
      %v5920 = vadd.f32 %v5807, %v5919
      %v5921 = vpop.f32.mrb[0].mxu0
      %v5922 = vadd.f32 %v5809, %v5921
      %v5923 = vpop.f32.mrb[0].mxu0
      %v5924 = vadd.f32 %v5811, %v5923
      %v5925 = vpop.f32.mrb[0].mxu0
      %v5926 = vadd.f32 %v5813, %v5925
      %5927 = vdwg.mxu0
      %5928 = vmatprep.subr.bf16.mxu0 %v3299
      %5929 = vmatpush1.bf16.msra.mxu0 %v3298
      %5930 = vmatprep.subr.bf16.mxu0 %v3309
      %5931 = vmatpush1.bf16.msra.mxu0 %v3308
      %5932 = vmatprep.subr.bf16.mxu0 %v3319
      %5933 = vmatpush1.bf16.msra.mxu0 %v3318
      %5934 = vmatprep.subr.bf16.mxu0 %v3329
      %5935 = vmatpush1.bf16.msra.mxu0 %v3328
      %5936 = vmatprep.subr.bf16.mxu0 %v3339
      %5937 = vmatpush1.bf16.msra.mxu0 %v3338
      %5938 = vmatprep.subr.bf16.mxu0 %v3349
      %5939 = vmatpush1.bf16.msra.mxu0 %v3348
      %5940 = vmatprep.subr.bf16.mxu0 %v3359
      %5941 = vmatpush1.bf16.msra.mxu0 %v3358
      %5942 = vmatprep.subr.bf16.mxu0 %v3369
      %5943 = vmatpush1.bf16.msra.mxu0 %v3368
      %5944 = vmatprep.subr.bf16.mxu0 %v3379
      %5945 = vmatpush1.bf16.msra.mxu0 %v3378
      %5946 = vmatprep.subr.bf16.mxu0 %v3389
      %5947 = vmatpush1.bf16.msra.mxu0 %v3388
      %5948 = vmatprep.subr.bf16.mxu0 %v3399
      %5949 = vmatpush1.bf16.msra.mxu0 %v3398
      %5950 = vmatprep.subr.bf16.mxu0 %v3409
      %5951 = vmatpush1.bf16.msra.mxu0 %v3408
      %5952 = vmatprep.subr.bf16.mxu0 %v3419
      %5953 = vmatpush1.bf16.msra.mxu0 %v3418
      %5954 = vmatprep.subr.bf16.mxu0 %v3429
      %5955 = vmatpush1.bf16.msra.mxu0 %v3428
      %5956 = vmatprep.subr.bf16.mxu0 %v3439
      %5957 = vmatpush1.bf16.msra.mxu0 %v3438
      %5958 = vmatprep.subr.bf16.mxu0 %v3449
      %5959 = vmatpush1.bf16.msra.mxu0 %v3448
      %5960 = vmatprep.mubr.bf16.mxu0 %v669
      %5961 = vmatmul.mubr.bf16.gmra.mrb[0].mxu0 %v668
      %v5962 = vpop.f32.mrb[0].mxu0
      %v5963 = vadd.f32 0.0, %v5962
      %v5964 = vpop.f32.mrb[0].mxu0
      %v5965 = vadd.f32 0.0, %v5964
      %v5966 = vpop.f32.mrb[0].mxu0
      %v5967 = vadd.f32 0.0, %v5966
      %v5968 = vpop.f32.mrb[0].mxu0
      %v5969 = vadd.f32 0.0, %v5968
      %5970 = vmatprep.mubr.bf16.mxu0 %v677
      %5971 = vmatmul.mubr.bf16.gmra.mrb[0].mxu0 %v676
      %v5972 = vpop.f32.mrb[0].mxu0
      %v5973 = vadd.f32 0.0, %v5972
      %v5974 = vpop.f32.mrb[0].mxu0
      %v5975 = vadd.f32 0.0, %v5974
      %v5976 = vpop.f32.mrb[0].mxu0
      %v5977 = vadd.f32 0.0, %v5976
      %v5978 = vpop.f32.mrb[0].mxu0
      %v5979 = vadd.f32 0.0, %v5978
      %5980 = vmatprep.mubr.bf16.mxu0 %v685
      %5981 = vmatmul.mubr.bf16.gmra.mrb[0].mxu0 %v684
      %v5982 = vpop.f32.mrb[0].mxu0
      %v5983 = vadd.f32 0.0, %v5982
      %v5984 = vpop.f32.mrb[0].mxu0
      %v5985 = vadd.f32 0.0, %v5984
      %v5986 = vpop.f32.mrb[0].mxu0
      %v5987 = vadd.f32 0.0, %v5986
      %v5988 = vpop.f32.mrb[0].mxu0
      %v5989 = vadd.f32 0.0, %v5988
      %5990 = vmatprep.mubr.bf16.mxu0 %v693
      %5991 = vmatmul.mubr.bf16.gmra.mrb[0].mxu0 %v692
      %v5992 = vpop.f32.mrb[0].mxu0
      %v5993 = vadd.f32 0.0, %v5992
      %v5994 = vpop.f32.mrb[0].mxu0
      %v5995 = vadd.f32 0.0, %v5994
      %v5996 = vpop.f32.mrb[0].mxu0
      %v5997 = vadd.f32 0.0, %v5996
      %v5998 = vpop.f32.mrb[0].mxu0
      %v5999 = vadd.f32 0.0, %v5998
      %6000 = vmatprep.mubr.bf16.mxu0 %v701
      %6001 = vmatmul.mubr.bf16.gmra.mrb[0].mxu0 %v700
      %v6002 = vpop.f32.mrb[0].mxu0
      %v6003 = vadd.f32 0.0, %v6002
      %v6004 = vpop.f32.mrb[0].mxu0
      %v6005 = vadd.f32 0.0, %v6004
      %v6006 = vpop.f32.mrb[0].mxu0
      %v6007 = vadd.f32 0.0, %v6006
      %v6008 = vpop.f32.mrb[0].mxu0
      %v6009 = vadd.f32 0.0, %v6008
      %6010 = vmatprep.mubr.bf16.mxu0 %v709
      %6011 = vmatmul.mubr.bf16.gmra.mrb[0].mxu0 %v708
      %v6012 = vpop.f32.mrb[0].mxu0
      %v6013 = vadd.f32 0.0, %v6012
      %v6014 = vpop.f32.mrb[0].mxu0
      %v6015 = vadd.f32 0.0, %v6014
      %v6016 = vpop.f32.mrb[0].mxu0
      %v6017 = vadd.f32 0.0, %v6016
      %v6018 = vpop.f32.mrb[0].mxu0
      %v6019 = vadd.f32 0.0, %v6018
      %6020 = vmatprep.mubr.bf16.mxu0 %v717
      %6021 = vmatmul.mubr.bf16.gmra.mrb[0].mxu0 %v716
      %v6022 = vpop.f32.mrb[0].mxu0
      %v6023 = vadd.f32 0.0, %v6022
      %v6024 = vpop.f32.mrb[0].mxu0
      %v6025 = vadd.f32 0.0, %v6024
      %v6026 = vpop.f32.mrb[0].mxu0
      %v6027 = vadd.f32 0.0, %v6026
      %v6028 = vpop.f32.mrb[0].mxu0
      %v6029 = vadd.f32 0.0, %v6028
      %6030 = vmatprep.mubr.bf16.mxu0 %v725
      %6031 = vmatmul.mubr.bf16.gmra.mrb[0].mxu0 %v724
      %v6032 = vpop.f32.mrb[0].mxu0
      %v6033 = vadd.f32 0.0, %v6032
      %v6034 = vpop.f32.mrb[0].mxu0
      %v6035 = vadd.f32 0.0, %v6034
      %v6036 = vpop.f32.mrb[0].mxu0
      %v6037 = vadd.f32 0.0, %v6036
      %v6038 = vpop.f32.mrb[0].mxu0
      %v6039 = vadd.f32 0.0, %v6038
      %6040 = vdwg.mxu0
      %6041 = vmatprep.subr.bf16.mxu0 %v3459
      %6042 = vmatpush1.bf16.msra.mxu0 %v3458
      %6043 = vmatprep.subr.bf16.mxu0 %v3469
      %6044 = vmatpush1.bf16.msra.mxu0 %v3468
      %6045 = vmatprep.subr.bf16.mxu0 %v3479
      %6046 = vmatpush1.bf16.msra.mxu0 %v3478
      %6047 = vmatprep.subr.bf16.mxu0 %v3489
      %6048 = vmatpush1.bf16.msra.mxu0 %v3488
      %6049 = vmatprep.subr.bf16.mxu0 %v3499
      %6050 = vmatpush1.bf16.msra.mxu0 %v3498
      %6051 = vmatprep.subr.bf16.mxu0 %v3509
      %6052 = vmatpush1.bf16.msra.mxu0 %v3508
      %6053 = vmatprep.subr.bf16.mxu0 %v3519
      %6054 = vmatpush1.bf16.msra.mxu0 %v3518
      %6055 = vmatprep.subr.bf16.mxu0 %v3529
      %6056 = vmatpush1.bf16.msra.mxu0 %v3528
      %6057 = vmatprep.subr.bf16.mxu0 %v3539
      %6058 = vmatpush1.bf16.msra.mxu0 %v3538
      %6059 = vmatprep.subr.bf16.mxu0 %v3549
      %6060 = vmatpush1.bf16.msra.mxu0 %v3548
      %6061 = vmatprep.subr.bf16.mxu0 %v3559
      %6062 = vmatpush1.bf16.msra.mxu0 %v3558
      %6063 = vmatprep.subr.bf16.mxu0 %v3569
      %6064 = vmatpush1.bf16.msra.mxu0 %v3568
      %6065 = vmatprep.subr.bf16.mxu0 %v3579
      %6066 = vmatpush1.bf16.msra.mxu0 %v3578
      %6067 = vmatprep.subr.bf16.mxu0 %v3589
      %6068 = vmatpush1.bf16.msra.mxu0 %v3588
      %6069 = vmatprep.subr.bf16.mxu0 %v3599
      %6070 = vmatpush1.bf16.msra.mxu0 %v3598
      %6071 = vmatprep.subr.bf16.mxu0 %v3609
      %6072 = vmatpush1.bf16.msra.mxu0 %v3608
      %6073 = vmatprep.mubr.bf16.mxu0 %v671
      %6074 = vmatmul.mubr.bf16.gmra.mrb[0].mxu0 %v670
      %v6075 = vpop.f32.mrb[0].mxu0
      %v6076 = vadd.f32 %v5963, %v6075
      %v6077 = vpop.f32.mrb[0].mxu0
      %v6078 = vadd.f32 %v5965, %v6077
      %v6079 = vpop.f32.mrb[0].mxu0
      %v6080 = vadd.f32 %v5967, %v6079
      %v6081 = vpop.f32.mrb[0].mxu0
      %v6082 = vadd.f32 %v5969, %v6081
      %6083 = vmatprep.mubr.bf16.mxu0 %v679
      %6084 = vmatmul.mubr.bf16.gmra.mrb[0].mxu0 %v678
      %v6085 = vpop.f32.mrb[0].mxu0
      %v6086 = vadd.f32 %v5973, %v6085
      %v6087 = vpop.f32.mrb[0].mxu0
      %v6088 = vadd.f32 %v5975, %v6087
      %v6089 = vpop.f32.mrb[0].mxu0
      %v6090 = vadd.f32 %v5977, %v6089
      %v6091 = vpop.f32.mrb[0].mxu0
      %v6092 = vadd.f32 %v5979, %v6091
      %6093 = vmatprep.mubr.bf16.mxu0 %v687
      %6094 = vmatmul.mubr.bf16.gmra.mrb[0].mxu0 %v686
      %v6095 = vpop.f32.mrb[0].mxu0
      %v6096 = vadd.f32 %v5983, %v6095
      %v6097 = vpop.f32.mrb[0].mxu0
      %v6098 = vadd.f32 %v5985, %v6097
      %v6099 = vpop.f32.mrb[0].mxu0
      %v6100 = vadd.f32 %v5987, %v6099
      %v6101 = vpop.f32.mrb[0].mxu0
      %v6102 = vadd.f32 %v5989, %v6101
      %6103 = vmatprep.mubr.bf16.mxu0 %v695
      %6104 = vmatmul.mubr.bf16.gmra.mrb[0].mxu0 %v694
      %v6105 = vpop.f32.mrb[0].mxu0
      %v6106 = vadd.f32 %v5993, %v6105
      %v6107 = vpop.f32.mrb[0].mxu0
      %v6108 = vadd.f32 %v5995, %v6107
      %v6109 = vpop.f32.mrb[0].mxu0
      %v6110 = vadd.f32 %v5997, %v6109
      %v6111 = vpop.f32.mrb[0].mxu0
      %v6112 = vadd.f32 %v5999, %v6111
      %6113 = vmatprep.mubr.bf16.mxu0 %v703
      %6114 = vmatmul.mubr.bf16.gmra.mrb[0].mxu0 %v702
      %v6115 = vpop.f32.mrb[0].mxu0
      %v6116 = vadd.f32 %v6003, %v6115
      %v6117 = vpop.f32.mrb[0].mxu0
      %v6118 = vadd.f32 %v6005, %v6117
      %v6119 = vpop.f32.mrb[0].mxu0
      %v6120 = vadd.f32 %v6007, %v6119
      %v6121 = vpop.f32.mrb[0].mxu0
      %v6122 = vadd.f32 %v6009, %v6121
      %6123 = vmatprep.mubr.bf16.mxu0 %v711
      %6124 = vmatmul.mubr.bf16.gmra.mrb[0].mxu0 %v710
      %v6125 = vpop.f32.mrb[0].mxu0
      %v6126 = vadd.f32 %v6013, %v6125
      %v6127 = vpop.f32.mrb[0].mxu0
      %v6128 = vadd.f32 %v6015, %v6127
      %v6129 = vpop.f32.mrb[0].mxu0
      %v6130 = vadd.f32 %v6017, %v6129
      %v6131 = vpop.f32.mrb[0].mxu0
      %v6132 = vadd.f32 %v6019, %v6131
      %6133 = vmatprep.mubr.bf16.mxu0 %v719
      %6134 = vmatmul.mubr.bf16.gmra.mrb[0].mxu0 %v718
      %v6135 = vpop.f32.mrb[0].mxu0
      %v6136 = vadd.f32 %v6023, %v6135
      %v6137 = vpop.f32.mrb[0].mxu0
      %v6138 = vadd.f32 %v6025, %v6137
      %v6139 = vpop.f32.mrb[0].mxu0
      %v6140 = vadd.f32 %v6027, %v6139
      %v6141 = vpop.f32.mrb[0].mxu0
      %v6142 = vadd.f32 %v6029, %v6141
      %6143 = vmatprep.mubr.bf16.mxu0 %v727
      %6144 = vmatmul.mubr.bf16.gmra.mrb[0].mxu0 %v726
      %v6145 = vpop.f32.mrb[0].mxu0
      %v6146 = vadd.f32 %v6033, %v6145
      %v6147 = vpop.f32.mrb[0].mxu0
      %v6148 = vadd.f32 %v6035, %v6147
      %v6149 = vpop.f32.mrb[0].mxu0
      %v6150 = vadd.f32 %v6037, %v6149
      %v6151 = vpop.f32.mrb[0].mxu0
      %v6152 = vadd.f32 %v6039, %v6151
      %6153 = vdwg.mxu0
      %6154 = vmatprep.subr.bf16.mxu0 %v3619
      %6155 = vmatpush1.bf16.msra.mxu0 %v3618
      %6156 = vmatprep.subr.bf16.mxu0 %v3629
      %6157 = vmatpush1.bf16.msra.mxu0 %v3628
      %6158 = vmatprep.subr.bf16.mxu0 %v3639
      %6159 = vmatpush1.bf16.msra.mxu0 %v3638
      %6160 = vmatprep.subr.bf16.mxu0 %v3649
      %6161 = vmatpush1.bf16.msra.mxu0 %v3648
      %6162 = vmatprep.subr.bf16.mxu0 %v3659
      %6163 = vmatpush1.bf16.msra.mxu0 %v3658
      %6164 = vmatprep.subr.bf16.mxu0 %v3669
      %6165 = vmatpush1.bf16.msra.mxu0 %v3668
      %6166 = vmatprep.subr.bf16.mxu0 %v3679
      %6167 = vmatpush1.bf16.msra.mxu0 %v3678
      %6168 = vmatprep.subr.bf16.mxu0 %v3689
      %6169 = vmatpush1.bf16.msra.mxu0 %v3688
      %6170 = vmatprep.subr.bf16.mxu0 %v3699
      %6171 = vmatpush1.bf16.msra.mxu0 %v3698
      %6172 = vmatprep.subr.bf16.mxu0 %v3709
      %6173 = vmatpush1.bf16.msra.mxu0 %v3708
      %6174 = vmatprep.subr.bf16.mxu0 %v3719
      %6175 = vmatpush1.bf16.msra.mxu0 %v3718
      %6176 = vmatprep.subr.bf16.mxu0 %v3729
      %6177 = vmatpush1.bf16.msra.mxu0 %v3728
      %6178 = vmatprep.subr.bf16.mxu0 %v3739
      %6179 = vmatpush1.bf16.msra.mxu0 %v3738
      %6180 = vmatprep.subr.bf16.mxu0 %v3749
      %6181 = vmatpush1.bf16.msra.mxu0 %v3748
      %6182 = vmatprep.subr.bf16.mxu0 %v3759
      %6183 = vmatpush1.bf16.msra.mxu0 %v3758
      %6184 = vmatprep.subr.bf16.mxu0 %v3769
      %6185 = vmatpush1.bf16.msra.mxu0 %v3768
      %6186 = vmatprep.mubr.bf16.mxu0 %v673
      %6187 = vmatmul.mubr.bf16.gmra.mrb[0].mxu0 %v672
      %v6188 = vpop.f32.mrb[0].mxu0
      %v6189 = vadd.f32 %v6076, %v6188
      %v6190 = vpop.f32.mrb[0].mxu0
      %v6191 = vadd.f32 %v6078, %v6190
      %v6192 = vpop.f32.mrb[0].mxu0
      %v6193 = vadd.f32 %v6080, %v6192
      %v6194 = vpop.f32.mrb[0].mxu0
      %v6195 = vadd.f32 %v6082, %v6194
      %6196 = vmatprep.mubr.bf16.mxu0 %v681
      %6197 = vmatmul.mubr.bf16.gmra.mrb[0].mxu0 %v680
      %v6198 = vpop.f32.mrb[0].mxu0
      %v6199 = vadd.f32 %v6086, %v6198
      %v6200 = vpop.f32.mrb[0].mxu0
      %v6201 = vadd.f32 %v6088, %v6200
      %v6202 = vpop.f32.mrb[0].mxu0
      %v6203 = vadd.f32 %v6090, %v6202
      %v6204 = vpop.f32.mrb[0].mxu0
      %v6205 = vadd.f32 %v6092, %v6204
      %6206 = vmatprep.mubr.bf16.mxu0 %v689
      %6207 = vmatmul.mubr.bf16.gmra.mrb[0].mxu0 %v688
      %v6208 = vpop.f32.mrb[0].mxu0
      %v6209 = vadd.f32 %v6096, %v6208
      %v6210 = vpop.f32.mrb[0].mxu0
      %v6211 = vadd.f32 %v6098, %v6210
      %v6212 = vpop.f32.mrb[0].mxu0
      %v6213 = vadd.f32 %v6100, %v6212
      %v6214 = vpop.f32.mrb[0].mxu0
      %v6215 = vadd.f32 %v6102, %v6214
      %6216 = vmatprep.mubr.bf16.mxu0 %v697
      %6217 = vmatmul.mubr.bf16.gmra.mrb[0].mxu0 %v696
      %v6218 = vpop.f32.mrb[0].mxu0
      %v6219 = vadd.f32 %v6106, %v6218
      %v6220 = vpop.f32.mrb[0].mxu0
      %v6221 = vadd.f32 %v6108, %v6220
      %v6222 = vpop.f32.mrb[0].mxu0
      %v6223 = vadd.f32 %v6110, %v6222
      %v6224 = vpop.f32.mrb[0].mxu0
      %v6225 = vadd.f32 %v6112, %v6224
      %6226 = vmatprep.mubr.bf16.mxu0 %v705
      %6227 = vmatmul.mubr.bf16.gmra.mrb[0].mxu0 %v704
      %v6228 = vpop.f32.mrb[0].mxu0
      %v6229 = vadd.f32 %v6116, %v6228
      %v6230 = vpop.f32.mrb[0].mxu0
      %v6231 = vadd.f32 %v6118, %v6230
      %v6232 = vpop.f32.mrb[0].mxu0
      %v6233 = vadd.f32 %v6120, %v6232
      %v6234 = vpop.f32.mrb[0].mxu0
      %v6235 = vadd.f32 %v6122, %v6234
      %6236 = vmatprep.mubr.bf16.mxu0 %v713
      %6237 = vmatmul.mubr.bf16.gmra.mrb[0].mxu0 %v712
      %v6238 = vpop.f32.mrb[0].mxu0
      %v6239 = vadd.f32 %v6126, %v6238
      %v6240 = vpop.f32.mrb[0].mxu0
      %v6241 = vadd.f32 %v6128, %v6240
      %v6242 = vpop.f32.mrb[0].mxu0
      %v6243 = vadd.f32 %v6130, %v6242
      %v6244 = vpop.f32.mrb[0].mxu0
      %v6245 = vadd.f32 %v6132, %v6244
      %6246 = vmatprep.mubr.bf16.mxu0 %v721
      %6247 = vmatmul.mubr.bf16.gmra.mrb[0].mxu0 %v720
      %v6248 = vpop.f32.mrb[0].mxu0
      %v6249 = vadd.f32 %v6136, %v6248
      %v6250 = vpop.f32.mrb[0].mxu0
      %v6251 = vadd.f32 %v6138, %v6250
      %v6252 = vpop.f32.mrb[0].mxu0
      %v6253 = vadd.f32 %v6140, %v6252
      %v6254 = vpop.f32.mrb[0].mxu0
      %v6255 = vadd.f32 %v6142, %v6254
      %6256 = vmatprep.mubr.bf16.mxu0 %v729
      %6257 = vmatmul.mubr.bf16.gmra.mrb[0].mxu0 %v728
      %v6258 = vpop.f32.mrb[0].mxu0
      %v6259 = vadd.f32 %v6146, %v6258
      %v6260 = vpop.f32.mrb[0].mxu0
      %v6261 = vadd.f32 %v6148, %v6260
      %v6262 = vpop.f32.mrb[0].mxu0
      %v6263 = vadd.f32 %v6150, %v6262
      %v6264 = vpop.f32.mrb[0].mxu0
      %v6265 = vadd.f32 %v6152, %v6264
      %6266 = vdwg.mxu0
      %6267 = vmatprep.subr.bf16.mxu0 %v3779
      %6268 = vmatpush1.bf16.msra.mxu0 %v3778
      %6269 = vmatprep.subr.bf16.mxu0 %v3789
      %6270 = vmatpush1.bf16.msra.mxu0 %v3788
      %6271 = vmatprep.subr.bf16.mxu0 %v3799
      %6272 = vmatpush1.bf16.msra.mxu0 %v3798
      %6273 = vmatprep.subr.bf16.mxu0 %v3809
      %6274 = vmatpush1.bf16.msra.mxu0 %v3808
      %6275 = vmatprep.subr.bf16.mxu0 %v3819
      %6276 = vmatpush1.bf16.msra.mxu0 %v3818
      %6277 = vmatprep.subr.bf16.mxu0 %v3829
      %6278 = vmatpush1.bf16.msra.mxu0 %v3828
      %6279 = vmatprep.subr.bf16.mxu0 %v3839
      %6280 = vmatpush1.bf16.msra.mxu0 %v3838
      %6281 = vmatprep.subr.bf16.mxu0 %v3849
      %6282 = vmatpush1.bf16.msra.mxu0 %v3848
      %6283 = vmatprep.subr.bf16.mxu0 %v3859
      %6284 = vmatpush1.bf16.msra.mxu0 %v3858
      %6285 = vmatprep.subr.bf16.mxu0 %v3869
      %6286 = vmatpush1.bf16.msra.mxu0 %v3868
      %6287 = vmatprep.subr.bf16.mxu0 %v3879
      %6288 = vmatpush1.bf16.msra.mxu0 %v3878
      %6289 = vmatprep.subr.bf16.mxu0 %v3889
      %6290 = vmatpush1.bf16.msra.mxu0 %v3888
      %6291 = vmatprep.subr.bf16.mxu0 %v3899
      %6292 = vmatpush1.bf16.msra.mxu0 %v3898
      %6293 = vmatprep.subr.bf16.mxu0 %v3909
      %6294 = vmatpush1.bf16.msra.mxu0 %v3908
      %6295 = vmatprep.subr.bf16.mxu0 %v3919
      %6296 = vmatpush1.bf16.msra.mxu0 %v3918
      %6297 = vmatprep.subr.bf16.mxu0 %v3929
      %6298 = vmatpush1.bf16.msra.mxu0 %v3928
      %6299 = vmatprep.mubr.bf16.mxu0 %v675
      %6300 = vmatmul.mubr.bf16.gmra.mrb[0].mxu0 %v674
      %v6301 = vpop.f32.mrb[0].mxu0
      %v6302 = vadd.f32 %v6189, %v6301
      %v6303 = vpop.f32.mrb[0].mxu0
      %v6304 = vadd.f32 %v6191, %v6303
      %v6305 = vpop.f32.mrb[0].mxu0
      %v6306 = vadd.f32 %v6193, %v6305
      %v6307 = vpop.f32.mrb[0].mxu0
      %v6308 = vadd.f32 %v6195, %v6307
      %6309 = vmatprep.mubr.bf16.mxu0 %v683
      %6310 = vmatmul.mubr.bf16.gmra.mrb[0].mxu0 %v682
      %v6311 = vpop.f32.mrb[0].mxu0
      %v6312 = vadd.f32 %v6199, %v6311
      %v6313 = vpop.f32.mrb[0].mxu0
      %v6314 = vadd.f32 %v6201, %v6313
      %v6315 = vpop.f32.mrb[0].mxu0
      %v6316 = vadd.f32 %v6203, %v6315
      %v6317 = vpop.f32.mrb[0].mxu0
      %v6318 = vadd.f32 %v6205, %v6317
      %6319 = vmatprep.mubr.bf16.mxu0 %v691
      %6320 = vmatmul.mubr.bf16.gmra.mrb[0].mxu0 %v690
      %v6321 = vpop.f32.mrb[0].mxu0
      %v6322 = vadd.f32 %v6209, %v6321
      %v6323 = vpop.f32.mrb[0].mxu0
      %v6324 = vadd.f32 %v6211, %v6323
      %v6325 = vpop.f32.mrb[0].mxu0
      %v6326 = vadd.f32 %v6213, %v6325
      %v6327 = vpop.f32.mrb[0].mxu0
      %v6328 = vadd.f32 %v6215, %v6327
      %6329 = vmatprep.mubr.bf16.mxu0 %v699
      %6330 = vmatmul.mubr.bf16.gmra.mrb[0].mxu0 %v698
      %v6331 = vpop.f32.mrb[0].mxu0
      %v6332 = vadd.f32 %v6219, %v6331
      %v6333 = vpop.f32.mrb[0].mxu0
      %v6334 = vadd.f32 %v6221, %v6333
      %v6335 = vpop.f32.mrb[0].mxu0
      %v6336 = vadd.f32 %v6223, %v6335
      %v6337 = vpop.f32.mrb[0].mxu0
      %v6338 = vadd.f32 %v6225, %v6337
      %6339 = vmatprep.mubr.bf16.mxu0 %v707
      %6340 = vmatmul.mubr.bf16.gmra.mrb[0].mxu0 %v706
      %v6341 = vpop.f32.mrb[0].mxu0
      %v6342 = vadd.f32 %v6229, %v6341
      %v6343 = vpop.f32.mrb[0].mxu0
      %v6344 = vadd.f32 %v6231, %v6343
      %v6345 = vpop.f32.mrb[0].mxu0
      %v6346 = vadd.f32 %v6233, %v6345
      %v6347 = vpop.f32.mrb[0].mxu0
      %v6348 = vadd.f32 %v6235, %v6347
      %6349 = vmatprep.mubr.bf16.mxu0 %v715
      %6350 = vmatmul.mubr.bf16.gmra.mrb[0].mxu0 %v714
      %v6351 = vpop.f32.mrb[0].mxu0
      %v6352 = vadd.f32 %v6239, %v6351
      %v6353 = vpop.f32.mrb[0].mxu0
      %v6354 = vadd.f32 %v6241, %v6353
      %v6355 = vpop.f32.mrb[0].mxu0
      %v6356 = vadd.f32 %v6243, %v6355
      %v6357 = vpop.f32.mrb[0].mxu0
      %v6358 = vadd.f32 %v6245, %v6357
      %6359 = vmatprep.mubr.bf16.mxu0 %v723
      %6360 = vmatmul.mubr.bf16.gmra.mrb[0].mxu0 %v722
      %v6361 = vpop.f32.mrb[0].mxu0
      %v6362 = vadd.f32 %v6249, %v6361
      %v6363 = vpop.f32.mrb[0].mxu0
      %v6364 = vadd.f32 %v6251, %v6363
      %v6365 = vpop.f32.mrb[0].mxu0
      %v6366 = vadd.f32 %v6253, %v6365
      %v6367 = vpop.f32.mrb[0].mxu0
      %v6368 = vadd.f32 %v6255, %v6367
      %6369 = vmatprep.mubr.bf16.mxu0 %v731
      %6370 = vmatmul.mubr.bf16.gmra.mrb[0].mxu0 %v730
      %v6371 = vpop.f32.mrb[0].mxu0
      %v6372 = vadd.f32 %v6259, %v6371
      %v6373 = vpop.f32.mrb[0].mxu0
      %v6374 = vadd.f32 %v6261, %v6373
      %v6375 = vpop.f32.mrb[0].mxu0
      %v6376 = vadd.f32 %v6263, %v6375
      %v6377 = vpop.f32.mrb[0].mxu0
      %v6378 = vadd.f32 %v6265, %v6377
      %6379 = vdwg.mxu0
      %6380 = vmatprep.subr.bf16.mxu0 %v3301
      %6381 = vmatpush1.bf16.msra.mxu0 %v3300
      %6382 = vmatprep.subr.bf16.mxu0 %v3311
      %6383 = vmatpush1.bf16.msra.mxu0 %v3310
      %6384 = vmatprep.subr.bf16.mxu0 %v3321
      %6385 = vmatpush1.bf16.msra.mxu0 %v3320
      %6386 = vmatprep.subr.bf16.mxu0 %v3331
      %6387 = vmatpush1.bf16.msra.mxu0 %v3330
      %6388 = vmatprep.subr.bf16.mxu0 %v3341
      %6389 = vmatpush1.bf16.msra.mxu0 %v3340
      %6390 = vmatprep.subr.bf16.mxu0 %v3351
      %6391 = vmatpush1.bf16.msra.mxu0 %v3350
      %6392 = vmatprep.subr.bf16.mxu0 %v3361
      %6393 = vmatpush1.bf16.msra.mxu0 %v3360
      %6394 = vmatprep.subr.bf16.mxu0 %v3371
      %6395 = vmatpush1.bf16.msra.mxu0 %v3370
      %6396 = vmatprep.subr.bf16.mxu0 %v3381
      %6397 = vmatpush1.bf16.msra.mxu0 %v3380
      %6398 = vmatprep.subr.bf16.mxu0 %v3391
      %6399 = vmatpush1.bf16.msra.mxu0 %v3390
      %6400 = vmatprep.subr.bf16.mxu0 %v3401
      %6401 = vmatpush1.bf16.msra.mxu0 %v3400
      %6402 = vmatprep.subr.bf16.mxu0 %v3411
      %6403 = vmatpush1.bf16.msra.mxu0 %v3410
      %6404 = vmatprep.subr.bf16.mxu0 %v3421
      %6405 = vmatpush1.bf16.msra.mxu0 %v3420
      %6406 = vmatprep.subr.bf16.mxu0 %v3431
      %6407 = vmatpush1.bf16.msra.mxu0 %v3430
      %6408 = vmatprep.subr.bf16.mxu0 %v3441
      %6409 = vmatpush1.bf16.msra.mxu0 %v3440
      %6410 = vmatprep.subr.bf16.mxu0 %v3451
      %6411 = vmatpush1.bf16.msra.mxu0 %v3450
      %6412 = vmatprep.mubr.bf16.mxu0 %v669
      %6413 = vmatmul.mubr.bf16.gmra.mrb[0].mxu0 %v668
      %v6414 = vpop.f32.mrb[0].mxu0
      %v6415 = vadd.f32 0.0, %v6414
      %v6416 = vpop.f32.mrb[0].mxu0
      %v6417 = vadd.f32 0.0, %v6416
      %v6418 = vpop.f32.mrb[0].mxu0
      %v6419 = vadd.f32 0.0, %v6418
      %v6420 = vpop.f32.mrb[0].mxu0
      %v6421 = vadd.f32 0.0, %v6420
      %6422 = vmatprep.mubr.bf16.mxu0 %v677
      %6423 = vmatmul.mubr.bf16.gmra.mrb[0].mxu0 %v676
      %v6424 = vpop.f32.mrb[0].mxu0
      %v6425 = vadd.f32 0.0, %v6424
      %v6426 = vpop.f32.mrb[0].mxu0
      %v6427 = vadd.f32 0.0, %v6426
      %v6428 = vpop.f32.mrb[0].mxu0
      %v6429 = vadd.f32 0.0, %v6428
      %v6430 = vpop.f32.mrb[0].mxu0
      %v6431 = vadd.f32 0.0, %v6430
      %6432 = vmatprep.mubr.bf16.mxu0 %v685
      %6433 = vmatmul.mubr.bf16.gmra.mrb[0].mxu0 %v684
      %v6434 = vpop.f32.mrb[0].mxu0
      %v6435 = vadd.f32 0.0, %v6434
      %v6436 = vpop.f32.mrb[0].mxu0
      %v6437 = vadd.f32 0.0, %v6436
      %v6438 = vpop.f32.mrb[0].mxu0
      %v6439 = vadd.f32 0.0, %v6438
      %v6440 = vpop.f32.mrb[0].mxu0
      %v6441 = vadd.f32 0.0, %v6440
      %6442 = vmatprep.mubr.bf16.mxu0 %v693
      %6443 = vmatmul.mubr.bf16.gmra.mrb[0].mxu0 %v692
      %v6444 = vpop.f32.mrb[0].mxu0
      %v6445 = vadd.f32 0.0, %v6444
      %v6446 = vpop.f32.mrb[0].mxu0
      %v6447 = vadd.f32 0.0, %v6446
      %v6448 = vpop.f32.mrb[0].mxu0
      %v6449 = vadd.f32 0.0, %v6448
      %v6450 = vpop.f32.mrb[0].mxu0
      %v6451 = vadd.f32 0.0, %v6450
      %6452 = vmatprep.mubr.bf16.mxu0 %v701
      %6453 = vmatmul.mubr.bf16.gmra.mrb[0].mxu0 %v700
      %v6454 = vpop.f32.mrb[0].mxu0
      %v6455 = vadd.f32 0.0, %v6454
      %v6456 = vpop.f32.mrb[0].mxu0
      %v6457 = vadd.f32 0.0, %v6456
      %v6458 = vpop.f32.mrb[0].mxu0
      %v6459 = vadd.f32 0.0, %v6458
      %v6460 = vpop.f32.mrb[0].mxu0
      %v6461 = vadd.f32 0.0, %v6460
      %6462 = vmatprep.mubr.bf16.mxu0 %v709
      %6463 = vmatmul.mubr.bf16.gmra.mrb[0].mxu0 %v708
      %v6464 = vpop.f32.mrb[0].mxu0
      %v6465 = vadd.f32 0.0, %v6464
      %v6466 = vpop.f32.mrb[0].mxu0
      %v6467 = vadd.f32 0.0, %v6466
      %v6468 = vpop.f32.mrb[0].mxu0
      %v6469 = vadd.f32 0.0, %v6468
      %v6470 = vpop.f32.mrb[0].mxu0
      %v6471 = vadd.f32 0.0, %v6470
      %6472 = vmatprep.mubr.bf16.mxu0 %v717
      %6473 = vmatmul.mubr.bf16.gmra.mrb[0].mxu0 %v716
      %v6474 = vpop.f32.mrb[0].mxu0
      %v6475 = vadd.f32 0.0, %v6474
      %v6476 = vpop.f32.mrb[0].mxu0
      %v6477 = vadd.f32 0.0, %v6476
      %v6478 = vpop.f32.mrb[0].mxu0
      %v6479 = vadd.f32 0.0, %v6478
      %v6480 = vpop.f32.mrb[0].mxu0
      %v6481 = vadd.f32 0.0, %v6480
      %6482 = vmatprep.mubr.bf16.mxu0 %v725
      %6483 = vmatmul.mubr.bf16.gmra.mrb[0].mxu0 %v724
      %v6484 = vpop.f32.mrb[0].mxu0
      %v6485 = vadd.f32 0.0, %v6484
      %v6486 = vpop.f32.mrb[0].mxu0
      %v6487 = vadd.f32 0.0, %v6486
      %v6488 = vpop.f32.mrb[0].mxu0
      %v6489 = vadd.f32 0.0, %v6488
      %v6490 = vpop.f32.mrb[0].mxu0
      %v6491 = vadd.f32 0.0, %v6490
      %6492 = vdwg.mxu0
      %6493 = vmatprep.subr.bf16.mxu0 %v3461
      %6494 = vmatpush1.bf16.msra.mxu0 %v3460
      %6495 = vmatprep.subr.bf16.mxu0 %v3471
      %6496 = vmatpush1.bf16.msra.mxu0 %v3470
      %6497 = vmatprep.subr.bf16.mxu0 %v3481
      %6498 = vmatpush1.bf16.msra.mxu0 %v3480
      %6499 = vmatprep.subr.bf16.mxu0 %v3491
      %6500 = vmatpush1.bf16.msra.mxu0 %v3490
      %6501 = vmatprep.subr.bf16.mxu0 %v3501
      %6502 = vmatpush1.bf16.msra.mxu0 %v3500
      %6503 = vmatprep.subr.bf16.mxu0 %v3511
      %6504 = vmatpush1.bf16.msra.mxu0 %v3510
      %6505 = vmatprep.subr.bf16.mxu0 %v3521
      %6506 = vmatpush1.bf16.msra.mxu0 %v3520
      %6507 = vmatprep.subr.bf16.mxu0 %v3531
      %6508 = vmatpush1.bf16.msra.mxu0 %v3530
      %6509 = vmatprep.subr.bf16.mxu0 %v3541
      %6510 = vmatpush1.bf16.msra.mxu0 %v3540
      %6511 = vmatprep.subr.bf16.mxu0 %v3551
      %6512 = vmatpush1.bf16.msra.mxu0 %v3550
      %6513 = vmatprep.subr.bf16.mxu0 %v3561
      %6514 = vmatpush1.bf16.msra.mxu0 %v3560
      %6515 = vmatprep.subr.bf16.mxu0 %v3571
      %6516 = vmatpush1.bf16.msra.mxu0 %v3570
      %6517 = vmatprep.subr.bf16.mxu0 %v3581
      %6518 = vmatpush1.bf16.msra.mxu0 %v3580
      %6519 = vmatprep.subr.bf16.mxu0 %v3591
      %6520 = vmatpush1.bf16.msra.mxu0 %v3590
      %6521 = vmatprep.subr.bf16.mxu0 %v3601
      %6522 = vmatpush1.bf16.msra.mxu0 %v3600
      %6523 = vmatprep.subr.bf16.mxu0 %v3611
      %6524 = vmatpush1.bf16.msra.mxu0 %v3610
      %6525 = vmatprep.mubr.bf16.mxu0 %v671
      %6526 = vmatmul.mubr.bf16.gmra.mrb[0].mxu0 %v670
      %v6527 = vpop.f32.mrb[0].mxu0
      %v6528 = vadd.f32 %v6415, %v6527
      %v6529 = vpop.f32.mrb[0].mxu0
      %v6530 = vadd.f32 %v6417, %v6529
      %v6531 = vpop.f32.mrb[0].mxu0
      %v6532 = vadd.f32 %v6419, %v6531
      %v6533 = vpop.f32.mrb[0].mxu0
      %v6534 = vadd.f32 %v6421, %v6533
      %6535 = vmatprep.mubr.bf16.mxu0 %v679
      %6536 = vmatmul.mubr.bf16.gmra.mrb[0].mxu0 %v678
      %v6537 = vpop.f32.mrb[0].mxu0
      %v6538 = vadd.f32 %v6425, %v6537
      %v6539 = vpop.f32.mrb[0].mxu0
      %v6540 = vadd.f32 %v6427, %v6539
      %v6541 = vpop.f32.mrb[0].mxu0
      %v6542 = vadd.f32 %v6429, %v6541
      %v6543 = vpop.f32.mrb[0].mxu0
      %v6544 = vadd.f32 %v6431, %v6543
      %6545 = vmatprep.mubr.bf16.mxu0 %v687
      %6546 = vmatmul.mubr.bf16.gmra.mrb[0].mxu0 %v686
      %v6547 = vpop.f32.mrb[0].mxu0
      %v6548 = vadd.f32 %v6435, %v6547
      %v6549 = vpop.f32.mrb[0].mxu0
      %v6550 = vadd.f32 %v6437, %v6549
      %v6551 = vpop.f32.mrb[0].mxu0
      %v6552 = vadd.f32 %v6439, %v6551
      %v6553 = vpop.f32.mrb[0].mxu0
      %v6554 = vadd.f32 %v6441, %v6553
      %6555 = vmatprep.mubr.bf16.mxu0 %v695
      %6556 = vmatmul.mubr.bf16.gmra.mrb[0].mxu0 %v694
      %v6557 = vpop.f32.mrb[0].mxu0
      %v6558 = vadd.f32 %v6445, %v6557
      %v6559 = vpop.f32.mrb[0].mxu0
      %v6560 = vadd.f32 %v6447, %v6559
      %v6561 = vpop.f32.mrb[0].mxu0
      %v6562 = vadd.f32 %v6449, %v6561
      %v6563 = vpop.f32.mrb[0].mxu0
      %v6564 = vadd.f32 %v6451, %v6563
      %6565 = vmatprep.mubr.bf16.mxu0 %v703
      %6566 = vmatmul.mubr.bf16.gmra.mrb[0].mxu0 %v702
      %v6567 = vpop.f32.mrb[0].mxu0
      %v6568 = vadd.f32 %v6455, %v6567
      %v6569 = vpop.f32.mrb[0].mxu0
      %v6570 = vadd.f32 %v6457, %v6569
      %v6571 = vpop.f32.mrb[0].mxu0
      %v6572 = vadd.f32 %v6459, %v6571
      %v6573 = vpop.f32.mrb[0].mxu0
      %v6574 = vadd.f32 %v6461, %v6573
      %6575 = vmatprep.mubr.bf16.mxu0 %v711
      %6576 = vmatmul.mubr.bf16.gmra.mrb[0].mxu0 %v710
      %v6577 = vpop.f32.mrb[0].mxu0
      %v6578 = vadd.f32 %v6465, %v6577
      %v6579 = vpop.f32.mrb[0].mxu0
      %v6580 = vadd.f32 %v6467, %v6579
      %v6581 = vpop.f32.mrb[0].mxu0
      %v6582 = vadd.f32 %v6469, %v6581
      %v6583 = vpop.f32.mrb[0].mxu0
      %v6584 = vadd.f32 %v6471, %v6583
      %6585 = vmatprep.mubr.bf16.mxu0 %v719
      %6586 = vmatmul.mubr.bf16.gmra.mrb[0].mxu0 %v718
      %v6587 = vpop.f32.mrb[0].mxu0
      %v6588 = vadd.f32 %v6475, %v6587
      %v6589 = vpop.f32.mrb[0].mxu0
      %v6590 = vadd.f32 %v6477, %v6589
      %v6591 = vpop.f32.mrb[0].mxu0
      %v6592 = vadd.f32 %v6479, %v6591
      %v6593 = vpop.f32.mrb[0].mxu0
      %v6594 = vadd.f32 %v6481, %v6593
      %6595 = vmatprep.mubr.bf16.mxu0 %v727
      %6596 = vmatmul.mubr.bf16.gmra.mrb[0].mxu0 %v726
      %v6597 = vpop.f32.mrb[0].mxu0
      %v6598 = vadd.f32 %v6485, %v6597
      %v6599 = vpop.f32.mrb[0].mxu0
      %v6600 = vadd.f32 %v6487, %v6599
      %v6601 = vpop.f32.mrb[0].mxu0
      %v6602 = vadd.f32 %v6489, %v6601
      %v6603 = vpop.f32.mrb[0].mxu0
      %v6604 = vadd.f32 %v6491, %v6603
      %6605 = vdwg.mxu0
      %6606 = vmatprep.subr.bf16.mxu0 %v3621
      %6607 = vmatpush1.bf16.msra.mxu0 %v3620
      %6608 = vmatprep.subr.bf16.mxu0 %v3631
      %6609 = vmatpush1.bf16.msra.mxu0 %v3630
      %6610 = vmatprep.subr.bf16.mxu0 %v3641
      %6611 = vmatpush1.bf16.msra.mxu0 %v3640
      %6612 = vmatprep.subr.bf16.mxu0 %v3651
      %6613 = vmatpush1.bf16.msra.mxu0 %v3650
      %6614 = vmatprep.subr.bf16.mxu0 %v3661
      %6615 = vmatpush1.bf16.msra.mxu0 %v3660
      %6616 = vmatprep.subr.bf16.mxu0 %v3671
      %6617 = vmatpush1.bf16.msra.mxu0 %v3670
      %6618 = vmatprep.subr.bf16.mxu0 %v3681
      %6619 = vmatpush1.bf16.msra.mxu0 %v3680
      %6620 = vmatprep.subr.bf16.mxu0 %v3691
      %6621 = vmatpush1.bf16.msra.mxu0 %v3690
      %6622 = vmatprep.subr.bf16.mxu0 %v3701
      %6623 = vmatpush1.bf16.msra.mxu0 %v3700
      %6624 = vmatprep.subr.bf16.mxu0 %v3711
      %6625 = vmatpush1.bf16.msra.mxu0 %v3710
      %6626 = vmatprep.subr.bf16.mxu0 %v3721
      %6627 = vmatpush1.bf16.msra.mxu0 %v3720
      %6628 = vmatprep.subr.bf16.mxu0 %v3731
      %6629 = vmatpush1.bf16.msra.mxu0 %v3730
      %6630 = vmatprep.subr.bf16.mxu0 %v3741
      %6631 = vmatpush1.bf16.msra.mxu0 %v3740
      %6632 = vmatprep.subr.bf16.mxu0 %v3751
      %6633 = vmatpush1.bf16.msra.mxu0 %v3750
      %6634 = vmatprep.subr.bf16.mxu0 %v3761
      %6635 = vmatpush1.bf16.msra.mxu0 %v3760
      %6636 = vmatprep.subr.bf16.mxu0 %v3771
      %6637 = vmatpush1.bf16.msra.mxu0 %v3770
      %6638 = vmatprep.mubr.bf16.mxu0 %v673
      %6639 = vmatmul.mubr.bf16.gmra.mrb[0].mxu0 %v672
      %v6640 = vpop.f32.mrb[0].mxu0
      %v6641 = vadd.f32 %v6528, %v6640
      %v6642 = vpop.f32.mrb[0].mxu0
      %v6643 = vadd.f32 %v6530, %v6642
      %v6644 = vpop.f32.mrb[0].mxu0
      %v6645 = vadd.f32 %v6532, %v6644
      %v6646 = vpop.f32.mrb[0].mxu0
      %v6647 = vadd.f32 %v6534, %v6646
      %6648 = vmatprep.mubr.bf16.mxu0 %v681
      %6649 = vmatmul.mubr.bf16.gmra.mrb[0].mxu0 %v680
      %v6650 = vpop.f32.mrb[0].mxu0
      %v6651 = vadd.f32 %v6538, %v6650
      %v6652 = vpop.f32.mrb[0].mxu0
      %v6653 = vadd.f32 %v6540, %v6652
      %v6654 = vpop.f32.mrb[0].mxu0
      %v6655 = vadd.f32 %v6542, %v6654
      %v6656 = vpop.f32.mrb[0].mxu0
      %v6657 = vadd.f32 %v6544, %v6656
      %6658 = vmatprep.mubr.bf16.mxu0 %v689
      %6659 = vmatmul.mubr.bf16.gmra.mrb[0].mxu0 %v688
      %v6660 = vpop.f32.mrb[0].mxu0
      %v6661 = vadd.f32 %v6548, %v6660
      %v6662 = vpop.f32.mrb[0].mxu0
      %v6663 = vadd.f32 %v6550, %v6662
      %v6664 = vpop.f32.mrb[0].mxu0
      %v6665 = vadd.f32 %v6552, %v6664
      %v6666 = vpop.f32.mrb[0].mxu0
      %v6667 = vadd.f32 %v6554, %v6666
      %6668 = vmatprep.mubr.bf16.mxu0 %v697
      %6669 = vmatmul.mubr.bf16.gmra.mrb[0].mxu0 %v696
      %v6670 = vpop.f32.mrb[0].mxu0
      %v6671 = vadd.f32 %v6558, %v6670
      %v6672 = vpop.f32.mrb[0].mxu0
      %v6673 = vadd.f32 %v6560, %v6672
      %v6674 = vpop.f32.mrb[0].mxu0
      %v6675 = vadd.f32 %v6562, %v6674
      %v6676 = vpop.f32.mrb[0].mxu0
      %v6677 = vadd.f32 %v6564, %v6676
      %6678 = vmatprep.mubr.bf16.mxu0 %v705
      %6679 = vmatmul.mubr.bf16.gmra.mrb[0].mxu0 %v704
      %v6680 = vpop.f32.mrb[0].mxu0
      %v6681 = vadd.f32 %v6568, %v6680
      %v6682 = vpop.f32.mrb[0].mxu0
      %v6683 = vadd.f32 %v6570, %v6682
      %v6684 = vpop.f32.mrb[0].mxu0
      %v6685 = vadd.f32 %v6572, %v6684
      %v6686 = vpop.f32.mrb[0].mxu0
      %v6687 = vadd.f32 %v6574, %v6686
      %6688 = vmatprep.mubr.bf16.mxu0 %v713
      %6689 = vmatmul.mubr.bf16.gmra.mrb[0].mxu0 %v712
      %v6690 = vpop.f32.mrb[0].mxu0
      %v6691 = vadd.f32 %v6578, %v6690
      %v6692 = vpop.f32.mrb[0].mxu0
      %v6693 = vadd.f32 %v6580, %v6692
      %v6694 = vpop.f32.mrb[0].mxu0
      %v6695 = vadd.f32 %v6582, %v6694
      %v6696 = vpop.f32.mrb[0].mxu0
      %v6697 = vadd.f32 %v6584, %v6696
      %6698 = vmatprep.mubr.bf16.mxu0 %v721
      %6699 = vmatmul.mubr.bf16.gmra.mrb[0].mxu0 %v720
      %v6700 = vpop.f32.mrb[0].mxu0
      %v6701 = vadd.f32 %v6588, %v6700
      %v6702 = vpop.f32.mrb[0].mxu0
      %v6703 = vadd.f32 %v6590, %v6702
      %v6704 = vpop.f32.mrb[0].mxu0
      %v6705 = vadd.f32 %v6592, %v6704
      %v6706 = vpop.f32.mrb[0].mxu0
      %v6707 = vadd.f32 %v6594, %v6706
      %6708 = vmatprep.mubr.bf16.mxu0 %v729
      %6709 = vmatmul.mubr.bf16.gmra.mrb[0].mxu0 %v728
      %v6710 = vpop.f32.mrb[0].mxu0
      %v6711 = vadd.f32 %v6598, %v6710
      %v6712 = vpop.f32.mrb[0].mxu0
      %v6713 = vadd.f32 %v6600, %v6712
      %v6714 = vpop.f32.mrb[0].mxu0
      %v6715 = vadd.f32 %v6602, %v6714
      %v6716 = vpop.f32.mrb[0].mxu0
      %v6717 = vadd.f32 %v6604, %v6716
      %6718 = vdwg.mxu0
      %6719 = vmatprep.subr.bf16.mxu0 %v3781
      %6720 = vmatpush1.bf16.msra.mxu0 %v3780
      %6721 = vmatprep.subr.bf16.mxu0 %v3791
      %6722 = vmatpush1.bf16.msra.mxu0 %v3790
      %6723 = vmatprep.subr.bf16.mxu0 %v3801
      %6724 = vmatpush1.bf16.msra.mxu0 %v3800
      %6725 = vmatprep.subr.bf16.mxu0 %v3811
      %6726 = vmatpush1.bf16.msra.mxu0 %v3810
      %6727 = vmatprep.subr.bf16.mxu0 %v3821
      %6728 = vmatpush1.bf16.msra.mxu0 %v3820
      %6729 = vmatprep.subr.bf16.mxu0 %v3831
      %6730 = vmatpush1.bf16.msra.mxu0 %v3830
      %6731 = vmatprep.subr.bf16.mxu0 %v3841
      %6732 = vmatpush1.bf16.msra.mxu0 %v3840
      %6733 = vmatprep.subr.bf16.mxu0 %v3851
      %6734 = vmatpush1.bf16.msra.mxu0 %v3850
      %6735 = vmatprep.subr.bf16.mxu0 %v3861
      %6736 = vmatpush1.bf16.msra.mxu0 %v3860
      %6737 = vmatprep.subr.bf16.mxu0 %v3871
      %6738 = vmatpush1.bf16.msra.mxu0 %v3870
      %6739 = vmatprep.subr.bf16.mxu0 %v3881
      %6740 = vmatpush1.bf16.msra.mxu0 %v3880
      %6741 = vmatprep.subr.bf16.mxu0 %v3891
      %6742 = vmatpush1.bf16.msra.mxu0 %v3890
      %6743 = vmatprep.subr.bf16.mxu0 %v3901
      %6744 = vmatpush1.bf16.msra.mxu0 %v3900
      %6745 = vmatprep.subr.bf16.mxu0 %v3911
      %6746 = vmatpush1.bf16.msra.mxu0 %v3910
      %6747 = vmatprep.subr.bf16.mxu0 %v3921
      %6748 = vmatpush1.bf16.msra.mxu0 %v3920
      %6749 = vmatprep.subr.bf16.mxu0 %v3931
      %6750 = vmatpush1.bf16.msra.mxu0 %v3930
      %6751 = vmatprep.mubr.bf16.mxu0 %v675
      %6752 = vmatmul.mubr.bf16.gmra.mrb[0].mxu0 %v674
      %v6753 = vpop.f32.mrb[0].mxu0
      %v6754 = vadd.f32 %v6641, %v6753
      %v6755 = vpop.f32.mrb[0].mxu0
      %v6756 = vadd.f32 %v6643, %v6755
      %v6757 = vpop.f32.mrb[0].mxu0
      %v6758 = vadd.f32 %v6645, %v6757
      %v6759 = vpop.f32.mrb[0].mxu0
      %v6760 = vadd.f32 %v6647, %v6759
      %6761 = vmatprep.mubr.bf16.mxu0 %v683
      %6762 = vmatmul.mubr.bf16.gmra.mrb[0].mxu0 %v682
      %v6763 = vpop.f32.mrb[0].mxu0
      %v6764 = vadd.f32 %v6651, %v6763
      %v6765 = vpop.f32.mrb[0].mxu0
      %v6766 = vadd.f32 %v6653, %v6765
      %v6767 = vpop.f32.mrb[0].mxu0
      %v6768 = vadd.f32 %v6655, %v6767
      %v6769 = vpop.f32.mrb[0].mxu0
      %v6770 = vadd.f32 %v6657, %v6769
      %6771 = vmatprep.mubr.bf16.mxu0 %v691
      %6772 = vmatmul.mubr.bf16.gmra.mrb[0].mxu0 %v690
      %v6773 = vpop.f32.mrb[0].mxu0
      %v6774 = vadd.f32 %v6661, %v6773
      %v6775 = vpop.f32.mrb[0].mxu0
      %v6776 = vadd.f32 %v6663, %v6775
      %v6777 = vpop.f32.mrb[0].mxu0
      %v6778 = vadd.f32 %v6665, %v6777
      %v6779 = vpop.f32.mrb[0].mxu0
      %v6780 = vadd.f32 %v6667, %v6779
      %6781 = vmatprep.mubr.bf16.mxu0 %v699
      %6782 = vmatmul.mubr.bf16.gmra.mrb[0].mxu0 %v698
      %v6783 = vpop.f32.mrb[0].mxu0
      %v6784 = vadd.f32 %v6671, %v6783
      %v6785 = vpop.f32.mrb[0].mxu0
      %v6786 = vadd.f32 %v6673, %v6785
      %v6787 = vpop.f32.mrb[0].mxu0
      %v6788 = vadd.f32 %v6675, %v6787
      %v6789 = vpop.f32.mrb[0].mxu0
      %v6790 = vadd.f32 %v6677, %v6789
      %6791 = vmatprep.mubr.bf16.mxu0 %v707
      %6792 = vmatmul.mubr.bf16.gmra.mrb[0].mxu0 %v706
      %v6793 = vpop.f32.mrb[0].mxu0
      %v6794 = vadd.f32 %v6681, %v6793
      %v6795 = vpop.f32.mrb[0].mxu0
      %v6796 = vadd.f32 %v6683, %v6795
      %v6797 = vpop.f32.mrb[0].mxu0
      %v6798 = vadd.f32 %v6685, %v6797
      %v6799 = vpop.f32.mrb[0].mxu0
      %v6800 = vadd.f32 %v6687, %v6799
      %6801 = vmatprep.mubr.bf16.mxu0 %v715
      %6802 = vmatmul.mubr.bf16.gmra.mrb[0].mxu0 %v714
      %v6803 = vpop.f32.mrb[0].mxu0
      %v6804 = vadd.f32 %v6691, %v6803
      %v6805 = vpop.f32.mrb[0].mxu0
      %v6806 = vadd.f32 %v6693, %v6805
      %v6807 = vpop.f32.mrb[0].mxu0
      %v6808 = vadd.f32 %v6695, %v6807
      %v6809 = vpop.f32.mrb[0].mxu0
      %v6810 = vadd.f32 %v6697, %v6809
      %6811 = vmatprep.mubr.bf16.mxu0 %v723
      %6812 = vmatmul.mubr.bf16.gmra.mrb[0].mxu0 %v722
      %v6813 = vpop.f32.mrb[0].mxu0
      %v6814 = vadd.f32 %v6701, %v6813
      %v6815 = vpop.f32.mrb[0].mxu0
      %v6816 = vadd.f32 %v6703, %v6815
      %v6817 = vpop.f32.mrb[0].mxu0
      %v6818 = vadd.f32 %v6705, %v6817
      %v6819 = vpop.f32.mrb[0].mxu0
      %v6820 = vadd.f32 %v6707, %v6819
      %6821 = vmatprep.mubr.bf16.mxu0 %v731
      %6822 = vmatmul.mubr.bf16.gmra.mrb[0].mxu0 %v730
      %v6823 = vpop.f32.mrb[0].mxu0
      %v6824 = vadd.f32 %v6711, %v6823
      %v6825 = vpop.f32.mrb[0].mxu0
      %v6826 = vadd.f32 %v6713, %v6825
      %v6827 = vpop.f32.mrb[0].mxu0
      %v6828 = vadd.f32 %v6715, %v6827
      %v6829 = vpop.f32.mrb[0].mxu0
      %v6830 = vadd.f32 %v6717, %v6829
      %6831 = vdwg.mxu0
      %v6832 = vmul.f32 %v4946, %v4946
      %v6833 = vmul.f32 %v4948, %v4948
      %v6834 = vmul.f32 %v5398, %v5398
      %v6835 = vmul.f32 %v5400, %v5400
      %v6836 = vmul.f32 %v5850, %v5850
      %v6837 = vmul.f32 %v4950, %v4950
      %v6838 = vmul.f32 %v4952, %v4952
      %v6839 = vmul.f32 %v5402, %v5402
      %v6840 = vmul.f32 %v5404, %v5404
      %v6841 = vmul.f32 %v5854, %v5854
      %v6842 = vmul.f32 %v4956, %v4956
      %v6843 = vmul.f32 %v4958, %v4958
      %v6844 = vmul.f32 %v5408, %v5408
      %v6845 = vmul.f32 %v5410, %v5410
      %v6846 = vmul.f32 %v5860, %v5860
      %v6847 = vmul.f32 %v4960, %v4960
      %v6848 = vmul.f32 %v4962, %v4962
      %v6849 = vmul.f32 %v5412, %v5412
      %v6850 = vmul.f32 %v5414, %v5414
      %v6851 = vmul.f32 %v5864, %v5864
      %v6852 = vmul.f32 %v4966, %v4966
      %v6853 = vmul.f32 %v4968, %v4968
      %v6854 = vmul.f32 %v5418, %v5418
      %v6855 = vmul.f32 %v5420, %v5420
      %v6856 = vmul.f32 %v5870, %v5870
      %v6857 = vmul.f32 %v4970, %v4970
      %v6858 = vmul.f32 %v4972, %v4972
      %v6859 = vmul.f32 %v5422, %v5422
      %v6860 = vmul.f32 %v5424, %v5424
      %v6861 = vmul.f32 %v5874, %v5874
      %v6862 = vmul.f32 %v4976, %v4976
      %v6863 = vmul.f32 %v4978, %v4978
      %v6864 = vmul.f32 %v5428, %v5428
      %v6865 = vmul.f32 %v5430, %v5430
      %v6866 = vmul.f32 %v5880, %v5880
      %v6867 = vmul.f32 %v4980, %v4980
      %v6868 = vmul.f32 %v4982, %v4982
      %v6869 = vmul.f32 %v5432, %v5432
      %v6870 = vmul.f32 %v5434, %v5434
      %v6871 = vmul.f32 %v5884, %v5884
      %v6872 = vmul.f32 %v4986, %v4986
      %v6873 = vmul.f32 %v4988, %v4988
      %v6874 = vmul.f32 %v5438, %v5438
      %v6875 = vmul.f32 %v5440, %v5440
      %v6876 = vmul.f32 %v5890, %v5890
      %v6877 = vmul.f32 %v4990, %v4990
      %v6878 = vmul.f32 %v4992, %v4992
      %v6879 = vmul.f32 %v5442, %v5442
      %v6880 = vmul.f32 %v5444, %v5444
      %v6881 = vmul.f32 %v5894, %v5894
      %v6882 = vmul.f32 %v4996, %v4996
      %v6883 = vmul.f32 %v4998, %v4998
      %v6884 = vmul.f32 %v5448, %v5448
      %v6885 = vmul.f32 %v5450, %v5450
      %v6886 = vmul.f32 %v5900, %v5900
      %v6887 = vmul.f32 %v5000, %v5000
      %v6888 = vmul.f32 %v5002, %v5002
      %v6889 = vmul.f32 %v5452, %v5452
      %v6890 = vmul.f32 %v5454, %v5454
      %v6891 = vmul.f32 %v5904, %v5904
      %v6892 = vmul.f32 %v5006, %v5006
      %v6893 = vmul.f32 %v5008, %v5008
      %v6894 = vmul.f32 %v5458, %v5458
      %v6895 = vmul.f32 %v5460, %v5460
      %v6896 = vmul.f32 %v5910, %v5910
      %v6897 = vmul.f32 %v5010, %v5010
      %v6898 = vmul.f32 %v5012, %v5012
      %v6899 = vmul.f32 %v5462, %v5462
      %v6900 = vmul.f32 %v5464, %v5464
      %v6901 = vmul.f32 %v5914, %v5914
      %v6902 = vmul.f32 %v5016, %v5016
      %v6903 = vmul.f32 %v5018, %v5018
      %v6904 = vmul.f32 %v5468, %v5468
      %v6905 = vmul.f32 %v5470, %v5470
      %v6906 = vmul.f32 %v5920, %v5920
      %v6907 = vmul.f32 %v5020, %v5020
      %v6908 = vmul.f32 %v5022, %v5022
      %v6909 = vmul.f32 %v5472, %v5472
      %v6910 = vmul.f32 %v5474, %v5474
      %v6911 = vmul.f32 %v5924, %v5924
      %v6912 = vmul.f32 %v5852, %v5852
      %v6913 = vmul.f32 %v6302, %v6302
      %v6914 = vmul.f32 %v6304, %v6304
      %v6915 = vmul.f32 %v6754, %v6754
      %v6916 = vmul.f32 %v6756, %v6756
      %v6917 = vmul.f32 %v5856, %v5856
      %v6918 = vmul.f32 %v6306, %v6306
      %v6919 = vmul.f32 %v6308, %v6308
      %v6920 = vmul.f32 %v6758, %v6758
      %v6921 = vmul.f32 %v6760, %v6760
      %v6922 = vmul.f32 %v5862, %v5862
      %v6923 = vmul.f32 %v6312, %v6312
      %v6924 = vmul.f32 %v6314, %v6314
      %v6925 = vmul.f32 %v6764, %v6764
      %v6926 = vmul.f32 %v6766, %v6766
      %v6927 = vmul.f32 %v5866, %v5866
      %v6928 = vmul.f32 %v6316, %v6316
      %v6929 = vmul.f32 %v6318, %v6318
      %v6930 = vmul.f32 %v6768, %v6768
      %v6931 = vmul.f32 %v6770, %v6770
      %v6932 = vmul.f32 %v5872, %v5872
      %v6933 = vmul.f32 %v6322, %v6322
      %v6934 = vmul.f32 %v6324, %v6324
      %v6935 = vmul.f32 %v6774, %v6774
      %v6936 = vmul.f32 %v6776, %v6776
      %v6937 = vmul.f32 %v5876, %v5876
      %v6938 = vmul.f32 %v6326, %v6326
      %v6939 = vmul.f32 %v6328, %v6328
      %v6940 = vmul.f32 %v6778, %v6778
      %v6941 = vmul.f32 %v6780, %v6780
      %v6942 = vmul.f32 %v5882, %v5882
      %v6943 = vmul.f32 %v6332, %v6332
      %v6944 = vmul.f32 %v6334, %v6334
      %v6945 = vmul.f32 %v6784, %v6784
      %v6946 = vmul.f32 %v6786, %v6786
      %v6947 = vmul.f32 %v5886, %v5886
      %v6948 = vmul.f32 %v6336, %v6336
      %v6949 = vmul.f32 %v6338, %v6338
      %v6950 = vmul.f32 %v6788, %v6788
      %v6951 = vmul.f32 %v6790, %v6790
      %v6952 = vmul.f32 %v5892, %v5892
      %v6953 = vmul.f32 %v6342, %v6342
      %v6954 = vmul.f32 %v6344, %v6344
      %v6955 = vmul.f32 %v6794, %v6794
      %v6956 = vmul.f32 %v6796, %v6796
      %v6957 = vmul.f32 %v5896, %v5896
      %v6958 = vmul.f32 %v6346, %v6346
      %v6959 = vmul.f32 %v6348, %v6348
      %v6960 = vmul.f32 %v6798, %v6798
      %v6961 = vmul.f32 %v6800, %v6800
      %v6962 = vmul.f32 %v5902, %v5902
      %v6963 = vmul.f32 %v6352, %v6352
      %v6964 = vmul.f32 %v6354, %v6354
      %v6965 = vmul.f32 %v6804, %v6804
      %v6966 = vmul.f32 %v6806, %v6806
      %v6967 = vmul.f32 %v5906, %v5906
      %v6968 = vmul.f32 %v6356, %v6356
      %v6969 = vmul.f32 %v6358, %v6358
      %v6970 = vmul.f32 %v6808, %v6808
      %v6971 = vmul.f32 %v6810, %v6810
      %v6972 = vmul.f32 %v5912, %v5912
      %v6973 = vmul.f32 %v6362, %v6362
      %v6974 = vmul.f32 %v6364, %v6364
      %v6975 = vmul.f32 %v6814, %v6814
      %v6976 = vmul.f32 %v6816, %v6816
      %v6977 = vmul.f32 %v5916, %v5916
      %v6978 = vmul.f32 %v6366, %v6366
      %v6979 = vmul.f32 %v6368, %v6368
      %v6980 = vmul.f32 %v6818, %v6818
      %v6981 = vmul.f32 %v6820, %v6820
      %v6982 = vmul.f32 %v5922, %v5922
      %v6983 = vmul.f32 %v6372, %v6372
      %v6984 = vmul.f32 %v6374, %v6374
      %v6985 = vmul.f32 %v6824, %v6824
      %v6986 = vmul.f32 %v6826, %v6826
      %v6987 = vmul.f32 %v5926, %v5926
      %v6988 = vmul.f32 %v6376, %v6376
      %v6989 = vmul.f32 %v6378, %v6378
      %v6990 = vmul.f32 %v6828, %v6828
      %v6991 = vmul.f32 %v6830, %v6830
      %v6992 = vadd.f32 %v6832, %v6912
      %v6993 = vadd.f32 %v6833, %v6913
      %v6994 = vadd.f32 %v6834, %v6914
      %v6995 = vadd.f32 %v6835, %v6915
      %v6996 = vadd.f32 %v6836, %v6916
      %v6997 = vadd.f32 %v6837, %v6917
      %v6998 = vadd.f32 %v6838, %v6918
      %v6999 = vadd.f32 %v6839, %v6919
      %v7000 = vadd.f32 %v6840, %v6920
      %v7001 = vadd.f32 %v6841, %v6921
      %v7002 = vadd.f32 %v6842, %v6922
      %v7003 = vadd.f32 %v6843, %v6923
      %v7004 = vadd.f32 %v6844, %v6924
      %v7005 = vadd.f32 %v6845, %v6925
      %v7006 = vadd.f32 %v6846, %v6926
      %v7007 = vadd.f32 %v6847, %v6927
      %v7008 = vadd.f32 %v6848, %v6928
      %v7009 = vadd.f32 %v6849, %v6929
      %v7010 = vadd.f32 %v6850, %v6930
      %v7011 = vadd.f32 %v6851, %v6931
      %v7012 = vadd.f32 %v6852, %v6932
      %v7013 = vadd.f32 %v6853, %v6933
      %v7014 = vadd.f32 %v6854, %v6934
      %v7015 = vadd.f32 %v6855, %v6935
      %v7016 = vadd.f32 %v6856, %v6936
      %v7017 = vadd.f32 %v6857, %v6937
      %v7018 = vadd.f32 %v6858, %v6938
      %v7019 = vadd.f32 %v6859, %v6939
      %v7020 = vadd.f32 %v6860, %v6940
      %v7021 = vadd.f32 %v6861, %v6941
      %v7022 = vadd.f32 %v6862, %v6942
      %v7023 = vadd.f32 %v6863, %v6943
      %v7024 = vadd.f32 %v6864, %v6944
      %v7025 = vadd.f32 %v6865, %v6945
      %v7026 = vadd.f32 %v6866, %v6946
      %v7027 = vadd.f32 %v6867, %v6947
      %v7028 = vadd.f32 %v6868, %v6948
      %v7029 = vadd.f32 %v6869, %v6949
      %v7030 = vadd.f32 %v6870, %v6950
      %v7031 = vadd.f32 %v6871, %v6951
      %v7032 = vadd.f32 %v6872, %v6952
      %v7033 = vadd.f32 %v6873, %v6953
      %v7034 = vadd.f32 %v6874, %v6954
      %v7035 = vadd.f32 %v6875, %v6955
      %v7036 = vadd.f32 %v6876, %v6956
      %v7037 = vadd.f32 %v6877, %v6957
      %v7038 = vadd.f32 %v6878, %v6958
      %v7039 = vadd.f32 %v6879, %v6959
      %v7040 = vadd.f32 %v6880, %v6960
      %v7041 = vadd.f32 %v6881, %v6961
      %v7042 = vadd.f32 %v6882, %v6962
      %v7043 = vadd.f32 %v6883, %v6963
      %v7044 = vadd.f32 %v6884, %v6964
      %v7045 = vadd.f32 %v6885, %v6965
      %v7046 = vadd.f32 %v6886, %v6966
      %v7047 = vadd.f32 %v6887, %v6967
      %v7048 = vadd.f32 %v6888, %v6968
      %v7049 = vadd.f32 %v6889, %v6969
      %v7050 = vadd.f32 %v6890, %v6970
      %v7051 = vadd.f32 %v6891, %v6971
      %v7052 = vadd.f32 %v6892, %v6972
      %v7053 = vadd.f32 %v6893, %v6973
      %v7054 = vadd.f32 %v6894, %v6974
      %v7055 = vadd.f32 %v6895, %v6975
      %v7056 = vadd.f32 %v6896, %v6976
      %v7057 = vadd.f32 %v6897, %v6977
      %v7058 = vadd.f32 %v6898, %v6978
      %v7059 = vadd.f32 %v6899, %v6979
      %v7060 = vadd.f32 %v6900, %v6980
      %v7061 = vadd.f32 %v6901, %v6981
      %v7062 = vadd.f32 %v6902, %v6982
      %v7063 = vadd.f32 %v6903, %v6983
      %v7064 = vadd.f32 %v6904, %v6984
      %v7065 = vadd.f32 %v6905, %v6985
      %v7066 = vadd.f32 %v6906, %v6986
      %v7067 = vadd.f32 %v6907, %v6987
      %v7068 = vadd.f32 %v6908, %v6988
      %v7069 = vadd.f32 %v6909, %v6989
      %v7070 = vadd.f32 %v6910, %v6990
      %v7071 = vadd.f32 %v6911, %v6991
      %v7072 = vrsqrt.pop %v6992
      %v7073 = vmul.f32 %v6992, %v7072
      %vm7074 = vcmp.eq.f32.partialorder %v6992, inf
      %v7075 = vsel %vm7074, %v6992, %v7073
      %vm7076 = vcmp.eq.f32.partialorder %v6992, 0.0
      %v7077 = vand.u32 %v6992, 2147483648
      %v7078 = vsel %vm7076, %v7077, %v7075
      %v7079 = vrsqrt.pop %v6993
      %v7080 = vmul.f32 %v6993, %v7079
      %vm7081 = vcmp.eq.f32.partialorder %v6993, inf
      %v7082 = vsel %vm7081, %v6993, %v7080
      %vm7083 = vcmp.eq.f32.partialorder %v6993, 0.0
      %v7084 = vand.u32 %v6993, 2147483648
      %v7085 = vsel %vm7083, %v7084, %v7082
      %v7086 = vrsqrt.pop %v6994
      %v7087 = vmul.f32 %v6994, %v7086
      %vm7088 = vcmp.eq.f32.partialorder %v6994, inf
      %v7089 = vsel %vm7088, %v6994, %v7087
      %vm7090 = vcmp.eq.f32.partialorder %v6994, 0.0
      %v7091 = vand.u32 %v6994, 2147483648
      %v7092 = vsel %vm7090, %v7091, %v7089
      %v7093 = vrsqrt.pop %v6995
      %v7094 = vmul.f32 %v6995, %v7093
      %vm7095 = vcmp.eq.f32.partialorder %v6995, inf
      %v7096 = vsel %vm7095, %v6995, %v7094
      %vm7097 = vcmp.eq.f32.partialorder %v6995, 0.0
      %v7098 = vand.u32 %v6995, 2147483648
      %v7099 = vsel %vm7097, %v7098, %v7096
      %v7100 = vrsqrt.pop %v6996
      %v7101 = vmul.f32 %v6996, %v7100
      %vm7102 = vcmp.eq.f32.partialorder %v6996, inf
      %v7103 = vsel %vm7102, %v6996, %v7101
      %vm7104 = vcmp.eq.f32.partialorder %v6996, 0.0
      %v7105 = vand.u32 %v6996, 2147483648
      %v7106 = vsel %vm7104, %v7105, %v7103
      %v7107 = vrsqrt.pop %v6997
      %v7108 = vmul.f32 %v6997, %v7107
      %vm7109 = vcmp.eq.f32.partialorder %v6997, inf
      %v7110 = vsel %vm7109, %v6997, %v7108
      %vm7111 = vcmp.eq.f32.partialorder %v6997, 0.0
      %v7112 = vand.u32 %v6997, 2147483648
      %v7113 = vsel %vm7111, %v7112, %v7110
      %v7114 = vrsqrt.pop %v6998
      %v7115 = vmul.f32 %v6998, %v7114
      %vm7116 = vcmp.eq.f32.partialorder %v6998, inf
      %v7117 = vsel %vm7116, %v6998, %v7115
      %vm7118 = vcmp.eq.f32.partialorder %v6998, 0.0
      %v7119 = vand.u32 %v6998, 2147483648
      %v7120 = vsel %vm7118, %v7119, %v7117
      %v7121 = vrsqrt.pop %v6999
      %v7122 = vmul.f32 %v6999, %v7121
      %vm7123 = vcmp.eq.f32.partialorder %v6999, inf
      %v7124 = vsel %vm7123, %v6999, %v7122
      %vm7125 = vcmp.eq.f32.partialorder %v6999, 0.0
      %v7126 = vand.u32 %v6999, 2147483648
      %v7127 = vsel %vm7125, %v7126, %v7124
      %v7128 = vrsqrt.pop %v7000
      %v7129 = vmul.f32 %v7000, %v7128
      %vm7130 = vcmp.eq.f32.partialorder %v7000, inf
      %v7131 = vsel %vm7130, %v7000, %v7129
      %vm7132 = vcmp.eq.f32.partialorder %v7000, 0.0
      %v7133 = vand.u32 %v7000, 2147483648
      %v7134 = vsel %vm7132, %v7133, %v7131
      %v7135 = vrsqrt.pop %v7001
      %v7136 = vmul.f32 %v7001, %v7135
      %vm7137 = vcmp.eq.f32.partialorder %v7001, inf
      %v7138 = vsel %vm7137, %v7001, %v7136
      %vm7139 = vcmp.eq.f32.partialorder %v7001, 0.0
      %v7140 = vand.u32 %v7001, 2147483648
      %v7141 = vsel %vm7139, %v7140, %v7138
      %v7142 = vrsqrt.pop %v7002
      %v7143 = vmul.f32 %v7002, %v7142
      %vm7144 = vcmp.eq.f32.partialorder %v7002, inf
      %v7145 = vsel %vm7144, %v7002, %v7143
      %vm7146 = vcmp.eq.f32.partialorder %v7002, 0.0
      %v7147 = vand.u32 %v7002, 2147483648
      %v7148 = vsel %vm7146, %v7147, %v7145
      %v7149 = vrsqrt.pop %v7003
      %v7150 = vmul.f32 %v7003, %v7149
      %vm7151 = vcmp.eq.f32.partialorder %v7003, inf
      %v7152 = vsel %vm7151, %v7003, %v7150
      %vm7153 = vcmp.eq.f32.partialorder %v7003, 0.0
      %v7154 = vand.u32 %v7003, 2147483648
      %v7155 = vsel %vm7153, %v7154, %v7152
      %v7156 = vrsqrt.pop %v7004
      %v7157 = vmul.f32 %v7004, %v7156
      %vm7158 = vcmp.eq.f32.partialorder %v7004, inf
      %v7159 = vsel %vm7158, %v7004, %v7157
      %vm7160 = vcmp.eq.f32.partialorder %v7004, 0.0
      %v7161 = vand.u32 %v7004, 2147483648
      %v7162 = vsel %vm7160, %v7161, %v7159
      %v7163 = vrsqrt.pop %v7005
      %v7164 = vmul.f32 %v7005, %v7163
      %vm7165 = vcmp.eq.f32.partialorder %v7005, inf
      %v7166 = vsel %vm7165, %v7005, %v7164
      %vm7167 = vcmp.eq.f32.partialorder %v7005, 0.0
      %v7168 = vand.u32 %v7005, 2147483648
      %v7169 = vsel %vm7167, %v7168, %v7166
      %v7170 = vrsqrt.pop %v7006
      %v7171 = vmul.f32 %v7006, %v7170
      %vm7172 = vcmp.eq.f32.partialorder %v7006, inf
      %v7173 = vsel %vm7172, %v7006, %v7171
      %vm7174 = vcmp.eq.f32.partialorder %v7006, 0.0
      %v7175 = vand.u32 %v7006, 2147483648
      %v7176 = vsel %vm7174, %v7175, %v7173
      %v7177 = vrsqrt.pop %v7007
      %v7178 = vmul.f32 %v7007, %v7177
      %vm7179 = vcmp.eq.f32.partialorder %v7007, inf
      %v7180 = vsel %vm7179, %v7007, %v7178
      %vm7181 = vcmp.eq.f32.partialorder %v7007, 0.0
      %v7182 = vand.u32 %v7007, 2147483648
      %v7183 = vsel %vm7181, %v7182, %v7180
      %v7184 = vrsqrt.pop %v7008
      %v7185 = vmul.f32 %v7008, %v7184
      %vm7186 = vcmp.eq.f32.partialorder %v7008, inf
      %v7187 = vsel %vm7186, %v7008, %v7185
      %vm7188 = vcmp.eq.f32.partialorder %v7008, 0.0
      %v7189 = vand.u32 %v7008, 2147483648
      %v7190 = vsel %vm7188, %v7189, %v7187
      %v7191 = vrsqrt.pop %v7009
      %v7192 = vmul.f32 %v7009, %v7191
      %vm7193 = vcmp.eq.f32.partialorder %v7009, inf
      %v7194 = vsel %vm7193, %v7009, %v7192
      %vm7195 = vcmp.eq.f32.partialorder %v7009, 0.0
      %v7196 = vand.u32 %v7009, 2147483648
      %v7197 = vsel %vm7195, %v7196, %v7194
      %v7198 = vrsqrt.pop %v7010
      %v7199 = vmul.f32 %v7010, %v7198
      %vm7200 = vcmp.eq.f32.partialorder %v7010, inf
      %v7201 = vsel %vm7200, %v7010, %v7199
      %vm7202 = vcmp.eq.f32.partialorder %v7010, 0.0
      %v7203 = vand.u32 %v7010, 2147483648
      %v7204 = vsel %vm7202, %v7203, %v7201
      %v7205 = vrsqrt.pop %v7011
      %v7206 = vmul.f32 %v7011, %v7205
      %vm7207 = vcmp.eq.f32.partialorder %v7011, inf
      %v7208 = vsel %vm7207, %v7011, %v7206
      %vm7209 = vcmp.eq.f32.partialorder %v7011, 0.0
      %v7210 = vand.u32 %v7011, 2147483648
      %v7211 = vsel %vm7209, %v7210, %v7208
      %v7212 = vrsqrt.pop %v7012
      %v7213 = vmul.f32 %v7012, %v7212
      %vm7214 = vcmp.eq.f32.partialorder %v7012, inf
      %v7215 = vsel %vm7214, %v7012, %v7213
      %vm7216 = vcmp.eq.f32.partialorder %v7012, 0.0
      %v7217 = vand.u32 %v7012, 2147483648
      %v7218 = vsel %vm7216, %v7217, %v7215
      %v7219 = vrsqrt.pop %v7013
      %v7220 = vmul.f32 %v7013, %v7219
      %vm7221 = vcmp.eq.f32.partialorder %v7013, inf
      %v7222 = vsel %vm7221, %v7013, %v7220
      %vm7223 = vcmp.eq.f32.partialorder %v7013, 0.0
      %v7224 = vand.u32 %v7013, 2147483648
      %v7225 = vsel %vm7223, %v7224, %v7222
      %v7226 = vrsqrt.pop %v7014
      %v7227 = vmul.f32 %v7014, %v7226
      %vm7228 = vcmp.eq.f32.partialorder %v7014, inf
      %v7229 = vsel %vm7228, %v7014, %v7227
      %vm7230 = vcmp.eq.f32.partialorder %v7014, 0.0
      %v7231 = vand.u32 %v7014, 2147483648
      %v7232 = vsel %vm7230, %v7231, %v7229
      %v7233 = vrsqrt.pop %v7015
      %v7234 = vmul.f32 %v7015, %v7233
      %vm7235 = vcmp.eq.f32.partialorder %v7015, inf
      %v7236 = vsel %vm7235, %v7015, %v7234
      %vm7237 = vcmp.eq.f32.partialorder %v7015, 0.0
      %v7238 = vand.u32 %v7015, 2147483648
      %v7239 = vsel %vm7237, %v7238, %v7236
      %v7240 = vrsqrt.pop %v7016
      %v7241 = vmul.f32 %v7016, %v7240
      %vm7242 = vcmp.eq.f32.partialorder %v7016, inf
      %v7243 = vsel %vm7242, %v7016, %v7241
      %vm7244 = vcmp.eq.f32.partialorder %v7016, 0.0
      %v7245 = vand.u32 %v7016, 2147483648
      %v7246 = vsel %vm7244, %v7245, %v7243
      %v7247 = vrsqrt.pop %v7017
      %v7248 = vmul.f32 %v7017, %v7247
      %vm7249 = vcmp.eq.f32.partialorder %v7017, inf
      %v7250 = vsel %vm7249, %v7017, %v7248
      %vm7251 = vcmp.eq.f32.partialorder %v7017, 0.0
      %v7252 = vand.u32 %v7017, 2147483648
      %v7253 = vsel %vm7251, %v7252, %v7250
      %v7254 = vrsqrt.pop %v7018
      %v7255 = vmul.f32 %v7018, %v7254
      %vm7256 = vcmp.eq.f32.partialorder %v7018, inf
      %v7257 = vsel %vm7256, %v7018, %v7255
      %vm7258 = vcmp.eq.f32.partialorder %v7018, 0.0
      %v7259 = vand.u32 %v7018, 2147483648
      %v7260 = vsel %vm7258, %v7259, %v7257
      %v7261 = vrsqrt.pop %v7019
      %v7262 = vmul.f32 %v7019, %v7261
      %vm7263 = vcmp.eq.f32.partialorder %v7019, inf
      %v7264 = vsel %vm7263, %v7019, %v7262
      %vm7265 = vcmp.eq.f32.partialorder %v7019, 0.0
      %v7266 = vand.u32 %v7019, 2147483648
      %v7267 = vsel %vm7265, %v7266, %v7264
      %v7268 = vrsqrt.pop %v7020
      %v7269 = vmul.f32 %v7020, %v7268
      %vm7270 = vcmp.eq.f32.partialorder %v7020, inf
      %v7271 = vsel %vm7270, %v7020, %v7269
      %vm7272 = vcmp.eq.f32.partialorder %v7020, 0.0
      %v7273 = vand.u32 %v7020, 2147483648
      %v7274 = vsel %vm7272, %v7273, %v7271
      %v7275 = vrsqrt.pop %v7021
      %v7276 = vmul.f32 %v7021, %v7275
      %vm7277 = vcmp.eq.f32.partialorder %v7021, inf
      %v7278 = vsel %vm7277, %v7021, %v7276
      %vm7279 = vcmp.eq.f32.partialorder %v7021, 0.0
      %v7280 = vand.u32 %v7021, 2147483648
      %v7281 = vsel %vm7279, %v7280, %v7278
      %v7282 = vrsqrt.pop %v7022
      %v7283 = vmul.f32 %v7022, %v7282
      %vm7284 = vcmp.eq.f32.partialorder %v7022, inf
      %v7285 = vsel %vm7284, %v7022, %v7283
      %vm7286 = vcmp.eq.f32.partialorder %v7022, 0.0
      %v7287 = vand.u32 %v7022, 2147483648
      %v7288 = vsel %vm7286, %v7287, %v7285
      %v7289 = vrsqrt.pop %v7023
      %v7290 = vmul.f32 %v7023, %v7289
      %vm7291 = vcmp.eq.f32.partialorder %v7023, inf
      %v7292 = vsel %vm7291, %v7023, %v7290
      %vm7293 = vcmp.eq.f32.partialorder %v7023, 0.0
      %v7294 = vand.u32 %v7023, 2147483648
      %v7295 = vsel %vm7293, %v7294, %v7292
      %v7296 = vrsqrt.pop %v7024
      %v7297 = vmul.f32 %v7024, %v7296
      %vm7298 = vcmp.eq.f32.partialorder %v7024, inf
      %v7299 = vsel %vm7298, %v7024, %v7297
      %vm7300 = vcmp.eq.f32.partialorder %v7024, 0.0
      %v7301 = vand.u32 %v7024, 2147483648
      %v7302 = vsel %vm7300, %v7301, %v7299
      %v7303 = vrsqrt.pop %v7025
      %v7304 = vmul.f32 %v7025, %v7303
      %vm7305 = vcmp.eq.f32.partialorder %v7025, inf
      %v7306 = vsel %vm7305, %v7025, %v7304
      %vm7307 = vcmp.eq.f32.partialorder %v7025, 0.0
      %v7308 = vand.u32 %v7025, 2147483648
      %v7309 = vsel %vm7307, %v7308, %v7306
      %v7310 = vrsqrt.pop %v7026
      %v7311 = vmul.f32 %v7026, %v7310
      %vm7312 = vcmp.eq.f32.partialorder %v7026, inf
      %v7313 = vsel %vm7312, %v7026, %v7311
      %vm7314 = vcmp.eq.f32.partialorder %v7026, 0.0
      %v7315 = vand.u32 %v7026, 2147483648
      %v7316 = vsel %vm7314, %v7315, %v7313
      %v7317 = vrsqrt.pop %v7027
      %v7318 = vmul.f32 %v7027, %v7317
      %vm7319 = vcmp.eq.f32.partialorder %v7027, inf
      %v7320 = vsel %vm7319, %v7027, %v7318
      %vm7321 = vcmp.eq.f32.partialorder %v7027, 0.0
      %v7322 = vand.u32 %v7027, 2147483648
      %v7323 = vsel %vm7321, %v7322, %v7320
      %v7324 = vrsqrt.pop %v7028
      %v7325 = vmul.f32 %v7028, %v7324
      %vm7326 = vcmp.eq.f32.partialorder %v7028, inf
      %v7327 = vsel %vm7326, %v7028, %v7325
      %vm7328 = vcmp.eq.f32.partialorder %v7028, 0.0
      %v7329 = vand.u32 %v7028, 2147483648
      %v7330 = vsel %vm7328, %v7329, %v7327
      %v7331 = vrsqrt.pop %v7029
      %v7332 = vmul.f32 %v7029, %v7331
      %vm7333 = vcmp.eq.f32.partialorder %v7029, inf
      %v7334 = vsel %vm7333, %v7029, %v7332
      %vm7335 = vcmp.eq.f32.partialorder %v7029, 0.0
      %v7336 = vand.u32 %v7029, 2147483648
      %v7337 = vsel %vm7335, %v7336, %v7334
      %v7338 = vrsqrt.pop %v7030
      %v7339 = vmul.f32 %v7030, %v7338
      %vm7340 = vcmp.eq.f32.partialorder %v7030, inf
      %v7341 = vsel %vm7340, %v7030, %v7339
      %vm7342 = vcmp.eq.f32.partialorder %v7030, 0.0
      %v7343 = vand.u32 %v7030, 2147483648
      %v7344 = vsel %vm7342, %v7343, %v7341
      %v7345 = vrsqrt.pop %v7031
      %v7346 = vmul.f32 %v7031, %v7345
      %vm7347 = vcmp.eq.f32.partialorder %v7031, inf
      %v7348 = vsel %vm7347, %v7031, %v7346
      %vm7349 = vcmp.eq.f32.partialorder %v7031, 0.0
      %v7350 = vand.u32 %v7031, 2147483648
      %v7351 = vsel %vm7349, %v7350, %v7348
      %v7352 = vrsqrt.pop %v7032
      %v7353 = vmul.f32 %v7032, %v7352
      %vm7354 = vcmp.eq.f32.partialorder %v7032, inf
      %v7355 = vsel %vm7354, %v7032, %v7353
      %vm7356 = vcmp.eq.f32.partialorder %v7032, 0.0
      %v7357 = vand.u32 %v7032, 2147483648
      %v7358 = vsel %vm7356, %v7357, %v7355
      %v7359 = vrsqrt.pop %v7033
      %v7360 = vmul.f32 %v7033, %v7359
      %vm7361 = vcmp.eq.f32.partialorder %v7033, inf
      %v7362 = vsel %vm7361, %v7033, %v7360
      %vm7363 = vcmp.eq.f32.partialorder %v7033, 0.0
      %v7364 = vand.u32 %v7033, 2147483648
      %v7365 = vsel %vm7363, %v7364, %v7362
      %v7366 = vrsqrt.pop %v7034
      %v7367 = vmul.f32 %v7034, %v7366
      %vm7368 = vcmp.eq.f32.partialorder %v7034, inf
      %v7369 = vsel %vm7368, %v7034, %v7367
      %vm7370 = vcmp.eq.f32.partialorder %v7034, 0.0
      %v7371 = vand.u32 %v7034, 2147483648
      %v7372 = vsel %vm7370, %v7371, %v7369
      %v7373 = vrsqrt.pop %v7035
      %v7374 = vmul.f32 %v7035, %v7373
      %vm7375 = vcmp.eq.f32.partialorder %v7035, inf
      %v7376 = vsel %vm7375, %v7035, %v7374
      %vm7377 = vcmp.eq.f32.partialorder %v7035, 0.0
      %v7378 = vand.u32 %v7035, 2147483648
      %v7379 = vsel %vm7377, %v7378, %v7376
      %v7380 = vrsqrt.pop %v7036
      %v7381 = vmul.f32 %v7036, %v7380
      %vm7382 = vcmp.eq.f32.partialorder %v7036, inf
      %v7383 = vsel %vm7382, %v7036, %v7381
      %vm7384 = vcmp.eq.f32.partialorder %v7036, 0.0
      %v7385 = vand.u32 %v7036, 2147483648
      %v7386 = vsel %vm7384, %v7385, %v7383
      %v7387 = vrsqrt.pop %v7037
      %v7388 = vmul.f32 %v7037, %v7387
      %vm7389 = vcmp.eq.f32.partialorder %v7037, inf
      %v7390 = vsel %vm7389, %v7037, %v7388
      %vm7391 = vcmp.eq.f32.partialorder %v7037, 0.0
      %v7392 = vand.u32 %v7037, 2147483648
      %v7393 = vsel %vm7391, %v7392, %v7390
      %v7394 = vrsqrt.pop %v7038
      %v7395 = vmul.f32 %v7038, %v7394
      %vm7396 = vcmp.eq.f32.partialorder %v7038, inf
      %v7397 = vsel %vm7396, %v7038, %v7395
      %vm7398 = vcmp.eq.f32.partialorder %v7038, 0.0
      %v7399 = vand.u32 %v7038, 2147483648
      %v7400 = vsel %vm7398, %v7399, %v7397
      %v7401 = vrsqrt.pop %v7039
      %v7402 = vmul.f32 %v7039, %v7401
      %vm7403 = vcmp.eq.f32.partialorder %v7039, inf
      %v7404 = vsel %vm7403, %v7039, %v7402
      %vm7405 = vcmp.eq.f32.partialorder %v7039, 0.0
      %v7406 = vand.u32 %v7039, 2147483648
      %v7407 = vsel %vm7405, %v7406, %v7404
      %v7408 = vrsqrt.pop %v7040
      %v7409 = vmul.f32 %v7040, %v7408
      %vm7410 = vcmp.eq.f32.partialorder %v7040, inf
      %v7411 = vsel %vm7410, %v7040, %v7409
      %vm7412 = vcmp.eq.f32.partialorder %v7040, 0.0
      %v7413 = vand.u32 %v7040, 2147483648
      %v7414 = vsel %vm7412, %v7413, %v7411
      %v7415 = vrsqrt.pop %v7041
      %v7416 = vmul.f32 %v7041, %v7415
      %vm7417 = vcmp.eq.f32.partialorder %v7041, inf
      %v7418 = vsel %vm7417, %v7041, %v7416
      %vm7419 = vcmp.eq.f32.partialorder %v7041, 0.0
      %v7420 = vand.u32 %v7041, 2147483648
      %v7421 = vsel %vm7419, %v7420, %v7418
      %v7422 = vrsqrt.pop %v7042
      %v7423 = vmul.f32 %v7042, %v7422
      %vm7424 = vcmp.eq.f32.partialorder %v7042, inf
      %v7425 = vsel %vm7424, %v7042, %v7423
      %vm7426 = vcmp.eq.f32.partialorder %v7042, 0.0
      %v7427 = vand.u32 %v7042, 2147483648
      %v7428 = vsel %vm7426, %v7427, %v7425
      %v7429 = vrsqrt.pop %v7043
      %v7430 = vmul.f32 %v7043, %v7429
      %vm7431 = vcmp.eq.f32.partialorder %v7043, inf
      %v7432 = vsel %vm7431, %v7043, %v7430
      %vm7433 = vcmp.eq.f32.partialorder %v7043, 0.0
      %v7434 = vand.u32 %v7043, 2147483648
      %v7435 = vsel %vm7433, %v7434, %v7432
      %v7436 = vrsqrt.pop %v7044
      %v7437 = vmul.f32 %v7044, %v7436
      %vm7438 = vcmp.eq.f32.partialorder %v7044, inf
      %v7439 = vsel %vm7438, %v7044, %v7437
      %vm7440 = vcmp.eq.f32.partialorder %v7044, 0.0
      %v7441 = vand.u32 %v7044, 2147483648
      %v7442 = vsel %vm7440, %v7441, %v7439
      %v7443 = vrsqrt.pop %v7045
      %v7444 = vmul.f32 %v7045, %v7443
      %vm7445 = vcmp.eq.f32.partialorder %v7045, inf
      %v7446 = vsel %vm7445, %v7045, %v7444
      %vm7447 = vcmp.eq.f32.partialorder %v7045, 0.0
      %v7448 = vand.u32 %v7045, 2147483648
      %v7449 = vsel %vm7447, %v7448, %v7446
      %v7450 = vrsqrt.pop %v7046
      %v7451 = vmul.f32 %v7046, %v7450
      %vm7452 = vcmp.eq.f32.partialorder %v7046, inf
      %v7453 = vsel %vm7452, %v7046, %v7451
      %vm7454 = vcmp.eq.f32.partialorder %v7046, 0.0
      %v7455 = vand.u32 %v7046, 2147483648
      %v7456 = vsel %vm7454, %v7455, %v7453
      %v7457 = vrsqrt.pop %v7047
      %v7458 = vmul.f32 %v7047, %v7457
      %vm7459 = vcmp.eq.f32.partialorder %v7047, inf
      %v7460 = vsel %vm7459, %v7047, %v7458
      %vm7461 = vcmp.eq.f32.partialorder %v7047, 0.0
      %v7462 = vand.u32 %v7047, 2147483648
      %v7463 = vsel %vm7461, %v7462, %v7460
      %v7464 = vrsqrt.pop %v7048
      %v7465 = vmul.f32 %v7048, %v7464
      %vm7466 = vcmp.eq.f32.partialorder %v7048, inf
      %v7467 = vsel %vm7466, %v7048, %v7465
      %vm7468 = vcmp.eq.f32.partialorder %v7048, 0.0
      %v7469 = vand.u32 %v7048, 2147483648
      %v7470 = vsel %vm7468, %v7469, %v7467
      %v7471 = vrsqrt.pop %v7049
      %v7472 = vmul.f32 %v7049, %v7471
      %vm7473 = vcmp.eq.f32.partialorder %v7049, inf
      %v7474 = vsel %vm7473, %v7049, %v7472
      %vm7475 = vcmp.eq.f32.partialorder %v7049, 0.0
      %v7476 = vand.u32 %v7049, 2147483648
      %v7477 = vsel %vm7475, %v7476, %v7474
      %v7478 = vrsqrt.pop %v7050
      %v7479 = vmul.f32 %v7050, %v7478
      %vm7480 = vcmp.eq.f32.partialorder %v7050, inf
      %v7481 = vsel %vm7480, %v7050, %v7479
      %vm7482 = vcmp.eq.f32.partialorder %v7050, 0.0
      %v7483 = vand.u32 %v7050, 2147483648
      %v7484 = vsel %vm7482, %v7483, %v7481
      %v7485 = vrsqrt.pop %v7051
      %v7486 = vmul.f32 %v7051, %v7485
      %vm7487 = vcmp.eq.f32.partialorder %v7051, inf
      %v7488 = vsel %vm7487, %v7051, %v7486
      %vm7489 = vcmp.eq.f32.partialorder %v7051, 0.0
      %v7490 = vand.u32 %v7051, 2147483648
      %v7491 = vsel %vm7489, %v7490, %v7488
      %v7492 = vrsqrt.pop %v7052
      %v7493 = vmul.f32 %v7052, %v7492
      %vm7494 = vcmp.eq.f32.partialorder %v7052, inf
      %v7495 = vsel %vm7494, %v7052, %v7493
      %vm7496 = vcmp.eq.f32.partialorder %v7052, 0.0
      %v7497 = vand.u32 %v7052, 2147483648
      %v7498 = vsel %vm7496, %v7497, %v7495
      %v7499 = vrsqrt.pop %v7053
      %v7500 = vmul.f32 %v7053, %v7499
      %vm7501 = vcmp.eq.f32.partialorder %v7053, inf
      %v7502 = vsel %vm7501, %v7053, %v7500
      %vm7503 = vcmp.eq.f32.partialorder %v7053, 0.0
      %v7504 = vand.u32 %v7053, 2147483648
      %v7505 = vsel %vm7503, %v7504, %v7502
      %v7506 = vrsqrt.pop %v7054
      %v7507 = vmul.f32 %v7054, %v7506
      %vm7508 = vcmp.eq.f32.partialorder %v7054, inf
      %v7509 = vsel %vm7508, %v7054, %v7507
      %vm7510 = vcmp.eq.f32.partialorder %v7054, 0.0
      %v7511 = vand.u32 %v7054, 2147483648
      %v7512 = vsel %vm7510, %v7511, %v7509
      %v7513 = vrsqrt.pop %v7055
      %v7514 = vmul.f32 %v7055, %v7513
      %vm7515 = vcmp.eq.f32.partialorder %v7055, inf
      %v7516 = vsel %vm7515, %v7055, %v7514
      %vm7517 = vcmp.eq.f32.partialorder %v7055, 0.0
      %v7518 = vand.u32 %v7055, 2147483648
      %v7519 = vsel %vm7517, %v7518, %v7516
      %v7520 = vrsqrt.pop %v7056
      %v7521 = vmul.f32 %v7056, %v7520
      %vm7522 = vcmp.eq.f32.partialorder %v7056, inf
      %v7523 = vsel %vm7522, %v7056, %v7521
      %vm7524 = vcmp.eq.f32.partialorder %v7056, 0.0
      %v7525 = vand.u32 %v7056, 2147483648
      %v7526 = vsel %vm7524, %v7525, %v7523
      %v7527 = vrsqrt.pop %v7057
      %v7528 = vmul.f32 %v7057, %v7527
      %vm7529 = vcmp.eq.f32.partialorder %v7057, inf
      %v7530 = vsel %vm7529, %v7057, %v7528
      %vm7531 = vcmp.eq.f32.partialorder %v7057, 0.0
      %v7532 = vand.u32 %v7057, 2147483648
      %v7533 = vsel %vm7531, %v7532, %v7530
      %v7534 = vrsqrt.pop %v7058
      %v7535 = vmul.f32 %v7058, %v7534
      %vm7536 = vcmp.eq.f32.partialorder %v7058, inf
      %v7537 = vsel %vm7536, %v7058, %v7535
      %vm7538 = vcmp.eq.f32.partialorder %v7058, 0.0
      %v7539 = vand.u32 %v7058, 2147483648
      %v7540 = vsel %vm7538, %v7539, %v7537
      %v7541 = vrsqrt.pop %v7059
      %v7542 = vmul.f32 %v7059, %v7541
      %vm7543 = vcmp.eq.f32.partialorder %v7059, inf
      %v7544 = vsel %vm7543, %v7059, %v7542
      %vm7545 = vcmp.eq.f32.partialorder %v7059, 0.0
      %v7546 = vand.u32 %v7059, 2147483648
      %v7547 = vsel %vm7545, %v7546, %v7544
      %v7548 = vrsqrt.pop %v7060
      %v7549 = vmul.f32 %v7060, %v7548
      %vm7550 = vcmp.eq.f32.partialorder %v7060, inf
      %v7551 = vsel %vm7550, %v7060, %v7549
      %vm7552 = vcmp.eq.f32.partialorder %v7060, 0.0
      %v7553 = vand.u32 %v7060, 2147483648
      %v7554 = vsel %vm7552, %v7553, %v7551
      %v7555 = vrsqrt.pop %v7061
      %v7556 = vmul.f32 %v7061, %v7555
      %vm7557 = vcmp.eq.f32.partialorder %v7061, inf
      %v7558 = vsel %vm7557, %v7061, %v7556
      %vm7559 = vcmp.eq.f32.partialorder %v7061, 0.0
      %v7560 = vand.u32 %v7061, 2147483648
      %v7561 = vsel %vm7559, %v7560, %v7558
      %v7562 = vrsqrt.pop %v7062
      %v7563 = vmul.f32 %v7062, %v7562
      %vm7564 = vcmp.eq.f32.partialorder %v7062, inf
      %v7565 = vsel %vm7564, %v7062, %v7563
      %vm7566 = vcmp.eq.f32.partialorder %v7062, 0.0
      %v7567 = vand.u32 %v7062, 2147483648
      %v7568 = vsel %vm7566, %v7567, %v7565
      %v7569 = vrsqrt.pop %v7063
      %v7570 = vmul.f32 %v7063, %v7569
      %vm7571 = vcmp.eq.f32.partialorder %v7063, inf
      %v7572 = vsel %vm7571, %v7063, %v7570
      %vm7573 = vcmp.eq.f32.partialorder %v7063, 0.0
      %v7574 = vand.u32 %v7063, 2147483648
      %v7575 = vsel %vm7573, %v7574, %v7572
      %v7576 = vrsqrt.pop %v7064
      %v7577 = vmul.f32 %v7064, %v7576
      %vm7578 = vcmp.eq.f32.partialorder %v7064, inf
      %v7579 = vsel %vm7578, %v7064, %v7577
      %vm7580 = vcmp.eq.f32.partialorder %v7064, 0.0
      %v7581 = vand.u32 %v7064, 2147483648
      %v7582 = vsel %vm7580, %v7581, %v7579
      %v7583 = vrsqrt.pop %v7065
      %v7584 = vmul.f32 %v7065, %v7583
      %vm7585 = vcmp.eq.f32.partialorder %v7065, inf
      %v7586 = vsel %vm7585, %v7065, %v7584
      %vm7587 = vcmp.eq.f32.partialorder %v7065, 0.0
      %v7588 = vand.u32 %v7065, 2147483648
      %v7589 = vsel %vm7587, %v7588, %v7586
      %v7590 = vrsqrt.pop %v7066
      %v7591 = vmul.f32 %v7066, %v7590
      %vm7592 = vcmp.eq.f32.partialorder %v7066, inf
      %v7593 = vsel %vm7592, %v7066, %v7591
      %vm7594 = vcmp.eq.f32.partialorder %v7066, 0.0
      %v7595 = vand.u32 %v7066, 2147483648
      %v7596 = vsel %vm7594, %v7595, %v7593
      %v7597 = vrsqrt.pop %v7067
      %v7598 = vmul.f32 %v7067, %v7597
      %vm7599 = vcmp.eq.f32.partialorder %v7067, inf
      %v7600 = vsel %vm7599, %v7067, %v7598
      %vm7601 = vcmp.eq.f32.partialorder %v7067, 0.0
      %v7602 = vand.u32 %v7067, 2147483648
      %v7603 = vsel %vm7601, %v7602, %v7600
      %v7604 = vrsqrt.pop %v7068
      %v7605 = vmul.f32 %v7068, %v7604
      %vm7606 = vcmp.eq.f32.partialorder %v7068, inf
      %v7607 = vsel %vm7606, %v7068, %v7605
      %vm7608 = vcmp.eq.f32.partialorder %v7068, 0.0
      %v7609 = vand.u32 %v7068, 2147483648
      %v7610 = vsel %vm7608, %v7609, %v7607
      %v7611 = vrsqrt.pop %v7069
      %v7612 = vmul.f32 %v7069, %v7611
      %vm7613 = vcmp.eq.f32.partialorder %v7069, inf
      %v7614 = vsel %vm7613, %v7069, %v7612
      %vm7615 = vcmp.eq.f32.partialorder %v7069, 0.0
      %v7616 = vand.u32 %v7069, 2147483648
      %v7617 = vsel %vm7615, %v7616, %v7614
      %v7618 = vrsqrt.pop %v7070
      %v7619 = vmul.f32 %v7070, %v7618
      %vm7620 = vcmp.eq.f32.partialorder %v7070, inf
      %v7621 = vsel %vm7620, %v7070, %v7619
      %vm7622 = vcmp.eq.f32.partialorder %v7070, 0.0
      %v7623 = vand.u32 %v7070, 2147483648
      %v7624 = vsel %vm7622, %v7623, %v7621
      %v7625 = vrsqrt.pop %v7071
      %v7626 = vmul.f32 %v7071, %v7625
      %vm7627 = vcmp.eq.f32.partialorder %v7071, inf
      %v7628 = vsel %vm7627, %v7071, %v7626
      %vm7629 = vcmp.eq.f32.partialorder %v7071, 0.0
      %v7630 = vand.u32 %v7071, 2147483648
      %v7631 = vsel %vm7629, %v7630, %v7628
      %v7632 = vpack.c.bf16 %v7113, %v7078
      %v7633 = vpack.c.bf16 %v7120, %v7085
      %v7634 = vpack.c.bf16 %v7127, %v7092
      %v7635 = vpack.c.bf16 %v7134, %v7099
      %v7636 = vpack.c.bf16 %v7141, %v7106
      %v7637 = vpack.c.bf16 %v7183, %v7148
      %v7638 = vpack.c.bf16 %v7190, %v7155
      %v7639 = vpack.c.bf16 %v7197, %v7162
      %v7640 = vpack.c.bf16 %v7204, %v7169
      %v7641 = vpack.c.bf16 %v7211, %v7176
      %v7642 = vpack.c.bf16 %v7253, %v7218
      %v7643 = vpack.c.bf16 %v7260, %v7225
      %v7644 = vpack.c.bf16 %v7267, %v7232
      %v7645 = vpack.c.bf16 %v7274, %v7239
      %v7646 = vpack.c.bf16 %v7281, %v7246
      %v7647 = vpack.c.bf16 %v7323, %v7288
      %v7648 = vpack.c.bf16 %v7330, %v7295
      %v7649 = vpack.c.bf16 %v7337, %v7302
      %v7650 = vpack.c.bf16 %v7344, %v7309
      %v7651 = vpack.c.bf16 %v7351, %v7316
      %v7652 = vpack.c.bf16 %v7393, %v7358
      %v7653 = vpack.c.bf16 %v7400, %v7365
      %v7654 = vpack.c.bf16 %v7407, %v7372
      %v7655 = vpack.c.bf16 %v7414, %v7379
      %v7656 = vpack.c.bf16 %v7421, %v7386
      %v7657 = vpack.c.bf16 %v7463, %v7428
      %v7658 = vpack.c.bf16 %v7470, %v7435
      %v7659 = vpack.c.bf16 %v7477, %v7442
      %v7660 = vpack.c.bf16 %v7484, %v7449
      %v7661 = vpack.c.bf16 %v7491, %v7456
      %v7662 = vpack.c.bf16 %v7533, %v7498
      %v7663 = vpack.c.bf16 %v7540, %v7505
      %v7664 = vpack.c.bf16 %v7547, %v7512
      %v7665 = vpack.c.bf16 %v7554, %v7519
      %v7666 = vpack.c.bf16 %v7561, %v7526
      %v7667 = vpack.c.bf16 %v7603, %v7568
      %v7668 = vpack.c.bf16 %v7610, %v7575
      %v7669 = vpack.c.bf16 %v7617, %v7582
      %v7670 = vpack.c.bf16 %v7624, %v7589
      %v7671 = vpack.c.bf16 %v7631, %v7596
      %v7672 = vld [vmem:[%s3] sm:$0xf]
      %v7673 = vld [vmem:[%s3 + $0x4] sm:$0xf]
      %v7674 = vld [vmem:[%s3 + $0x8] sm:$0xf]
      %v7675 = vld [vmem:[%s3 + $0xc] sm:$0xf]
      %v7676 = vld [vmem:[%s3 + $0x10] sm:$0xf]
      %v7677 = vld [vmem:[%s3 + $0x14] sm:$0xf]
      %v7678 = vld [vmem:[%s3 + $0x18] sm:$0xf]
      %v7679 = vld [vmem:[%s3 + $0x1c] sm:$0xf]
      %v7680 = vld [vmem:[%s3 + $0x20] sm:$0xf]
      %v7681 = vld [vmem:[%s3 + $0x24] sm:$0xf]
      %v7682 = vld [vmem:[%s3 + $0x28] sm:$0xf]
      %v7683 = vld [vmem:[%s3 + $0x2c] sm:$0xf]
      %v7684 = vld [vmem:[%s3 + $0x30] sm:$0xf]
      %v7685 = vld [vmem:[%s3 + $0x34] sm:$0xf]
      %v7686 = vld [vmem:[%s3 + $0x38] sm:$0xf]
      %v7687 = vld [vmem:[%s3 + $0x3c] sm:$0xf]
      %v7688 = vld [vmem:[%s3 + $0x40] sm:$0xf]
      %v7689 = vld [vmem:[%s3 + $0x44] sm:$0xf]
      %v7690 = vld [vmem:[%s3 + $0x48] sm:$0xf]
      %v7691 = vld [vmem:[%s3 + $0x4c] sm:$0xf]
      %v7692 = vld [vmem:[%s3 + $0x50] sm:$0xf]
      %v7693 = vld [vmem:[%s3 + $0x54] sm:$0xf]
      %v7694 = vld [vmem:[%s3 + $0x58] sm:$0xf]
      %v7695 = vld [vmem:[%s3 + $0x5c] sm:$0xf]
      %v7696 = vld [vmem:[%s3 + $0x60] sm:$0xf]
      %v7697 = vld [vmem:[%s3 + $0x64] sm:$0xf]
      %v7698 = vld [vmem:[%s3 + $0x68] sm:$0xf]
      %v7699 = vld [vmem:[%s3 + $0x6c] sm:$0xf]
      %v7700 = vld [vmem:[%s3 + $0x70] sm:$0xf]
      %v7701 = vld [vmem:[%s3 + $0x74] sm:$0xf]
      %v7702 = vld [vmem:[%s3 + $0x78] sm:$0xf]
      %v7703 = vld [vmem:[%s3 + $0x7c] sm:$0xf]
      %v7704 = vld [vmem:[%s3 + $0x80] sm:$0xf]
      %v7705 = vld [vmem:[%s3 + $0x84] sm:$0xf]
      %v7706 = vld [vmem:[%s3 + $0x88] sm:$0xf]
      %v7707 = vld [vmem:[%s3 + $0x8c] sm:$0xf]
      %v7708 = vld [vmem:[%s3 + $0x90] sm:$0xf]
      %v7709 = vld [vmem:[%s3 + $0x94] sm:$0xf]
      %v7710 = vld [vmem:[%s3 + $0x98] sm:$0xf]
      %v7711 = vld [vmem:[%s3 + $0x9c] sm:$0xf]
      %v7712 = vld [vmem:[%s3 + $0xa0] sm:$0xf]
      %v7713 = vld [vmem:[%s3 + $0xa4] sm:$0xf]
      %v7714 = vld [vmem:[%s3 + $0xa8] sm:$0xf]
      %v7715 = vld [vmem:[%s3 + $0xac] sm:$0xf]
      %v7716 = vld [vmem:[%s3 + $0xb0] sm:$0xf]
      %v7717 = vld [vmem:[%s3 + $0xb4] sm:$0xf]
      %v7718 = vld [vmem:[%s3 + $0xb8] sm:$0xf]
      %v7719 = vld [vmem:[%s3 + $0xbc] sm:$0xf]
      %v7720 = vld [vmem:[%s3 + $0xc0] sm:$0xf]
      %v7721 = vld [vmem:[%s3 + $0xc4] sm:$0xf]
      %v7722 = vld [vmem:[%s3 + $0xc8] sm:$0xf]
      %v7723 = vld [vmem:[%s3 + $0xcc] sm:$0xf]
      %v7724 = vld [vmem:[%s3 + $0xd0] sm:$0xf]
      %v7725 = vld [vmem:[%s3 + $0xd4] sm:$0xf]
      %v7726 = vld [vmem:[%s3 + $0xd8] sm:$0xf]
      %v7727 = vld [vmem:[%s3 + $0xdc] sm:$0xf]
      %v7728 = vld [vmem:[%s3 + $0xe0] sm:$0xf]
      %v7729 = vld [vmem:[%s3 + $0xe4] sm:$0xf]
      %v7730 = vld [vmem:[%s3 + $0xe8] sm:$0xf]
      %v7731 = vld [vmem:[%s3 + $0xec] sm:$0xf]
      %v7732 = vld [vmem:[%s3 + $0xf0] sm:$0xf]
      %v7733 = vld [vmem:[%s3 + $0xf4] sm:$0xf]
      %v7734 = vld [vmem:[%s3 + $0xf8] sm:$0xf]
      %v7735 = vld [vmem:[%s3 + $0xfc] sm:$0xf]
      %v7736 = vld [vmem:[%s3 + $0x100] sm:$0xf]
      %v7737 = vld [vmem:[%s3 + $0x104] sm:$0xf]
      %v7738 = vld [vmem:[%s3 + $0x108] sm:$0xf]
      %v7739 = vld [vmem:[%s3 + $0x10c] sm:$0xf]
      %v7740 = vld [vmem:[%s3 + $0x110] sm:$0xf]
      %v7741 = vld [vmem:[%s3 + $0x114] sm:$0xf]
      %v7742 = vld [vmem:[%s3 + $0x118] sm:$0xf]
      %v7743 = vld [vmem:[%s3 + $0x11c] sm:$0xf]
      %v7744 = vld [vmem:[%s3 + $0x120] sm:$0xf]
      %v7745 = vld [vmem:[%s3 + $0x124] sm:$0xf]
      %v7746 = vld [vmem:[%s3 + $0x128] sm:$0xf]
      %v7747 = vld [vmem:[%s3 + $0x12c] sm:$0xf]
      %v7748 = vld [vmem:[%s3 + $0x130] sm:$0xf]
      %v7749 = vld [vmem:[%s3 + $0x134] sm:$0xf]
      %v7750 = vld [vmem:[%s3 + $0x138] sm:$0xf]
      %v7751 = vld [vmem:[%s3 + $0x13c] sm:$0xf]
      %v7832 = vunpack.c.l.b16 %v7672
      %v7833 = vunpack.c.l.b16 %v7673
      %v7834 = vunpack.c.l.b16 %v7674
      %v7835 = vunpack.c.l.b16 %v7675
      %v7836 = vunpack.c.l.b16 %v7676
      %v7837 = vunpack.c.l.b16 %v7677
      %v7838 = vunpack.c.l.b16 %v7678
      %v7839 = vunpack.c.l.b16 %v7679
      %v7840 = vunpack.c.l.b16 %v7680
      %v7841 = vunpack.c.l.b16 %v7681
      %v7842 = vunpack.c.l.b16 %v7682
      %v7843 = vunpack.c.l.b16 %v7683
      %v7844 = vunpack.c.l.b16 %v7684
      %v7845 = vunpack.c.l.b16 %v7685
      %v7846 = vunpack.c.l.b16 %v7686
      %v7847 = vunpack.c.l.b16 %v7687
      %v7848 = vunpack.c.l.b16 %v7688
      %v7849 = vunpack.c.l.b16 %v7689
      %v7850 = vunpack.c.l.b16 %v7690
      %v7851 = vunpack.c.l.b16 %v7691
      %v7852 = vunpack.c.l.b16 %v7692
      %v7853 = vunpack.c.l.b16 %v7693
      %v7854 = vunpack.c.l.b16 %v7694
      %v7855 = vunpack.c.l.b16 %v7695
      %v7856 = vunpack.c.l.b16 %v7696
      %v7857 = vunpack.c.l.b16 %v7697
      %v7858 = vunpack.c.l.b16 %v7698
      %v7859 = vunpack.c.l.b16 %v7699
      %v7860 = vunpack.c.l.b16 %v7700
      %v7861 = vunpack.c.l.b16 %v7701
      %v7862 = vunpack.c.l.b16 %v7702
      %v7863 = vunpack.c.l.b16 %v7703
      %v7864 = vunpack.c.l.b16 %v7704
      %v7865 = vunpack.c.l.b16 %v7705
      %v7866 = vunpack.c.l.b16 %v7706
      %v7867 = vunpack.c.l.b16 %v7707
      %v7868 = vunpack.c.l.b16 %v7708
      %v7869 = vunpack.c.l.b16 %v7709
      %v7870 = vunpack.c.l.b16 %v7710
      %v7871 = vunpack.c.l.b16 %v7711
      %v7872 = vunpack.c.l.b16 %v7712
      %v7873 = vunpack.c.l.b16 %v7713
      %v7874 = vunpack.c.l.b16 %v7714
      %v7875 = vunpack.c.l.b16 %v7715
      %v7876 = vunpack.c.l.b16 %v7716
      %v7877 = vunpack.c.l.b16 %v7717
      %v7878 = vunpack.c.l.b16 %v7718
      %v7879 = vunpack.c.l.b16 %v7719
      %v7880 = vunpack.c.l.b16 %v7720
      %v7881 = vunpack.c.l.b16 %v7721
      %v7882 = vunpack.c.l.b16 %v7722
      %v7883 = vunpack.c.l.b16 %v7723
      %v7884 = vunpack.c.l.b16 %v7724
      %v7885 = vunpack.c.l.b16 %v7725
      %v7886 = vunpack.c.l.b16 %v7726
      %v7887 = vunpack.c.l.b16 %v7727
      %v7888 = vunpack.c.l.b16 %v7728
      %v7889 = vunpack.c.l.b16 %v7729
      %v7890 = vunpack.c.l.b16 %v7730
      %v7891 = vunpack.c.l.b16 %v7731
      %v7892 = vunpack.c.l.b16 %v7732
      %v7893 = vunpack.c.l.b16 %v7733
      %v7894 = vunpack.c.l.b16 %v7734
      %v7895 = vunpack.c.l.b16 %v7735
      %v7896 = vunpack.c.l.b16 %v7736
      %v7897 = vunpack.c.l.b16 %v7737
      %v7898 = vunpack.c.l.b16 %v7738
      %v7899 = vunpack.c.l.b16 %v7739
      %v7900 = vunpack.c.l.b16 %v7740
      %v7901 = vunpack.c.l.b16 %v7741
      %v7902 = vunpack.c.l.b16 %v7742
      %v7903 = vunpack.c.l.b16 %v7743
      %v7904 = vunpack.c.l.b16 %v7744
      %v7905 = vunpack.c.l.b16 %v7745
      %v7906 = vunpack.c.l.b16 %v7746
      %v7907 = vunpack.c.l.b16 %v7747
      %v7908 = vunpack.c.l.b16 %v7748
      %v7909 = vunpack.c.l.b16 %v7749
      %v7910 = vunpack.c.l.b16 %v7750
      %v7911 = vunpack.c.l.b16 %v7751
      %v7912 = vpack.c.b16 %v7833, %v7832
      %v7913 = vpack.c.b16 %v7835, %v7834
      %v7914 = vpack.c.b16 %v7837, %v7836
      %v7915 = vpack.c.b16 %v7839, %v7838
      %v7916 = vpack.c.b16 %v7841, %v7840
      %v7917 = vpack.c.b16 %v7843, %v7842
      %v7918 = vpack.c.b16 %v7845, %v7844
      %v7919 = vpack.c.b16 %v7847, %v7846
      %v7920 = vpack.c.b16 %v7849, %v7848
      %v7921 = vpack.c.b16 %v7851, %v7850
      %v7922 = vpack.c.b16 %v7853, %v7852
      %v7923 = vpack.c.b16 %v7855, %v7854
      %v7924 = vpack.c.b16 %v7857, %v7856
      %v7925 = vpack.c.b16 %v7859, %v7858
      %v7926 = vpack.c.b16 %v7861, %v7860
      %v7927 = vpack.c.b16 %v7863, %v7862
      %v7928 = vpack.c.b16 %v7865, %v7864
      %v7929 = vpack.c.b16 %v7867, %v7866
      %v7930 = vpack.c.b16 %v7869, %v7868
      %v7931 = vpack.c.b16 %v7871, %v7870
      %v7932 = vpack.c.b16 %v7873, %v7872
      %v7933 = vpack.c.b16 %v7875, %v7874
      %v7934 = vpack.c.b16 %v7877, %v7876
      %v7935 = vpack.c.b16 %v7879, %v7878
      %v7936 = vpack.c.b16 %v7881, %v7880
      %v7937 = vpack.c.b16 %v7883, %v7882
      %v7938 = vpack.c.b16 %v7885, %v7884
      %v7939 = vpack.c.b16 %v7887, %v7886
      %v7940 = vpack.c.b16 %v7889, %v7888
      %v7941 = vpack.c.b16 %v7891, %v7890
      %v7942 = vpack.c.b16 %v7893, %v7892
      %v7943 = vpack.c.b16 %v7895, %v7894
      %v7944 = vpack.c.b16 %v7897, %v7896
      %v7945 = vpack.c.b16 %v7899, %v7898
      %v7946 = vpack.c.b16 %v7901, %v7900
      %v7947 = vpack.c.b16 %v7903, %v7902
      %v7948 = vpack.c.b16 %v7905, %v7904
      %v7949 = vpack.c.b16 %v7907, %v7906
      %v7950 = vpack.c.b16 %v7909, %v7908
      %v7951 = vpack.c.b16 %v7911, %v7910
      %7992 = vmatprep.subr.bf16.mxu0 0
      %7993 = vmatpush1.bf16.msra.mxu0 %v7912
      %7994 = vmatprep.subr.bf16.mxu0 0
      %7995 = vmatpush1.bf16.msra.mxu0 %v7913
      %7996 = vmatprep.subr.bf16.mxu0 0
      %7997 = vmatpush1.bf16.msra.mxu0 %v7914
      %7998 = vmatprep.subr.bf16.mxu0 0
      %7999 = vmatpush1.bf16.msra.mxu0 %v7915
      %8000 = vmatprep.subr.bf16.mxu0 0
      %8001 = vmatpush1.bf16.msra.mxu0 %v7916
      %8002 = vmatprep.subr.bf16.mxu0 0
      %8003 = vmatpush1.bf16.msra.mxu0 %v7917
      %8004 = vmatprep.subr.bf16.mxu0 0
      %8005 = vmatpush1.bf16.msra.mxu0 %v7918
      %8006 = vmatprep.subr.bf16.mxu0 0
      %8007 = vmatpush1.bf16.msra.mxu0 %v7919
      %8008 = vmatprep.subr.bf16.mxu0 0
      %8009 = vmatpush1.bf16.msra.mxu0 %v7920
      %8010 = vmatprep.subr.bf16.mxu0 0
      %8011 = vmatpush1.bf16.msra.mxu0 %v7921
      %8012 = vmatprep.subr.bf16.mxu0 0
      %8013 = vmatpush1.bf16.msra.mxu0 %v7922
      %8014 = vmatprep.subr.bf16.mxu0 0
      %8015 = vmatpush1.bf16.msra.mxu0 %v7923
      %8016 = vmatprep.subr.bf16.mxu0 0
      %8017 = vmatpush1.bf16.msra.mxu0 %v7924
      %8018 = vmatprep.subr.bf16.mxu0 0
      %8019 = vmatpush1.bf16.msra.mxu0 %v7925
      %8020 = vmatprep.subr.bf16.mxu0 0
      %8021 = vmatpush1.bf16.msra.mxu0 %v7926
      %8022 = vmatprep.subr.bf16.mxu0 0
      %8023 = vmatpush1.bf16.msra.mxu0 %v7927
      %8024 = vmatprep.mubr.bf16.mxu0 %v7633
      %8025 = vmatmul.mubr.bf16.gmra.mrb[0].mxu0 %v7632
      %v8026 = vpop.f32.mrb[0].mxu0
      %v8027 = vadd.f32 0.0, %v8026
      %v8028 = vpop.f32.mrb[0].mxu0
      %v8029 = vpop.f32.mrb[0].mxu0
      %v8030 = vadd.f32 0.0, %v8029
      %v8031 = vpop.f32.mrb[0].mxu0
      %8032 = vmatprep.mubr.bf16.mxu0 %v7638
      %8033 = vmatmul.mubr.bf16.gmra.mrb[0].mxu0 %v7637
      %v8034 = vpop.f32.mrb[0].mxu0
      %v8035 = vadd.f32 0.0, %v8034
      %v8036 = vpop.f32.mrb[0].mxu0
      %v8037 = vpop.f32.mrb[0].mxu0
      %v8038 = vadd.f32 0.0, %v8037
      %v8039 = vpop.f32.mrb[0].mxu0
      %8040 = vmatprep.mubr.bf16.mxu0 %v7643
      %8041 = vmatmul.mubr.bf16.gmra.mrb[0].mxu0 %v7642
      %v8042 = vpop.f32.mrb[0].mxu0
      %v8043 = vadd.f32 0.0, %v8042
      %v8044 = vpop.f32.mrb[0].mxu0
      %v8045 = vpop.f32.mrb[0].mxu0
      %v8046 = vadd.f32 0.0, %v8045
      %v8047 = vpop.f32.mrb[0].mxu0
      %8048 = vmatprep.mubr.bf16.mxu0 %v7648
      %8049 = vmatmul.mubr.bf16.gmra.mrb[0].mxu0 %v7647
      %v8050 = vpop.f32.mrb[0].mxu0
      %v8051 = vadd.f32 0.0, %v8050
      %v8052 = vpop.f32.mrb[0].mxu0
      %v8053 = vpop.f32.mrb[0].mxu0
      %v8054 = vadd.f32 0.0, %v8053
      %v8055 = vpop.f32.mrb[0].mxu0
      %8056 = vmatprep.mubr.bf16.mxu0 %v7653
      %8057 = vmatmul.mubr.bf16.gmra.mrb[0].mxu0 %v7652
      %v8058 = vpop.f32.mrb[0].mxu0
      %v8059 = vadd.f32 0.0, %v8058
      %v8060 = vpop.f32.mrb[0].mxu0
      %v8061 = vpop.f32.mrb[0].mxu0
      %v8062 = vadd.f32 0.0, %v8061
      %v8063 = vpop.f32.mrb[0].mxu0
      %8064 = vmatprep.mubr.bf16.mxu0 %v7658
      %8065 = vmatmul.mubr.bf16.gmra.mrb[0].mxu0 %v7657
      %v8066 = vpop.f32.mrb[0].mxu0
      %v8067 = vadd.f32 0.0, %v8066
      %v8068 = vpop.f32.mrb[0].mxu0
      %v8069 = vpop.f32.mrb[0].mxu0
      %v8070 = vadd.f32 0.0, %v8069
      %v8071 = vpop.f32.mrb[0].mxu0
      %8072 = vmatprep.mubr.bf16.mxu0 %v7663
      %8073 = vmatmul.mubr.bf16.gmra.mrb[0].mxu0 %v7662
      %v8074 = vpop.f32.mrb[0].mxu0
      %v8075 = vadd.f32 0.0, %v8074
      %v8076 = vpop.f32.mrb[0].mxu0
      %v8077 = vpop.f32.mrb[0].mxu0
      %v8078 = vadd.f32 0.0, %v8077
      %v8079 = vpop.f32.mrb[0].mxu0
      %8080 = vmatprep.mubr.bf16.mxu0 %v7668
      %8081 = vmatmul.mubr.bf16.gmra.mrb[0].mxu0 %v7667
      %v8082 = vpop.f32.mrb[0].mxu0
      %v8083 = vadd.f32 0.0, %v8082
      %v8084 = vpop.f32.mrb[0].mxu0
      %v8085 = vpop.f32.mrb[0].mxu0
      %v8086 = vadd.f32 0.0, %v8085
      %v8087 = vpop.f32.mrb[0].mxu0
      %8088 = vdwg.mxu0
      %8089 = vmatprep.subr.bf16.mxu0 0
      %8090 = vmatpush1.bf16.msra.mxu0 %v7928
      %8091 = vmatprep.subr.bf16.mxu0 0
      %8092 = vmatpush1.bf16.msra.mxu0 %v7929
      %8093 = vmatprep.subr.bf16.mxu0 0
      %8094 = vmatpush1.bf16.msra.mxu0 %v7930
      %8095 = vmatprep.subr.bf16.mxu0 0
      %8096 = vmatpush1.bf16.msra.mxu0 %v7931
      %8097 = vmatprep.subr.bf16.mxu0 0
      %8098 = vmatpush1.bf16.msra.mxu0 %v7932
      %8099 = vmatprep.subr.bf16.mxu0 0
      %8100 = vmatpush1.bf16.msra.mxu0 %v7933
      %8101 = vmatprep.subr.bf16.mxu0 0
      %8102 = vmatpush1.bf16.msra.mxu0 %v7934
      %8103 = vmatprep.subr.bf16.mxu0 0
      %8104 = vmatpush1.bf16.msra.mxu0 %v7935
      %8105 = vmatprep.subr.bf16.mxu0 0
      %8106 = vmatpush1.bf16.msra.mxu0 %v7936
      %8107 = vmatprep.subr.bf16.mxu0 0
      %8108 = vmatpush1.bf16.msra.mxu0 %v7937
      %8109 = vmatprep.subr.bf16.mxu0 0
      %8110 = vmatpush1.bf16.msra.mxu0 %v7938
      %8111 = vmatprep.subr.bf16.mxu0 0
      %8112 = vmatpush1.bf16.msra.mxu0 %v7939
      %8113 = vmatprep.subr.bf16.mxu0 0
      %8114 = vmatpush1.bf16.msra.mxu0 %v7940
      %8115 = vmatprep.subr.bf16.mxu0 0
      %8116 = vmatpush1.bf16.msra.mxu0 %v7941
      %8117 = vmatprep.subr.bf16.mxu0 0
      %8118 = vmatpush1.bf16.msra.mxu0 %v7942
      %8119 = vmatprep.subr.bf16.mxu0 0
      %8120 = vmatpush1.bf16.msra.mxu0 %v7943
      %8121 = vmatprep.mubr.bf16.mxu0 %v7635
      %8122 = vmatmul.mubr.bf16.gmra.mrb[0].mxu0 %v7634
      %v8123 = vpop.f32.mrb[0].mxu0
      %v8124 = vadd.f32 %v8027, %v8123
      %v8125 = vpop.f32.mrb[0].mxu0
      %v8126 = vpop.f32.mrb[0].mxu0
      %v8127 = vadd.f32 %v8030, %v8126
      %v8128 = vpop.f32.mrb[0].mxu0
      %8129 = vmatprep.mubr.bf16.mxu0 %v7640
      %8130 = vmatmul.mubr.bf16.gmra.mrb[0].mxu0 %v7639
      %v8131 = vpop.f32.mrb[0].mxu0
      %v8132 = vadd.f32 %v8035, %v8131
      %v8133 = vpop.f32.mrb[0].mxu0
      %v8134 = vpop.f32.mrb[0].mxu0
      %v8135 = vadd.f32 %v8038, %v8134
      %v8136 = vpop.f32.mrb[0].mxu0
      %8137 = vmatprep.mubr.bf16.mxu0 %v7645
      %8138 = vmatmul.mubr.bf16.gmra.mrb[0].mxu0 %v7644
      %v8139 = vpop.f32.mrb[0].mxu0
      %v8140 = vadd.f32 %v8043, %v8139
      %v8141 = vpop.f32.mrb[0].mxu0
      %v8142 = vpop.f32.mrb[0].mxu0
      %v8143 = vadd.f32 %v8046, %v8142
      %v8144 = vpop.f32.mrb[0].mxu0
      %8145 = vmatprep.mubr.bf16.mxu0 %v7650
      %8146 = vmatmul.mubr.bf16.gmra.mrb[0].mxu0 %v7649
      %v8147 = vpop.f32.mrb[0].mxu0
      %v8148 = vadd.f32 %v8051, %v8147
      %v8149 = vpop.f32.mrb[0].mxu0
      %v8150 = vpop.f32.mrb[0].mxu0
      %v8151 = vadd.f32 %v8054, %v8150
      %v8152 = vpop.f32.mrb[0].mxu0
      %8153 = vmatprep.mubr.bf16.mxu0 %v7655
      %8154 = vmatmul.mubr.bf16.gmra.mrb[0].mxu0 %v7654
      %v8155 = vpop.f32.mrb[0].mxu0
      %v8156 = vadd.f32 %v8059, %v8155
      %v8157 = vpop.f32.mrb[0].mxu0
      %v8158 = vpop.f32.mrb[0].mxu0
      %v8159 = vadd.f32 %v8062, %v8158
      %v8160 = vpop.f32.mrb[0].mxu0
      %8161 = vmatprep.mubr.bf16.mxu0 %v7660
      %8162 = vmatmul.mubr.bf16.gmra.mrb[0].mxu0 %v7659
      %v8163 = vpop.f32.mrb[0].mxu0
      %v8164 = vadd.f32 %v8067, %v8163
      %v8165 = vpop.f32.mrb[0].mxu0
      %v8166 = vpop.f32.mrb[0].mxu0
      %v8167 = vadd.f32 %v8070, %v8166
      %v8168 = vpop.f32.mrb[0].mxu0
      %8169 = vmatprep.mubr.bf16.mxu0 %v7665
      %8170 = vmatmul.mubr.bf16.gmra.mrb[0].mxu0 %v7664
      %v8171 = vpop.f32.mrb[0].mxu0
      %v8172 = vadd.f32 %v8075, %v8171
      %v8173 = vpop.f32.mrb[0].mxu0
      %v8174 = vpop.f32.mrb[0].mxu0
      %v8175 = vadd.f32 %v8078, %v8174
      %v8176 = vpop.f32.mrb[0].mxu0
      %8177 = vmatprep.mubr.bf16.mxu0 %v7670
      %8178 = vmatmul.mubr.bf16.gmra.mrb[0].mxu0 %v7669
      %v8179 = vpop.f32.mrb[0].mxu0
      %v8180 = vadd.f32 %v8083, %v8179
      %v8181 = vpop.f32.mrb[0].mxu0
      %v8182 = vpop.f32.mrb[0].mxu0
      %v8183 = vadd.f32 %v8086, %v8182
      %v8184 = vpop.f32.mrb[0].mxu0
      %8185 = vdwg.mxu0
      %8186 = vmatprep.subr.bf16.mxu0 0
      %8187 = vmatpush1.bf16.msra.mxu0 %v7944
      %8188 = vmatprep.subr.bf16.mxu0 0
      %8189 = vmatpush1.bf16.msra.mxu0 %v7945
      %8190 = vmatprep.subr.bf16.mxu0 0
      %8191 = vmatpush1.bf16.msra.mxu0 %v7946
      %8192 = vmatprep.subr.bf16.mxu0 0
      %8193 = vmatpush1.bf16.msra.mxu0 %v7947
      %8194 = vmatprep.subr.bf16.mxu0 0
      %8195 = vmatpush1.bf16.msra.mxu0 %v7948
      %8196 = vmatprep.subr.bf16.mxu0 0
      %8197 = vmatpush1.bf16.msra.mxu0 %v7949
      %8198 = vmatprep.subr.bf16.mxu0 0
      %8199 = vmatpush1.bf16.msra.mxu0 %v7950
      %8200 = vmatprep.subr.bf16.mxu0 0
      %8201 = vmatpush1.bf16.msra.mxu0 %v7951
      %8202 = vmatprep.subr.bf16.mxu0 0
      %8203 = vmatpush1.bf16.msra.mxu0 0
      %8204 = vmatprep.subr.bf16.mxu0 0
      %8205 = vmatpush1.bf16.msra.mxu0 0
      %8206 = vmatprep.subr.bf16.mxu0 0
      %8207 = vmatpush1.bf16.msra.mxu0 0
      %8208 = vmatprep.subr.bf16.mxu0 0
      %8209 = vmatpush1.bf16.msra.mxu0 0
      %8210 = vmatprep.subr.bf16.mxu0 0
      %8211 = vmatpush1.bf16.msra.mxu0 0
      %8212 = vmatprep.subr.bf16.mxu0 0
      %8213 = vmatpush1.bf16.msra.mxu0 0
      %8214 = vmatprep.subr.bf16.mxu0 0
      %8215 = vmatpush1.bf16.msra.mxu0 0
      %8216 = vmatprep.subr.bf16.mxu0 0
      %8217 = vmatpush1.bf16.msra.mxu0 0
      %8218 = vmatprep.mubr.bf16.mxu0 0
      %8219 = vmatmul.mubr.bf16.gmra.mrb[0].mxu0 %v7636
      %v8220 = vpop.f32.mrb[0].mxu0
      %v8221 = vadd.f32 %v8124, %v8220
      %v8222 = vpop.f32.mrb[0].mxu0
      %v8223 = vpop.f32.mrb[0].mxu0
      %v8224 = vadd.f32 %v8127, %v8223
      %v8225 = vpop.f32.mrb[0].mxu0
      %8226 = vmatprep.mubr.bf16.mxu0 0
      %8227 = vmatmul.mubr.bf16.gmra.mrb[0].mxu0 %v7641
      %v8228 = vpop.f32.mrb[0].mxu0
      %v8229 = vadd.f32 %v8132, %v8228
      %v8230 = vpop.f32.mrb[0].mxu0
      %v8231 = vpop.f32.mrb[0].mxu0
      %v8232 = vadd.f32 %v8135, %v8231
      %v8233 = vpop.f32.mrb[0].mxu0
      %8234 = vmatprep.mubr.bf16.mxu0 0
      %8235 = vmatmul.mubr.bf16.gmra.mrb[0].mxu0 %v7646
      %v8236 = vpop.f32.mrb[0].mxu0
      %v8237 = vadd.f32 %v8140, %v8236
      %v8238 = vpop.f32.mrb[0].mxu0
      %v8239 = vpop.f32.mrb[0].mxu0
      %v8240 = vadd.f32 %v8143, %v8239
      %v8241 = vpop.f32.mrb[0].mxu0
      %8242 = vmatprep.mubr.bf16.mxu0 0
      %8243 = vmatmul.mubr.bf16.gmra.mrb[0].mxu0 %v7651
      %v8244 = vpop.f32.mrb[0].mxu0
      %v8245 = vadd.f32 %v8148, %v8244
      %v8246 = vpop.f32.mrb[0].mxu0
      %v8247 = vpop.f32.mrb[0].mxu0
      %v8248 = vadd.f32 %v8151, %v8247
      %v8249 = vpop.f32.mrb[0].mxu0
      %8250 = vmatprep.mubr.bf16.mxu0 0
      %8251 = vmatmul.mubr.bf16.gmra.mrb[0].mxu0 %v7656
      %v8252 = vpop.f32.mrb[0].mxu0
      %v8253 = vadd.f32 %v8156, %v8252
      %v8254 = vpop.f32.mrb[0].mxu0
      %v8255 = vpop.f32.mrb[0].mxu0
      %v8256 = vadd.f32 %v8159, %v8255
      %v8257 = vpop.f32.mrb[0].mxu0
      %8258 = vmatprep.mubr.bf16.mxu0 0
      %8259 = vmatmul.mubr.bf16.gmra.mrb[0].mxu0 %v7661
      %v8260 = vpop.f32.mrb[0].mxu0
      %v8261 = vadd.f32 %v8164, %v8260
      %v8262 = vpop.f32.mrb[0].mxu0
      %v8263 = vpop.f32.mrb[0].mxu0
      %v8264 = vadd.f32 %v8167, %v8263
      %v8265 = vpop.f32.mrb[0].mxu0
      %8266 = vmatprep.mubr.bf16.mxu0 0
      %8267 = vmatmul.mubr.bf16.gmra.mrb[0].mxu0 %v7666
      %v8268 = vpop.f32.mrb[0].mxu0
      %v8269 = vadd.f32 %v8172, %v8268
      %v8270 = vpop.f32.mrb[0].mxu0
      %v8271 = vpop.f32.mrb[0].mxu0
      %v8272 = vadd.f32 %v8175, %v8271
      %v8273 = vpop.f32.mrb[0].mxu0
      %8274 = vmatprep.mubr.bf16.mxu0 0
      %8275 = vmatmul.mubr.bf16.gmra.mrb[0].mxu0 %v7671
      %v8276 = vpop.f32.mrb[0].mxu0
      %v8277 = vadd.f32 %v8180, %v8276
      %v8278 = vpop.f32.mrb[0].mxu0
      %v8279 = vpop.f32.mrb[0].mxu0
      %v8280 = vadd.f32 %v8183, %v8279
      %v8281 = vpop.f32.mrb[0].mxu0
      %8282 = vdwg.mxu0
      %v8283 = vmax.f32 %v8221, 1e-05
      %v8284 = vmax.f32 %v8224, 1e-05
      %v8285 = vmax.f32 %v8229, 1e-05
      %v8286 = vmax.f32 %v8232, 1e-05
      %v8287 = vmax.f32 %v8237, 1e-05
      %v8288 = vmax.f32 %v8240, 1e-05
      %v8289 = vmax.f32 %v8245, 1e-05
      %v8290 = vmax.f32 %v8248, 1e-05
      %v8291 = vmax.f32 %v8253, 1e-05
      %v8292 = vmax.f32 %v8256, 1e-05
      %v8293 = vmax.f32 %v8261, 1e-05
      %v8294 = vmax.f32 %v8264, 1e-05
      %v8295 = vmax.f32 %v8269, 1e-05
      %v8296 = vmax.f32 %v8272, 1e-05
      %v8297 = vmax.f32 %v8277, 1e-05
      %v8298 = vmax.f32 %v8280, 1e-05
      %v8299 = vlog2.pop %v8283
      %v8300 = vmul.f32 %v8299, 0.6931472
      %v8301 = vlog2.pop %v8284
      %v8302 = vmul.f32 %v8301, 0.6931472
      %v8303 = vlog2.pop %v8285
      %v8304 = vmul.f32 %v8303, 0.6931472
      %v8305 = vlog2.pop %v8286
      %v8306 = vmul.f32 %v8305, 0.6931472
      %v8307 = vlog2.pop %v8287
      %v8308 = vmul.f32 %v8307, 0.6931472
      %v8309 = vlog2.pop %v8288
      %v8310 = vmul.f32 %v8309, 0.6931472
      %v8311 = vlog2.pop %v8289
      %v8312 = vmul.f32 %v8311, 0.6931472
      %v8313 = vlog2.pop %v8290
      %v8314 = vmul.f32 %v8313, 0.6931472
      %v8315 = vlog2.pop %v8291
      %v8316 = vmul.f32 %v8315, 0.6931472
      %v8317 = vlog2.pop %v8292
      %v8318 = vmul.f32 %v8317, 0.6931472
      %v8319 = vlog2.pop %v8293
      %v8320 = vmul.f32 %v8319, 0.6931472
      %v8321 = vlog2.pop %v8294
      %v8322 = vmul.f32 %v8321, 0.6931472
      %v8323 = vlog2.pop %v8295
      %v8324 = vmul.f32 %v8323, 0.6931472
      %v8325 = vlog2.pop %v8296
      %v8326 = vmul.f32 %v8325, 0.6931472
      %v8327 = vlog2.pop %v8297
      %v8328 = vmul.f32 %v8327, 0.6931472
      %v8329 = vlog2.pop %v8298
      %v8330 = vmul.f32 %v8329, 0.6931472
      %8331 = vxpose.xlu0.b32.start [1/16] %v8300, 128
      %8332 = vxpose.xlu0.b32.cont [2/16] %v8302, 128
      %8333 = vxpose.xlu0.b32.cont [3/16] %v8304, 128
      %8334 = vxpose.xlu0.b32.cont [4/16] %v8306, 128
      %8335 = vxpose.xlu0.b32.cont [5/16] %v8308, 128
      %8336 = vxpose.xlu0.b32.cont [6/16] %v8310, 128
      %8337 = vxpose.xlu0.b32.cont [7/16] %v8312, 128
      %8338 = vxpose.xlu0.b32.cont [8/16] %v8314, 128
      %8339 = vxpose.xlu0.b32.cont [9/16] %v8316, 128
      %8340 = vxpose.xlu0.b32.cont [10/16] %v8318, 128
      %8341 = vxpose.xlu0.b32.cont [11/16] %v8320, 128
      %8342 = vxpose.xlu0.b32.cont [12/16] %v8322, 128
      %8343 = vxpose.xlu0.b32.cont [13/16] %v8324, 128
      %8344 = vxpose.xlu0.b32.cont [14/16] %v8326, 128
      %8345 = vxpose.xlu0.b32.cont [15/16] %v8328, 128
      %8346 = vxpose.xlu0.b32.end [16/16] %v8330, 128
      %v8347 = vpop.trf.xlu0
      %v8348 = vpop.trf.xlu0
      %v8349 = vpop.trf.xlu0
      %v8350 = vpop.trf.xlu0
      %v8351 = vpop.trf.xlu0
      %v8352 = vpop.trf.xlu0
      %v8353 = vpop.trf.xlu0
      %v8354 = vpop.trf.xlu0
      %v8355 = vpop.trf.xlu0
      %v8356 = vpop.trf.xlu0
      %v8357 = vpop.trf.xlu0
      %v8358 = vpop.trf.xlu0
      %v8359 = vpop.trf.xlu0
      %v8360 = vpop.trf.xlu0
      %v8361 = vpop.trf.xlu0
      %v8362 = vpop.trf.xlu0
      %8363 = vst [vmem:[%s284] sm:$0xff] %v8347
      %8364 = vst [vmem:[%s284 + $0x8] sm:$0xff] %v8348
      %8365 = vst [vmem:[%s284 + $0x10] sm:$0xff] %v8349
      %8366 = vst [vmem:[%s284 + $0x18] sm:$0xff] %v8350
      %8367 = vst [vmem:[%s284 + $0x20] sm:$0xff] %v8351
      %8368 = vst [vmem:[%s284 + $0x28] sm:$0xff] %v8352
      %8369 = vst [vmem:[%s284 + $0x30] sm:$0xff] %v8353
      %8370 = vst [vmem:[%s284 + $0x38] sm:$0xff] %v8354
      %8371 = vst [vmem:[%s284 + $0x40] sm:$0xff] %v8355
      %8372 = vst [vmem:[%s284 + $0x48] sm:$0xff] %v8356
      %8373 = vst [vmem:[%s284 + $0x50] sm:$0xff] %v8357
      %8374 = vst [vmem:[%s284 + $0x58] sm:$0xff] %v8358
      %8375 = vst [vmem:[%s284 + $0x60] sm:$0xff] %v8359
      %8376 = vst [vmem:[%s284 + $0x68] sm:$0xff] %v8360
      %8377 = vst [vmem:[%s284 + $0x70] sm:$0xff] %v8361
      %8378 = vst [vmem:[%s284 + $0x78] sm:$0xff] %v8362
      %p8379 = scmp.lt.s32.totalorder %s19, 1
      %s8380 = scalar_select %p8379, %s19, 1
      %p8381 = scmp.lt.s32.totalorder %s20, 0
      %s8382 = scalar_select %p8381, %s20, 0
      %s8383 = smul.addr %s8380, 16
      %s8384 = sadd.s32 %s8382, %s8383
      %s8385 = smul.addr %s8384, 8
      %s8386 = scalar_lea.vmem %s4, %s8385
      // Predicated region
      $region37: #{mel_spec_forward.1} parent=35 // pred_check
        %p8387 = pneg %p149
      $region38: #{mel_spec_forward.1} parent=35 // pred_check_branch
        %8389 = sbr.rel (%p8387) target = $region40
      $region39: #{mel_spec_forward.1} parent=35 // pred_region
        _
      $region40: #{mel_spec_forward.1} parent=35 // pred_fallthru
        _
    $region36: #{mel_spec_forward.1} parent=5 // pred_fallthru
      _
    %p8390 = scmp.le.s32.totalorder 2, %s10
    // Predicated region
    $region41: #{mel_spec_forward.1} parent=5 // pred_check
      %p8391 = pneg %p8390
    $region42: #{mel_spec_forward.1} parent=5 // pred_check_branch
      %8393 = sbr.rel (%p8391) target = $region44
    $region43: #{mel_spec_forward.1} parent=5 // pred_region
      %s8394 = ssub.s32 %s10, 2
      // Predicated region
      $region45: #{mel_spec_forward.1} parent=43 // pred_check
        %p8395 = pneg %p155
      $region46: #{mel_spec_forward.1} parent=43 // pred_check_branch
        %8397 = sbr.rel (%p8395) target = $region48
      $region47: #{mel_spec_forward.1} parent=43 // pred_region
        %p8398 = scmp.lt.s32.totalorder %s21, 1
        %s8399 = scalar_select %p8398, %s21, 1
        %p8400 = scmp.lt.s32.totalorder %s22, 0
        %s8401 = scalar_select %p8400, %s22, 0
        %s8402 = smul.addr %s8399, 16
        %s8403 = sadd.s32 %s8401, %s8402
        %s8404 = smul.addr %s8403, 8
        %s8405 = scalar_lea.vmem %s4, %s8404
      $region48: #{mel_spec_forward.1} parent=43 // pred_fallthru
        _
    $region44: #{mel_spec_forward.1} parent=5 // pred_fallthru
      _
  $region6: #{mel_spec_forward.1} parent=0 // loop_footer
    %s14 = sadd.s32 1, %s10
  $region7: #{mel_spec_forward.1} parent=0 // loop_footer_branch
    %9 = sbr.rel target = $region3
  $region8: #{mel_spec_forward.1} parent=0 // loop_exit
    _

</llo_original>
